<compile_context>
chip_gen: v7x
topology: tpu7x:2x2x1
jax: 0.10.0
libtpu: 0.0.40
codegen_flags: <defaults>
</compile_context>

<pallas_src>
import functools

import jax
import jax.numpy as jnp
from jax import lax
from jax.experimental import pallas as pl
from jax.experimental.pallas import tpu as pltpu


def _round_up(x, m):
    return (x + m - 1) // m * m


# ----------------------------------------------------------------------------
# Kernel 1: fused matmul + bias + activation (backs every im2col convolution)
# ----------------------------------------------------------------------------
def _matmul_bias_act_kernel(a_ref, b_ref, bias_ref, o_ref, *, act):
    acc = jnp.dot(a_ref[...], b_ref[...], preferred_element_type=jnp.float32)
    acc = acc + bias_ref[...]
    if act == "relu":
        acc = jnp.maximum(acc, 0.0)
    elif act == "elu":
        # clamp the exp argument so the unselected branch never produces inf.
        acc = jnp.where(acc > 0, acc, jnp.exp(jnp.minimum(acc, 0.0)) - 1.0)
    elif act == "sigmoid":
        acc = jax.nn.sigmoid(acc)
    o_ref[...] = acc


def matmul_bias_act(a, b, bias, act="none", block_m=256):
    """(M,K)@(K,N)+bias+act.  bf16 MXU operands, f32 epilogue.
    M is tiled over a 'parallel' grid axis (software pipelined; shards across
    the two v7x TensorCores when more than one tile exists)."""
    M, K = a.shape
    K2, N = b.shape
    assert K == K2
    tm = min(block_m, _round_up(M, 8))
    mp = _round_up(M, tm)
    if mp != M:
        a = jnp.pad(a, ((0, mp - M), (0, 0)))
    grid_spec = pltpu.PrefetchScalarGridSpec(
        num_scalar_prefetch=0,
        grid=(mp // tm,),
        in_specs=[
            pl.BlockSpec((tm, K), lambda i: (i, 0)),   # patches tile
            pl.BlockSpec((K, N), lambda i: (0, 0)),    # weights (resident)
            pl.BlockSpec((1, N), lambda i: (0, 0)),    # bias (resident)
        ],
        out_specs=pl.BlockSpec((tm, N), lambda i: (i, 0)),
    )
    y = pl.pallas_call(
        functools.partial(_matmul_bias_act_kernel, act=act),
        grid_spec=grid_spec,
        out_shape=jax.ShapeDtypeStruct((mp, N), jnp.float32),
        compiler_params=pltpu.CompilerParams(
            dimension_semantics=("parallel",)),
    )(a.astype(jnp.bfloat16), b.astype(jnp.bfloat16),
      bias.reshape(1, N).astype(jnp.float32))
    return y[:M] if mp != M else y


def _im2col(x_nhwc, kh, kw, stride, pad):
    B, H, W, C = x_nhwc.shape
    xp = jnp.pad(x_nhwc, ((0, 0), (pad, pad), (pad, pad), (0, 0)))
    OH = (H + 2 * pad - kh) // stride + 1
    OW = (W + 2 * pad - kw) // stride + 1
    cols = []
    for i in range(kh):
        for j in range(kw):
            cols.append(xp[:, i:i + stride * (OH - 1) + 1:stride,
                           j:j + stride * (OW - 1) + 1:stride, :])
    patches = jnp.concatenate(cols, axis=-1)            # (B, OH, OW, kh*kw*C)
    return patches.reshape(B * OH * OW, kh * kw * C), OH, OW


def conv2d_nhwc(x, w, b, stride=1, pad=1, act="none"):
    """NHWC conv via im2col + Pallas matmul.  w: (kh, kw, Cin, Cout)."""
    B, H, W, C = x.shape
    kh, kw, _, cout = w.shape
    patches, OH, OW = _im2col(x, kh, kw, stride, pad)
    y = matmul_bias_act(patches, w.reshape(kh * kw * C, cout), b, act=act)
    return y.reshape(B, OH, OW, cout)


# ----------------------------------------------------------------------------
# Kernel 2: fused transformer stack (+ final LN, decoder, skip, BN, ELU)
# ----------------------------------------------------------------------------
def _transformer_kernel(
        tok_ref, skip_ref, abias_ref,
        ln1g_ref, ln1b_ref, wqkv_ref, bqkv_ref, wo_ref, bo_ref,
        ln2g_ref, ln2b_ref, w1_ref, b1_ref, w2_ref, b2_ref,
        lnfg_ref, lnfb_ref, decw_ref, decb_ref,
        out_ref, x_res,
        *, heads, bn_scale, bn_shift, ln_eps):
    layer = pl.program_id(0)

    @pl.when(layer == 0)
    def _():
        x_res[...] = tok_ref[...]

    x = x_res[...]                                   # (BS, D) f32, VMEM resident
    bs, d = x.shape
    hd = d // heads
    scale = 1.0 / float(hd) ** 0.5

    def ln(v, g, b):
        mu = jnp.mean(v, axis=-1, keepdims=True)
        var = jnp.mean(jnp.square(v - mu), axis=-1, keepdims=True)
        return (v - mu) * lax.rsqrt(var + ln_eps) * g + b

    def mm(a, w):                                    # bf16 MXU, f32 accumulate
        return jnp.dot(a.astype(jnp.bfloat16), w,
                       preferred_element_type=jnp.float32)

    # ---- multi-head self-attention ---------------------------------------
    h1 = ln(x, ln1g_ref[0], ln1b_ref[0])
    qkv = mm(h1, wqkv_ref[0]) + bqkv_ref[0]          # (BS, 3D) f32
    abias = abias_ref[...]                           # block-diag batch mask bias

    o_heads = []
    for h in range(heads):
        qh = qkv[:, h * hd:(h + 1) * hd].astype(jnp.bfloat16)
        kh = qkv[:, d + h * hd:d + (h + 1) * hd].astype(jnp.bfloat16)
        vh = qkv[:, 2 * d + h * hd:2 * d + (h + 1) * hd].astype(jnp.bfloat16)
        # all batches share one (BS, BS) score matrix; cross-batch entries get
        # a -1e30 additive bias so softmax zeroes them exactly.
        s = lax.dot_general(qh, kh, (((1,), (1,)), ((), ())),
                            preferred_element_type=jnp.float32) * scale + abias
        m = jnp.max(s, axis=-1, keepdims=True)
        p = jnp.exp(s - m)
        p = p * pl.reciprocal(jnp.sum(p, axis=-1, keepdims=True), approx=True)
        o_heads.append(jnp.dot(p.astype(jnp.bfloat16), vh,
                               preferred_element_type=jnp.float32))
    o = jnp.concatenate(o_heads, axis=-1)            # (BS, D)
    x = x + mm(o, wo_ref[0]) + bo_ref[0]

    # ---- MLP ---------------------------------------------------------------
    h2 = ln(x, ln2g_ref[0], ln2b_ref[0])
    m1 = mm(h2, w1_ref[0]) + b1_ref[0]
    # TODO(synk): PyTorch nn.GELU defaults to the exact erf form; tanh approx used.
    m1 = jax.nn.gelu(m1, approximate=True)
    x = x + mm(m1, w2_ref[0]) + b2_ref[0]
    x_res[...] = x

    # ---- last layer: final LN + token->patch decoder + skip + BN(eval) + ELU
    @pl.when(layer == pl.num_programs(0) - 1)
    def _():
        xf = ln(x, lnfg_ref[...], lnfb_ref[...])
        dec = mm(xf, decw_ref[...]) + decb_ref[...]          # (BS, patch*patch)
        y = (dec + skip_ref[...]) * bn_scale + bn_shift      # vit_bn (eval mode)
        out_ref[...] = jnp.where(y > 0, y, jnp.exp(jnp.minimum(y, 0.0)) - 1.0)


def transformer_decode(p, tokens, skip_tok, attn_bias, *, heads,
                       bn_scale, bn_shift):
    bs, d = tokens.shape
    num_layers = p["wqkv"].shape[0]
    hidden = p["w1"].shape[-1]
    p2 = p["dec_w"].shape[-1]
    bf = lambda a: a.astype(jnp.bfloat16)

    cst2 = lambda l: (0, 0)
    lay3 = lambda l: (l, 0, 0)

    grid_spec = pltpu.PrefetchScalarGridSpec(
        num_scalar_prefetch=0,
        grid=(num_layers,),
        in_specs=[
            pl.BlockSpec((bs, d), cst2),            # tokens
            pl.BlockSpec((bs, p2), cst2),           # skip (token/patch layout)
            pl.BlockSpec((bs, bs), cst2),           # attention batch-mask bias
            pl.BlockSpec((1, 1, d), lay3),          # ln1 gamma
            pl.BlockSpec((1, 1, d), lay3),          # ln1 beta
            pl.BlockSpec((1, d, 3 * d), lay3),      # wqkv
            pl.BlockSpec((1, 1, 3 * d), lay3),      # bqkv
            pl.BlockSpec((1, d, d), lay3),          # wo
            pl.BlockSpec((1, 1, d), lay3),          # bo
            pl.BlockSpec((1, 1, d), lay3),          # ln2 gamma
            pl.BlockSpec((1, 1, d), lay3),          # ln2 beta
            pl.BlockSpec((1, d, hidden), lay3),     # w1
            pl.BlockSpec((1, 1, hidden), lay3),     # b1
            pl.BlockSpec((1, hidden, d), lay3),     # w2
            pl.BlockSpec((1, 1, d), lay3),          # b2
            pl.BlockSpec((1, d), cst2),             # final-LN gamma
            pl.BlockSpec((1, d), cst2),             # final-LN beta
            pl.BlockSpec((d, p2), cst2),            # decoder weight
            pl.BlockSpec((1, p2), cst2),            # decoder bias
        ],
        out_specs=pl.BlockSpec((bs, p2), cst2),
        scratch_shapes=[pltpu.VMEM((bs, d), jnp.float32)],   # residual stream
    )
    kernel = functools.partial(
        _transformer_kernel, heads=heads,
        bn_scale=bn_scale, bn_shift=bn_shift, ln_eps=1e-5)
    return pl.pallas_call(
        kernel,
        grid_spec=grid_spec,
        out_shape=jax.ShapeDtypeStruct((bs, p2), jnp.float32),
        compiler_params=pltpu.CompilerParams(
            dimension_semantics=("arbitrary",)),     # layers are sequential
    )(tokens.astype(jnp.float32), skip_tok.astype(jnp.float32),
      attn_bias.astype(jnp.float32),
      p["ln1_g"], p["ln1_b"], bf(p["wqkv"]), p["bqkv"], bf(p["wo"]), p["bo"],
      p["ln2_g"], p["ln2_b"], bf(p["w1"]), p["b1"], bf(p["w2"]), p["b2"],
      p["lnf_g"], p["lnf_b"], bf(p["dec_w"]), p["dec_b"])


# ----------------------------------------------------------------------------
# Sub-modules (NHWC activations everywhere)
# ----------------------------------------------------------------------------
def skipvit_pr_forward(p, x_nhwc, *, heads):
    """FullSkip_FCN_CCT (representative) fused with vit_bn (eval) + ELU."""
    B, H, W, _ = x_nhwc.shape
    # Conv tokenizer: two stride-2 convs.
    # TODO(synk): reference CCT tokenizer also contains maxpool layers; omitted.
    h = conv2d_nhwc(x_nhwc, p["tok1_w"], p["tok1_b"], stride=2, pad=1, act="relu")
    h = conv2d_nhwc(h, p["tok2_w"], p["tok2_b"], stride=2, pad=1, act="relu")
    _, GH, GW, D = h.shape
    S = GH * GW
    patch = H // GH
    tokens = (h.reshape(B, S, D) + p["pos_emb"][None]).reshape(B * S, D)

    # "Full skip": 1x1 conv on the raw input (degenerate matmul -> plain XLA),
    # rearranged into the same (token, patch-pixel) layout the decoder emits.
    skip = jnp.einsum("bhwc,c->bhw", x_nhwc, p["skip_w"]) + p["skip_b"]
    skip_tok = skip.reshape(B, GH, patch, GW, patch).transpose(0, 1, 3, 2, 4)
    skip_tok = skip_tok.reshape(B * S, patch * patch)

    # Block-diagonal batch mask (additive bias) so tokens never attend across
    # batch images while sharing one (B*S, B*S) score matmul.
    bidx = jnp.arange(B * S) // S
    attn_bias = jnp.where(bidx[:, None] == bidx[None, :], 0.0, -1e30)

    # vit_bn = BatchNorm2d(1, eps=1e-3) in eval mode with fresh running stats.
    bn_eps = 1e-3
    bn_scale = 1.0 / (1.0 + bn_eps) ** 0.5
    bn_shift = 0.0

    xpr_tok = transformer_decode(p, tokens, skip_tok, attn_bias, heads=heads,
                                 bn_scale=bn_scale, bn_shift=bn_shift)
    xpr = xpr_tok.reshape(B, GH, GW, patch, patch).transpose(0, 1, 3, 2, 4)
    return xpr.reshape(B, H, W, 1)                   # == ELU(vit_bn(skipvit(x)))


def fcn_cbam_forward(p, x):
    """FCN_Pad_Xaiver_CBAM2 (representative): conv -> CBAM -> conv, 3ch out."""
    h = conv2d_nhwc(x, p["c1_w"], p["c1_b"], pad=1, act="elu")     # (B,H,W,8)
    # Channel attention: (B,8) matmuls are pure launch overhead in Pallas ->
    # plain XLA per perf review.
    avg = jnp.mean(h, axis=(1, 2))
    mx = jnp.max(h, axis=(1, 2))

    def ca_mlp(v):
        v = jax.nn.relu(v @ p["ca_w1"] + p["ca_b1"])
        return v @ p["ca_w2"] + p["ca_b2"]

    ch = jax.nn.sigmoid(ca_mlp(avg) + ca_mlp(mx))
    h = h * ch[:, None, None, :]
    # Spatial attention (7x7 conv on [avg, max] maps) stays on the Pallas path.
    savg = jnp.mean(h, axis=-1, keepdims=True)
    smax = jnp.max(h, axis=-1, keepdims=True)
    satt = conv2d_nhwc(jnp.concatenate([savg, smax], axis=-1),
                       p["sa_w"], p["sa_b"], pad=3, act="sigmoid")
    h = h * satt
    return conv2d_nhwc(h, p["c2_w"], p["c2_b"], pad=1)             # (B,H,W,3)


def fcn4_forward(p, x):
    """FCN_4 (representative): 3 convs, 4ch in -> 2ch out."""
    h = conv2d_nhwc(x, p["c1_w"], p["c1_b"], pad=1, act="elu")
    h = conv2d_nhwc(h, p["c2_w"], p["c2_b"], pad=1, act="elu")
    return conv2d_nhwc(h, p["c3_w"], p["c3_b"], pad=1)


def heatformer_passive_forward(params, x_nchw, *, heads):
    x = jnp.transpose(x_nchw, (0, 2, 3, 1))          # NCHW -> NHWC once
    x_pr = skipvit_pr_forward(params["skipvit"], x, heads=heads)   # (B,H,W,1)
    x_vel = fcn_cbam_forward(params["fcn"], x[..., :3])            # (B,H,W,3)
    y = fcn4_forward(params["out_conv"],
                     jnp.concatenate([x_vel, x_pr], axis=-1))      # (B,H,W,2)
    return jnp.transpose(y, (0, 3, 1, 2))            # back to NCHW


# ----------------------------------------------------------------------------
# Deterministic parameter init (NHWC / (kh,kw,Cin,Cout) conv weight layout)
# ----------------------------------------------------------------------------
def init_params(key, *, img, cin, dim, heads, layers, mlp_ratio):
    keys = iter(jax.random.split(key, 64))

    def nrm(shape, s=0.1):
        return s * jax.random.normal(next(keys), shape, jnp.float32)

    tok_c1 = 16
    grid = img // 4                      # two stride-2 convs
    patch = img // grid
    hidden = int(dim * mlp_ratio)
    L = layers

    sk = {
        "tok1_w": nrm((3, 3, cin, tok_c1)), "tok1_b": nrm((tok_c1,)),
        "tok2_w": nrm((3, 3, tok_c1, dim)), "tok2_b": nrm((dim,)),
        "pos_emb": nrm((grid * grid, dim)),
        # per-layer weights stacked along a leading layer axis
        "ln1_g": jnp.ones((L, 1, dim), jnp.float32),
        "ln1_b": jnp.zeros((L, 1, dim), jnp.float32),
        "wqkv": nrm((L, dim, 3 * dim)), "bqkv": nrm((L, 1, 3 * dim)),
        "wo": nrm((L, dim, dim)), "bo": nrm((L, 1, dim)),
        "ln2_g": jnp.ones((L, 1, dim), jnp.float32),
        "ln2_b": jnp.zeros((L, 1, dim), jnp.float32),
        "w1": nrm((L, dim, hidden)), "b1": nrm((L, 1, hidden)),
        "w2": nrm((L, hidden, dim)), "b2": nrm((L, 1, dim)),
        "lnf_g": jnp.ones((1, dim), jnp.float32),
        "lnf_b": jnp.zeros((1, dim), jnp.float32),
        "dec_w": nrm((dim, patch * patch)), "dec_b": nrm((1, patch * patch)),
        "skip_w": nrm((cin,)), "skip_b": nrm(()),
    }
    feat = 8
    fcn = {
        "c1_w": nrm((3, 3, 3, feat)), "c1_b": nrm((feat,)),
        "ca_w1": nrm((feat, feat // 4)), "ca_b1": nrm((feat // 4,)),
        "ca_w2": nrm((feat // 4, feat)), "ca_b2": nrm((feat,)),
        "sa_w": nrm((7, 7, 2, 1)), "sa_b": nrm((1,)),
        "c2_w": nrm((3, 3, feat, 3)), "c2_b": nrm((3,)),
    }
    out_conv = {
        "c1_w": nrm((3, 3, 4, feat)), "c1_b": nrm((feat,)),
        "c2_w": nrm((3, 3, feat, feat)), "c2_b": nrm((feat,)),
        "c3_w": nrm((3, 3, feat, 2)), "c3_b": nrm((2,)),
    }
    return {"skipvit": sk, "fcn": fcn, "out_conv": out_conv}


# ----------------------------------------------------------------------------
if __name__ == "__main__":
    B, CIN, IMG = 2, 4, 16
    DIM, HEADS, LAYERS, MLP = 32, 4, 3, 4.0

    key = jax.random.PRNGKey(0)
    k_x, k_p = jax.random.split(key)
    x = jax.random.normal(k_x, (B, CIN, IMG, IMG), jnp.float32)
    params = init_params(k_p, img=IMG, cin=CIN, dim=DIM, heads=HEADS,
                         layers=LAYERS, mlp_ratio=MLP)

    fwd = jax.jit(functools.partial(heatformer_passive_forward, heads=HEADS))
    out = fwd(params, x)
    jax.block_until_ready(out)

    assert out.shape == (B, 2, IMG, IMG), out.shape
    assert bool(jnp.all(jnp.isfinite(out)))
    print("KERNEL_OK")
</pallas_src>

<mosaic_0001>
module attributes {stable_mosaic.version = 11 : i64} {
  func.func @_matmul_bias_act_kernel(%arg0: i32, %arg1: memref<128x36xbf16, #tpu.memory_space<vmem>>, %arg2: memref<36x16xbf16, #tpu.memory_space<vmem>>, %arg3: memref<1x16xf32, #tpu.memory_space<vmem>>, %arg4: memref<128x16xf32, #tpu.memory_space<vmem>>) attributes {dimension_semantics = [#tpu.dimension_semantics<parallel>], iteration_bounds = array<i64: 1>, scalar_prefetch = 0 : i64, scratch_operands = 0 : i64, tpu.core_type = #tpu.core_type<tc>, window_params = [{transform_indices = @transform_0, window_bounds = array<i64: 128, 36>}, {pipeline_mode = #tpu.pipeline_mode<synchronous>, transform_indices = @transform_1, window_bounds = array<i64: 36, 16>}, {pipeline_mode = #tpu.pipeline_mode<synchronous>, transform_indices = @transform_2, window_bounds = array<i64: 1, 16>}, {transform_indices = @transform_3, window_bounds = array<i64: 128, 16>}]} {
    %c0 = arith.constant 0 : index
    %c0_0 = arith.constant 0 : index
    %0 = vector.load %arg1[%c0, %c0_0] : memref<128x36xbf16, #tpu.memory_space<vmem>>, vector<128x36xbf16>
    %c0_1 = arith.constant 0 : index
    %c0_2 = arith.constant 0 : index
    %1 = vector.load %arg2[%c0_1, %c0_2] : memref<36x16xbf16, #tpu.memory_space<vmem>>, vector<36x16xbf16>
    %cst = arith.constant dense<0.000000e+00> : vector<128x16xf32>
    %2 = tpu.matmul %0, %1, %cst {dimension_numbers = #tpu.dot_dimension_numbers<[1], [0], [0], [1], [0, 0, 1, 1], [], []>} : vector<128x36xbf16>, vector<36x16xbf16>, vector<128x16xf32> -> vector<128x16xf32>
    %c0_3 = arith.constant 0 : index
    %c0_4 = arith.constant 0 : index
    %3 = vector.load %arg3[%c0_3, %c0_4] : memref<1x16xf32, #tpu.memory_space<vmem>>, vector<1x16xf32>
    %4 = vector.broadcast %3 : vector<1x16xf32> to vector<128x16xf32>
    %5 = arith.addf %2, %4 : vector<128x16xf32>
    %cst_5 = arith.constant 0.000000e+00 : f32
    %6 = vector.broadcast %cst_5 : f32 to vector<128x16xf32>
    %7 = arith.maximumf %5, %6 : vector<128x16xf32>
    %c0_6 = arith.constant 0 : index
    %c0_7 = arith.constant 0 : index
    %8 = vector.load %arg4[%c0_6, %c0_7] : memref<128x16xf32, #tpu.memory_space<vmem>>, vector<128x16xf32>
    tpu.vector_store %arg4[%c0_6, %c0_7], %7 {strides = array<i32>} : memref<128x16xf32, #tpu.memory_space<vmem>>, vector<128x16xf32>,
    return
  }
  func.func @transform_0(%arg0: i32) -> (i32, i32) {
    %c0_i32 = arith.constant 0 : i32
    %c0_i32_0 = arith.constant 0 : i32
    return %arg0, %c0_i32 : i32, i32
  }
  func.func @transform_1(%arg0: i32) -> (i32, i32) {
    %c0_i32 = arith.constant 0 : i32
    %c0_i32_0 = arith.constant 0 : i32
    %c0_i32_1 = arith.constant 0 : i32
    return %c0_i32, %c0_i32_0 : i32, i32
  }
  func.func @transform_2(%arg0: i32) -> (i32, i32) {
    %c0_i32 = arith.constant 0 : i32
    %c0_i32_0 = arith.constant 0 : i32
    %c0_i32_1 = arith.constant 0 : i32
    return %c0_i32, %c0_i32_0 : i32, i32
  }
  func.func @transform_3(%arg0: i32) -> (i32, i32) {
    %c0_i32 = arith.constant 0 : i32
    %c0_i32_0 = arith.constant 0 : i32
    return %arg0, %c0_i32 : i32, i32
  }
}

module attributes {stable_mosaic.version = 11 : i64} {
  func.func @_matmul_bias_act_kernel(%arg0: i32, %arg1: memref<32x144xbf16, #tpu.memory_space<vmem>>, %arg2: memref<144x32xbf16, #tpu.memory_space<vmem>>, %arg3: memref<1x32xf32, #tpu.memory_space<vmem>>, %arg4: memref<32x32xf32, #tpu.memory_space<vmem>>) attributes {dimension_semantics = [#tpu.dimension_semantics<parallel>], iteration_bounds = array<i64: 1>, scalar_prefetch = 0 : i64, scratch_operands = 0 : i64, tpu.core_type = #tpu.core_type<tc>, window_params = [{transform_indices = @transform_0, window_bounds = array<i64: 32, 144>}, {pipeline_mode = #tpu.pipeline_mode<synchronous>, transform_indices = @transform_1, window_bounds = array<i64: 144, 32>}, {pipeline_mode = #tpu.pipeline_mode<synchronous>, transform_indices = @transform_2, window_bounds = array<i64: 1, 32>}, {transform_indices = @transform_3, window_bounds = array<i64: 32, 32>}]} {
    %c0 = arith.constant 0 : index
    %c0_0 = arith.constant 0 : index
    %0 = vector.load %arg1[%c0, %c0_0] : memref<32x144xbf16, #tpu.memory_space<vmem>>, vector<32x144xbf16>
    %c0_1 = arith.constant 0 : index
    %c0_2 = arith.constant 0 : index
    %1 = vector.load %arg2[%c0_1, %c0_2] : memref<144x32xbf16, #tpu.memory_space<vmem>>, vector<144x32xbf16>
    %cst = arith.constant dense<0.000000e+00> : vector<32x32xf32>
    %2 = tpu.matmul %0, %1, %cst {dimension_numbers = #tpu.dot_dimension_numbers<[1], [0], [0], [1], [0, 0, 1, 1], [], []>} : vector<32x144xbf16>, vector<144x32xbf16>, vector<32x32xf32> -> vector<32x32xf32>
    %c0_3 = arith.constant 0 : index
    %c0_4 = arith.constant 0 : index
    %3 = vector.load %arg3[%c0_3, %c0_4] : memref<1x32xf32, #tpu.memory_space<vmem>>, vector<1x32xf32>
    %4 = vector.broadcast %3 : vector<1x32xf32> to vector<32x32xf32>
    %5 = arith.addf %2, %4 : vector<32x32xf32>
    %cst_5 = arith.constant 0.000000e+00 : f32
    %6 = vector.broadcast %cst_5 : f32 to vector<32x32xf32>
    %7 = arith.maximumf %5, %6 : vector<32x32xf32>
    %c0_6 = arith.constant 0 : index
    %c0_7 = arith.constant 0 : index
    %8 = vector.load %arg4[%c0_6, %c0_7] : memref<32x32xf32, #tpu.memory_space<vmem>>, vector<32x32xf32>
    tpu.vector_store %arg4[%c0_6, %c0_7], %7 {strides = array<i32>} : memref<32x32xf32, #tpu.memory_space<vmem>>, vector<32x32xf32>,
    return
  }
  func.func @transform_0(%arg0: i32) -> (i32, i32) {
    %c0_i32 = arith.constant 0 : i32
    %c0_i32_0 = arith.constant 0 : i32
    return %arg0, %c0_i32 : i32, i32
  }
  func.func @transform_1(%arg0: i32) -> (i32, i32) {
    %c0_i32 = arith.constant 0 : i32
    %c0_i32_0 = arith.constant 0 : i32
    %c0_i32_1 = arith.constant 0 : i32
    return %c0_i32, %c0_i32_0 : i32, i32
  }
  func.func @transform_2(%arg0: i32) -> (i32, i32) {
    %c0_i32 = arith.constant 0 : i32
    %c0_i32_0 = arith.constant 0 : i32
    %c0_i32_1 = arith.constant 0 : i32
    return %c0_i32, %c0_i32_0 : i32, i32
  }
  func.func @transform_3(%arg0: i32) -> (i32, i32) {
    %c0_i32 = arith.constant 0 : i32
    %c0_i32_0 = arith.constant 0 : i32
    return %arg0, %c0_i32 : i32, i32
  }
}

module attributes {stable_mosaic.version = 11 : i64} {
  func.func @_transformer_kernel(%arg0: i32, %arg1: memref<32x32xf32, #tpu.memory_space<vmem>>, %arg2: memref<32x16xf32, #tpu.memory_space<vmem>>, %arg3: memref<32x32xf32, #tpu.memory_space<vmem>>, %arg4: memref<1x1x32xf32, #tpu.memory_space<vmem>>, %arg5: memref<1x1x32xf32, #tpu.memory_space<vmem>>, %arg6: memref<1x32x96xbf16, #tpu.memory_space<vmem>>, %arg7: memref<1x1x96xf32, #tpu.memory_space<vmem>>, %arg8: memref<1x32x32xbf16, #tpu.memory_space<vmem>>, %arg9: memref<1x1x32xf32, #tpu.memory_space<vmem>>, %arg10: memref<1x1x32xf32, #tpu.memory_space<vmem>>, %arg11: memref<1x1x32xf32, #tpu.memory_space<vmem>>, %arg12: memref<1x32x128xbf16, #tpu.memory_space<vmem>>, %arg13: memref<1x1x128xf32, #tpu.memory_space<vmem>>, %arg14: memref<1x128x32xbf16, #tpu.memory_space<vmem>>, %arg15: memref<1x1x32xf32, #tpu.memory_space<vmem>>, %arg16: memref<1x32xf32, #tpu.memory_space<vmem>>, %arg17: memref<1x32xf32, #tpu.memory_space<vmem>>, %arg18: memref<32x16xbf16, #tpu.memory_space<vmem>>, %arg19: memref<1x16xf32, #tpu.memory_space<vmem>>, %arg20: memref<32x16xf32, #tpu.memory_space<vmem>>, %arg21: memref<32x32xf32, #tpu.memory_space<vmem>>) attributes {dimension_semantics = [#tpu.dimension_semantics<arbitrary>], iteration_bounds = array<i64: 3>, scalar_prefetch = 0 : i64, scratch_operands = 1 : i64, tpu.core_type = #tpu.core_type<tc>, window_params = [{pipeline_mode = #tpu.pipeline_mode<synchronous>, transform_indices = @transform_0, window_bounds = array<i64: 32, 32>}, {pipeline_mode = #tpu.pipeline_mode<synchronous>, transform_indices = @transform_1, window_bounds = array<i64: 32, 16>}, {pipeline_mode = #tpu.pipeline_mode<synchronous>, transform_indices = @transform_2, window_bounds = array<i64: 32, 32>}, {transform_indices = @transform_3, window_bounds = array<i64: 1, 1, 32>}, {transform_indices = @transform_4, window_bounds = array<i64: 1, 1, 32>}, {transform_indices = @transform_5, window_bounds = array<i64: 1, 32, 96>}, {transform_indices = @transform_6, window_bounds = array<i64: 1, 1, 96>}, {transform_indices = @transform_7, window_bounds = array<i64: 1, 32, 32>}, {transform_indices = @transform_8, window_bounds = array<i64: 1, 1, 32>}, {transform_indices = @transform_9, window_bounds = array<i64: 1, 1, 32>}, {transform_indices = @transform_10, window_bounds = array<i64: 1, 1, 32>}, {transform_indices = @transform_11, window_bounds = array<i64: 1, 32, 128>}, {transform_indices = @transform_12, window_bounds = array<i64: 1, 1, 128>}, {transform_indices = @transform_13, window_bounds = array<i64: 1, 128, 32>}, {transform_indices = @transform_14, window_bounds = array<i64: 1, 1, 32>}, {pipeline_mode = #tpu.pipeline_mode<synchronous>, transform_indices = @transform_15, window_bounds = array<i64: 1, 32>}, {pipeline_mode = #tpu.pipeline_mode<synchronous>, transform_indices = @transform_16, window_bounds = array<i64: 1, 32>}, {pipeline_mode = #tpu.pipeline_mode<synchronous>, transform_indices = @transform_17, window_bounds = array<i64: 32, 16>}, {pipeline_mode = #tpu.pipeline_mode<synchronous>, transform_indices = @transform_18, window_bounds = array<i64: 1, 16>}, {pipeline_mode = #tpu.pipeline_mode<synchronous>, transform_indices = @transform_19, window_bounds = array<i64: 32, 16>}]} {
    %c0_i32 = arith.constant 0 : i32
    %0 = arith.cmpi eq, %arg0, %c0_i32 : i32
    %1 = arith.extui %0 : i1 to i32
    %c0_i32_0 = arith.constant 0 : i32
    %2 = arith.cmpi ne, %1, %c0_i32_0 : i32
    scf.if %2 {
      %c0_80 = arith.constant 0 : index
      %c0_81 = arith.constant 0 : index
      %197 = vector.load %arg1[%c0_80, %c0_81] : memref<32x32xf32, #tpu.memory_space<vmem>>, vector<32x32xf32>
      %c0_82 = arith.constant 0 : index
      %c0_83 = arith.constant 0 : index
      %198 = vector.load %arg21[%c0_82, %c0_83] : memref<32x32xf32, #tpu.memory_space<vmem>>, vector<32x32xf32>
      tpu.vector_store %arg21[%c0_82, %c0_83], %197 {strides = array<i32>} : memref<32x32xf32, #tpu.memory_space<vmem>>, vector<32x32xf32>,
    } else {
    }
    %c0 = arith.constant 0 : index
    %c0_1 = arith.constant 0 : index
    %3 = vector.load %arg21[%c0, %c0_1] : memref<32x32xf32, #tpu.memory_space<vmem>>, vector<32x32xf32>
    %c0_2 = arith.constant 0 : index
    %c0_3 = arith.constant 0 : index
    %c0_4 = arith.constant 0 : index
    %4 = vector.load %arg4[%c0_2, %c0_3, %c0_4] : memref<1x1x32xf32, #tpu.memory_space<vmem>>, vector<1x1x32xf32>
    %5 = vector.shape_cast %4 : vector<1x1x32xf32> to vector<1x32xf32>
    %c0_5 = arith.constant 0 : index
    %c0_6 = arith.constant 0 : index
    %c0_7 = arith.constant 0 : index
    %6 = vector.load %arg5[%c0_5, %c0_6, %c0_7] : memref<1x1x32xf32, #tpu.memory_space<vmem>>, vector<1x1x32xf32>
    %7 = vector.shape_cast %6 : vector<1x1x32xf32> to vector<1x32xf32>
    %cst = arith.constant dense<0.000000e+00> : vector<32xf32>
    %8 = vector.multi_reduction <add>, %3, %cst [1] : vector<32x32xf32> to vector<32xf32>
    %9 = vector.shape_cast %8 : vector<32xf32> to vector<32x1xf32>
    %cst_8 = arith.constant 3.200000e+01 : f32
    %10 = vector.broadcast %cst_8 : f32 to vector<32x1xf32>
    %11 = arith.divf %9, %10 : vector<32x1xf32>
    %12 = vector.broadcast %11 : vector<32x1xf32> to vector<32x32xf32>
    %13 = arith.subf %3, %12 : vector<32x32xf32>
    %14 = arith.mulf %13, %13 : vector<32x32xf32>
    %cst_9 = arith.constant dense<0.000000e+00> : vector<32xf32>
    %15 = vector.multi_reduction <add>, %14, %cst_9 [1] : vector<32x32xf32> to vector<32xf32>
    %16 = vector.shape_cast %15 : vector<32xf32> to vector<32x1xf32>
    %cst_10 = arith.constant 3.200000e+01 : f32
    %17 = vector.broadcast %cst_10 : f32 to vector<32x1xf32>
    %18 = arith.divf %16, %17 : vector<32x1xf32>
    %19 = vector.broadcast %11 : vector<32x1xf32> to vector<32x32xf32>
    %20 = arith.subf %3, %19 : vector<32x32xf32>
    %cst_11 = arith.constant 9.99999974E-6 : f32
    %21 = vector.broadcast %cst_11 : f32 to vector<32x1xf32>
    %22 = arith.addf %18, %21 : vector<32x1xf32>
    %23 = math.rsqrt %22 : vector<32x1xf32>
    %24 = vector.broadcast %23 : vector<32x1xf32> to vector<32x32xf32>
    %25 = arith.mulf %20, %24 : vector<32x32xf32>
    %26 = vector.broadcast %5 : vector<1x32xf32> to vector<32x32xf32>
    %27 = arith.mulf %25, %26 : vector<32x32xf32>
    %28 = vector.broadcast %7 : vector<1x32xf32> to vector<32x32xf32>
    %29 = arith.addf %27, %28 : vector<32x32xf32>
    %c0_12 = arith.constant 0 : index
    %c0_13 = arith.constant 0 : index
    %c0_14 = arith.constant 0 : index
    %30 = vector.load %arg6[%c0_12, %c0_13, %c0_14] : memref<1x32x96xbf16, #tpu.memory_space<vmem>>, vector<1x32x96xbf16>
    %31 = vector.shape_cast %30 : vector<1x32x96xbf16> to vector<32x96xbf16>
    %32 = arith.truncf %29 : vector<32x32xf32> to vector<32x32xbf16>
    %cst_15 = arith.constant dense<0.000000e+00> : vector<32x96xf32>
    %33 = tpu.matmul %32, %31, %cst_15 {dimension_numbers = #tpu.dot_dimension_numbers<[1], [0], [0], [1], [0, 0, 1, 1], [], []>} : vector<32x32xbf16>, vector<32x96xbf16>, vector<32x96xf32> -> vector<32x96xf32>
    %c0_16 = arith.constant 0 : index
    %c0_17 = arith.constant 0 : index
    %c0_18 = arith.constant 0 : index
    %34 = vector.load %arg7[%c0_16, %c0_17, %c0_18] : memref<1x1x96xf32, #tpu.memory_space<vmem>>, vector<1x1x96xf32>
    %35 = vector.shape_cast %34 : vector<1x1x96xf32> to vector<1x96xf32>
    %36 = vector.broadcast %35 : vector<1x96xf32> to vector<32x96xf32>
    %37 = arith.addf %33, %36 : vector<32x96xf32>
    %c0_19 = arith.constant 0 : index
    %c0_20 = arith.constant 0 : index
    %38 = vector.load %arg3[%c0_19, %c0_20] : memref<32x32xf32, #tpu.memory_space<vmem>>, vector<32x32xf32>
    %39 = vector.extract_strided_slice %37 {offsets = [0, 0], sizes = [32, 8], strides = [1, 1]} : vector<32x96xf32> to vector<32x8xf32>
    %40 = arith.truncf %39 : vector<32x8xf32> to vector<32x8xbf16>
    %41 = vector.extract_strided_slice %37 {offsets = [0, 32], sizes = [32, 8], strides = [1, 1]} : vector<32x96xf32> to vector<32x8xf32>
    %42 = arith.truncf %41 : vector<32x8xf32> to vector<32x8xbf16>
    %43 = vector.extract_strided_slice %37 {offsets = [0, 64], sizes = [32, 8], strides = [1, 1]} : vector<32x96xf32> to vector<32x8xf32>
    %44 = arith.truncf %43 : vector<32x8xf32> to vector<32x8xbf16>
    %cst_21 = arith.constant dense<0.000000e+00> : vector<32x32xf32>
    %45 = tpu.matmul %40, %42, %cst_21 {dimension_numbers = #tpu.dot_dimension_numbers<[1], [1], [0], [0], [0, 0, 1, 0], [], []>} : vector<32x8xbf16>, vector<32x8xbf16>, vector<32x32xf32> -> vector<32x32xf32>
    %cst_22 = arith.constant 0.353553385 : f32
    %46 = vector.broadcast %cst_22 : f32 to vector<32x32xf32>
    %47 = arith.mulf %45, %46 : vector<32x32xf32>
    %48 = arith.addf %47, %38 : vector<32x32xf32>
    %cst_23 = arith.constant dense<0xFF800000> : vector<32xf32>
    %49 = vector.multi_reduction <maximumf>, %48, %cst_23 [1] : vector<32x32xf32> to vector<32xf32>
    %50 = vector.shape_cast %49 : vector<32xf32> to vector<32x1xf32>
    %51 = vector.broadcast %50 : vector<32x1xf32> to vector<32x32xf32>
    %52 = arith.subf %48, %51 : vector<32x32xf32>
    %53 = math.exp %52 : vector<32x32xf32>
    %cst_24 = arith.constant dense<0.000000e+00> : vector<32xf32>
    %54 = vector.multi_reduction <add>, %53, %cst_24 [1] : vector<32x32xf32> to vector<32xf32>
    %55 = vector.shape_cast %54 : vector<32xf32> to vector<32x1xf32>
    %56 = tpu.reciprocal %55 {approx = true} : vector<32x1xf32> -> vector<32x1xf32>
    %57 = vector.broadcast %56 : vector<32x1xf32> to vector<32x32xf32>
    %58 = arith.mulf %53, %57 : vector<32x32xf32>
    %59 = arith.truncf %58 : vector<32x32xf32> to vector<32x32xbf16>
    %cst_25 = arith.constant dense<0.000000e+00> : vector<32x8xf32>
    %60 = tpu.matmul %59, %44, %cst_25 {dimension_numbers = #tpu.dot_dimension_numbers<[1], [0], [0], [1], [0, 0, 1, 1], [], []>} : vector<32x32xbf16>, vector<32x8xbf16>, vector<32x8xf32> -> vector<32x8xf32>
    %61 = vector.extract_strided_slice %37 {offsets = [0, 8], sizes = [32, 8], strides = [1, 1]} : vector<32x96xf32> to vector<32x8xf32>
    %62 = arith.truncf %61 : vector<32x8xf32> to vector<32x8xbf16>
    %63 = vector.extract_strided_slice %37 {offsets = [0, 40], sizes = [32, 8], strides = [1, 1]} : vector<32x96xf32> to vector<32x8xf32>
    %64 = arith.truncf %63 : vector<32x8xf32> to vector<32x8xbf16>
    %65 = vector.extract_strided_slice %37 {offsets = [0, 72], sizes = [32, 8], strides = [1, 1]} : vector<32x96xf32> to vector<32x8xf32>
    %66 = arith.truncf %65 : vector<32x8xf32> to vector<32x8xbf16>
    %cst_26 = arith.constant dense<0.000000e+00> : vector<32x32xf32>
    %67 = tpu.matmul %62, %64, %cst_26 {dimension_numbers = #tpu.dot_dimension_numbers<[1], [1], [0], [0], [0, 0, 1, 0], [], []>} : vector<32x8xbf16>, vector<32x8xbf16>, vector<32x32xf32> -> vector<32x32xf32>
    %cst_27 = arith.constant 0.353553385 : f32
    %68 = vector.broadcast %cst_27 : f32 to vector<32x32xf32>
    %69 = arith.mulf %67, %68 : vector<32x32xf32>
    %70 = arith.addf %69, %38 : vector<32x32xf32>
    %cst_28 = arith.constant dense<0xFF800000> : vector<32xf32>
    %71 = vector.multi_reduction <maximumf>, %70, %cst_28 [1] : vector<32x32xf32> to vector<32xf32>
    %72 = vector.shape_cast %71 : vector<32xf32> to vector<32x1xf32>
    %73 = vector.broadcast %72 : vector<32x1xf32> to vector<32x32xf32>
    %74 = arith.subf %70, %73 : vector<32x32xf32>
    %75 = math.exp %74 : vector<32x32xf32>
    %cst_29 = arith.constant dense<0.000000e+00> : vector<32xf32>
    %76 = vector.multi_reduction <add>, %75, %cst_29 [1] : vector<32x32xf32> to vector<32xf32>
    %77 = vector.shape_cast %76 : vector<32xf32> to vector<32x1xf32>
    %78 = tpu.reciprocal %77 {approx = true} : vector<32x1xf32> -> vector<32x1xf32>
    %79 = vector.broadcast %78 : vector<32x1xf32> to vector<32x32xf32>
    %80 = arith.mulf %75, %79 : vector<32x32xf32>
    %81 = arith.truncf %80 : vector<32x32xf32> to vector<32x32xbf16>
    %cst_30 = arith.constant dense<0.000000e+00> : vector<32x8xf32>
    %82 = tpu.matmul %81, %66, %cst_30 {dimension_numbers = #tpu.dot_dimension_numbers<[1], [0], [0], [1], [0, 0, 1, 1], [], []>} : vector<32x32xbf16>, vector<32x8xbf16>, vector<32x8xf32> -> vector<32x8xf32>
    %83 = vector.extract_strided_slice %37 {offsets = [0, 16], sizes = [32, 8], strides = [1, 1]} : vector<32x96xf32> to vector<32x8xf32>
    %84 = arith.truncf %83 : vector<32x8xf32> to vector<32x8xbf16>
    %85 = vector.extract_strided_slice %37 {offsets = [0, 48], sizes = [32, 8], strides = [1, 1]} : vector<32x96xf32> to vector<32x8xf32>
    %86 = arith.truncf %85 : vector<32x8xf32> to vector<32x8xbf16>
    %87 = vector.extract_strided_slice %37 {offsets = [0, 80], sizes = [32, 8], strides = [1, 1]} : vector<32x96xf32> to vector<32x8xf32>
    %88 = arith.truncf %87 : vector<32x8xf32> to vector<32x8xbf16>
    %cst_31 = arith.constant dense<0.000000e+00> : vector<32x32xf32>
    %89 = tpu.matmul %84, %86, %cst_31 {dimension_numbers = #tpu.dot_dimension_numbers<[1], [1], [0], [0], [0, 0, 1, 0], [], []>} : vector<32x8xbf16>, vector<32x8xbf16>, vector<32x32xf32> -> vector<32x32xf32>
    %cst_32 = arith.constant 0.353553385 : f32
    %90 = vector.broadcast %cst_32 : f32 to vector<32x32xf32>
    %91 = arith.mulf %89, %90 : vector<32x32xf32>
    %92 = arith.addf %91, %38 : vector<32x32xf32>
    %cst_33 = arith.constant dense<0xFF800000> : vector<32xf32>
    %93 = vector.multi_reduction <maximumf>, %92, %cst_33 [1] : vector<32x32xf32> to vector<32xf32>
    %94 = vector.shape_cast %93 : vector<32xf32> to vector<32x1xf32>
    %95 = vector.broadcast %94 : vector<32x1xf32> to vector<32x32xf32>
    %96 = arith.subf %92, %95 : vector<32x32xf32>
    %97 = math.exp %96 : vector<32x32xf32>
    %cst_34 = arith.constant dense<0.000000e+00> : vector<32xf32>
    %98 = vector.multi_reduction <add>, %97, %cst_34 [1] : vector<32x32xf32> to vector<32xf32>
    %99 = vector.shape_cast %98 : vector<32xf32> to vector<32x1xf32>
    %100 = tpu.reciprocal %99 {approx = true} : vector<32x1xf32> -> vector<32x1xf32>
    %101 = vector.broadcast %100 : vector<32x1xf32> to vector<32x32xf32>
    %102 = arith.mulf %97, %101 : vector<32x32xf32>
    %103 = arith.truncf %102 : vector<32x32xf32> to vector<32x32xbf16>
    %cst_35 = arith.constant dense<0.000000e+00> : vector<32x8xf32>
    %104 = tpu.matmul %103, %88, %cst_35 {dimension_numbers = #tpu.dot_dimension_numbers<[1], [0], [0], [1], [0, 0, 1, 1], [], []>} : vector<32x32xbf16>, vector<32x8xbf16>, vector<32x8xf32> -> vector<32x8xf32>
    %105 = vector.extract_strided_slice %37 {offsets = [0, 24], sizes = [32, 8], strides = [1, 1]} : vector<32x96xf32> to vector<32x8xf32>
    %106 = arith.truncf %105 : vector<32x8xf32> to vector<32x8xbf16>
    %107 = vector.extract_strided_slice %37 {offsets = [0, 56], sizes = [32, 8], strides = [1, 1]} : vector<32x96xf32> to vector<32x8xf32>
    %108 = arith.truncf %107 : vector<32x8xf32> to vector<32x8xbf16>
    %109 = vector.extract_strided_slice %37 {offsets = [0, 88], sizes = [32, 8], strides = [1, 1]} : vector<32x96xf32> to vector<32x8xf32>
    %110 = arith.truncf %109 : vector<32x8xf32> to vector<32x8xbf16>
    %cst_36 = arith.constant dense<0.000000e+00> : vector<32x32xf32>
    %111 = tpu.matmul %106, %108, %cst_36 {dimension_numbers = #tpu.dot_dimension_numbers<[1], [1], [0], [0], [0, 0, 1, 0], [], []>} : vector<32x8xbf16>, vector<32x8xbf16>, vector<32x32xf32> -> vector<32x32xf32>
    %cst_37 = arith.constant 0.353553385 : f32
    %112 = vector.broadcast %cst_37 : f32 to vector<32x32xf32>
    %113 = arith.mulf %111, %112 : vector<32x32xf32>
    %114 = arith.addf %113, %38 : vector<32x32xf32>
    %cst_38 = arith.constant dense<0xFF800000> : vector<32xf32>
    %115 = vector.multi_reduction <maximumf>, %114, %cst_38 [1] : vector<32x32xf32> to vector<32xf32>
    %116 = vector.shape_cast %115 : vector<32xf32> to vector<32x1xf32>
    %117 = vector.broadcast %116 : vector<32x1xf32> to vector<32x32xf32>
    %118 = arith.subf %114, %117 : vector<32x32xf32>
    %119 = math.exp %118 : vector<32x32xf32>
    %cst_39 = arith.constant dense<0.000000e+00> : vector<32xf32>
    %120 = vector.multi_reduction <add>, %119, %cst_39 [1] : vector<32x32xf32> to vector<32xf32>
    %121 = vector.shape_cast %120 : vector<32xf32> to vector<32x1xf32>
    %122 = tpu.reciprocal %121 {approx = true} : vector<32x1xf32> -> vector<32x1xf32>
    %123 = vector.broadcast %122 : vector<32x1xf32> to vector<32x32xf32>
    %124 = arith.mulf %119, %123 : vector<32x32xf32>
    %125 = arith.truncf %124 : vector<32x32xf32> to vector<32x32xbf16>
    %cst_40 = arith.constant dense<0.000000e+00> : vector<32x8xf32>
    %126 = tpu.matmul %125, %110, %cst_40 {dimension_numbers = #tpu.dot_dimension_numbers<[1], [0], [0], [1], [0, 0, 1, 1], [], []>} : vector<32x32xbf16>, vector<32x8xbf16>, vector<32x8xf32> -> vector<32x8xf32>
    %127 = tpu.concatenate %60, %82, %104, %126 in 1 : vector<32x8xf32>, vector<32x8xf32>, vector<32x8xf32>, vector<32x8xf32> -> vector<32x32xf32>
    %c0_41 = arith.constant 0 : index
    %c0_42 = arith.constant 0 : index
    %c0_43 = arith.constant 0 : index
    %128 = vector.load %arg8[%c0_41, %c0_42, %c0_43] : memref<1x32x32xbf16, #tpu.memory_space<vmem>>, vector<1x32x32xbf16>
    %129 = vector.shape_cast %128 : vector<1x32x32xbf16> to vector<32x32xbf16>
    %130 = arith.truncf %127 : vector<32x32xf32> to vector<32x32xbf16>
    %cst_44 = arith.constant dense<0.000000e+00> : vector<32x32xf32>
    %131 = tpu.matmul %130, %129, %cst_44 {dimension_numbers = #tpu.dot_dimension_numbers<[1], [0], [0], [1], [0, 0, 1, 1], [], []>} : vector<32x32xbf16>, vector<32x32xbf16>, vector<32x32xf32> -> vector<32x32xf32>
    %132 = arith.addf %3, %131 : vector<32x32xf32>
    %c0_45 = arith.constant 0 : index
    %c0_46 = arith.constant 0 : index
    %c0_47 = arith.constant 0 : index
    %133 = vector.load %arg9[%c0_45, %c0_46, %c0_47] : memref<1x1x32xf32, #tpu.memory_space<vmem>>, vector<1x1x32xf32>
    %134 = vector.shape_cast %133 : vector<1x1x32xf32> to vector<1x32xf32>
    %135 = vector.broadcast %134 : vector<1x32xf32> to vector<32x32xf32>
    %136 = arith.addf %132, %135 : vector<32x32xf32>
    %c0_48 = arith.constant 0 : index
    %c0_49 = arith.constant 0 : index
    %c0_50 = arith.constant 0 : index
    %137 = vector.load %arg10[%c0_48, %c0_49, %c0_50] : memref<1x1x32xf32, #tpu.memory_space<vmem>>, vector<1x1x32xf32>
    %138 = vector.shape_cast %137 : vector<1x1x32xf32> to vector<1x32xf32>
    %c0_51 = arith.constant 0 : index
    %c0_52 = arith.constant 0 : index
    %c0_53 = arith.constant 0 : index
    %139 = vector.load %arg11[%c0_51, %c0_52, %c0_53] : memref<1x1x32xf32, #tpu.memory_space<vmem>>, vector<1x1x32xf32>
    %140 = vector.shape_cast %139 : vector<1x1x32xf32> to vector<1x32xf32>
    %cst_54 = arith.constant dense<0.000000e+00> : vector<32xf32>
    %141 = vector.multi_reduction <add>, %136, %cst_54 [1] : vector<32x32xf32> to vector<32xf32>
    %142 = vector.shape_cast %141 : vector<32xf32> to vector<32x1xf32>
    %cst_55 = arith.constant 3.200000e+01 : f32
    %143 = vector.broadcast %cst_55 : f32 to vector<32x1xf32>
    %144 = arith.divf %142, %143 : vector<32x1xf32>
    %145 = vector.broadcast %144 : vector<32x1xf32> to vector<32x32xf32>
    %146 = arith.subf %136, %145 : vector<32x32xf32>
    %147 = arith.mulf %146, %146 : vector<32x32xf32>
    %cst_56 = arith.constant dense<0.000000e+00> : vector<32xf32>
    %148 = vector.multi_reduction <add>, %147, %cst_56 [1] : vector<32x32xf32> to vector<32xf32>
    %149 = vector.shape_cast %148 : vector<32xf32> to vector<32x1xf32>
    %cst_57 = arith.constant 3.200000e+01 : f32
    %150 = vector.broadcast %cst_57 : f32 to vector<32x1xf32>
    %151 = arith.divf %149, %150 : vector<32x1xf32>
    %152 = vector.broadcast %144 : vector<32x1xf32> to vector<32x32xf32>
    %153 = arith.subf %136, %152 : vector<32x32xf32>
    %cst_58 = arith.constant 9.99999974E-6 : f32
    %154 = vector.broadcast %cst_58 : f32 to vector<32x1xf32>
    %155 = arith.addf %151, %154 : vector<32x1xf32>
    %156 = math.rsqrt %155 : vector<32x1xf32>
    %157 = vector.broadcast %156 : vector<32x1xf32> to vector<32x32xf32>
    %158 = arith.mulf %153, %157 : vector<32x32xf32>
    %159 = vector.broadcast %138 : vector<1x32xf32> to vector<32x32xf32>
    %160 = arith.mulf %158, %159 : vector<32x32xf32>
    %161 = vector.broadcast %140 : vector<1x32xf32> to vector<32x32xf32>
    %162 = arith.addf %160, %161 : vector<32x32xf32>
    %c0_59 = arith.constant 0 : index
    %c0_60 = arith.constant 0 : index
    %c0_61 = arith.constant 0 : index
    %163 = vector.load %arg12[%c0_59, %c0_60, %c0_61] : memref<1x32x128xbf16, #tpu.memory_space<vmem>>, vector<1x32x128xbf16>
    %164 = vector.shape_cast %163 : vector<1x32x128xbf16> to vector<32x128xbf16>
    %165 = arith.truncf %162 : vector<32x32xf32> to vector<32x32xbf16>
    %cst_62 = arith.constant dense<0.000000e+00> : vector<32x128xf32>
    %166 = tpu.matmul %165, %164, %cst_62 {dimension_numbers = #tpu.dot_dimension_numbers<[1], [0], [0], [1], [0, 0, 1, 1], [], []>} : vector<32x32xbf16>, vector<32x128xbf16>, vector<32x128xf32> -> vector<32x128xf32>
    %c0_63 = arith.constant 0 : index
    %c0_64 = arith.constant 0 : index
    %c0_65 = arith.constant 0 : index
    %167 = vector.load %arg13[%c0_63, %c0_64, %c0_65] : memref<1x1x128xf32, #tpu.memory_space<vmem>>, vector<1x1x128xf32>
    %168 = vector.shape_cast %167 : vector<1x1x128xf32> to vector<1x128xf32>
    %169 = vector.broadcast %168 : vector<1x128xf32> to vector<32x128xf32>
    %170 = arith.addf %166, %169 : vector<32x128xf32>
    %171 = arith.mulf %170, %170 : vector<32x128xf32>
    %172 = arith.mulf %170, %171 : vector<32x128xf32>
    %cst_66 = arith.constant 4.471500e-02 : f32
    %173 = vector.broadcast %cst_66 : f32 to vector<32x128xf32>
    %174 = arith.mulf %173, %172 : vector<32x128xf32>
    %175 = arith.addf %170, %174 : vector<32x128xf32>
    %cst_67 = arith.constant 0.797884583 : f32
    %176 = vector.broadcast %cst_67 : f32 to vector<32x128xf32>
    %177 = arith.mulf %176, %175 : vector<32x128xf32>
    %178 = math.tanh %177 : vector<32x128xf32>
    %cst_68 = arith.constant 1.000000e+00 : f32
    %179 = vector.broadcast %cst_68 : f32 to vector<32x128xf32>
    %180 = arith.addf %179, %178 : vector<32x128xf32>
    %cst_69 = arith.constant 5.000000e-01 : f32
    %181 = vector.broadcast %cst_69 : f32 to vector<32x128xf32>
    %182 = arith.mulf %181, %180 : vector<32x128xf32>
    %183 = arith.mulf %170, %182 : vector<32x128xf32>
    %c0_70 = arith.constant 0 : index
    %c0_71 = arith.constant 0 : index
    %c0_72 = arith.constant 0 : index
    %184 = vector.load %arg14[%c0_70, %c0_71, %c0_72] : memref<1x128x32xbf16, #tpu.memory_space<vmem>>, vector<1x128x32xbf16>
    %185 = vector.shape_cast %184 : vector<1x128x32xbf16> to vector<128x32xbf16>
    %186 = arith.truncf %183 : vector<32x128xf32> to vector<32x128xbf16>
    %cst_73 = arith.constant dense<0.000000e+00> : vector<32x32xf32>
    %187 = tpu.matmul %186, %185, %cst_73 {dimension_numbers = #tpu.dot_dimension_numbers<[1], [0], [0], [1], [0, 0, 1, 1], [], []>} : vector<32x128xbf16>, vector<128x32xbf16>, vector<32x32xf32> -> vector<32x32xf32>
    %188 = arith.addf %136, %187 : vector<32x32xf32>
    %c0_74 = arith.constant 0 : index
    %c0_75 = arith.constant 0 : index
    %c0_76 = arith.constant 0 : index
    %189 = vector.load %arg15[%c0_74, %c0_75, %c0_76] : memref<1x1x32xf32, #tpu.memory_space<vmem>>, vector<1x1x32xf32>
    %190 = vector.shape_cast %189 : vector<1x1x32xf32> to vector<1x32xf32>
    %191 = vector.broadcast %190 : vector<1x32xf32> to vector<32x32xf32>
    %192 = arith.addf %188, %191 : vector<32x32xf32>
    %c0_77 = arith.constant 0 : index
    %c0_78 = arith.constant 0 : index
    %193 = vector.load %arg21[%c0_77, %c0_78] : memref<32x32xf32, #tpu.memory_space<vmem>>, vector<32x32xf32>
    tpu.vector_store %arg21[%c0_77, %c0_78], %192 {strides = array<i32>} : memref<32x32xf32, #tpu.memory_space<vmem>>, vector<32x32xf32>,
    %c2_i32 = arith.constant 2 : i32
    %194 = arith.cmpi eq, %arg0, %c2_i32 : i32
    %195 = arith.extui %194 : i1 to i32
    %c0_i32_79 = arith.constant 0 : i32
    %196 = arith.cmpi ne, %195, %c0_i32_79 : i32
    scf.if %196 {
      %c0_80 = arith.constant 0 : index
      %c0_81 = arith.constant 0 : index
      %197 = vector.load %arg16[%c0_80, %c0_81] : memref<1x32xf32, #tpu.memory_space<vmem>>, vector<1x32xf32>
      %c0_82 = arith.constant 0 : index
      %c0_83 = arith.constant 0 : index
      %198 = vector.load %arg17[%c0_82, %c0_83] : memref<1x32xf32, #tpu.memory_space<vmem>>, vector<1x32xf32>
      %cst_84 = arith.constant dense<0.000000e+00> : vector<32xf32>
      %199 = vector.multi_reduction <add>, %192, %cst_84 [1] : vector<32x32xf32> to vector<32xf32>
      %200 = vector.shape_cast %199 : vector<32xf32> to vector<32x1xf32>
      %cst_85 = arith.constant 3.200000e+01 : f32
      %201 = vector.broadcast %cst_85 : f32 to vector<32x1xf32>
      %202 = arith.divf %200, %201 : vector<32x1xf32>
      %203 = vector.broadcast %202 : vector<32x1xf32> to vector<32x32xf32>
      %204 = arith.subf %192, %203 : vector<32x32xf32>
      %205 = arith.mulf %204, %204 : vector<32x32xf32>
      %cst_86 = arith.constant dense<0.000000e+00> : vector<32xf32>
      %206 = vector.multi_reduction <add>, %205, %cst_86 [1] : vector<32x32xf32> to vector<32xf32>
      %207 = vector.shape_cast %206 : vector<32xf32> to vector<32x1xf32>
      %cst_87 = arith.constant 3.200000e+01 : f32
      %208 = vector.broadcast %cst_87 : f32 to vector<32x1xf32>
      %209 = arith.divf %207, %208 : vector<32x1xf32>
      %210 = vector.broadcast %202 : vector<32x1xf32> to vector<32x32xf32>
      %211 = arith.subf %192, %210 : vector<32x32xf32>
      %cst_88 = arith.constant 9.99999974E-6 : f32
      %212 = vector.broadcast %cst_88 : f32 to vector<32x1xf32>
      %213 = arith.addf %209, %212 : vector<32x1xf32>
      %214 = math.rsqrt %213 : vector<32x1xf32>
      %215 = vector.broadcast %214 : vector<32x1xf32> to vector<32x32xf32>
      %216 = arith.mulf %211, %215 : vector<32x32xf32>
      %217 = vector.broadcast %197 : vector<1x32xf32> to vector<32x32xf32>
      %218 = arith.mulf %216, %217 : vector<32x32xf32>
      %219 = vector.broadcast %198 : vector<1x32xf32> to vector<32x32xf32>
      %220 = arith.addf %218, %219 : vector<32x32xf32>
      %c0_89 = arith.constant 0 : index
      %c0_90 = arith.constant 0 : index
      %221 = vector.load %arg18[%c0_89, %c0_90] : memref<32x16xbf16, #tpu.memory_space<vmem>>, vector<32x16xbf16>
      %222 = arith.truncf %220 : vector<32x32xf32> to vector<32x32xbf16>
      %cst_91 = arith.constant dense<0.000000e+00> : vector<32x16xf32>
      %223 = tpu.matmul %222, %221, %cst_91 {dimension_numbers = #tpu.dot_dimension_numbers<[1], [0], [0], [1], [0, 0, 1, 1], [], []>} : vector<32x32xbf16>, vector<32x16xbf16>, vector<32x16xf32> -> vector<32x16xf32>
      %c0_92 = arith.constant 0 : index
      %c0_93 = arith.constant 0 : index
      %224 = vector.load %arg19[%c0_92, %c0_93] : memref<1x16xf32, #tpu.memory_space<vmem>>, vector<1x16xf32>
      %225 = vector.broadcast %224 : vector<1x16xf32> to vector<32x16xf32>
      %226 = arith.addf %223, %225 : vector<32x16xf32>
      %c0_94 = arith.constant 0 : index
      %c0_95 = arith.constant 0 : index
      %227 = vector.load %arg2[%c0_94, %c0_95] : memref<32x16xf32, #tpu.memory_space<vmem>>, vector<32x16xf32>
      %228 = arith.addf %226, %227 : vector<32x16xf32>
      %cst_96 = arith.constant 0.999500393 : f32
      %229 = vector.broadcast %cst_96 : f32 to vector<32x16xf32>
      %230 = arith.mulf %228, %229 : vector<32x16xf32>
      %cst_97 = arith.constant 0.000000e+00 : f32
      %231 = vector.broadcast %cst_97 : f32 to vector<32x16xf32>
      %232 = arith.addf %230, %231 : vector<32x16xf32>
      %cst_98 = arith.constant 0.000000e+00 : f32
      %233 = vector.broadcast %cst_98 : f32 to vector<32x16xf32>
      %234 = arith.cmpf ogt, %232, %233 : vector<32x16xf32>
      %cst_99 = arith.constant 0.000000e+00 : f32
      %235 = vector.broadcast %cst_99 : f32 to vector<32x16xf32>
      %236 = arith.minimumf %232, %235 : vector<32x16xf32>
      %237 = math.exp %236 : vector<32x16xf32>
      %cst_100 = arith.constant 1.000000e+00 : f32
      %238 = vector.broadcast %cst_100 : f32 to vector<32x16xf32>
      %239 = arith.subf %237, %238 : vector<32x16xf32>
      %240 = arith.select %234, %232, %239 : vector<32x16xi1>, vector<32x16xf32>
      %c0_101 = arith.constant 0 : index
      %c0_102 = arith.constant 0 : index
      %241 = vector.load %arg20[%c0_101, %c0_102] : memref<32x16xf32, #tpu.memory_space<vmem>>, vector<32x16xf32>
      tpu.vector_store %arg20[%c0_101, %c0_102], %240 {strides = array<i32>} : memref<32x16xf32, #tpu.memory_space<vmem>>, vector<32x16xf32>,
    } else {
    }
    return
  }
  func.func @transform_0(%arg0: i32) -> (i32, i32) {
    %c0_i32 = arith.constant 0 : i32
    %c0_i32_0 = arith.constant 0 : i32
    %c0_i32_1 = arith.constant 0 : i32
    return %c0_i32, %c0_i32_0 : i32, i32
  }
  func.func @transform_1(%arg0: i32) -> (i32, i32) {
    %c0_i32 = arith.constant 0 : i32
    %c0_i32_0 = arith.constant 0 : i32
    %c0_i32_1 = arith.constant 0 : i32
    return %c0_i32, %c0_i32_0 : i32, i32
  }
  func.func @transform_2(%arg0: i32) -> (i32, i32) {
    %c0_i32 = arith.constant 0 : i32
    %c0_i32_0 = arith.constant 0 : i32
    %c0_i32_1 = arith.constant 0 : i32
    return %c0_i32, %c0_i32_0 : i32, i32
  }
  func.func @transform_3(%arg0: i32) -> (i32, i32, i32) {
    %c0_i32 = arith.constant 0 : i32
    %c0_i32_0 = arith.constant 0 : i32
    %c0_i32_1 = arith.constant 0 : i32
    return %arg0, %c0_i32, %c0_i32_0 : i32, i32, i32
  }
  func.func @transform_4(%arg0: i32) -> (i32, i32, i32) {
    %c0_i32 = arith.constant 0 : i32
    %c0_i32_0 = arith.constant 0 : i32
    %c0_i32_1 = arith.constant 0 : i32
    return %arg0, %c0_i32, %c0_i32_0 : i32, i32, i32
  }
  func.func @transform_5(%arg0: i32) -> (i32, i32, i32) {
    %c0_i32 = arith.constant 0 : i32
    %c0_i32_0 = arith.constant 0 : i32
    %c0_i32_1 = arith.constant 0 : i32
    return %arg0, %c0_i32, %c0_i32_0 : i32, i32, i32
  }
  func.func @transform_6(%arg0: i32) -> (i32, i32, i32) {
    %c0_i32 = arith.constant 0 : i32
    %c0_i32_0 = arith.constant 0 : i32
    %c0_i32_1 = arith.constant 0 : i32
    return %arg0, %c0_i32, %c0_i32_0 : i32, i32, i32
  }
  func.func @transform_7(%arg0: i32) -> (i32, i32, i32) {
    %c0_i32 = arith.constant 0 : i32
    %c0_i32_0 = arith.constant 0 : i32
    %c0_i32_1 = arith.constant 0 : i32
    return %arg0, %c0_i32, %c0_i32_0 : i32, i32, i32
  }
  func.func @transform_8(%arg0: i32) -> (i32, i32, i32) {
    %c0_i32 = arith.constant 0 : i32
    %c0_i32_0 = arith.constant 0 : i32
    %c0_i32_1 = arith.constant 0 : i32
    return %arg0, %c0_i32, %c0_i32_0 : i32, i32, i32
  }
  func.func @transform_9(%arg0: i32) -> (i32, i32, i32) {
    %c0_i32 = arith.constant 0 : i32
    %c0_i32_0 = arith.constant 0 : i32
    %c0_i32_1 = arith.constant 0 : i32
    return %arg0, %c0_i32, %c0_i32_0 : i32, i32, i32
  }
  func.func @transform_10(%arg0: i32) -> (i32, i32, i32) {
    %c0_i32 = arith.constant 0 : i32
    %c0_i32_0 = arith.constant 0 : i32
    %c0_i32_1 = arith.constant 0 : i32
    return %arg0, %c0_i32, %c0_i32_0 : i32, i32, i32
  }
  func.func @transform_11(%arg0: i32) -> (i32, i32, i32) {
    %c0_i32 = arith.constant 0 : i32
    %c0_i32_0 = arith.constant 0 : i32
    %c0_i32_1 = arith.constant 0 : i32
    return %arg0, %c0_i32, %c0_i32_0 : i32, i32, i32
  }
  func.func @transform_12(%arg0: i32) -> (i32, i32, i32) {
    %c0_i32 = arith.constant 0 : i32
    %c0_i32_0 = arith.constant 0 : i32
    %c0_i32_1 = arith.constant 0 : i32
    return %arg0, %c0_i32, %c0_i32_0 : i32, i32, i32
  }
  func.func @transform_13(%arg0: i32) -> (i32, i32, i32) {
    %c0_i32 = arith.constant 0 : i32
    %c0_i32_0 = arith.constant 0 : i32
    %c0_i32_1 = arith.constant 0 : i32
    return %arg0, %c0_i32, %c0_i32_0 : i32, i32, i32
  }
  func.func @transform_14(%arg0: i32) -> (i32, i32, i32) {
    %c0_i32 = arith.constant 0 : i32
    %c0_i32_0 = arith.constant 0 : i32
    %c0_i32_1 = arith.constant 0 : i32
    return %arg0, %c0_i32, %c0_i32_0 : i32, i32, i32
  }
  func.func @transform_15(%arg0: i32) -> (i32, i32) {
    %c0_i32 = arith.constant 0 : i32
    %c0_i32_0 = arith.constant 0 : i32
    %c0_i32_1 = arith.constant 0 : i32
    return %c0_i32, %c0_i32_0 : i32, i32
  }
  func.func @transform_16(%arg0: i32) -> (i32, i32) {
    %c0_i32 = arith.constant 0 : i32
    %c0_i32_0 = arith.constant 0 : i32
    %c0_i32_1 = arith.constant 0 : i32
    return %c0_i32, %c0_i32_0 : i32, i32
  }
  func.func @transform_17(%arg0: i32) -> (i32, i32) {
    %c0_i32 = arith.constant 0 : i32
    %c0_i32_0 = arith.constant 0 : i32
    %c0_i32_1 = arith.constant 0 : i32
    return %c0_i32, %c0_i32_0 : i32, i32
  }
  func.func @transform_18(%arg0: i32) -> (i32, i32) {
    %c0_i32 = arith.constant 0 : i32
    %c0_i32_0 = arith.constant 0 : i32
    %c0_i32_1 = arith.constant 0 : i32
    return %c0_i32, %c0_i32_0 : i32, i32
  }
  func.func @transform_19(%arg0: i32) -> (i32, i32) {
    %c0_i32 = arith.constant 0 : i32
    %c0_i32_0 = arith.constant 0 : i32
    %c0_i32_1 = arith.constant 0 : i32
    return %c0_i32, %c0_i32_0 : i32, i32
  }
}

module attributes {stable_mosaic.version = 11 : i64} {
  func.func @_matmul_bias_act_kernel(%arg0: i32, %arg1: memref<256x27xbf16, #tpu.memory_space<vmem>>, %arg2: memref<27x8xbf16, #tpu.memory_space<vmem>>, %arg3: memref<1x8xf32, #tpu.memory_space<vmem>>, %arg4: memref<256x8xf32, #tpu.memory_space<vmem>>) attributes {dimension_semantics = [#tpu.dimension_semantics<parallel>], iteration_bounds = array<i64: 2>, scalar_prefetch = 0 : i64, scratch_operands = 0 : i64, tpu.core_type = #tpu.core_type<tc>, window_params = [{transform_indices = @transform_0, window_bounds = array<i64: 256, 27>}, {pipeline_mode = #tpu.pipeline_mode<synchronous>, transform_indices = @transform_1, window_bounds = array<i64: 27, 8>}, {pipeline_mode = #tpu.pipeline_mode<synchronous>, transform_indices = @transform_2, window_bounds = array<i64: 1, 8>}, {transform_indices = @transform_3, window_bounds = array<i64: 256, 8>}]} {
    %c0 = arith.constant 0 : index
    %c0_0 = arith.constant 0 : index
    %0 = vector.load %arg1[%c0, %c0_0] : memref<256x27xbf16, #tpu.memory_space<vmem>>, vector<256x27xbf16>
    %c0_1 = arith.constant 0 : index
    %c0_2 = arith.constant 0 : index
    %1 = vector.load %arg2[%c0_1, %c0_2] : memref<27x8xbf16, #tpu.memory_space<vmem>>, vector<27x8xbf16>
    %cst = arith.constant dense<0.000000e+00> : vector<256x8xf32>
    %2 = tpu.matmul %0, %1, %cst {dimension_numbers = #tpu.dot_dimension_numbers<[1], [0], [0], [1], [0, 0, 1, 1], [], []>} : vector<256x27xbf16>, vector<27x8xbf16>, vector<256x8xf32> -> vector<256x8xf32>
    %c0_3 = arith.constant 0 : index
    %c0_4 = arith.constant 0 : index
    %3 = vector.load %arg3[%c0_3, %c0_4] : memref<1x8xf32, #tpu.memory_space<vmem>>, vector<1x8xf32>
    %4 = vector.broadcast %3 : vector<1x8xf32> to vector<256x8xf32>
    %5 = arith.addf %2, %4 : vector<256x8xf32>
    %cst_5 = arith.constant 0.000000e+00 : f32
    %6 = vector.broadcast %cst_5 : f32 to vector<256x8xf32>
    %7 = arith.cmpf ogt, %5, %6 : vector<256x8xf32>
    %cst_6 = arith.constant 0.000000e+00 : f32
    %8 = vector.broadcast %cst_6 : f32 to vector<256x8xf32>
    %9 = arith.minimumf %5, %8 : vector<256x8xf32>
    %10 = math.exp %9 : vector<256x8xf32>
    %cst_7 = arith.constant 1.000000e+00 : f32
    %11 = vector.broadcast %cst_7 : f32 to vector<256x8xf32>
    %12 = arith.subf %10, %11 : vector<256x8xf32>
    %13 = arith.select %7, %5, %12 : vector<256x8xi1>, vector<256x8xf32>
    %c0_8 = arith.constant 0 : index
    %c0_9 = arith.constant 0 : index
    %14 = vector.load %arg4[%c0_8, %c0_9] : memref<256x8xf32, #tpu.memory_space<vmem>>, vector<256x8xf32>
    tpu.vector_store %arg4[%c0_8, %c0_9], %13 {strides = array<i32>} : memref<256x8xf32, #tpu.memory_space<vmem>>, vector<256x8xf32>,
    return
  }
  func.func @transform_0(%arg0: i32) -> (i32, i32) {
    %c0_i32 = arith.constant 0 : i32
    %c0_i32_0 = arith.constant 0 : i32
    return %arg0, %c0_i32 : i32, i32
  }
  func.func @transform_1(%arg0: i32) -> (i32, i32) {
    %c0_i32 = arith.constant 0 : i32
    %c0_i32_0 = arith.constant 0 : i32
    %c0_i32_1 = arith.constant 0 : i32
    return %c0_i32, %c0_i32_0 : i32, i32
  }
  func.func @transform_2(%arg0: i32) -> (i32, i32) {
    %c0_i32 = arith.constant 0 : i32
    %c0_i32_0 = arith.constant 0 : i32
    %c0_i32_1 = arith.constant 0 : i32
    return %c0_i32, %c0_i32_0 : i32, i32
  }
  func.func @transform_3(%arg0: i32) -> (i32, i32) {
    %c0_i32 = arith.constant 0 : i32
    %c0_i32_0 = arith.constant 0 : i32
    return %arg0, %c0_i32 : i32, i32
  }
}

module attributes {stable_mosaic.version = 11 : i64} {
  func.func @_matmul_bias_act_kernel(%arg0: i32, %arg1: memref<256x98xbf16, #tpu.memory_space<vmem>>, %arg2: memref<98x1xbf16, #tpu.memory_space<vmem>>, %arg3: memref<1x1xf32, #tpu.memory_space<vmem>>, %arg4: memref<256x1xf32, #tpu.memory_space<vmem>>) attributes {dimension_semantics = [#tpu.dimension_semantics<parallel>], iteration_bounds = array<i64: 2>, scalar_prefetch = 0 : i64, scratch_operands = 0 : i64, tpu.core_type = #tpu.core_type<tc>, window_params = [{transform_indices = @transform_0, window_bounds = array<i64: 256, 98>}, {pipeline_mode = #tpu.pipeline_mode<synchronous>, transform_indices = @transform_1, window_bounds = array<i64: 98, 1>}, {pipeline_mode = #tpu.pipeline_mode<synchronous>, transform_indices = @transform_2, window_bounds = array<i64: 1, 1>}, {transform_indices = @transform_3, window_bounds = array<i64: 256, 1>}]} {
    %c0 = arith.constant 0 : index
    %c0_0 = arith.constant 0 : index
    %0 = vector.load %arg1[%c0, %c0_0] : memref<256x98xbf16, #tpu.memory_space<vmem>>, vector<256x98xbf16>
    %c0_1 = arith.constant 0 : index
    %c0_2 = arith.constant 0 : index
    %1 = vector.load %arg2[%c0_1, %c0_2] : memref<98x1xbf16, #tpu.memory_space<vmem>>, vector<98x1xbf16>
    %cst = arith.constant dense<0.000000e+00> : vector<256x1xf32>
    %2 = tpu.matmul %0, %1, %cst {dimension_numbers = #tpu.dot_dimension_numbers<[1], [0], [0], [1], [0, 0, 1, 1], [], []>} : vector<256x98xbf16>, vector<98x1xbf16>, vector<256x1xf32> -> vector<256x1xf32>
    %c0_3 = arith.constant 0 : index
    %c0_4 = arith.constant 0 : index
    %3 = vector.load %arg3[%c0_3, %c0_4] : memref<1x1xf32, #tpu.memory_space<vmem>>, vector<1x1xf32>
    %4 = vector.broadcast %3 : vector<1x1xf32> to vector<256x1xf32>
    %5 = arith.addf %2, %4 : vector<256x1xf32>
    %6 = arith.negf %5 : vector<256x1xf32>
    %7 = math.exp %6 : vector<256x1xf32>
    %cst_5 = arith.constant 1.000000e+00 : f32
    %8 = vector.broadcast %cst_5 : f32 to vector<256x1xf32>
    %9 = arith.addf %8, %7 : vector<256x1xf32>
    %10 = arith.divf %8, %9 : vector<256x1xf32>
    %c0_6 = arith.constant 0 : index
    %c0_7 = arith.constant 0 : index
    %11 = vector.load %arg4[%c0_6, %c0_7] : memref<256x1xf32, #tpu.memory_space<vmem>>, vector<256x1xf32>
    tpu.vector_store %arg4[%c0_6, %c0_7], %10 {strides = array<i32>} : memref<256x1xf32, #tpu.memory_space<vmem>>, vector<256x1xf32>,
    return
  }
  func.func @transform_0(%arg0: i32) -> (i32, i32) {
    %c0_i32 = arith.constant 0 : i32
    %c0_i32_0 = arith.constant 0 : i32
    return %arg0, %c0_i32 : i32, i32
  }
  func.func @transform_1(%arg0: i32) -> (i32, i32) {
    %c0_i32 = arith.constant 0 : i32
    %c0_i32_0 = arith.constant 0 : i32
    %c0_i32_1 = arith.constant 0 : i32
    return %c0_i32, %c0_i32_0 : i32, i32
  }
  func.func @transform_2(%arg0: i32) -> (i32, i32) {
    %c0_i32 = arith.constant 0 : i32
    %c0_i32_0 = arith.constant 0 : i32
    %c0_i32_1 = arith.constant 0 : i32
    return %c0_i32, %c0_i32_0 : i32, i32
  }
  func.func @transform_3(%arg0: i32) -> (i32, i32) {
    %c0_i32 = arith.constant 0 : i32
    %c0_i32_0 = arith.constant 0 : i32
    return %arg0, %c0_i32 : i32, i32
  }
}

module attributes {stable_mosaic.version = 11 : i64} {
  func.func @_matmul_bias_act_kernel(%arg0: i32, %arg1: memref<256x72xbf16, #tpu.memory_space<vmem>>, %arg2: memref<72x3xbf16, #tpu.memory_space<vmem>>, %arg3: memref<1x3xf32, #tpu.memory_space<vmem>>, %arg4: memref<256x3xf32, #tpu.memory_space<vmem>>) attributes {dimension_semantics = [#tpu.dimension_semantics<parallel>], iteration_bounds = array<i64: 2>, scalar_prefetch = 0 : i64, scratch_operands = 0 : i64, tpu.core_type = #tpu.core_type<tc>, window_params = [{transform_indices = @transform_0, window_bounds = array<i64: 256, 72>}, {pipeline_mode = #tpu.pipeline_mode<synchronous>, transform_indices = @transform_1, window_bounds = array<i64: 72, 3>}, {pipeline_mode = #tpu.pipeline_mode<synchronous>, transform_indices = @transform_2, window_bounds = array<i64: 1, 3>}, {transform_indices = @transform_3, window_bounds = array<i64: 256, 3>}]} {
    %c0 = arith.constant 0 : index
    %c0_0 = arith.constant 0 : index
    %0 = vector.load %arg1[%c0, %c0_0] : memref<256x72xbf16, #tpu.memory_space<vmem>>, vector<256x72xbf16>
    %c0_1 = arith.constant 0 : index
    %c0_2 = arith.constant 0 : index
    %1 = vector.load %arg2[%c0_1, %c0_2] : memref<72x3xbf16, #tpu.memory_space<vmem>>, vector<72x3xbf16>
    %cst = arith.constant dense<0.000000e+00> : vector<256x3xf32>
    %2 = tpu.matmul %0, %1, %cst {dimension_numbers = #tpu.dot_dimension_numbers<[1], [0], [0], [1], [0, 0, 1, 1], [], []>} : vector<256x72xbf16>, vector<72x3xbf16>, vector<256x3xf32> -> vector<256x3xf32>
    %c0_3 = arith.constant 0 : index
    %c0_4 = arith.constant 0 : index
    %3 = vector.load %arg3[%c0_3, %c0_4] : memref<1x3xf32, #tpu.memory_space<vmem>>, vector<1x3xf32>
    %4 = vector.broadcast %3 : vector<1x3xf32> to vector<256x3xf32>
    %5 = arith.addf %2, %4 : vector<256x3xf32>
    %c0_5 = arith.constant 0 : index
    %c0_6 = arith.constant 0 : index
    %6 = vector.load %arg4[%c0_5, %c0_6] : memref<256x3xf32, #tpu.memory_space<vmem>>, vector<256x3xf32>
    tpu.vector_store %arg4[%c0_5, %c0_6], %5 {strides = array<i32>} : memref<256x3xf32, #tpu.memory_space<vmem>>, vector<256x3xf32>,
    return
  }
  func.func @transform_0(%arg0: i32) -> (i32, i32) {
    %c0_i32 = arith.constant 0 : i32
    %c0_i32_0 = arith.constant 0 : i32
    return %arg0, %c0_i32 : i32, i32
  }
  func.func @transform_1(%arg0: i32) -> (i32, i32) {
    %c0_i32 = arith.constant 0 : i32
    %c0_i32_0 = arith.constant 0 : i32
    %c0_i32_1 = arith.constant 0 : i32
    return %c0_i32, %c0_i32_0 : i32, i32
  }
  func.func @transform_2(%arg0: i32) -> (i32, i32) {
    %c0_i32 = arith.constant 0 : i32
    %c0_i32_0 = arith.constant 0 : i32
    %c0_i32_1 = arith.constant 0 : i32
    return %c0_i32, %c0_i32_0 : i32, i32
  }
  func.func @transform_3(%arg0: i32) -> (i32, i32) {
    %c0_i32 = arith.constant 0 : i32
    %c0_i32_0 = arith.constant 0 : i32
    return %arg0, %c0_i32 : i32, i32
  }
}

module attributes {stable_mosaic.version = 11 : i64} {
  func.func @_matmul_bias_act_kernel(%arg0: i32, %arg1: memref<256x36xbf16, #tpu.memory_space<vmem>>, %arg2: memref<36x8xbf16, #tpu.memory_space<vmem>>, %arg3: memref<1x8xf32, #tpu.memory_space<vmem>>, %arg4: memref<256x8xf32, #tpu.memory_space<vmem>>) attributes {dimension_semantics = [#tpu.dimension_semantics<parallel>], iteration_bounds = array<i64: 2>, scalar_prefetch = 0 : i64, scratch_operands = 0 : i64, tpu.core_type = #tpu.core_type<tc>, window_params = [{transform_indices = @transform_0, window_bounds = array<i64: 256, 36>}, {pipeline_mode = #tpu.pipeline_mode<synchronous>, transform_indices = @transform_1, window_bounds = array<i64: 36, 8>}, {pipeline_mode = #tpu.pipeline_mode<synchronous>, transform_indices = @transform_2, window_bounds = array<i64: 1, 8>}, {transform_indices = @transform_3, window_bounds = array<i64: 256, 8>}]} {
    %c0 = arith.constant 0 : index
    %c0_0 = arith.constant 0 : index
    %0 = vector.load %arg1[%c0, %c0_0] : memref<256x36xbf16, #tpu.memory_space<vmem>>, vector<256x36xbf16>
    %c0_1 = arith.constant 0 : index
    %c0_2 = arith.constant 0 : index
    %1 = vector.load %arg2[%c0_1, %c0_2] : memref<36x8xbf16, #tpu.memory_space<vmem>>, vector<36x8xbf16>
    %cst = arith.constant dense<0.000000e+00> : vector<256x8xf32>
    %2 = tpu.matmul %0, %1, %cst {dimension_numbers = #tpu.dot_dimension_numbers<[1], [0], [0], [1], [0, 0, 1, 1], [], []>} : vector<256x36xbf16>, vector<36x8xbf16>, vector<256x8xf32> -> vector<256x8xf32>
    %c0_3 = arith.constant 0 : index
    %c0_4 = arith.constant 0 : index
    %3 = vector.load %arg3[%c0_3, %c0_4] : memref<1x8xf32, #tpu.memory_space<vmem>>, vector<1x8xf32>
    %4 = vector.broadcast %3 : vector<1x8xf32> to vector<256x8xf32>
    %5 = arith.addf %2, %4 : vector<256x8xf32>
    %cst_5 = arith.constant 0.000000e+00 : f32
    %6 = vector.broadcast %cst_5 : f32 to vector<256x8xf32>
    %7 = arith.cmpf ogt, %5, %6 : vector<256x8xf32>
    %cst_6 = arith.constant 0.000000e+00 : f32
    %8 = vector.broadcast %cst_6 : f32 to vector<256x8xf32>
    %9 = arith.minimumf %5, %8 : vector<256x8xf32>
    %10 = math.exp %9 : vector<256x8xf32>
    %cst_7 = arith.constant 1.000000e+00 : f32
    %11 = vector.broadcast %cst_7 : f32 to vector<256x8xf32>
    %12 = arith.subf %10, %11 : vector<256x8xf32>
    %13 = arith.select %7, %5, %12 : vector<256x8xi1>, vector<256x8xf32>
    %c0_8 = arith.constant 0 : index
    %c0_9 = arith.constant 0 : index
    %14 = vector.load %arg4[%c0_8, %c0_9] : memref<256x8xf32, #tpu.memory_space<vmem>>, vector<256x8xf32>
    tpu.vector_store %arg4[%c0_8, %c0_9], %13 {strides = array<i32>} : memref<256x8xf32, #tpu.memory_space<vmem>>, vector<256x8xf32>,
    return
  }
  func.func @transform_0(%arg0: i32) -> (i32, i32) {
    %c0_i32 = arith.constant 0 : i32
    %c0_i32_0 = arith.constant 0 : i32
    return %arg0, %c0_i32 : i32, i32
  }
  func.func @transform_1(%arg0: i32) -> (i32, i32) {
    %c0_i32 = arith.constant 0 : i32
    %c0_i32_0 = arith.constant 0 : i32
    %c0_i32_1 = arith.constant 0 : i32
    return %c0_i32, %c0_i32_0 : i32, i32
  }
  func.func @transform_2(%arg0: i32) -> (i32, i32) {
    %c0_i32 = arith.constant 0 : i32
    %c0_i32_0 = arith.constant 0 : i32
    %c0_i32_1 = arith.constant 0 : i32
    return %c0_i32, %c0_i32_0 : i32, i32
  }
  func.func @transform_3(%arg0: i32) -> (i32, i32) {
    %c0_i32 = arith.constant 0 : i32
    %c0_i32_0 = arith.constant 0 : i32
    return %arg0, %c0_i32 : i32, i32
  }
}

module attributes {stable_mosaic.version = 11 : i64} {
  func.func @_matmul_bias_act_kernel(%arg0: i32, %arg1: memref<256x72xbf16, #tpu.memory_space<vmem>>, %arg2: memref<72x8xbf16, #tpu.memory_space<vmem>>, %arg3: memref<1x8xf32, #tpu.memory_space<vmem>>, %arg4: memref<256x8xf32, #tpu.memory_space<vmem>>) attributes {dimension_semantics = [#tpu.dimension_semantics<parallel>], iteration_bounds = array<i64: 2>, scalar_prefetch = 0 : i64, scratch_operands = 0 : i64, tpu.core_type = #tpu.core_type<tc>, window_params = [{transform_indices = @transform_0, window_bounds = array<i64: 256, 72>}, {pipeline_mode = #tpu.pipeline_mode<synchronous>, transform_indices = @transform_1, window_bounds = array<i64: 72, 8>}, {pipeline_mode = #tpu.pipeline_mode<synchronous>, transform_indices = @transform_2, window_bounds = array<i64: 1, 8>}, {transform_indices = @transform_3, window_bounds = array<i64: 256, 8>}]} {
    %c0 = arith.constant 0 : index
    %c0_0 = arith.constant 0 : index
    %0 = vector.load %arg1[%c0, %c0_0] : memref<256x72xbf16, #tpu.memory_space<vmem>>, vector<256x72xbf16>
    %c0_1 = arith.constant 0 : index
    %c0_2 = arith.constant 0 : index
    %1 = vector.load %arg2[%c0_1, %c0_2] : memref<72x8xbf16, #tpu.memory_space<vmem>>, vector<72x8xbf16>
    %cst = arith.constant dense<0.000000e+00> : vector<256x8xf32>
    %2 = tpu.matmul %0, %1, %cst {dimension_numbers = #tpu.dot_dimension_numbers<[1], [0], [0], [1], [0, 0, 1, 1], [], []>} : vector<256x72xbf16>, vector<72x8xbf16>, vector<256x8xf32> -> vector<256x8xf32>
    %c0_3 = arith.constant 0 : index
    %c0_4 = arith.constant 0 : index
    %3 = vector.load %arg3[%c0_3, %c0_4] : memref<1x8xf32, #tpu.memory_space<vmem>>, vector<1x8xf32>
    %4 = vector.broadcast %3 : vector<1x8xf32> to vector<256x8xf32>
    %5 = arith.addf %2, %4 : vector<256x8xf32>
    %cst_5 = arith.constant 0.000000e+00 : f32
    %6 = vector.broadcast %cst_5 : f32 to vector<256x8xf32>
    %7 = arith.cmpf ogt, %5, %6 : vector<256x8xf32>
    %cst_6 = arith.constant 0.000000e+00 : f32
    %8 = vector.broadcast %cst_6 : f32 to vector<256x8xf32>
    %9 = arith.minimumf %5, %8 : vector<256x8xf32>
    %10 = math.exp %9 : vector<256x8xf32>
    %cst_7 = arith.constant 1.000000e+00 : f32
    %11 = vector.broadcast %cst_7 : f32 to vector<256x8xf32>
    %12 = arith.subf %10, %11 : vector<256x8xf32>
    %13 = arith.select %7, %5, %12 : vector<256x8xi1>, vector<256x8xf32>
    %c0_8 = arith.constant 0 : index
    %c0_9 = arith.constant 0 : index
    %14 = vector.load %arg4[%c0_8, %c0_9] : memref<256x8xf32, #tpu.memory_space<vmem>>, vector<256x8xf32>
    tpu.vector_store %arg4[%c0_8, %c0_9], %13 {strides = array<i32>} : memref<256x8xf32, #tpu.memory_space<vmem>>, vector<256x8xf32>,
    return
  }
  func.func @transform_0(%arg0: i32) -> (i32, i32) {
    %c0_i32 = arith.constant 0 : i32
    %c0_i32_0 = arith.constant 0 : i32
    return %arg0, %c0_i32 : i32, i32
  }
  func.func @transform_1(%arg0: i32) -> (i32, i32) {
    %c0_i32 = arith.constant 0 : i32
    %c0_i32_0 = arith.constant 0 : i32
    %c0_i32_1 = arith.constant 0 : i32
    return %c0_i32, %c0_i32_0 : i32, i32
  }
  func.func @transform_2(%arg0: i32) -> (i32, i32) {
    %c0_i32 = arith.constant 0 : i32
    %c0_i32_0 = arith.constant 0 : i32
    %c0_i32_1 = arith.constant 0 : i32
    return %c0_i32, %c0_i32_0 : i32, i32
  }
  func.func @transform_3(%arg0: i32) -> (i32, i32) {
    %c0_i32 = arith.constant 0 : i32
    %c0_i32_0 = arith.constant 0 : i32
    return %arg0, %c0_i32 : i32, i32
  }
}

module attributes {stable_mosaic.version = 11 : i64} {
  func.func @_matmul_bias_act_kernel(%arg0: i32, %arg1: memref<256x72xbf16, #tpu.memory_space<vmem>>, %arg2: memref<72x2xbf16, #tpu.memory_space<vmem>>, %arg3: memref<1x2xf32, #tpu.memory_space<vmem>>, %arg4: memref<256x2xf32, #tpu.memory_space<vmem>>) attributes {dimension_semantics = [#tpu.dimension_semantics<parallel>], iteration_bounds = array<i64: 2>, scalar_prefetch = 0 : i64, scratch_operands = 0 : i64, tpu.core_type = #tpu.core_type<tc>, window_params = [{transform_indices = @transform_0, window_bounds = array<i64: 256, 72>}, {pipeline_mode = #tpu.pipeline_mode<synchronous>, transform_indices = @transform_1, window_bounds = array<i64: 72, 2>}, {pipeline_mode = #tpu.pipeline_mode<synchronous>, transform_indices = @transform_2, window_bounds = array<i64: 1, 2>}, {transform_indices = @transform_3, window_bounds = array<i64: 256, 2>}]} {
    %c0 = arith.constant 0 : index
    %c0_0 = arith.constant 0 : index
    %0 = vector.load %arg1[%c0, %c0_0] : memref<256x72xbf16, #tpu.memory_space<vmem>>, vector<256x72xbf16>
    %c0_1 = arith.constant 0 : index
    %c0_2 = arith.constant 0 : index
    %1 = vector.load %arg2[%c0_1, %c0_2] : memref<72x2xbf16, #tpu.memory_space<vmem>>, vector<72x2xbf16>
    %cst = arith.constant dense<0.000000e+00> : vector<256x2xf32>
    %2 = tpu.matmul %0, %1, %cst {dimension_numbers = #tpu.dot_dimension_numbers<[1], [0], [0], [1], [0, 0, 1, 1], [], []>} : vector<256x72xbf16>, vector<72x2xbf16>, vector<256x2xf32> -> vector<256x2xf32>
    %c0_3 = arith.constant 0 : index
    %c0_4 = arith.constant 0 : index
    %3 = vector.load %arg3[%c0_3, %c0_4] : memref<1x2xf32, #tpu.memory_space<vmem>>, vector<1x2xf32>
    %4 = vector.broadcast %3 : vector<1x2xf32> to vector<256x2xf32>
    %5 = arith.addf %2, %4 : vector<256x2xf32>
    %c0_5 = arith.constant 0 : index
    %c0_6 = arith.constant 0 : index
    %6 = vector.load %arg4[%c0_5, %c0_6] : memref<256x2xf32, #tpu.memory_space<vmem>>, vector<256x2xf32>
    tpu.vector_store %arg4[%c0_5, %c0_6], %5 {strides = array<i32>} : memref<256x2xf32, #tpu.memory_space<vmem>>, vector<256x2xf32>,
    return
  }
  func.func @transform_0(%arg0: i32) -> (i32, i32) {
    %c0_i32 = arith.constant 0 : i32
    %c0_i32_0 = arith.constant 0 : i32
    return %arg0, %c0_i32 : i32, i32
  }
  func.func @transform_1(%arg0: i32) -> (i32, i32) {
    %c0_i32 = arith.constant 0 : i32
    %c0_i32_0 = arith.constant 0 : i32
    %c0_i32_1 = arith.constant 0 : i32
    return %c0_i32, %c0_i32_0 : i32, i32
  }
  func.func @transform_2(%arg0: i32) -> (i32, i32) {
    %c0_i32 = arith.constant 0 : i32
    %c0_i32_0 = arith.constant 0 : i32
    %c0_i32_1 = arith.constant 0 : i32
    return %c0_i32, %c0_i32_0 : i32, i32
  }
  func.func @transform_3(%arg0: i32) -> (i32, i32) {
    %c0_i32 = arith.constant 0 : i32
    %c0_i32_0 = arith.constant 0 : i32
    return %arg0, %c0_i32 : i32, i32
  }
}

</mosaic_0001>

<llo_original>
// kernel: heatformer_passive_forward.10
$region0: #{heatformer_passive_forward.10}
  #allocation0 [shape = 'u32[]', space=smem, size = 0x4, offset = 0x4, fixed_abs, tag = 'smem constant byte address 0x4 - core index']
  #allocation1 [shape = 'u32[144,128]{1,0:T(1,128)}', space=vmem, size = 0x12000, scoped, tag = 'internal scratch']
  %s0 = inlined_call_operand.vmem [shape: bf16[32,144], index: 0, kind: input, shape index: {}]
  %s1 = inlined_call_operand.vmem [shape: bf16[144,32], index: 1, kind: input, shape index: {}]
  %s2 = inlined_call_operand.vmem [shape: f32[1,32], index: 2, kind: input, shape index: {}]
  %s3 = inlined_call_operand.vmem [shape: f32[32,32], index: 3, kind: output, shape index: {}]
  %s4 = sld [smem:[#allocation0]]
  $region22: #{heatformer_passive_forward.10} parent=0
    _
  %s6 = ssub.s32 1, %s4
  %s7 = scalar_select 0, %s6, %s4
  // Predicated region
  $region2: #{heatformer_passive_forward.10} parent=0 // pred_check
    _
  $region3: #{heatformer_passive_forward.10} parent=0 // pred_check_branch
    %9 = sbr.rel (0) target = $region5
  $region4: #{heatformer_passive_forward.10} parent=0 // pred_region
    _
  $region5: #{heatformer_passive_forward.10} parent=0 // pred_fallthru
    _
  // Predicated region
  $region6: #{heatformer_passive_forward.10} parent=0 // pred_check
    _
  $region7: #{heatformer_passive_forward.10} parent=0 // pred_check_branch
    %11 = sbr.rel (0) target = $region9
  $region8: #{heatformer_passive_forward.10} parent=0 // pred_region
    _
  $region9: #{heatformer_passive_forward.10} parent=0 // pred_fallthru
    _
  // Predicated region
  $region10: #{heatformer_passive_forward.10} parent=0 // pred_check
    _
  $region11: #{heatformer_passive_forward.10} parent=0 // pred_check_branch
    %13 = sbr.rel (0) target = $region13
  $region12: #{heatformer_passive_forward.10} parent=0 // pred_region
    _
  $region13: #{heatformer_passive_forward.10} parent=0 // pred_fallthru
    _
  %v15 = vld [vmem:[%s0] sm:$0xff]
  %v16 = vld [vmem:[%s0 + $0x8] sm:$0xff]
  %v17 = vld [vmem:[%s0 + $0x10] sm:$0xff]
  %v18 = vld [vmem:[%s0 + $0x18] sm:$0xff]
  %v19 = vld [vmem:[%s1] sm:$0xf]
  %v20 = vld [vmem:[%s1 + $0x4] sm:$0xf]
  %v21 = vld [vmem:[%s1 + $0x8] sm:$0xf]
  %v22 = vld [vmem:[%s1 + $0xc] sm:$0xf]
  %v23 = vld [vmem:[%s1 + $0x10] sm:$0xf]
  %v24 = vld [vmem:[%s1 + $0x14] sm:$0xf]
  %v25 = vld [vmem:[%s1 + $0x18] sm:$0xf]
  %v26 = vld [vmem:[%s1 + $0x1c] sm:$0xf]
  %v27 = vld [vmem:[%s1 + $0x20] sm:$0xf]
  %v28 = vld [vmem:[%s1 + $0x24] sm:$0xf]
  %v29 = vld [vmem:[%s1 + $0x28] sm:$0xf]
  %v30 = vld [vmem:[%s1 + $0x2c] sm:$0xf]
  %v31 = vld [vmem:[%s1 + $0x30] sm:$0xf]
  %v32 = vld [vmem:[%s1 + $0x34] sm:$0xf]
  %v33 = vld [vmem:[%s1 + $0x38] sm:$0xf]
  %v34 = vld [vmem:[%s1 + $0x3c] sm:$0xf]
  %v35 = vld [vmem:[%s1 + $0x40] sm:$0xf]
  %v36 = vld [vmem:[%s1 + $0x44] sm:$0xf]
  %v37 = vld [vmem:[%s2] sm:$0x1]
  %v39 = vlaneseq
  %v40 = vshrl.u32 %v39, 7
  %v41 = vsub.s32 0, %v40
  %v42 = vrot.slane %v37, %v41
  %v48 = vunpack.c.l.b16 %v15
  %v49 = vunpack.c.h.b16 %v15
  %v50 = vunpack.c.l.b16 %v16
  %v51 = vunpack.c.h.b16 %v16
  %v52 = vunpack.c.l.b16 %v17
  %v53 = vunpack.c.h.b16 %v17
  %v54 = vunpack.c.l.b16 %v18
  %v55 = vunpack.c.h.b16 %v18
  %v56 = vpack.c.b16 %v50, %v48
  %v57 = vpack.c.b16 %v51, %v49
  %v58 = vpack.c.b16 %v54, %v52
  %v59 = vpack.c.b16 %v55, %v53
  %v80 = vunpack.c.l.b16 %v19
  %v81 = vunpack.c.l.b16 %v20
  %v82 = vunpack.c.l.b16 %v21
  %v83 = vunpack.c.l.b16 %v22
  %v84 = vunpack.c.l.b16 %v23
  %v85 = vunpack.c.l.b16 %v24
  %v86 = vunpack.c.l.b16 %v25
  %v87 = vunpack.c.l.b16 %v26
  %v88 = vunpack.c.l.b16 %v27
  %v89 = vunpack.c.l.b16 %v28
  %v90 = vunpack.c.l.b16 %v29
  %v91 = vunpack.c.l.b16 %v30
  %v92 = vunpack.c.l.b16 %v31
  %v93 = vunpack.c.l.b16 %v32
  %v94 = vunpack.c.l.b16 %v33
  %v95 = vunpack.c.l.b16 %v34
  %v96 = vunpack.c.l.b16 %v35
  %v97 = vunpack.c.l.b16 %v36
  %v98 = vpack.c.b16 %v81, %v80
  %v99 = vpack.c.b16 %v83, %v82
  %v100 = vpack.c.b16 %v85, %v84
  %v101 = vpack.c.b16 %v87, %v86
  %v102 = vpack.c.b16 %v89, %v88
  %v103 = vpack.c.b16 %v91, %v90
  %v104 = vpack.c.b16 %v93, %v92
  %v105 = vpack.c.b16 %v95, %v94
  %v106 = vpack.c.b16 %v97, %v96
  %vm116 = vcmask 130048
  %v118 = vsel %vm116, %v57, 0
  %v121 = vsel %vm116, %v59, 0
  %123 = vmatprep.subr.bf16.mxu0 0
  %124 = vmatpush1.bf16.msra.mxu0 %v98
  %125 = vmatprep.subr.bf16.mxu0 0
  %126 = vmatpush1.bf16.msra.mxu0 %v99
  %127 = vmatprep.subr.bf16.mxu0 0
  %128 = vmatpush1.bf16.msra.mxu0 %v100
  %129 = vmatprep.subr.bf16.mxu0 0
  %130 = vmatpush1.bf16.msra.mxu0 %v101
  %131 = vmatprep.subr.bf16.mxu0 0
  %132 = vmatpush1.bf16.msra.mxu0 %v102
  %133 = vmatprep.subr.bf16.mxu0 0
  %134 = vmatpush1.bf16.msra.mxu0 %v103
  %135 = vmatprep.subr.bf16.mxu0 0
  %136 = vmatpush1.bf16.msra.mxu0 %v104
  %137 = vmatprep.subr.bf16.mxu0 0
  %138 = vmatpush1.bf16.msra.mxu0 %v105
  %139 = vmatprep.subr.bf16.mxu0 0
  %140 = vmatpush1.bf16.msra.mxu0 %v106
  %141 = vmatprep.subr.bf16.mxu0 0
  %142 = vmatpush1.bf16.msra.mxu0 0
  %143 = vmatprep.subr.bf16.mxu0 0
  %144 = vmatpush1.bf16.msra.mxu0 0
  %145 = vmatprep.subr.bf16.mxu0 0
  %146 = vmatpush1.bf16.msra.mxu0 0
  %147 = vmatprep.subr.bf16.mxu0 0
  %148 = vmatpush1.bf16.msra.mxu0 0
  %149 = vmatprep.subr.bf16.mxu0 0
  %150 = vmatpush1.bf16.msra.mxu0 0
  %151 = vmatprep.subr.bf16.mxu0 0
  %152 = vmatpush1.bf16.msra.mxu0 0
  %153 = vmatprep.subr.bf16.mxu0 0
  %154 = vmatpush1.bf16.msra.mxu0 0
  %155 = vmatprep.mubr.bf16.mxu0 %v118
  %156 = vmatmul.mubr.bf16.gmra.mrb[0].mxu0 %v56
  %v157 = vpop.f32.mrb[0].mxu0
  %v158 = vadd.f32 %v42, %v157
  %v159 = vpop.f32.mrb[0].mxu0
  %v160 = vpop.f32.mrb[0].mxu0
  %v161 = vadd.f32 %v42, %v160
  %v162 = vpop.f32.mrb[0].mxu0
  %163 = vmatprep.mubr.bf16.mxu0 %v121
  %164 = vmatmul.mubr.bf16.gmra.mrb[0].mxu0 %v58
  %v165 = vpop.f32.mrb[0].mxu0
  %v166 = vadd.f32 %v42, %v165
  %v167 = vpop.f32.mrb[0].mxu0
  %v168 = vpop.f32.mrb[0].mxu0
  %v169 = vadd.f32 %v42, %v168
  %v170 = vpop.f32.mrb[0].mxu0
  %171 = vdwg.mxu0
  %v172 = vmax.f32 %v158, 0.0
  %v173 = vmax.f32 %v161, 0.0
  %v174 = vmax.f32 %v166, 0.0
  %v175 = vmax.f32 %v169, 0.0
  %vm176 = vcmask 261120
  %177 = vst.msk [vmem:[%s3] sm:$0xff] %vm176, %v172
  %178 = vst.msk [vmem:[%s3 + $0x8] sm:$0xff] %vm176, %v173
  %179 = vst.msk [vmem:[%s3 + $0x10] sm:$0xff] %vm176, %v174
  %180 = vst.msk [vmem:[%s3 + $0x18] sm:$0xff] %vm176, %v175
  // Predicated region
  $region14: #{heatformer_passive_forward.10} parent=0 // pred_check
    _
  $region15: #{heatformer_passive_forward.10} parent=0 // pred_check_branch
    %182 = sbr.rel (0) target = $region17
  $region16: #{heatformer_passive_forward.10} parent=0 // pred_region
    _
  $region17: #{heatformer_passive_forward.10} parent=0 // pred_fallthru
    _
  // Predicated region
  $region18: #{heatformer_passive_forward.10} parent=0 // pred_check
    _
  $region19: #{heatformer_passive_forward.10} parent=0 // pred_check_branch
    %184 = sbr.rel (0) target = $region21
  $region20: #{heatformer_passive_forward.10} parent=0 // pred_region
    _
  $region21: #{heatformer_passive_forward.10} parent=0 // pred_fallthru
    _

// kernel: heatformer_passive_forward.9
$region0: #{heatformer_passive_forward.9}
  #allocation0 [shape = 'u32[]', space=smem, size = 0x4, offset = 0x4, fixed_abs, tag = 'smem constant byte address 0x4 - core index']
  #allocation1 [shape = 'u32[144,128]{1,0:T(1,128)}', space=vmem, size = 0x12000, scoped, tag = 'internal scratch']
  %s0 = inlined_call_operand.vmem [shape: bf16[128,36], index: 0, kind: input, shape index: {}]
  %s1 = inlined_call_operand.vmem [shape: bf16[36,16], index: 1, kind: input, shape index: {}]
  %s2 = inlined_call_operand.vmem [shape: f32[1,16], index: 2, kind: input, shape index: {}]
  %s3 = inlined_call_operand.vmem [shape: f32[128,16], index: 3, kind: output, shape index: {}]
  %s4 = sld [smem:[#allocation0]]
  $region22: #{heatformer_passive_forward.9} parent=0
    _
  %s6 = ssub.s32 1, %s4
  %s7 = scalar_select 0, %s6, %s4
  // Predicated region
  $region2: #{heatformer_passive_forward.9} parent=0 // pred_check
    _
  $region3: #{heatformer_passive_forward.9} parent=0 // pred_check_branch
    %9 = sbr.rel (0) target = $region5
  $region4: #{heatformer_passive_forward.9} parent=0 // pred_region
    _
  $region5: #{heatformer_passive_forward.9} parent=0 // pred_fallthru
    _
  // Predicated region
  $region6: #{heatformer_passive_forward.9} parent=0 // pred_check
    _
  $region7: #{heatformer_passive_forward.9} parent=0 // pred_check_branch
    %11 = sbr.rel (0) target = $region9
  $region8: #{heatformer_passive_forward.9} parent=0 // pred_region
    _
  $region9: #{heatformer_passive_forward.9} parent=0 // pred_fallthru
    _
  // Predicated region
  $region10: #{heatformer_passive_forward.9} parent=0 // pred_check
    _
  $region11: #{heatformer_passive_forward.9} parent=0 // pred_check_branch
    %13 = sbr.rel (0) target = $region13
  $region12: #{heatformer_passive_forward.9} parent=0 // pred_region
    _
  $region13: #{heatformer_passive_forward.9} parent=0 // pred_fallthru
    _
  %v15 = vld [vmem:[%s0] sm:$0xf]
  %v16 = vld [vmem:[%s0 + $0x4] sm:$0xf]
  %v17 = vld [vmem:[%s0 + $0x8] sm:$0xf]
  %v18 = vld [vmem:[%s0 + $0xc] sm:$0xf]
  %v19 = vld [vmem:[%s0 + $0x10] sm:$0xf]
  %v20 = vld [vmem:[%s0 + $0x14] sm:$0xf]
  %v21 = vld [vmem:[%s0 + $0x18] sm:$0xf]
  %v22 = vld [vmem:[%s0 + $0x1c] sm:$0xf]
  %v23 = vld [vmem:[%s0 + $0x20] sm:$0xf]
  %v24 = vld [vmem:[%s0 + $0x24] sm:$0xf]
  %v25 = vld [vmem:[%s0 + $0x28] sm:$0xf]
  %v26 = vld [vmem:[%s0 + $0x2c] sm:$0xf]
  %v27 = vld [vmem:[%s0 + $0x30] sm:$0xf]
  %v28 = vld [vmem:[%s0 + $0x34] sm:$0xf]
  %v29 = vld [vmem:[%s0 + $0x38] sm:$0xf]
  %v30 = vld [vmem:[%s0 + $0x3c] sm:$0xf]
  %v31 = vld [vmem:[%s1] sm:$0xf]
  %v32 = vld [vmem:[%s1 + $0x4] sm:$0xf]
  %v33 = vld [vmem:[%s1 + $0x8] sm:$0xf]
  %v34 = vld [vmem:[%s1 + $0xc] sm:$0xf]
  %v35 = vld [vmem:[%s1 + $0x10] sm:$0x3]
  %v36 = vld [vmem:[%s2] sm:$0x1]
  %v38 = vlaneseq
  %v39 = vshrl.u32 %v38, 7
  %v40 = vsub.s32 0, %v39
  %v41 = vrot.slane %v36, %v40
  %v59 = vunpack.c.l.b16 %v15
  %v60 = vunpack.c.l.b16 %v16
  %v61 = vunpack.c.l.b16 %v17
  %v62 = vunpack.c.l.b16 %v18
  %v63 = vunpack.c.l.b16 %v19
  %v64 = vunpack.c.l.b16 %v20
  %v65 = vunpack.c.l.b16 %v21
  %v66 = vunpack.c.l.b16 %v22
  %v67 = vunpack.c.l.b16 %v23
  %v68 = vunpack.c.l.b16 %v24
  %v69 = vunpack.c.l.b16 %v25
  %v70 = vunpack.c.l.b16 %v26
  %v71 = vunpack.c.l.b16 %v27
  %v72 = vunpack.c.l.b16 %v28
  %v73 = vunpack.c.l.b16 %v29
  %v74 = vunpack.c.l.b16 %v30
  %v75 = vpack.c.b16 %v60, %v59
  %v76 = vpack.c.b16 %v62, %v61
  %v77 = vpack.c.b16 %v64, %v63
  %v78 = vpack.c.b16 %v66, %v65
  %v79 = vpack.c.b16 %v68, %v67
  %v80 = vpack.c.b16 %v70, %v69
  %v81 = vpack.c.b16 %v72, %v71
  %v82 = vpack.c.b16 %v74, %v73
  %v88 = vunpack.c.l.b16 %v31
  %v89 = vunpack.c.l.b16 %v32
  %v90 = vunpack.c.l.b16 %v33
  %v91 = vunpack.c.l.b16 %v34
  %v92 = vunpack.c.l.b16 %v35
  %v93 = vpack.c.b16 %v89, %v88
  %v94 = vpack.c.b16 %v91, %v90
  %v95 = vpack.c.b16 %v92, %v92
  %vm98 = vcmask 293888
  %v100 = vsel %vm98, %v75, 0
  %v103 = vsel %vm98, %v76, 0
  %v106 = vsel %vm98, %v77, 0
  %v109 = vsel %vm98, %v78, 0
  %v112 = vsel %vm98, %v79, 0
  %v115 = vsel %vm98, %v80, 0
  %v118 = vsel %vm98, %v81, 0
  %v121 = vsel %vm98, %v82, 0
  %vm123 = vcmask 1041408
  %v125 = vsel %vm123, %v95, 0
  %127 = vmatprep.subr.bf16.mxu0 0
  %128 = vmatpush1.bf16.msra.mxu0 %v93
  %129 = vmatprep.subr.bf16.mxu0 0
  %130 = vmatpush1.bf16.msra.mxu0 %v94
  %131 = vmatprep.subr.bf16.mxu0 0
  %132 = vmatpush1.bf16.msra.mxu0 %v125
  %133 = vmatprep.subr.bf16.mxu0 0
  %134 = vmatpush1.bf16.msra.mxu0 0
  %135 = vmatprep.subr.bf16.mxu0 0
  %136 = vmatpush1.bf16.msra.mxu0 0
  %137 = vmatprep.subr.bf16.mxu0 0
  %138 = vmatpush1.bf16.msra.mxu0 0
  %139 = vmatprep.subr.bf16.mxu0 0
  %140 = vmatpush1.bf16.msra.mxu0 0
  %141 = vmatprep.subr.bf16.mxu0 0
  %142 = vmatpush1.bf16.msra.mxu0 0
  %143 = vmatprep.subr.bf16.mxu0 0
  %144 = vmatpush1.bf16.msra.mxu0 0
  %145 = vmatprep.subr.bf16.mxu0 0
  %146 = vmatpush1.bf16.msra.mxu0 0
  %147 = vmatprep.subr.bf16.mxu0 0
  %148 = vmatpush1.bf16.msra.mxu0 0
  %149 = vmatprep.subr.bf16.mxu0 0
  %150 = vmatpush1.bf16.msra.mxu0 0
  %151 = vmatprep.subr.bf16.mxu0 0
  %152 = vmatpush1.bf16.msra.mxu0 0
  %153 = vmatprep.subr.bf16.mxu0 0
  %154 = vmatpush1.bf16.msra.mxu0 0
  %155 = vmatprep.subr.bf16.mxu0 0
  %156 = vmatpush1.bf16.msra.mxu0 0
  %157 = vmatprep.subr.bf16.mxu0 0
  %158 = vmatpush1.bf16.msra.mxu0 0
  %159 = vmatprep.mubr.bf16.mxu0 0
  %160 = vmatmul.mubr.bf16.gmra.mrb[0].mxu0 %v100
  %v161 = vpop.f32.mrb[0].mxu0
  %v162 = vadd.f32 %v41, %v161
  %v163 = vpop.f32.mrb[0].mxu0
  %v164 = vpop.f32.mrb[0].mxu0
  %v165 = vadd.f32 %v41, %v164
  %v166 = vpop.f32.mrb[0].mxu0
  %167 = vmatprep.mubr.bf16.mxu0 0
  %168 = vmatmul.mubr.bf16.gmra.mrb[0].mxu0 %v103
  %v169 = vpop.f32.mrb[0].mxu0
  %v170 = vadd.f32 %v41, %v169
  %v171 = vpop.f32.mrb[0].mxu0
  %v172 = vpop.f32.mrb[0].mxu0
  %v173 = vadd.f32 %v41, %v172
  %v174 = vpop.f32.mrb[0].mxu0
  %175 = vmatprep.mubr.bf16.mxu0 0
  %176 = vmatmul.mubr.bf16.gmra.mrb[0].mxu0 %v106
  %v177 = vpop.f32.mrb[0].mxu0
  %v178 = vadd.f32 %v41, %v177
  %v179 = vpop.f32.mrb[0].mxu0
  %v180 = vpop.f32.mrb[0].mxu0
  %v181 = vadd.f32 %v41, %v180
  %v182 = vpop.f32.mrb[0].mxu0
  %183 = vmatprep.mubr.bf16.mxu0 0
  %184 = vmatmul.mubr.bf16.gmra.mrb[0].mxu0 %v109
  %v185 = vpop.f32.mrb[0].mxu0
  %v186 = vadd.f32 %v41, %v185
  %v187 = vpop.f32.mrb[0].mxu0
  %v188 = vpop.f32.mrb[0].mxu0
  %v189 = vadd.f32 %v41, %v188
  %v190 = vpop.f32.mrb[0].mxu0
  %191 = vmatprep.mubr.bf16.mxu0 0
  %192 = vmatmul.mubr.bf16.gmra.mrb[0].mxu0 %v112
  %v193 = vpop.f32.mrb[0].mxu0
  %v194 = vadd.f32 %v41, %v193
  %v195 = vpop.f32.mrb[0].mxu0
  %v196 = vpop.f32.mrb[0].mxu0
  %v197 = vadd.f32 %v41, %v196
  %v198 = vpop.f32.mrb[0].mxu0
  %199 = vmatprep.mubr.bf16.mxu0 0
  %200 = vmatmul.mubr.bf16.gmra.mrb[0].mxu0 %v115
  %v201 = vpop.f32.mrb[0].mxu0
  %v202 = vadd.f32 %v41, %v201
  %v203 = vpop.f32.mrb[0].mxu0
  %v204 = vpop.f32.mrb[0].mxu0
  %v205 = vadd.f32 %v41, %v204
  %v206 = vpop.f32.mrb[0].mxu0
  %207 = vmatprep.mubr.bf16.mxu0 0
  %208 = vmatmul.mubr.bf16.gmra.mrb[0].mxu0 %v118
  %v209 = vpop.f32.mrb[0].mxu0
  %v210 = vadd.f32 %v41, %v209
  %v211 = vpop.f32.mrb[0].mxu0
  %v212 = vpop.f32.mrb[0].mxu0
  %v213 = vadd.f32 %v41, %v212
  %v214 = vpop.f32.mrb[0].mxu0
  %215 = vmatprep.mubr.bf16.mxu0 0
  %216 = vmatmul.mubr.bf16.gmra.mrb[0].mxu0 %v121
  %v217 = vpop.f32.mrb[0].mxu0
  %v218 = vadd.f32 %v41, %v217
  %v219 = vpop.f32.mrb[0].mxu0
  %v220 = vpop.f32.mrb[0].mxu0
  %v221 = vadd.f32 %v41, %v220
  %v222 = vpop.f32.mrb[0].mxu0
  %223 = vdwg.mxu0
  %v224 = vmax.f32 %v162, 0.0
  %v225 = vmax.f32 %v165, 0.0
  %v226 = vmax.f32 %v170, 0.0
  %v227 = vmax.f32 %v173, 0.0
  %v228 = vmax.f32 %v178, 0.0
  %v229 = vmax.f32 %v181, 0.0
  %v230 = vmax.f32 %v186, 0.0
  %v231 = vmax.f32 %v189, 0.0
  %v232 = vmax.f32 %v194, 0.0
  %v233 = vmax.f32 %v197, 0.0
  %v234 = vmax.f32 %v202, 0.0
  %v235 = vmax.f32 %v205, 0.0
  %v236 = vmax.f32 %v210, 0.0
  %v237 = vmax.f32 %v213, 0.0
  %v238 = vmax.f32 %v218, 0.0
  %v239 = vmax.f32 %v221, 0.0
  %vm240 = vcmask 130048
  %241 = vst.msk [vmem:[%s3] sm:$0xff] %vm240, %v224
  %242 = vst.msk [vmem:[%s3 + $0x8] sm:$0xff] %vm240, %v225
  %243 = vst.msk [vmem:[%s3 + $0x10] sm:$0xff] %vm240, %v226
  %244 = vst.msk [vmem:[%s3 + $0x18] sm:$0xff] %vm240, %v227
  %245 = vst.msk [vmem:[%s3 + $0x20] sm:$0xff] %vm240, %v228
  %246 = vst.msk [vmem:[%s3 + $0x28] sm:$0xff] %vm240, %v229
  %247 = vst.msk [vmem:[%s3 + $0x30] sm:$0xff] %vm240, %v230
  %248 = vst.msk [vmem:[%s3 + $0x38] sm:$0xff] %vm240, %v231
  %249 = vst.msk [vmem:[%s3 + $0x40] sm:$0xff] %vm240, %v232
  %250 = vst.msk [vmem:[%s3 + $0x48] sm:$0xff] %vm240, %v233
  %251 = vst.msk [vmem:[%s3 + $0x50] sm:$0xff] %vm240, %v234
  %252 = vst.msk [vmem:[%s3 + $0x58] sm:$0xff] %vm240, %v235
  %253 = vst.msk [vmem:[%s3 + $0x60] sm:$0xff] %vm240, %v236
  %254 = vst.msk [vmem:[%s3 + $0x68] sm:$0xff] %vm240, %v237
  %255 = vst.msk [vmem:[%s3 + $0x70] sm:$0xff] %vm240, %v238
  %256 = vst.msk [vmem:[%s3 + $0x78] sm:$0xff] %vm240, %v239
  // Predicated region
  $region14: #{heatformer_passive_forward.9} parent=0 // pred_check
    _
  $region15: #{heatformer_passive_forward.9} parent=0 // pred_check_branch
    %258 = sbr.rel (0) target = $region17
  $region16: #{heatformer_passive_forward.9} parent=0 // pred_region
    _
  $region17: #{heatformer_passive_forward.9} parent=0 // pred_fallthru
    _
  // Predicated region
  $region18: #{heatformer_passive_forward.9} parent=0 // pred_check
    _
  $region19: #{heatformer_passive_forward.9} parent=0 // pred_check_branch
    %260 = sbr.rel (0) target = $region21
  $region20: #{heatformer_passive_forward.9} parent=0 // pred_region
    _
  $region21: #{heatformer_passive_forward.9} parent=0 // pred_fallthru
    _

// kernel: heatformer_passive_forward.11
$region0: #{heatformer_passive_forward.11}
  #allocation0 [shape = 'u32[]', space=smem, size = 0x4, offset = 0x4, fixed_abs, tag = 'smem constant byte address 0x4 - core index']
  #allocation1 [shape = 'u32[144,128]{1,0:T(1,128)}', space=vmem, size = 0x12000, scoped, tag = 'internal scratch']
  #allocation2 [shape = 'f32[32,32]{1,0:T(8,128)}', space=vmem, size = 0x4000, scoped, tag = 'scratch operand']
  %s0 = inlined_call_operand.vmem [shape: f32[32,32], index: 0, kind: input, shape index: {}]
  %s1 = inlined_call_operand.vmem [shape: f32[32,16], index: 1, kind: input, shape index: {}]
  %s2 = inlined_call_operand.vmem [shape: f32[32,32], index: 2, kind: input, shape index: {}]
  %s3 = inlined_call_operand.vmem [shape: f32[3,1,32], index: 3, kind: input, shape index: {}]
  %s4 = inlined_call_operand.vmem [shape: f32[3,1,32], index: 4, kind: input, shape index: {}]
  %s5 = inlined_call_operand.vmem [shape: bf16[3,32,96], index: 5, kind: input, shape index: {}]
  %s6 = inlined_call_operand.vmem [shape: f32[3,1,96], index: 6, kind: input, shape index: {}]
  %s7 = inlined_call_operand.vmem [shape: bf16[3,32,32], index: 7, kind: input, shape index: {}]
  %s8 = inlined_call_operand.vmem [shape: f32[3,1,32], index: 8, kind: input, shape index: {}]
  %s9 = inlined_call_operand.vmem [shape: f32[3,1,32], index: 9, kind: input, shape index: {}]
  %s10 = inlined_call_operand.vmem [shape: f32[3,1,32], index: 10, kind: input, shape index: {}]
  %s11 = inlined_call_operand.vmem [shape: bf16[3,32,128], index: 11, kind: input, shape index: {}]
  %s12 = inlined_call_operand.vmem [shape: f32[3,1,128], index: 12, kind: input, shape index: {}]
  %s13 = inlined_call_operand.vmem [shape: bf16[3,128,32], index: 13, kind: input, shape index: {}]
  %s14 = inlined_call_operand.vmem [shape: f32[3,1,32], index: 14, kind: input, shape index: {}]
  %s15 = inlined_call_operand.vmem [shape: f32[1,32], index: 15, kind: input, shape index: {}]
  %s16 = inlined_call_operand.vmem [shape: f32[1,32], index: 16, kind: input, shape index: {}]
  %s17 = inlined_call_operand.vmem [shape: bf16[32,16], index: 17, kind: input, shape index: {}]
  %s18 = inlined_call_operand.vmem [shape: f32[1,16], index: 18, kind: input, shape index: {}]
  %s19 = inlined_call_operand.vmem [shape: f32[32,16], index: 19, kind: output, shape index: {}]
  %s20 = sld [smem:[#allocation0]]
  $region117: #{heatformer_passive_forward.11} parent=0
    _
  %s22 = ssub.s32 1, %s20
  %s23 = scalar_select 0, %s22, %s20
  loop: start=0, step=1, limit=5
  $region2: #{heatformer_passive_forward.11} parent=0 // loop_pre_header
    _
  $region3: #{heatformer_passive_forward.11} parent=0 // loop_header
    %s25 = sphi 0, %s29
    %p26 = scmp.ge.s32.totalorder %s25, 5
    %s33 = sphi 0, %s33
    %s35 = sphi 0, %s33
    %s36 = sphi 0, %s35
    %s50 = sphi 0, %s36
    %s54 = sphi 0, %s54
    %s56 = sphi 0, %s54
    %s57 = sphi 0, %s56
    %s71 = sphi 0, %s57
    %s75 = sphi 0, %s75
    %s77 = sphi 0, %s75
    %s78 = sphi 0, %s77
    %s92 = sphi 0, %s78
    %s98 = sphi 0, %s100
    %s101 = sphi 0, %s98
    %s102 = sphi 0, %s101
    %s118 = sphi 0, %s102
    %s124 = sphi 0, %s126
    %s127 = sphi 0, %s124
    %s128 = sphi 0, %s127
    %s144 = sphi 0, %s128
    %s150 = sphi 0, %s152
    %s153 = sphi 0, %s150
    %s154 = sphi 0, %s153
    %s170 = sphi 0, %s154
    %s176 = sphi 0, %s178
    %s179 = sphi 0, %s176
    %s180 = sphi 0, %s179
    %s196 = sphi 0, %s180
    %s202 = sphi 0, %s204
    %s205 = sphi 0, %s202
    %s206 = sphi 0, %s205
    %s222 = sphi 0, %s206
    %s228 = sphi 0, %s230
    %s231 = sphi 0, %s228
    %s232 = sphi 0, %s231
    %s248 = sphi 0, %s232
    %s254 = sphi 0, %s256
    %s257 = sphi 0, %s254
    %s258 = sphi 0, %s257
    %s274 = sphi 0, %s258
    %s280 = sphi 0, %s282
    %s283 = sphi 0, %s280
    %s284 = sphi 0, %s283
    %s300 = sphi 0, %s284
    %s306 = sphi 0, %s308
    %s309 = sphi 0, %s306
    %s310 = sphi 0, %s309
    %s326 = sphi 0, %s310
    %s332 = sphi 0, %s334
    %s335 = sphi 0, %s332
    %s336 = sphi 0, %s335
    %s352 = sphi 0, %s336
    %s358 = sphi 0, %s360
    %s361 = sphi 0, %s358
    %s362 = sphi 0, %s361
    %s378 = sphi 0, %s362
    %s384 = sphi 0, %s386
    %s387 = sphi 0, %s384
    %s388 = sphi 0, %s387
    %s404 = sphi 0, %s388
    %s408 = sphi 0, %s408
    %s410 = sphi 0, %s408
    %s411 = sphi 0, %s410
    %s425 = sphi 0, %s411
    %s429 = sphi 0, %s429
    %s431 = sphi 0, %s429
    %s432 = sphi 0, %s431
    %s446 = sphi 0, %s432
    %s450 = sphi 0, %s450
    %s452 = sphi 0, %s450
    %s453 = sphi 0, %s452
    %s467 = sphi 0, %s453
    %s471 = sphi 0, %s471
    %s473 = sphi 0, %s471
    %s474 = sphi 0, %s473
    %s488 = sphi 0, %s474
    %s492 = sphi 0, %s492
    %s494 = sphi 0, %s492
    %s495 = sphi 0, %s494
    %s509 = sphi 0, %s495
  $region4: #{heatformer_passive_forward.11} parent=0 // loop_header_branch
    %28 = sbr.rel (%p26) target = $region8
  $region5: #{heatformer_passive_forward.11} parent=0 // loop_body
    %s30 = ssub.s32 %s25, 1
    %s31 = ssub.s32 %s25, 2
    %s32 = sadd.s32 %s25, 1
    %s34 = sadd.s32 %s33, 1
    %p37 = scmp.eq.s32.totalorder %s25, 2
    %p38 = scmp.ne.s32.totalorder %s33, %s35
    %p39 = scmp.eq.s32.totalorder %s25, 0
    %p40 = por %p38, %p39
    %p41 = scmp.ne.s32.totalorder %s33, %s35
    %p42 = scmp.eq.s32.totalorder %s30, 2
    %p43 = por %p41, %p42
    %p44 = scmp.ne.s32.totalorder %s35, %s36
    %p45 = scmp.eq.s32.totalorder %s30, 0
    %p46 = por %p44, %p45
    %p47 = scmp.ne.s32.totalorder %s35, %s36
    %p48 = scmp.eq.s32.totalorder %s31, 2
    %p49 = por %p47, %p48
    %p51 = scmp.ne.s32.totalorder %s36, %s50
    %p52 = scmp.eq.s32.totalorder %s31, 0
    %p53 = por %p51, %p52
    %s55 = sadd.s32 %s54, 1
    %p58 = scmp.eq.s32.totalorder %s25, 2
    %p59 = scmp.ne.s32.totalorder %s54, %s56
    %p60 = scmp.eq.s32.totalorder %s25, 0
    %p61 = por %p59, %p60
    %p62 = scmp.ne.s32.totalorder %s54, %s56
    %p63 = scmp.eq.s32.totalorder %s30, 2
    %p64 = por %p62, %p63
    %p65 = scmp.ne.s32.totalorder %s56, %s57
    %p66 = scmp.eq.s32.totalorder %s30, 0
    %p67 = por %p65, %p66
    %p68 = scmp.ne.s32.totalorder %s56, %s57
    %p69 = scmp.eq.s32.totalorder %s31, 2
    %p70 = por %p68, %p69
    %p72 = scmp.ne.s32.totalorder %s57, %s71
    %p73 = scmp.eq.s32.totalorder %s31, 0
    %p74 = por %p72, %p73
    %s76 = sadd.s32 %s75, 1
    %p79 = scmp.eq.s32.totalorder %s25, 2
    %p80 = scmp.ne.s32.totalorder %s75, %s77
    %p81 = scmp.eq.s32.totalorder %s25, 0
    %p82 = por %p80, %p81
    %p83 = scmp.ne.s32.totalorder %s75, %s77
    %p84 = scmp.eq.s32.totalorder %s30, 2
    %p85 = por %p83, %p84
    %p86 = scmp.ne.s32.totalorder %s77, %s78
    %p87 = scmp.eq.s32.totalorder %s30, 0
    %p88 = por %p86, %p87
    %p89 = scmp.ne.s32.totalorder %s77, %s78
    %p90 = scmp.eq.s32.totalorder %s31, 2
    %p91 = por %p89, %p90
    %p93 = scmp.ne.s32.totalorder %s78, %s92
    %p94 = scmp.eq.s32.totalorder %s31, 0
    %p95 = por %p93, %p94
    %s96 = ssub.s32 %s25, %s32
    %p97 = scmp.eq.s32.totalorder %s96, 0
    %s99 = sadd.s32 %s98, 1
    %s100 = scalar_select %p97, %s98, %s99
    %p103 = pneg %p97
    %p104 = scmp.eq.s32.totalorder %s25, 2
    %p105 = por %p103, %p104
    %p106 = scmp.ne.s32.totalorder %s98, %s101
    %p107 = scmp.eq.s32.totalorder %s25, 0
    %p108 = por %p106, %p107
    %p109 = scmp.ne.s32.totalorder %s98, %s101
    %p110 = scmp.eq.s32.totalorder %s30, 2
    %p111 = por %p109, %p110
    %p112 = scmp.ne.s32.totalorder %s101, %s102
    %p113 = scmp.eq.s32.totalorder %s30, 0
    %p114 = por %p112, %p113
    %p115 = scmp.ne.s32.totalorder %s101, %s102
    %p116 = scmp.eq.s32.totalorder %s31, 2
    %p117 = por %p115, %p116
    %p119 = scmp.ne.s32.totalorder %s102, %s118
    %p120 = scmp.eq.s32.totalorder %s31, 0
    %p121 = por %p119, %p120
    %s122 = ssub.s32 %s25, %s32
    %p123 = scmp.eq.s32.totalorder %s122, 0
    %s125 = sadd.s32 %s124, 1
    %s126 = scalar_select %p123, %s124, %s125
    %p129 = pneg %p123
    %p130 = scmp.eq.s32.totalorder %s25, 2
    %p131 = por %p129, %p130
    %p132 = scmp.ne.s32.totalorder %s124, %s127
    %p133 = scmp.eq.s32.totalorder %s25, 0
    %p134 = por %p132, %p133
    %p135 = scmp.ne.s32.totalorder %s124, %s127
    %p136 = scmp.eq.s32.totalorder %s30, 2
    %p137 = por %p135, %p136
    %p138 = scmp.ne.s32.totalorder %s127, %s128
    %p139 = scmp.eq.s32.totalorder %s30, 0
    %p140 = por %p138, %p139
    %p141 = scmp.ne.s32.totalorder %s127, %s128
    %p142 = scmp.eq.s32.totalorder %s31, 2
    %p143 = por %p141, %p142
    %p145 = scmp.ne.s32.totalorder %s128, %s144
    %p146 = scmp.eq.s32.totalorder %s31, 0
    %p147 = por %p145, %p146
    %s148 = ssub.s32 %s25, %s32
    %p149 = scmp.eq.s32.totalorder %s148, 0
    %s151 = sadd.s32 %s150, 1
    %s152 = scalar_select %p149, %s150, %s151
    %p155 = pneg %p149
    %p156 = scmp.eq.s32.totalorder %s25, 2
    %p157 = por %p155, %p156
    %p158 = scmp.ne.s32.totalorder %s150, %s153
    %p159 = scmp.eq.s32.totalorder %s25, 0
    %p160 = por %p158, %p159
    %p161 = scmp.ne.s32.totalorder %s150, %s153
    %p162 = scmp.eq.s32.totalorder %s30, 2
    %p163 = por %p161, %p162
    %p164 = scmp.ne.s32.totalorder %s153, %s154
    %p165 = scmp.eq.s32.totalorder %s30, 0
    %p166 = por %p164, %p165
    %p167 = scmp.ne.s32.totalorder %s153, %s154
    %p168 = scmp.eq.s32.totalorder %s31, 2
    %p169 = por %p167, %p168
    %p171 = scmp.ne.s32.totalorder %s154, %s170
    %p172 = scmp.eq.s32.totalorder %s31, 0
    %p173 = por %p171, %p172
    %s174 = ssub.s32 %s25, %s32
    %p175 = scmp.eq.s32.totalorder %s174, 0
    %s177 = sadd.s32 %s176, 1
    %s178 = scalar_select %p175, %s176, %s177
    %p181 = pneg %p175
    %p182 = scmp.eq.s32.totalorder %s25, 2
    %p183 = por %p181, %p182
    %p184 = scmp.ne.s32.totalorder %s176, %s179
    %p185 = scmp.eq.s32.totalorder %s25, 0
    %p186 = por %p184, %p185
    %p187 = scmp.ne.s32.totalorder %s176, %s179
    %p188 = scmp.eq.s32.totalorder %s30, 2
    %p189 = por %p187, %p188
    %p190 = scmp.ne.s32.totalorder %s179, %s180
    %p191 = scmp.eq.s32.totalorder %s30, 0
    %p192 = por %p190, %p191
    %p193 = scmp.ne.s32.totalorder %s179, %s180
    %p194 = scmp.eq.s32.totalorder %s31, 2
    %p195 = por %p193, %p194
    %p197 = scmp.ne.s32.totalorder %s180, %s196
    %p198 = scmp.eq.s32.totalorder %s31, 0
    %p199 = por %p197, %p198
    %s200 = ssub.s32 %s25, %s32
    %p201 = scmp.eq.s32.totalorder %s200, 0
    %s203 = sadd.s32 %s202, 1
    %s204 = scalar_select %p201, %s202, %s203
    %p207 = pneg %p201
    %p208 = scmp.eq.s32.totalorder %s25, 2
    %p209 = por %p207, %p208
    %p210 = scmp.ne.s32.totalorder %s202, %s205
    %p211 = scmp.eq.s32.totalorder %s25, 0
    %p212 = por %p210, %p211
    %p213 = scmp.ne.s32.totalorder %s202, %s205
    %p214 = scmp.eq.s32.totalorder %s30, 2
    %p215 = por %p213, %p214
    %p216 = scmp.ne.s32.totalorder %s205, %s206
    %p217 = scmp.eq.s32.totalorder %s30, 0
    %p218 = por %p216, %p217
    %p219 = scmp.ne.s32.totalorder %s205, %s206
    %p220 = scmp.eq.s32.totalorder %s31, 2
    %p221 = por %p219, %p220
    %p223 = scmp.ne.s32.totalorder %s206, %s222
    %p224 = scmp.eq.s32.totalorder %s31, 0
    %p225 = por %p223, %p224
    %s226 = ssub.s32 %s25, %s32
    %p227 = scmp.eq.s32.totalorder %s226, 0
    %s229 = sadd.s32 %s228, 1
    %s230 = scalar_select %p227, %s228, %s229
    %p233 = pneg %p227
    %p234 = scmp.eq.s32.totalorder %s25, 2
    %p235 = por %p233, %p234
    %p236 = scmp.ne.s32.totalorder %s228, %s231
    %p237 = scmp.eq.s32.totalorder %s25, 0
    %p238 = por %p236, %p237
    %p239 = scmp.ne.s32.totalorder %s228, %s231
    %p240 = scmp.eq.s32.totalorder %s30, 2
    %p241 = por %p239, %p240
    %p242 = scmp.ne.s32.totalorder %s231, %s232
    %p243 = scmp.eq.s32.totalorder %s30, 0
    %p244 = por %p242, %p243
    %p245 = scmp.ne.s32.totalorder %s231, %s232
    %p246 = scmp.eq.s32.totalorder %s31, 2
    %p247 = por %p245, %p246
    %p249 = scmp.ne.s32.totalorder %s232, %s248
    %p250 = scmp.eq.s32.totalorder %s31, 0
    %p251 = por %p249, %p250
    %s252 = ssub.s32 %s25, %s32
    %p253 = scmp.eq.s32.totalorder %s252, 0
    %s255 = sadd.s32 %s254, 1
    %s256 = scalar_select %p253, %s254, %s255
    %p259 = pneg %p253
    %p260 = scmp.eq.s32.totalorder %s25, 2
    %p261 = por %p259, %p260
    %p262 = scmp.ne.s32.totalorder %s254, %s257
    %p263 = scmp.eq.s32.totalorder %s25, 0
    %p264 = por %p262, %p263
    %p265 = scmp.ne.s32.totalorder %s254, %s257
    %p266 = scmp.eq.s32.totalorder %s30, 2
    %p267 = por %p265, %p266
    %p268 = scmp.ne.s32.totalorder %s257, %s258
    %p269 = scmp.eq.s32.totalorder %s30, 0
    %p270 = por %p268, %p269
    %p271 = scmp.ne.s32.totalorder %s257, %s258
    %p272 = scmp.eq.s32.totalorder %s31, 2
    %p273 = por %p271, %p272
    %p275 = scmp.ne.s32.totalorder %s258, %s274
    %p276 = scmp.eq.s32.totalorder %s31, 0
    %p277 = por %p275, %p276
    %s278 = ssub.s32 %s25, %s32
    %p279 = scmp.eq.s32.totalorder %s278, 0
    %s281 = sadd.s32 %s280, 1
    %s282 = scalar_select %p279, %s280, %s281
    %p285 = pneg %p279
    %p286 = scmp.eq.s32.totalorder %s25, 2
    %p287 = por %p285, %p286
    %p288 = scmp.ne.s32.totalorder %s280, %s283
    %p289 = scmp.eq.s32.totalorder %s25, 0
    %p290 = por %p288, %p289
    %p291 = scmp.ne.s32.totalorder %s280, %s283
    %p292 = scmp.eq.s32.totalorder %s30, 2
    %p293 = por %p291, %p292
    %p294 = scmp.ne.s32.totalorder %s283, %s284
    %p295 = scmp.eq.s32.totalorder %s30, 0
    %p296 = por %p294, %p295
    %p297 = scmp.ne.s32.totalorder %s283, %s284
    %p298 = scmp.eq.s32.totalorder %s31, 2
    %p299 = por %p297, %p298
    %p301 = scmp.ne.s32.totalorder %s284, %s300
    %p302 = scmp.eq.s32.totalorder %s31, 0
    %p303 = por %p301, %p302
    %s304 = ssub.s32 %s25, %s32
    %p305 = scmp.eq.s32.totalorder %s304, 0
    %s307 = sadd.s32 %s306, 1
    %s308 = scalar_select %p305, %s306, %s307
    %p311 = pneg %p305
    %p312 = scmp.eq.s32.totalorder %s25, 2
    %p313 = por %p311, %p312
    %p314 = scmp.ne.s32.totalorder %s306, %s309
    %p315 = scmp.eq.s32.totalorder %s25, 0
    %p316 = por %p314, %p315
    %p317 = scmp.ne.s32.totalorder %s306, %s309
    %p318 = scmp.eq.s32.totalorder %s30, 2
    %p319 = por %p317, %p318
    %p320 = scmp.ne.s32.totalorder %s309, %s310
    %p321 = scmp.eq.s32.totalorder %s30, 0
    %p322 = por %p320, %p321
    %p323 = scmp.ne.s32.totalorder %s309, %s310
    %p324 = scmp.eq.s32.totalorder %s31, 2
    %p325 = por %p323, %p324
    %p327 = scmp.ne.s32.totalorder %s310, %s326
    %p328 = scmp.eq.s32.totalorder %s31, 0
    %p329 = por %p327, %p328
    %s330 = ssub.s32 %s25, %s32
    %p331 = scmp.eq.s32.totalorder %s330, 0
    %s333 = sadd.s32 %s332, 1
    %s334 = scalar_select %p331, %s332, %s333
    %p337 = pneg %p331
    %p338 = scmp.eq.s32.totalorder %s25, 2
    %p339 = por %p337, %p338
    %p340 = scmp.ne.s32.totalorder %s332, %s335
    %p341 = scmp.eq.s32.totalorder %s25, 0
    %p342 = por %p340, %p341
    %p343 = scmp.ne.s32.totalorder %s332, %s335
    %p344 = scmp.eq.s32.totalorder %s30, 2
    %p345 = por %p343, %p344
    %p346 = scmp.ne.s32.totalorder %s335, %s336
    %p347 = scmp.eq.s32.totalorder %s30, 0
    %p348 = por %p346, %p347
    %p349 = scmp.ne.s32.totalorder %s335, %s336
    %p350 = scmp.eq.s32.totalorder %s31, 2
    %p351 = por %p349, %p350
    %p353 = scmp.ne.s32.totalorder %s336, %s352
    %p354 = scmp.eq.s32.totalorder %s31, 0
    %p355 = por %p353, %p354
    %s356 = ssub.s32 %s25, %s32
    %p357 = scmp.eq.s32.totalorder %s356, 0
    %s359 = sadd.s32 %s358, 1
    %s360 = scalar_select %p357, %s358, %s359
    %p363 = pneg %p357
    %p364 = scmp.eq.s32.totalorder %s25, 2
    %p365 = por %p363, %p364
    %p366 = scmp.ne.s32.totalorder %s358, %s361
    %p367 = scmp.eq.s32.totalorder %s25, 0
    %p368 = por %p366, %p367
    %p369 = scmp.ne.s32.totalorder %s358, %s361
    %p370 = scmp.eq.s32.totalorder %s30, 2
    %p371 = por %p369, %p370
    %p372 = scmp.ne.s32.totalorder %s361, %s362
    %p373 = scmp.eq.s32.totalorder %s30, 0
    %p374 = por %p372, %p373
    %p375 = scmp.ne.s32.totalorder %s361, %s362
    %p376 = scmp.eq.s32.totalorder %s31, 2
    %p377 = por %p375, %p376
    %p379 = scmp.ne.s32.totalorder %s362, %s378
    %p380 = scmp.eq.s32.totalorder %s31, 0
    %p381 = por %p379, %p380
    %s382 = ssub.s32 %s25, %s32
    %p383 = scmp.eq.s32.totalorder %s382, 0
    %s385 = sadd.s32 %s384, 1
    %s386 = scalar_select %p383, %s384, %s385
    %p389 = pneg %p383
    %p390 = scmp.eq.s32.totalorder %s25, 2
    %p391 = por %p389, %p390
    %p392 = scmp.ne.s32.totalorder %s384, %s387
    %p393 = scmp.eq.s32.totalorder %s25, 0
    %p394 = por %p392, %p393
    %p395 = scmp.ne.s32.totalorder %s384, %s387
    %p396 = scmp.eq.s32.totalorder %s30, 2
    %p397 = por %p395, %p396
    %p398 = scmp.ne.s32.totalorder %s387, %s388
    %p399 = scmp.eq.s32.totalorder %s30, 0
    %p400 = por %p398, %p399
    %p401 = scmp.ne.s32.totalorder %s387, %s388
    %p402 = scmp.eq.s32.totalorder %s31, 2
    %p403 = por %p401, %p402
    %p405 = scmp.ne.s32.totalorder %s388, %s404
    %p406 = scmp.eq.s32.totalorder %s31, 0
    %p407 = por %p405, %p406
    %s409 = sadd.s32 %s408, 1
    %p412 = scmp.eq.s32.totalorder %s25, 2
    %p413 = scmp.ne.s32.totalorder %s408, %s410
    %p414 = scmp.eq.s32.totalorder %s25, 0
    %p415 = por %p413, %p414
    %p416 = scmp.ne.s32.totalorder %s408, %s410
    %p417 = scmp.eq.s32.totalorder %s30, 2
    %p418 = por %p416, %p417
    %p419 = scmp.ne.s32.totalorder %s410, %s411
    %p420 = scmp.eq.s32.totalorder %s30, 0
    %p421 = por %p419, %p420
    %p422 = scmp.ne.s32.totalorder %s410, %s411
    %p423 = scmp.eq.s32.totalorder %s31, 2
    %p424 = por %p422, %p423
    %p426 = scmp.ne.s32.totalorder %s411, %s425
    %p427 = scmp.eq.s32.totalorder %s31, 0
    %p428 = por %p426, %p427
    %s430 = sadd.s32 %s429, 1
    %p433 = scmp.eq.s32.totalorder %s25, 2
    %p434 = scmp.ne.s32.totalorder %s429, %s431
    %p435 = scmp.eq.s32.totalorder %s25, 0
    %p436 = por %p434, %p435
    %p437 = scmp.ne.s32.totalorder %s429, %s431
    %p438 = scmp.eq.s32.totalorder %s30, 2
    %p439 = por %p437, %p438
    %p440 = scmp.ne.s32.totalorder %s431, %s432
    %p441 = scmp.eq.s32.totalorder %s30, 0
    %p442 = por %p440, %p441
    %p443 = scmp.ne.s32.totalorder %s431, %s432
    %p444 = scmp.eq.s32.totalorder %s31, 2
    %p445 = por %p443, %p444
    %p447 = scmp.ne.s32.totalorder %s432, %s446
    %p448 = scmp.eq.s32.totalorder %s31, 0
    %p449 = por %p447, %p448
    %s451 = sadd.s32 %s450, 1
    %p454 = scmp.eq.s32.totalorder %s25, 2
    %p455 = scmp.ne.s32.totalorder %s450, %s452
    %p456 = scmp.eq.s32.totalorder %s25, 0
    %p457 = por %p455, %p456
    %p458 = scmp.ne.s32.totalorder %s450, %s452
    %p459 = scmp.eq.s32.totalorder %s30, 2
    %p460 = por %p458, %p459
    %p461 = scmp.ne.s32.totalorder %s452, %s453
    %p462 = scmp.eq.s32.totalorder %s30, 0
    %p463 = por %p461, %p462
    %p464 = scmp.ne.s32.totalorder %s452, %s453
    %p465 = scmp.eq.s32.totalorder %s31, 2
    %p466 = por %p464, %p465
    %p468 = scmp.ne.s32.totalorder %s453, %s467
    %p469 = scmp.eq.s32.totalorder %s31, 0
    %p470 = por %p468, %p469
    %s472 = sadd.s32 %s471, 1
    %p475 = scmp.eq.s32.totalorder %s25, 2
    %p476 = scmp.ne.s32.totalorder %s471, %s473
    %p477 = scmp.eq.s32.totalorder %s25, 0
    %p478 = por %p476, %p477
    %p479 = scmp.ne.s32.totalorder %s471, %s473
    %p480 = scmp.eq.s32.totalorder %s30, 2
    %p481 = por %p479, %p480
    %p482 = scmp.ne.s32.totalorder %s473, %s474
    %p483 = scmp.eq.s32.totalorder %s30, 0
    %p484 = por %p482, %p483
    %p485 = scmp.ne.s32.totalorder %s473, %s474
    %p486 = scmp.eq.s32.totalorder %s31, 2
    %p487 = por %p485, %p486
    %p489 = scmp.ne.s32.totalorder %s474, %s488
    %p490 = scmp.eq.s32.totalorder %s31, 0
    %p491 = por %p489, %p490
    %s493 = sadd.s32 %s492, 1
    %p496 = scmp.eq.s32.totalorder %s25, 2
    %p497 = scmp.ne.s32.totalorder %s492, %s494
    %p498 = scmp.eq.s32.totalorder %s25, 0
    %p499 = por %p497, %p498
    %p500 = scmp.ne.s32.totalorder %s492, %s494
    %p501 = scmp.eq.s32.totalorder %s30, 2
    %p502 = por %p500, %p501
    %p503 = scmp.ne.s32.totalorder %s494, %s495
    %p504 = scmp.eq.s32.totalorder %s30, 0
    %p505 = por %p503, %p504
    %p506 = scmp.ne.s32.totalorder %s494, %s495
    %p507 = scmp.eq.s32.totalorder %s31, 2
    %p508 = por %p506, %p507
    %p510 = scmp.ne.s32.totalorder %s495, %s509
    %p511 = scmp.eq.s32.totalorder %s31, 0
    %p512 = por %p510, %p511
    %p513 = scmp.le.s32.totalorder 1, %s25
    %p514 = scmp.lt.s32.totalorder %s25, 4
    %p515 = pnand %p513, %p514
    %p516 = pneg %p515
    // Predicated region
    $region9: #{heatformer_passive_forward.11} parent=5 // pred_check
      _
    $region10: #{heatformer_passive_forward.11} parent=5 // pred_check_branch
      %518 = sbr.rel (%p515) target = $region12
    $region11: #{heatformer_passive_forward.11} parent=5 // pred_region
      %s519 = ssub.s32 %s25, 1
      // Predicated region
      $region13: #{heatformer_passive_forward.11} parent=11 // pred_check
        %p520 = pneg %p46
      $region14: #{heatformer_passive_forward.11} parent=11 // pred_check_branch
        %522 = sbr.rel (%p520) target = $region16
      $region15: #{heatformer_passive_forward.11} parent=11 // pred_region
        _
      $region16: #{heatformer_passive_forward.11} parent=11 // pred_fallthru
        _
      // Predicated region
      $region17: #{heatformer_passive_forward.11} parent=11 // pred_check
        %p523 = pneg %p67
      $region18: #{heatformer_passive_forward.11} parent=11 // pred_check_branch
        %525 = sbr.rel (%p523) target = $region20
      $region19: #{heatformer_passive_forward.11} parent=11 // pred_region
        _
      $region20: #{heatformer_passive_forward.11} parent=11 // pred_fallthru
        _
      // Predicated region
      $region21: #{heatformer_passive_forward.11} parent=11 // pred_check
        %p526 = pneg %p88
      $region22: #{heatformer_passive_forward.11} parent=11 // pred_check_branch
        %528 = sbr.rel (%p526) target = $region24
      $region23: #{heatformer_passive_forward.11} parent=11 // pred_region
        _
      $region24: #{heatformer_passive_forward.11} parent=11 // pred_fallthru
        _
      // Predicated region
      $region25: #{heatformer_passive_forward.11} parent=11 // pred_check
        %p529 = pneg %p421
      $region26: #{heatformer_passive_forward.11} parent=11 // pred_check_branch
        %531 = sbr.rel (%p529) target = $region28
      $region27: #{heatformer_passive_forward.11} parent=11 // pred_region
        _
      $region28: #{heatformer_passive_forward.11} parent=11 // pred_fallthru
        _
      // Predicated region
      $region29: #{heatformer_passive_forward.11} parent=11 // pred_check
        %p532 = pneg %p442
      $region30: #{heatformer_passive_forward.11} parent=11 // pred_check_branch
        %534 = sbr.rel (%p532) target = $region32
      $region31: #{heatformer_passive_forward.11} parent=11 // pred_region
        _
      $region32: #{heatformer_passive_forward.11} parent=11 // pred_fallthru
        _
      // Predicated region
      $region33: #{heatformer_passive_forward.11} parent=11 // pred_check
        %p535 = pneg %p463
      $region34: #{heatformer_passive_forward.11} parent=11 // pred_check_branch
        %537 = sbr.rel (%p535) target = $region36
      $region35: #{heatformer_passive_forward.11} parent=11 // pred_region
        _
      $region36: #{heatformer_passive_forward.11} parent=11 // pred_fallthru
        _
      // Predicated region
      $region37: #{heatformer_passive_forward.11} parent=11 // pred_check
        %p538 = pneg %p484
      $region38: #{heatformer_passive_forward.11} parent=11 // pred_check_branch
        %540 = sbr.rel (%p538) target = $region40
      $region39: #{heatformer_passive_forward.11} parent=11 // pred_region
        _
      $region40: #{heatformer_passive_forward.11} parent=11 // pred_fallthru
        _
    $region12: #{heatformer_passive_forward.11} parent=5 // pred_fallthru
      _
    %p541 = scmp.lt.s32.totalorder %s25, 3
    // Predicated region
    $region41: #{heatformer_passive_forward.11} parent=5 // pred_check
      %p542 = pneg %p541
    $region42: #{heatformer_passive_forward.11} parent=5 // pred_check_branch
      %544 = sbr.rel (%p542) target = $region44
    $region43: #{heatformer_passive_forward.11} parent=5 // pred_region
      // Predicated region
      $region45: #{heatformer_passive_forward.11} parent=43 // pred_check
        %p545 = pneg %p108
      $region46: #{heatformer_passive_forward.11} parent=43 // pred_check_branch
        %547 = sbr.rel (%p545) target = $region48
      $region47: #{heatformer_passive_forward.11} parent=43 // pred_region
        %p548 = scmp.lt.s32.totalorder %s25, 2
        %s549 = scalar_select %p548, %s25, 2
        %s550 = scalar_lea.vmem %s3, %s549
      $region48: #{heatformer_passive_forward.11} parent=43 // pred_fallthru
        _
      // Predicated region
      $region49: #{heatformer_passive_forward.11} parent=43 // pred_check
        %p551 = pneg %p134
      $region50: #{heatformer_passive_forward.11} parent=43 // pred_check_branch
        %553 = sbr.rel (%p551) target = $region52
      $region51: #{heatformer_passive_forward.11} parent=43 // pred_region
        %p554 = scmp.lt.s32.totalorder %s25, 2
        %s555 = scalar_select %p554, %s25, 2
        %s556 = scalar_lea.vmem %s4, %s555
      $region52: #{heatformer_passive_forward.11} parent=43 // pred_fallthru
        _
      // Predicated region
      $region53: #{heatformer_passive_forward.11} parent=43 // pred_check
        %p557 = pneg %p160
      $region54: #{heatformer_passive_forward.11} parent=43 // pred_check_branch
        %559 = sbr.rel (%p557) target = $region56
      $region55: #{heatformer_passive_forward.11} parent=43 // pred_region
        %p560 = scmp.lt.s32.totalorder %s25, 2
        %s561 = scalar_select %p560, %s25, 2
        %s562 = smul.addr %s561, 4
        %s563 = smul.addr %s562, 4
        %s564 = scalar_lea.vmem %s5, %s563
      $region56: #{heatformer_passive_forward.11} parent=43 // pred_fallthru
        _
      // Predicated region
      $region57: #{heatformer_passive_forward.11} parent=43 // pred_check
        %p565 = pneg %p186
      $region58: #{heatformer_passive_forward.11} parent=43 // pred_check_branch
        %567 = sbr.rel (%p565) target = $region60
      $region59: #{heatformer_passive_forward.11} parent=43 // pred_region
        %p568 = scmp.lt.s32.totalorder %s25, 2
        %s569 = scalar_select %p568, %s25, 2
        %s570 = scalar_lea.vmem %s6, %s569
      $region60: #{heatformer_passive_forward.11} parent=43 // pred_fallthru
        _
      // Predicated region
      $region61: #{heatformer_passive_forward.11} parent=43 // pred_check
        %p571 = pneg %p212
      $region62: #{heatformer_passive_forward.11} parent=43 // pred_check_branch
        %573 = sbr.rel (%p571) target = $region64
      $region63: #{heatformer_passive_forward.11} parent=43 // pred_region
        %p574 = scmp.lt.s32.totalorder %s25, 2
        %s575 = scalar_select %p574, %s25, 2
        %s576 = smul.addr %s575, 4
        %s577 = smul.addr %s576, 4
        %s578 = scalar_lea.vmem %s7, %s577
      $region64: #{heatformer_passive_forward.11} parent=43 // pred_fallthru
        _
      // Predicated region
      $region65: #{heatformer_passive_forward.11} parent=43 // pred_check
        %p579 = pneg %p238
      $region66: #{heatformer_passive_forward.11} parent=43 // pred_check_branch
        %581 = sbr.rel (%p579) target = $region68
      $region67: #{heatformer_passive_forward.11} parent=43 // pred_region
        %p582 = scmp.lt.s32.totalorder %s25, 2
        %s583 = scalar_select %p582, %s25, 2
        %s584 = scalar_lea.vmem %s8, %s583
      $region68: #{heatformer_passive_forward.11} parent=43 // pred_fallthru
        _
      // Predicated region
      $region69: #{heatformer_passive_forward.11} parent=43 // pred_check
        %p585 = pneg %p264
      $region70: #{heatformer_passive_forward.11} parent=43 // pred_check_branch
        %587 = sbr.rel (%p585) target = $region72
      $region71: #{heatformer_passive_forward.11} parent=43 // pred_region
        %p588 = scmp.lt.s32.totalorder %s25, 2
        %s589 = scalar_select %p588, %s25, 2
        %s590 = scalar_lea.vmem %s9, %s589
      $region72: #{heatformer_passive_forward.11} parent=43 // pred_fallthru
        _
      // Predicated region
      $region73: #{heatformer_passive_forward.11} parent=43 // pred_check
        %p591 = pneg %p290
      $region74: #{heatformer_passive_forward.11} parent=43 // pred_check_branch
        %593 = sbr.rel (%p591) target = $region76
      $region75: #{heatformer_passive_forward.11} parent=43 // pred_region
        %p594 = scmp.lt.s32.totalorder %s25, 2
        %s595 = scalar_select %p594, %s25, 2
        %s596 = scalar_lea.vmem %s10, %s595
      $region76: #{heatformer_passive_forward.11} parent=43 // pred_fallthru
        _
      // Predicated region
      $region77: #{heatformer_passive_forward.11} parent=43 // pred_check
        %p597 = pneg %p316
      $region78: #{heatformer_passive_forward.11} parent=43 // pred_check_branch
        %599 = sbr.rel (%p597) target = $region80
      $region79: #{heatformer_passive_forward.11} parent=43 // pred_region
        %p600 = scmp.lt.s32.totalorder %s25, 2
        %s601 = scalar_select %p600, %s25, 2
        %s602 = smul.addr %s601, 4
        %s603 = smul.addr %s602, 4
        %s604 = scalar_lea.vmem %s11, %s603
      $region80: #{heatformer_passive_forward.11} parent=43 // pred_fallthru
        _
      // Predicated region
      $region81: #{heatformer_passive_forward.11} parent=43 // pred_check
        %p605 = pneg %p342
      $region82: #{heatformer_passive_forward.11} parent=43 // pred_check_branch
        %607 = sbr.rel (%p605) target = $region84
      $region83: #{heatformer_passive_forward.11} parent=43 // pred_region
        %p608 = scmp.lt.s32.totalorder %s25, 2
        %s609 = scalar_select %p608, %s25, 2
        %s610 = scalar_lea.vmem %s12, %s609
      $region84: #{heatformer_passive_forward.11} parent=43 // pred_fallthru
        _
      // Predicated region
      $region85: #{heatformer_passive_forward.11} parent=43 // pred_check
        %p611 = pneg %p368
      $region86: #{heatformer_passive_forward.11} parent=43 // pred_check_branch
        %613 = sbr.rel (%p611) target = $region88
      $region87: #{heatformer_passive_forward.11} parent=43 // pred_region
        %p614 = scmp.lt.s32.totalorder %s25, 2
        %s615 = scalar_select %p614, %s25, 2
        %s616 = smul.addr %s615, 16
        %s617 = smul.addr %s616, 4
        %s618 = scalar_lea.vmem %s13, %s617
      $region88: #{heatformer_passive_forward.11} parent=43 // pred_fallthru
        _
      // Predicated region
      $region89: #{heatformer_passive_forward.11} parent=43 // pred_check
        %p619 = pneg %p394
      $region90: #{heatformer_passive_forward.11} parent=43 // pred_check_branch
        %621 = sbr.rel (%p619) target = $region92
      $region91: #{heatformer_passive_forward.11} parent=43 // pred_region
        %p622 = scmp.lt.s32.totalorder %s25, 2
        %s623 = scalar_select %p622, %s25, 2
        %s624 = scalar_lea.vmem %s14, %s623
      $region92: #{heatformer_passive_forward.11} parent=43 // pred_fallthru
        _
    $region44: #{heatformer_passive_forward.11} parent=5 // pred_fallthru
      _
    %p625 = scmp.le.s32.totalorder 1, %s25
    %p626 = scmp.lt.s32.totalorder %s25, 4
    %p627 = pnand %p625, %p626
    %p628 = pneg %p627
    // Predicated region
    $region93: #{heatformer_passive_forward.11} parent=5 // pred_check
      _
    $region94: #{heatformer_passive_forward.11} parent=5 // pred_check_branch
      %630 = sbr.rel (%p627) target = $region96
    $region95: #{heatformer_passive_forward.11} parent=5 // pred_region
      %s631 = ssub.s32 %s25, 1
      %p632 = pneg %p46
      %p633 = pneg %p43
      %p634 = pneg %p67
      %p635 = pneg %p64
      %p636 = pneg %p88
      %p637 = pneg %p85
      %p638 = scmp.lt.s32.totalorder %s30, 2
      %s639 = scalar_select %p638, %s30, 2
      %s640 = scalar_lea.vmem %s3, %s639
      %p641 = pneg %p114
      %p642 = pneg %p111
      %p643 = scmp.lt.s32.totalorder %s30, 2
      %s644 = scalar_select %p643, %s30, 2
      %s645 = scalar_lea.vmem %s4, %s644
      %p646 = pneg %p140
      %p647 = pneg %p137
      %p648 = scmp.lt.s32.totalorder %s30, 2
      %s649 = scalar_select %p648, %s30, 2
      %s650 = smul.addr %s649, 4
      %s651 = smul.addr %s650, 4
      %s652 = scalar_lea.vmem %s5, %s651
      %p653 = pneg %p166
      %p654 = pneg %p163
      %p655 = scmp.lt.s32.totalorder %s30, 2
      %s656 = scalar_select %p655, %s30, 2
      %s657 = scalar_lea.vmem %s6, %s656
      %p658 = pneg %p192
      %p659 = pneg %p189
      %p660 = scmp.lt.s32.totalorder %s30, 2
      %s661 = scalar_select %p660, %s30, 2
      %s662 = smul.addr %s661, 4
      %s663 = smul.addr %s662, 4
      %s664 = scalar_lea.vmem %s7, %s663
      %p665 = pneg %p218
      %p666 = pneg %p215
      %p667 = scmp.lt.s32.totalorder %s30, 2
      %s668 = scalar_select %p667, %s30, 2
      %s669 = scalar_lea.vmem %s8, %s668
      %p670 = pneg %p244
      %p671 = pneg %p241
      %p672 = scmp.lt.s32.totalorder %s30, 2
      %s673 = scalar_select %p672, %s30, 2
      %s674 = scalar_lea.vmem %s9, %s673
      %p675 = pneg %p270
      %p676 = pneg %p267
      %p677 = scmp.lt.s32.totalorder %s30, 2
      %s678 = scalar_select %p677, %s30, 2
      %s679 = scalar_lea.vmem %s10, %s678
      %p680 = pneg %p296
      %p681 = pneg %p293
      %p682 = scmp.lt.s32.totalorder %s30, 2
      %s683 = scalar_select %p682, %s30, 2
      %s684 = smul.addr %s683, 4
      %s685 = smul.addr %s684, 4
      %s686 = scalar_lea.vmem %s11, %s685
      %p687 = pneg %p322
      %p688 = pneg %p319
      %p689 = scmp.lt.s32.totalorder %s30, 2
      %s690 = scalar_select %p689, %s30, 2
      %s691 = scalar_lea.vmem %s12, %s690
      %p692 = pneg %p348
      %p693 = pneg %p345
      %p694 = scmp.lt.s32.totalorder %s30, 2
      %s695 = scalar_select %p694, %s30, 2
      %s696 = smul.addr %s695, 16
      %s697 = smul.addr %s696, 4
      %s698 = scalar_lea.vmem %s13, %s697
      %p699 = pneg %p374
      %p700 = pneg %p371
      %p701 = scmp.lt.s32.totalorder %s30, 2
      %s702 = scalar_select %p701, %s30, 2
      %s703 = scalar_lea.vmem %s14, %s702
      %p704 = pneg %p400
      %p705 = pneg %p397
      %p706 = pneg %p421
      %p707 = pneg %p418
      %p708 = pneg %p442
      %p709 = pneg %p439
      %p710 = pneg %p463
      %p711 = pneg %p460
      %p712 = pneg %p484
      %p713 = pneg %p481
      %p714 = pneg %p505
      %p715 = pneg %p502
      %p716 = scmp.lt.s32.totalorder %s30, 2
      %s717 = scalar_select %p716, %s30, 2
      %s718 = scalar_lea.vmem %s3, %s717
      %p719 = scmp.lt.s32.totalorder %s30, 2
      %s720 = scalar_select %p719, %s30, 2
      %s721 = scalar_lea.vmem %s4, %s720
      %p722 = scmp.lt.s32.totalorder %s30, 2
      %s723 = scalar_select %p722, %s30, 2
      %s724 = smul.addr %s723, 4
      %s725 = smul.addr %s724, 4
      %s726 = scalar_lea.vmem %s5, %s725
      %p727 = scmp.lt.s32.totalorder %s30, 2
      %s728 = scalar_select %p727, %s30, 2
      %s729 = scalar_lea.vmem %s6, %s728
      %p730 = scmp.lt.s32.totalorder %s30, 2
      %s731 = scalar_select %p730, %s30, 2
      %s732 = smul.addr %s731, 4
      %s733 = smul.addr %s732, 4
      %s734 = scalar_lea.vmem %s7, %s733
      %p735 = scmp.lt.s32.totalorder %s30, 2
      %s736 = scalar_select %p735, %s30, 2
      %s737 = scalar_lea.vmem %s8, %s736
      %p738 = scmp.lt.s32.totalorder %s30, 2
      %s739 = scalar_select %p738, %s30, 2
      %s740 = scalar_lea.vmem %s9, %s739
      %p741 = scmp.lt.s32.totalorder %s30, 2
      %s742 = scalar_select %p741, %s30, 2
      %s743 = scalar_lea.vmem %s10, %s742
      %p744 = scmp.lt.s32.totalorder %s30, 2
      %s745 = scalar_select %p744, %s30, 2
      %s746 = smul.addr %s745, 4
      %s747 = smul.addr %s746, 4
      %s748 = scalar_lea.vmem %s11, %s747
      %p749 = scmp.lt.s32.totalorder %s30, 2
      %s750 = scalar_select %p749, %s30, 2
      %s751 = scalar_lea.vmem %s12, %s750
      %p752 = scmp.lt.s32.totalorder %s30, 2
      %s753 = scalar_select %p752, %s30, 2
      %s754 = smul.addr %s753, 16
      %s755 = smul.addr %s754, 4
      %s756 = scalar_lea.vmem %s13, %s755
      %p757 = scmp.lt.s32.totalorder %s30, 2
      %s758 = scalar_select %p757, %s30, 2
      %s759 = scalar_lea.vmem %s14, %s758
      %p761 = scmp.eq.s32.totalorder %s30, 0
      // Predicated region
      $region97: #{heatformer_passive_forward.11} parent=95 // pred_check
        %p762 = pneg %p761
      $region98: #{heatformer_passive_forward.11} parent=95 // pred_check_branch
        %764 = sbr.rel (%p762) target = $region100
      $region99: #{heatformer_passive_forward.11} parent=95 // pred_region
        %v765 = vld [vmem:[%s0] sm:$0xff]
        %v766 = vld [vmem:[%s0 + $0x8] sm:$0xff]
        %v767 = vld [vmem:[%s0 + $0x10] sm:$0xff]
        %v768 = vld [vmem:[%s0 + $0x18] sm:$0xff]
        %vm769 = vcmask 261120
        %770 = vst.msk [vmem:[#allocation2] sm:$0xff] %vm769, %v765
        %771 = vst.msk [vmem:[#allocation2 + $0x8] sm:$0xff] %vm769, %v766
        %772 = vst.msk [vmem:[#allocation2 + $0x10] sm:$0xff] %vm769, %v767
        %773 = vst.msk [vmem:[#allocation2 + $0x18] sm:$0xff] %vm769, %v768
      $region100: #{heatformer_passive_forward.11} parent=95 // pred_fallthru
        _
      %v774 = vld [vmem:[#allocation2] sm:$0xff]
      %v775 = vld [vmem:[#allocation2 + $0x8] sm:$0xff]
      %v776 = vld [vmem:[#allocation2 + $0x10] sm:$0xff]
      %v777 = vld [vmem:[#allocation2 + $0x18] sm:$0xff]
      %v778 = vld [vmem:[%s718] sm:$0x1]
      %v779 = vld [vmem:[%s721] sm:$0x1]
      %vm780 = vcmask 261120
      %v781 = vsel %vm780, %v774, 0.0
      %782 = vadd.xlane.f32.xlu0 %v781
      %v783 = vpop.xlane.xlu0 %782
      %v784 = vsel %vm780, %v775, 0.0
      %785 = vadd.xlane.f32.xlu0 %v784
      %v786 = vpop.xlane.xlu0 %785
      %v787 = vsel %vm780, %v776, 0.0
      %788 = vadd.xlane.f32.xlu0 %v787
      %v789 = vpop.xlane.xlu0 %788
      %v790 = vsel %vm780, %v777, 0.0
      %791 = vadd.xlane.f32.xlu0 %v790
      %v792 = vpop.xlane.xlu0 %791
      %v793 = vrcp.pop 32.0
      %v794 = vmul.f32 %v783, %v793
      %v795 = vmul.f32 %v786, %v793
      %v796 = vmul.f32 %v789, %v793
      %v797 = vmul.f32 %v792, %v793
      %v798 = vsub.f32 %v774, %v794
      %v799 = vsub.f32 %v775, %v795
      %v800 = vsub.f32 %v776, %v796
      %v801 = vsub.f32 %v777, %v797
      %v802 = vmul.f32 %v798, %v798
      %v803 = vmul.f32 %v799, %v799
      %v804 = vmul.f32 %v800, %v800
      %v805 = vmul.f32 %v801, %v801
      %v806 = vsel %vm780, %v802, 0.0
      %807 = vadd.xlane.f32.xlu0 %v806
      %v808 = vpop.xlane.xlu0 %807
      %v809 = vsel %vm780, %v803, 0.0
      %810 = vadd.xlane.f32.xlu0 %v809
      %v811 = vpop.xlane.xlu0 %810
      %v812 = vsel %vm780, %v804, 0.0
      %813 = vadd.xlane.f32.xlu0 %v812
      %v814 = vpop.xlane.xlu0 %813
      %v815 = vsel %vm780, %v805, 0.0
      %816 = vadd.xlane.f32.xlu0 %v815
      %v817 = vpop.xlane.xlu0 %816
      %v818 = vmul.f32 %v808, %v793
      %v819 = vmul.f32 %v811, %v793
      %v820 = vmul.f32 %v814, %v793
      %v821 = vmul.f32 %v817, %v793
      %v822 = vadd.f32 %v818, 1e-05
      %v823 = vadd.f32 %v819, 1e-05
      %v824 = vadd.f32 %v820, 1e-05
      %v825 = vadd.f32 %v821, 1e-05
      %v826 = vrsqrt.pop %v822
      %v827 = vrsqrt.pop %v823
      %v828 = vrsqrt.pop %v824
      %v829 = vrsqrt.pop %v825
      %v830 = vmul.f32 %v798, %v826
      %v831 = vmul.f32 %v799, %v827
      %v832 = vmul.f32 %v800, %v828
      %v833 = vmul.f32 %v801, %v829
      %v835 = vlaneseq
      %v836 = vshrl.u32 %v835, 7
      %v837 = vsub.s32 0, %v836
      %v838 = vrot.slane %v778, %v837
      %v840 = vmul.f32 %v830, %v838
      %v841 = vmul.f32 %v831, %v838
      %v842 = vmul.f32 %v832, %v838
      %v843 = vmul.f32 %v833, %v838
      %v845 = vlaneseq
      %v846 = vshrl.u32 %v845, 7
      %v847 = vsub.s32 0, %v846
      %v848 = vrot.slane %v779, %v847
      %v850 = vadd.f32 %v840, %v848
      %v851 = vadd.f32 %v841, %v848
      %v852 = vadd.f32 %v842, %v848
      %v853 = vadd.f32 %v843, %v848
      %v854 = vld [vmem:[%s726] sm:$0xf]
      %v855 = vld [vmem:[%s726 + $0x4] sm:$0xf]
      %v856 = vld [vmem:[%s726 + $0x8] sm:$0xf]
      %v857 = vld [vmem:[%s726 + $0xc] sm:$0xf]
      %v858 = vpack.c.bf16 %v851, %v850
      %v859 = vpack.c.bf16 %v853, %v852
      %v860 = vld [vmem:[%s729] sm:$0x1]
      %v862 = vlaneseq
      %v863 = vshrl.u32 %v862, 7
      %v864 = vsub.s32 0, %v863
      %v865 = vrot.slane %v860, %v864
      %v871 = vunpack.c.l.b16 %v854
      %v872 = vunpack.c.l.b16 %v855
      %v873 = vunpack.c.l.b16 %v856
      %v874 = vunpack.c.l.b16 %v857
      %v875 = vpack.c.b16 %v872, %v871
      %v876 = vpack.c.b16 %v874, %v873
      %v880 = vsel %vm780, %v858, 0
      %v883 = vsel %vm780, %v859, 0
      %885 = vmatprep.subr.bf16.mxu0 0
      %886 = vmatpush1.bf16.msra.mxu0 %v875
      %887 = vmatprep.subr.bf16.mxu0 0
      %888 = vmatpush1.bf16.msra.mxu0 %v876
      %889 = vmatprep.subr.bf16.mxu0 0
      %890 = vmatpush1.bf16.msra.mxu0 0
      %891 = vmatprep.subr.bf16.mxu0 0
      %892 = vmatpush1.bf16.msra.mxu0 0
      %893 = vmatprep.subr.bf16.mxu0 0
      %894 = vmatpush1.bf16.msra.mxu0 0
      %895 = vmatprep.subr.bf16.mxu0 0
      %896 = vmatpush1.bf16.msra.mxu0 0
      %897 = vmatprep.subr.bf16.mxu0 0
      %898 = vmatpush1.bf16.msra.mxu0 0
      %899 = vmatprep.subr.bf16.mxu0 0
      %900 = vmatpush1.bf16.msra.mxu0 0
      %901 = vmatprep.subr.bf16.mxu0 0
      %902 = vmatpush1.bf16.msra.mxu0 0
      %903 = vmatprep.subr.bf16.mxu0 0
      %904 = vmatpush1.bf16.msra.mxu0 0
      %905 = vmatprep.subr.bf16.mxu0 0
      %906 = vmatpush1.bf16.msra.mxu0 0
      %907 = vmatprep.subr.bf16.mxu0 0
      %908 = vmatpush1.bf16.msra.mxu0 0
      %909 = vmatprep.subr.bf16.mxu0 0
      %910 = vmatpush1.bf16.msra.mxu0 0
      %911 = vmatprep.subr.bf16.mxu0 0
      %912 = vmatpush1.bf16.msra.mxu0 0
      %913 = vmatprep.subr.bf16.mxu0 0
      %914 = vmatpush1.bf16.msra.mxu0 0
      %915 = vmatprep.subr.bf16.mxu0 0
      %916 = vmatpush1.bf16.msra.mxu0 0
      %917 = vmatprep.mubr.bf16.mxu0 0
      %918 = vmatmul.mubr.bf16.gmra.mrb[0].mxu0 %v880
      %v919 = vpop.f32.mrb[0].mxu0
      %v920 = vadd.f32 %v865, %v919
      %v921 = vpop.f32.mrb[0].mxu0
      %v922 = vpop.f32.mrb[0].mxu0
      %v923 = vadd.f32 %v865, %v922
      %v924 = vpop.f32.mrb[0].mxu0
      %925 = vmatprep.mubr.bf16.mxu0 0
      %926 = vmatmul.mubr.bf16.gmra.mrb[0].mxu0 %v883
      %v927 = vpop.f32.mrb[0].mxu0
      %v928 = vadd.f32 %v865, %v927
      %v929 = vpop.f32.mrb[0].mxu0
      %v930 = vpop.f32.mrb[0].mxu0
      %v931 = vadd.f32 %v865, %v930
      %v932 = vpop.f32.mrb[0].mxu0
      %933 = vdwg.mxu0
      %v934 = vld [vmem:[%s2] sm:$0xff]
      %v935 = vld [vmem:[%s2 + $0x8] sm:$0xff]
      %v936 = vld [vmem:[%s2 + $0x10] sm:$0xff]
      %v937 = vld [vmem:[%s2 + $0x18] sm:$0xff]
      %v938 = vpack.c.bf16 %v923, %v920
      %v939 = vpack.c.bf16 %v931, %v928
      %942 = vrot.lane.b32.xlu0 %v938, 96
      %v943 = vpop.permute.xlu0 %942
      %944 = vrot.lane.b32.xlu0 %v939, 96
      %v945 = vpop.permute.xlu0 %944
      %vm946 = vcmask 64512
      %v948 = vsel %vm946, %v938, 0
      %v951 = vsel %vm946, %v939, 0
      %v954 = vsel %vm946, %v943, 0
      %v957 = vsel %vm946, %v945, 0
      %959 = vmatprep.subr.bf16.mxu0 0
      %960 = vmatpush1.bf16.xpose.msra.mxu0 %v954
      %961 = vmatprep.subr.bf16.mxu0 0
      %962 = vmatpush1.bf16.xpose.msra.mxu0 %v957
      %963 = vmatprep.subr.bf16.mxu0 0
      %964 = vmatpush1.bf16.xpose.msra.mxu0 0
      %965 = vmatprep.subr.bf16.mxu0 0
      %966 = vmatpush1.bf16.xpose.msra.mxu0 0
      %967 = vmatprep.subr.bf16.mxu0 0
      %968 = vmatpush1.bf16.xpose.msra.mxu0 0
      %969 = vmatprep.subr.bf16.mxu0 0
      %970 = vmatpush1.bf16.xpose.msra.mxu0 0
      %971 = vmatprep.subr.bf16.mxu0 0
      %972 = vmatpush1.bf16.xpose.msra.mxu0 0
      %973 = vmatprep.subr.bf16.mxu0 0
      %974 = vmatpush1.bf16.xpose.msra.mxu0 0
      %975 = vmatprep.subr.bf16.mxu0 0
      %976 = vmatpush1.bf16.xpose.msra.mxu0 0
      %977 = vmatprep.subr.bf16.mxu0 0
      %978 = vmatpush1.bf16.xpose.msra.mxu0 0
      %979 = vmatprep.subr.bf16.mxu0 0
      %980 = vmatpush1.bf16.xpose.msra.mxu0 0
      %981 = vmatprep.subr.bf16.mxu0 0
      %982 = vmatpush1.bf16.xpose.msra.mxu0 0
      %983 = vmatprep.subr.bf16.mxu0 0
      %984 = vmatpush1.bf16.xpose.msra.mxu0 0
      %985 = vmatprep.subr.bf16.mxu0 0
      %986 = vmatpush1.bf16.xpose.msra.mxu0 0
      %987 = vmatprep.subr.bf16.mxu0 0
      %988 = vmatpush1.bf16.xpose.msra.mxu0 0
      %989 = vmatprep.subr.bf16.mxu0 0
      %990 = vmatpush1.bf16.xpose.msra.mxu0 0
      %991 = vmatprep.mubr.bf16.mxu0 0
      %992 = vmatmul.mubr.bf16.gmra.mrb[0].mxu0 %v948
      %v993 = vpop.f32.mrb[0].mxu0
      %v994 = vadd.f32 0.0, %v993
      %v995 = vpop.f32.mrb[0].mxu0
      %v996 = vpop.f32.mrb[0].mxu0
      %v997 = vadd.f32 0.0, %v996
      %v998 = vpop.f32.mrb[0].mxu0
      %999 = vmatprep.mubr.bf16.mxu0 0
      %1000 = vmatmul.mubr.bf16.gmra.mrb[0].mxu0 %v951
      %v1001 = vpop.f32.mrb[0].mxu0
      %v1002 = vadd.f32 0.0, %v1001
      %v1003 = vpop.f32.mrb[0].mxu0
      %v1004 = vpop.f32.mrb[0].mxu0
      %v1005 = vadd.f32 0.0, %v1004
      %v1006 = vpop.f32.mrb[0].mxu0
      %1007 = vdwg.mxu0
      %v1008 = vmul.f32 %v994, 0.35355338
      %v1009 = vmul.f32 %v997, 0.35355338
      %v1010 = vmul.f32 %v1002, 0.35355338
      %v1011 = vmul.f32 %v1005, 0.35355338
      %v1012 = vadd.f32 %v1008, %v934
      %v1013 = vadd.f32 %v1009, %v935
      %v1014 = vadd.f32 %v1010, %v936
      %v1015 = vadd.f32 %v1011, %v937
      %v1016 = vsel %vm780, %v1012, -inf
      %1017 = vmax.xlane.f32.xlu0 %v1016
      %v1018 = vpop.xlane.xlu0 %1017
      %v1019 = vsel %vm780, %v1013, -inf
      %1020 = vmax.xlane.f32.xlu0 %v1019
      %v1021 = vpop.xlane.xlu0 %1020
      %v1022 = vsel %vm780, %v1014, -inf
      %1023 = vmax.xlane.f32.xlu0 %v1022
      %v1024 = vpop.xlane.xlu0 %1023
      %v1025 = vsel %vm780, %v1015, -inf
      %1026 = vmax.xlane.f32.xlu0 %v1025
      %v1027 = vpop.xlane.xlu0 %1026
      %v1028 = vsub.f32 %v1012, %v1018
      %v1029 = vsub.f32 %v1013, %v1021
      %v1030 = vsub.f32 %v1014, %v1024
      %v1031 = vsub.f32 %v1015, %v1027
      %v1032 = vmul.f32 %v1028, 1.442695
      %v1033 = vpow.pop %v1032
      %v1034 = vmul.f32 %v1029, 1.442695
      %v1035 = vpow.pop %v1034
      %v1036 = vmul.f32 %v1030, 1.442695
      %v1037 = vpow.pop %v1036
      %v1038 = vmul.f32 %v1031, 1.442695
      %v1039 = vpow.pop %v1038
      %v1040 = vsel %vm780, %v1033, 0.0
      %1041 = vadd.xlane.f32.xlu0 %v1040
      %v1042 = vpop.xlane.xlu0 %1041
      %v1043 = vsel %vm780, %v1035, 0.0
      %1044 = vadd.xlane.f32.xlu0 %v1043
      %v1045 = vpop.xlane.xlu0 %1044
      %v1046 = vsel %vm780, %v1037, 0.0
      %1047 = vadd.xlane.f32.xlu0 %v1046
      %v1048 = vpop.xlane.xlu0 %1047
      %v1049 = vsel %vm780, %v1039, 0.0
      %1050 = vadd.xlane.f32.xlu0 %v1049
      %v1051 = vpop.xlane.xlu0 %1050
      %v1052 = vrcp.pop %v1042
      %v1053 = vrcp.pop %v1045
      %v1054 = vrcp.pop %v1048
      %v1055 = vrcp.pop %v1051
      %v1056 = vmul.f32 %v1033, %v1052
      %v1057 = vmul.f32 %v1035, %v1053
      %v1058 = vmul.f32 %v1037, %v1054
      %v1059 = vmul.f32 %v1039, %v1055
      %v1060 = vpack.c.bf16 %v1057, %v1056
      %v1061 = vpack.c.bf16 %v1059, %v1058
      %1062 = vrot.lane.b32.xlu0 %v938, 64
      %v1063 = vpop.permute.xlu0 %1062
      %1064 = vrot.lane.b32.xlu0 %v939, 64
      %v1065 = vpop.permute.xlu0 %1064
      %v1069 = vsel %vm780, %v1060, 0
      %v1072 = vsel %vm780, %v1061, 0
      %1074 = vmatprep.subr.bf16.mxu0 0
      %1075 = vmatpush1.bf16.msra.mxu0 %v1063
      %1076 = vmatprep.subr.bf16.mxu0 0
      %1077 = vmatpush1.bf16.msra.mxu0 %v1065
      %1078 = vmatprep.subr.bf16.mxu0 0
      %1079 = vmatpush1.bf16.msra.mxu0 0
      %1080 = vmatprep.subr.bf16.mxu0 0
      %1081 = vmatpush1.bf16.msra.mxu0 0
      %1082 = vmatprep.subr.bf16.mxu0 0
      %1083 = vmatpush1.bf16.msra.mxu0 0
      %1084 = vmatprep.subr.bf16.mxu0 0
      %1085 = vmatpush1.bf16.msra.mxu0 0
      %1086 = vmatprep.subr.bf16.mxu0 0
      %1087 = vmatpush1.bf16.msra.mxu0 0
      %1088 = vmatprep.subr.bf16.mxu0 0
      %1089 = vmatpush1.bf16.msra.mxu0 0
      %1090 = vmatprep.subr.bf16.mxu0 0
      %1091 = vmatpush1.bf16.msra.mxu0 0
      %1092 = vmatprep.subr.bf16.mxu0 0
      %1093 = vmatpush1.bf16.msra.mxu0 0
      %1094 = vmatprep.subr.bf16.mxu0 0
      %1095 = vmatpush1.bf16.msra.mxu0 0
      %1096 = vmatprep.subr.bf16.mxu0 0
      %1097 = vmatpush1.bf16.msra.mxu0 0
      %1098 = vmatprep.subr.bf16.mxu0 0
      %1099 = vmatpush1.bf16.msra.mxu0 0
      %1100 = vmatprep.subr.bf16.mxu0 0
      %1101 = vmatpush1.bf16.msra.mxu0 0
      %1102 = vmatprep.subr.bf16.mxu0 0
      %1103 = vmatpush1.bf16.msra.mxu0 0
      %1104 = vmatprep.subr.bf16.mxu0 0
      %1105 = vmatpush1.bf16.msra.mxu0 0
      %1106 = vmatprep.mubr.bf16.mxu0 0
      %1107 = vmatmul.mubr.bf16.gmra.mrb[0].mxu0 %v1069
      %v1108 = vpop.f32.mrb[0].mxu0
      %v1109 = vadd.f32 0.0, %v1108
      %v1110 = vpop.f32.mrb[0].mxu0
      %v1111 = vpop.f32.mrb[0].mxu0
      %v1112 = vadd.f32 0.0, %v1111
      %v1113 = vpop.f32.mrb[0].mxu0
      %1114 = vmatprep.mubr.bf16.mxu0 0
      %1115 = vmatmul.mubr.bf16.gmra.mrb[0].mxu0 %v1072
      %v1116 = vpop.f32.mrb[0].mxu0
      %v1117 = vadd.f32 0.0, %v1116
      %v1118 = vpop.f32.mrb[0].mxu0
      %v1119 = vpop.f32.mrb[0].mxu0
      %v1120 = vadd.f32 0.0, %v1119
      %v1121 = vpop.f32.mrb[0].mxu0
      %1122 = vdwg.mxu0
      %1123 = vrot.lane.b32.xlu0 %v938, 120
      %v1124 = vpop.permute.xlu0 %1123
      %1125 = vrot.lane.b32.xlu0 %v939, 120
      %v1126 = vpop.permute.xlu0 %1125
      %1127 = vrot.lane.b32.xlu0 %v938, 88
      %v1128 = vpop.permute.xlu0 %1127
      %1129 = vrot.lane.b32.xlu0 %v939, 88
      %v1130 = vpop.permute.xlu0 %1129
      %v1132 = vsel %vm946, %v1124, 0
      %v1135 = vsel %vm946, %v1126, 0
      %v1138 = vsel %vm946, %v1128, 0
      %v1141 = vsel %vm946, %v1130, 0
      %1143 = vmatprep.subr.bf16.mxu0 0
      %1144 = vmatpush1.bf16.xpose.msra.mxu0 %v1138
      %1145 = vmatprep.subr.bf16.mxu0 0
      %1146 = vmatpush1.bf16.xpose.msra.mxu0 %v1141
      %1147 = vmatprep.subr.bf16.mxu0 0
      %1148 = vmatpush1.bf16.xpose.msra.mxu0 0
      %1149 = vmatprep.subr.bf16.mxu0 0
      %1150 = vmatpush1.bf16.xpose.msra.mxu0 0
      %1151 = vmatprep.subr.bf16.mxu0 0
      %1152 = vmatpush1.bf16.xpose.msra.mxu0 0
      %1153 = vmatprep.subr.bf16.mxu0 0
      %1154 = vmatpush1.bf16.xpose.msra.mxu0 0
      %1155 = vmatprep.subr.bf16.mxu0 0
      %1156 = vmatpush1.bf16.xpose.msra.mxu0 0
      %1157 = vmatprep.subr.bf16.mxu0 0
      %1158 = vmatpush1.bf16.xpose.msra.mxu0 0
      %1159 = vmatprep.subr.bf16.mxu0 0
      %1160 = vmatpush1.bf16.xpose.msra.mxu0 0
      %1161 = vmatprep.subr.bf16.mxu0 0
      %1162 = vmatpush1.bf16.xpose.msra.mxu0 0
      %1163 = vmatprep.subr.bf16.mxu0 0
      %1164 = vmatpush1.bf16.xpose.msra.mxu0 0
      %1165 = vmatprep.subr.bf16.mxu0 0
      %1166 = vmatpush1.bf16.xpose.msra.mxu0 0
      %1167 = vmatprep.subr.bf16.mxu0 0
      %1168 = vmatpush1.bf16.xpose.msra.mxu0 0
      %1169 = vmatprep.subr.bf16.mxu0 0
      %1170 = vmatpush1.bf16.xpose.msra.mxu0 0
      %1171 = vmatprep.subr.bf16.mxu0 0
      %1172 = vmatpush1.bf16.xpose.msra.mxu0 0
      %1173 = vmatprep.subr.bf16.mxu0 0
      %1174 = vmatpush1.bf16.xpose.msra.mxu0 0
      %1175 = vmatprep.mubr.bf16.mxu0 0
      %1176 = vmatmul.mubr.bf16.gmra.mrb[0].mxu0 %v1132
      %v1177 = vpop.f32.mrb[0].mxu0
      %v1178 = vadd.f32 0.0, %v1177
      %v1179 = vpop.f32.mrb[0].mxu0
      %v1180 = vpop.f32.mrb[0].mxu0
      %v1181 = vadd.f32 0.0, %v1180
      %v1182 = vpop.f32.mrb[0].mxu0
      %1183 = vmatprep.mubr.bf16.mxu0 0
      %1184 = vmatmul.mubr.bf16.gmra.mrb[0].mxu0 %v1135
      %v1185 = vpop.f32.mrb[0].mxu0
      %v1186 = vadd.f32 0.0, %v1185
      %v1187 = vpop.f32.mrb[0].mxu0
      %v1188 = vpop.f32.mrb[0].mxu0
      %v1189 = vadd.f32 0.0, %v1188
      %v1190 = vpop.f32.mrb[0].mxu0
      %1191 = vdwg.mxu0
      %v1192 = vmul.f32 %v1178, 0.35355338
      %v1193 = vmul.f32 %v1181, 0.35355338
      %v1194 = vmul.f32 %v1186, 0.35355338
      %v1195 = vmul.f32 %v1189, 0.35355338
      %v1196 = vadd.f32 %v1192, %v934
      %v1197 = vadd.f32 %v1193, %v935
      %v1198 = vadd.f32 %v1194, %v936
      %v1199 = vadd.f32 %v1195, %v937
      %v1200 = vsel %vm780, %v1196, -inf
      %1201 = vmax.xlane.f32.xlu0 %v1200
      %v1202 = vpop.xlane.xlu0 %1201
      %v1203 = vsel %vm780, %v1197, -inf
      %1204 = vmax.xlane.f32.xlu0 %v1203
      %v1205 = vpop.xlane.xlu0 %1204
      %v1206 = vsel %vm780, %v1198, -inf
      %1207 = vmax.xlane.f32.xlu0 %v1206
      %v1208 = vpop.xlane.xlu0 %1207
      %v1209 = vsel %vm780, %v1199, -inf
      %1210 = vmax.xlane.f32.xlu0 %v1209
      %v1211 = vpop.xlane.xlu0 %1210
      %v1212 = vsub.f32 %v1196, %v1202
      %v1213 = vsub.f32 %v1197, %v1205
      %v1214 = vsub.f32 %v1198, %v1208
      %v1215 = vsub.f32 %v1199, %v1211
      %v1216 = vmul.f32 %v1212, 1.442695
      %v1217 = vpow.pop %v1216
      %v1218 = vmul.f32 %v1213, 1.442695
      %v1219 = vpow.pop %v1218
      %v1220 = vmul.f32 %v1214, 1.442695
      %v1221 = vpow.pop %v1220
      %v1222 = vmul.f32 %v1215, 1.442695
      %v1223 = vpow.pop %v1222
      %v1224 = vsel %vm780, %v1217, 0.0
      %1225 = vadd.xlane.f32.xlu0 %v1224
      %v1226 = vpop.xlane.xlu0 %1225
      %v1227 = vsel %vm780, %v1219, 0.0
      %1228 = vadd.xlane.f32.xlu0 %v1227
      %v1229 = vpop.xlane.xlu0 %1228
      %v1230 = vsel %vm780, %v1221, 0.0
      %1231 = vadd.xlane.f32.xlu0 %v1230
      %v1232 = vpop.xlane.xlu0 %1231
      %v1233 = vsel %vm780, %v1223, 0.0
      %1234 = vadd.xlane.f32.xlu0 %v1233
      %v1235 = vpop.xlane.xlu0 %1234
      %v1236 = vrcp.pop %v1226
      %v1237 = vrcp.pop %v1229
      %v1238 = vrcp.pop %v1232
      %v1239 = vrcp.pop %v1235
      %v1240 = vmul.f32 %v1217, %v1236
      %v1241 = vmul.f32 %v1219, %v1237
      %v1242 = vmul.f32 %v1221, %v1238
      %v1243 = vmul.f32 %v1223, %v1239
      %v1244 = vpack.c.bf16 %v1241, %v1240
      %v1245 = vpack.c.bf16 %v1243, %v1242
      %1246 = vrot.lane.b32.xlu0 %v938, 56
      %v1247 = vpop.permute.xlu0 %1246
      %1248 = vrot.lane.b32.xlu0 %v939, 56
      %v1249 = vpop.permute.xlu0 %1248
      %v1253 = vsel %vm780, %v1244, 0
      %v1256 = vsel %vm780, %v1245, 0
      %1258 = vmatprep.subr.bf16.mxu0 0
      %1259 = vmatpush1.bf16.msra.mxu0 %v1247
      %1260 = vmatprep.subr.bf16.mxu0 0
      %1261 = vmatpush1.bf16.msra.mxu0 %v1249
      %1262 = vmatprep.subr.bf16.mxu0 0
      %1263 = vmatpush1.bf16.msra.mxu0 0
      %1264 = vmatprep.subr.bf16.mxu0 0
      %1265 = vmatpush1.bf16.msra.mxu0 0
      %1266 = vmatprep.subr.bf16.mxu0 0
      %1267 = vmatpush1.bf16.msra.mxu0 0
      %1268 = vmatprep.subr.bf16.mxu0 0
      %1269 = vmatpush1.bf16.msra.mxu0 0
      %1270 = vmatprep.subr.bf16.mxu0 0
      %1271 = vmatpush1.bf16.msra.mxu0 0
      %1272 = vmatprep.subr.bf16.mxu0 0
      %1273 = vmatpush1.bf16.msra.mxu0 0
      %1274 = vmatprep.subr.bf16.mxu0 0
      %1275 = vmatpush1.bf16.msra.mxu0 0
      %1276 = vmatprep.subr.bf16.mxu0 0
      %1277 = vmatpush1.bf16.msra.mxu0 0
      %1278 = vmatprep.subr.bf16.mxu0 0
      %1279 = vmatpush1.bf16.msra.mxu0 0
      %1280 = vmatprep.subr.bf16.mxu0 0
      %1281 = vmatpush1.bf16.msra.mxu0 0
      %1282 = vmatprep.subr.bf16.mxu0 0
      %1283 = vmatpush1.bf16.msra.mxu0 0
      %1284 = vmatprep.subr.bf16.mxu0 0
      %1285 = vmatpush1.bf16.msra.mxu0 0
      %1286 = vmatprep.subr.bf16.mxu0 0
      %1287 = vmatpush1.bf16.msra.mxu0 0
      %1288 = vmatprep.subr.bf16.mxu0 0
      %1289 = vmatpush1.bf16.msra.mxu0 0
      %1290 = vmatprep.mubr.bf16.mxu0 0
      %1291 = vmatmul.mubr.bf16.gmra.mrb[0].mxu0 %v1253
      %v1292 = vpop.f32.mrb[0].mxu0
      %v1293 = vadd.f32 0.0, %v1292
      %v1294 = vpop.f32.mrb[0].mxu0
      %v1295 = vpop.f32.mrb[0].mxu0
      %v1296 = vadd.f32 0.0, %v1295
      %v1297 = vpop.f32.mrb[0].mxu0
      %1298 = vmatprep.mubr.bf16.mxu0 0
      %1299 = vmatmul.mubr.bf16.gmra.mrb[0].mxu0 %v1256
      %v1300 = vpop.f32.mrb[0].mxu0
      %v1301 = vadd.f32 0.0, %v1300
      %v1302 = vpop.f32.mrb[0].mxu0
      %v1303 = vpop.f32.mrb[0].mxu0
      %v1304 = vadd.f32 0.0, %v1303
      %v1305 = vpop.f32.mrb[0].mxu0
      %1306 = vdwg.mxu0
      %1307 = vrot.lane.b32.xlu0 %v938, 112
      %v1308 = vpop.permute.xlu0 %1307
      %1309 = vrot.lane.b32.xlu0 %v939, 112
      %v1310 = vpop.permute.xlu0 %1309
      %1311 = vrot.lane.b32.xlu0 %v938, 80
      %v1312 = vpop.permute.xlu0 %1311
      %1313 = vrot.lane.b32.xlu0 %v939, 80
      %v1314 = vpop.permute.xlu0 %1313
      %v1316 = vsel %vm946, %v1308, 0
      %v1319 = vsel %vm946, %v1310, 0
      %v1322 = vsel %vm946, %v1312, 0
      %v1325 = vsel %vm946, %v1314, 0
      %1327 = vmatprep.subr.bf16.mxu0 0
      %1328 = vmatpush1.bf16.xpose.msra.mxu0 %v1322
      %1329 = vmatprep.subr.bf16.mxu0 0
      %1330 = vmatpush1.bf16.xpose.msra.mxu0 %v1325
      %1331 = vmatprep.subr.bf16.mxu0 0
      %1332 = vmatpush1.bf16.xpose.msra.mxu0 0
      %1333 = vmatprep.subr.bf16.mxu0 0
      %1334 = vmatpush1.bf16.xpose.msra.mxu0 0
      %1335 = vmatprep.subr.bf16.mxu0 0
      %1336 = vmatpush1.bf16.xpose.msra.mxu0 0
      %1337 = vmatprep.subr.bf16.mxu0 0
      %1338 = vmatpush1.bf16.xpose.msra.mxu0 0
      %1339 = vmatprep.subr.bf16.mxu0 0
      %1340 = vmatpush1.bf16.xpose.msra.mxu0 0
      %1341 = vmatprep.subr.bf16.mxu0 0
      %1342 = vmatpush1.bf16.xpose.msra.mxu0 0
      %1343 = vmatprep.subr.bf16.mxu0 0
      %1344 = vmatpush1.bf16.xpose.msra.mxu0 0
      %1345 = vmatprep.subr.bf16.mxu0 0
      %1346 = vmatpush1.bf16.xpose.msra.mxu0 0
      %1347 = vmatprep.subr.bf16.mxu0 0
      %1348 = vmatpush1.bf16.xpose.msra.mxu0 0
      %1349 = vmatprep.subr.bf16.mxu0 0
      %1350 = vmatpush1.bf16.xpose.msra.mxu0 0
      %1351 = vmatprep.subr.bf16.mxu0 0
      %1352 = vmatpush1.bf16.xpose.msra.mxu0 0
      %1353 = vmatprep.subr.bf16.mxu0 0
      %1354 = vmatpush1.bf16.xpose.msra.mxu0 0
      %1355 = vmatprep.subr.bf16.mxu0 0
      %1356 = vmatpush1.bf16.xpose.msra.mxu0 0
      %1357 = vmatprep.subr.bf16.mxu0 0
      %1358 = vmatpush1.bf16.xpose.msra.mxu0 0
      %1359 = vmatprep.mubr.bf16.mxu0 0
      %1360 = vmatmul.mubr.bf16.gmra.mrb[0].mxu0 %v1316
      %v1361 = vpop.f32.mrb[0].mxu0
      %v1362 = vadd.f32 0.0, %v1361
      %v1363 = vpop.f32.mrb[0].mxu0
      %v1364 = vpop.f32.mrb[0].mxu0
      %v1365 = vadd.f32 0.0, %v1364
      %v1366 = vpop.f32.mrb[0].mxu0
      %1367 = vmatprep.mubr.bf16.mxu0 0
      %1368 = vmatmul.mubr.bf16.gmra.mrb[0].mxu0 %v1319
      %v1369 = vpop.f32.mrb[0].mxu0
      %v1370 = vadd.f32 0.0, %v1369
      %v1371 = vpop.f32.mrb[0].mxu0
      %v1372 = vpop.f32.mrb[0].mxu0
      %v1373 = vadd.f32 0.0, %v1372
      %v1374 = vpop.f32.mrb[0].mxu0
      %1375 = vdwg.mxu0
      %v1376 = vmul.f32 %v1362, 0.35355338
      %v1377 = vmul.f32 %v1365, 0.35355338
      %v1378 = vmul.f32 %v1370, 0.35355338
      %v1379 = vmul.f32 %v1373, 0.35355338
      %v1380 = vadd.f32 %v1376, %v934
      %v1381 = vadd.f32 %v1377, %v935
      %v1382 = vadd.f32 %v1378, %v936
      %v1383 = vadd.f32 %v1379, %v937
      %v1384 = vsel %vm780, %v1380, -inf
      %1385 = vmax.xlane.f32.xlu0 %v1384
      %v1386 = vpop.xlane.xlu0 %1385
      %v1387 = vsel %vm780, %v1381, -inf
      %1388 = vmax.xlane.f32.xlu0 %v1387
      %v1389 = vpop.xlane.xlu0 %1388
      %v1390 = vsel %vm780, %v1382, -inf
      %1391 = vmax.xlane.f32.xlu0 %v1390
      %v1392 = vpop.xlane.xlu0 %1391
      %v1393 = vsel %vm780, %v1383, -inf
      %1394 = vmax.xlane.f32.xlu0 %v1393
      %v1395 = vpop.xlane.xlu0 %1394
      %v1396 = vsub.f32 %v1380, %v1386
      %v1397 = vsub.f32 %v1381, %v1389
      %v1398 = vsub.f32 %v1382, %v1392
      %v1399 = vsub.f32 %v1383, %v1395
      %v1400 = vmul.f32 %v1396, 1.442695
      %v1401 = vpow.pop %v1400
      %v1402 = vmul.f32 %v1397, 1.442695
      %v1403 = vpow.pop %v1402
      %v1404 = vmul.f32 %v1398, 1.442695
      %v1405 = vpow.pop %v1404
      %v1406 = vmul.f32 %v1399, 1.442695
      %v1407 = vpow.pop %v1406
      %v1408 = vsel %vm780, %v1401, 0.0
      %1409 = vadd.xlane.f32.xlu0 %v1408
      %v1410 = vpop.xlane.xlu0 %1409
      %v1411 = vsel %vm780, %v1403, 0.0
      %1412 = vadd.xlane.f32.xlu0 %v1411
      %v1413 = vpop.xlane.xlu0 %1412
      %v1414 = vsel %vm780, %v1405, 0.0
      %1415 = vadd.xlane.f32.xlu0 %v1414
      %v1416 = vpop.xlane.xlu0 %1415
      %v1417 = vsel %vm780, %v1407, 0.0
      %1418 = vadd.xlane.f32.xlu0 %v1417
      %v1419 = vpop.xlane.xlu0 %1418
      %v1420 = vrcp.pop %v1410
      %v1421 = vrcp.pop %v1413
      %v1422 = vrcp.pop %v1416
      %v1423 = vrcp.pop %v1419
      %v1424 = vmul.f32 %v1401, %v1420
      %v1425 = vmul.f32 %v1403, %v1421
      %v1426 = vmul.f32 %v1405, %v1422
      %v1427 = vmul.f32 %v1407, %v1423
      %v1428 = vpack.c.bf16 %v1425, %v1424
      %v1429 = vpack.c.bf16 %v1427, %v1426
      %1430 = vrot.lane.b32.xlu0 %v938, 48
      %v1431 = vpop.permute.xlu0 %1430
      %1432 = vrot.lane.b32.xlu0 %v939, 48
      %v1433 = vpop.permute.xlu0 %1432
      %v1437 = vsel %vm780, %v1428, 0
      %v1440 = vsel %vm780, %v1429, 0
      %1442 = vmatprep.subr.bf16.mxu0 0
      %1443 = vmatpush1.bf16.msra.mxu0 %v1431
      %1444 = vmatprep.subr.bf16.mxu0 0
      %1445 = vmatpush1.bf16.msra.mxu0 %v1433
      %1446 = vmatprep.subr.bf16.mxu0 0
      %1447 = vmatpush1.bf16.msra.mxu0 0
      %1448 = vmatprep.subr.bf16.mxu0 0
      %1449 = vmatpush1.bf16.msra.mxu0 0
      %1450 = vmatprep.subr.bf16.mxu0 0
      %1451 = vmatpush1.bf16.msra.mxu0 0
      %1452 = vmatprep.subr.bf16.mxu0 0
      %1453 = vmatpush1.bf16.msra.mxu0 0
      %1454 = vmatprep.subr.bf16.mxu0 0
      %1455 = vmatpush1.bf16.msra.mxu0 0
      %1456 = vmatprep.subr.bf16.mxu0 0
      %1457 = vmatpush1.bf16.msra.mxu0 0
      %1458 = vmatprep.subr.bf16.mxu0 0
      %1459 = vmatpush1.bf16.msra.mxu0 0
      %1460 = vmatprep.subr.bf16.mxu0 0
      %1461 = vmatpush1.bf16.msra.mxu0 0
      %1462 = vmatprep.subr.bf16.mxu0 0
      %1463 = vmatpush1.bf16.msra.mxu0 0
      %1464 = vmatprep.subr.bf16.mxu0 0
      %1465 = vmatpush1.bf16.msra.mxu0 0
      %1466 = vmatprep.subr.bf16.mxu0 0
      %1467 = vmatpush1.bf16.msra.mxu0 0
      %1468 = vmatprep.subr.bf16.mxu0 0
      %1469 = vmatpush1.bf16.msra.mxu0 0
      %1470 = vmatprep.subr.bf16.mxu0 0
      %1471 = vmatpush1.bf16.msra.mxu0 0
      %1472 = vmatprep.subr.bf16.mxu0 0
      %1473 = vmatpush1.bf16.msra.mxu0 0
      %1474 = vmatprep.mubr.bf16.mxu0 0
      %1475 = vmatmul.mubr.bf16.gmra.mrb[0].mxu0 %v1437
      %v1476 = vpop.f32.mrb[0].mxu0
      %v1477 = vadd.f32 0.0, %v1476
      %v1478 = vpop.f32.mrb[0].mxu0
      %v1479 = vpop.f32.mrb[0].mxu0
      %v1480 = vadd.f32 0.0, %v1479
      %v1481 = vpop.f32.mrb[0].mxu0
      %1482 = vmatprep.mubr.bf16.mxu0 0
      %1483 = vmatmul.mubr.bf16.gmra.mrb[0].mxu0 %v1440
      %v1484 = vpop.f32.mrb[0].mxu0
      %v1485 = vadd.f32 0.0, %v1484
      %v1486 = vpop.f32.mrb[0].mxu0
      %v1487 = vpop.f32.mrb[0].mxu0
      %v1488 = vadd.f32 0.0, %v1487
      %v1489 = vpop.f32.mrb[0].mxu0
      %1490 = vdwg.mxu0
      %1491 = vrot.lane.b32.xlu0 %v938, 104
      %v1492 = vpop.permute.xlu0 %1491
      %1493 = vrot.lane.b32.xlu0 %v939, 104
      %v1494 = vpop.permute.xlu0 %1493
      %1495 = vrot.lane.b32.xlu0 %v938, 72
      %v1496 = vpop.permute.xlu0 %1495
      %1497 = vrot.lane.b32.xlu0 %v939, 72
      %v1498 = vpop.permute.xlu0 %1497
      %v1500 = vsel %vm946, %v1492, 0
      %v1503 = vsel %vm946, %v1494, 0
      %v1506 = vsel %vm946, %v1496, 0
      %v1509 = vsel %vm946, %v1498, 0
      %1511 = vmatprep.subr.bf16.mxu0 0
      %1512 = vmatpush1.bf16.xpose.msra.mxu0 %v1506
      %1513 = vmatprep.subr.bf16.mxu0 0
      %1514 = vmatpush1.bf16.xpose.msra.mxu0 %v1509
      %1515 = vmatprep.subr.bf16.mxu0 0
      %1516 = vmatpush1.bf16.xpose.msra.mxu0 0
      %1517 = vmatprep.subr.bf16.mxu0 0
      %1518 = vmatpush1.bf16.xpose.msra.mxu0 0
      %1519 = vmatprep.subr.bf16.mxu0 0
      %1520 = vmatpush1.bf16.xpose.msra.mxu0 0
      %1521 = vmatprep.subr.bf16.mxu0 0
      %1522 = vmatpush1.bf16.xpose.msra.mxu0 0
      %1523 = vmatprep.subr.bf16.mxu0 0
      %1524 = vmatpush1.bf16.xpose.msra.mxu0 0
      %1525 = vmatprep.subr.bf16.mxu0 0
      %1526 = vmatpush1.bf16.xpose.msra.mxu0 0
      %1527 = vmatprep.subr.bf16.mxu0 0
      %1528 = vmatpush1.bf16.xpose.msra.mxu0 0
      %1529 = vmatprep.subr.bf16.mxu0 0
      %1530 = vmatpush1.bf16.xpose.msra.mxu0 0
      %1531 = vmatprep.subr.bf16.mxu0 0
      %1532 = vmatpush1.bf16.xpose.msra.mxu0 0
      %1533 = vmatprep.subr.bf16.mxu0 0
      %1534 = vmatpush1.bf16.xpose.msra.mxu0 0
      %1535 = vmatprep.subr.bf16.mxu0 0
      %1536 = vmatpush1.bf16.xpose.msra.mxu0 0
      %1537 = vmatprep.subr.bf16.mxu0 0
      %1538 = vmatpush1.bf16.xpose.msra.mxu0 0
      %1539 = vmatprep.subr.bf16.mxu0 0
      %1540 = vmatpush1.bf16.xpose.msra.mxu0 0
      %1541 = vmatprep.subr.bf16.mxu0 0
      %1542 = vmatpush1.bf16.xpose.msra.mxu0 0
      %1543 = vmatprep.mubr.bf16.mxu0 0
      %1544 = vmatmul.mubr.bf16.gmra.mrb[0].mxu0 %v1500
      %v1545 = vpop.f32.mrb[0].mxu0
      %v1546 = vadd.f32 0.0, %v1545
      %v1547 = vpop.f32.mrb[0].mxu0
      %v1548 = vpop.f32.mrb[0].mxu0
      %v1549 = vadd.f32 0.0, %v1548
      %v1550 = vpop.f32.mrb[0].mxu0
      %1551 = vmatprep.mubr.bf16.mxu0 0
      %1552 = vmatmul.mubr.bf16.gmra.mrb[0].mxu0 %v1503
      %v1553 = vpop.f32.mrb[0].mxu0
      %v1554 = vadd.f32 0.0, %v1553
      %v1555 = vpop.f32.mrb[0].mxu0
      %v1556 = vpop.f32.mrb[0].mxu0
      %v1557 = vadd.f32 0.0, %v1556
      %v1558 = vpop.f32.mrb[0].mxu0
      %1559 = vdwg.mxu0
      %v1560 = vmul.f32 %v1546, 0.35355338
      %v1561 = vmul.f32 %v1549, 0.35355338
      %v1562 = vmul.f32 %v1554, 0.35355338
      %v1563 = vmul.f32 %v1557, 0.35355338
      %v1564 = vadd.f32 %v1560, %v934
      %v1565 = vadd.f32 %v1561, %v935
      %v1566 = vadd.f32 %v1562, %v936
      %v1567 = vadd.f32 %v1563, %v937
      %v1568 = vsel %vm780, %v1564, -inf
      %1569 = vmax.xlane.f32.xlu0 %v1568
      %v1570 = vpop.xlane.xlu0 %1569
      %v1571 = vsel %vm780, %v1565, -inf
      %1572 = vmax.xlane.f32.xlu0 %v1571
      %v1573 = vpop.xlane.xlu0 %1572
      %v1574 = vsel %vm780, %v1566, -inf
      %1575 = vmax.xlane.f32.xlu0 %v1574
      %v1576 = vpop.xlane.xlu0 %1575
      %v1577 = vsel %vm780, %v1567, -inf
      %1578 = vmax.xlane.f32.xlu0 %v1577
      %v1579 = vpop.xlane.xlu0 %1578
      %v1580 = vsub.f32 %v1564, %v1570
      %v1581 = vsub.f32 %v1565, %v1573
      %v1582 = vsub.f32 %v1566, %v1576
      %v1583 = vsub.f32 %v1567, %v1579
      %v1584 = vmul.f32 %v1580, 1.442695
      %v1585 = vpow.pop %v1584
      %v1586 = vmul.f32 %v1581, 1.442695
      %v1587 = vpow.pop %v1586
      %v1588 = vmul.f32 %v1582, 1.442695
      %v1589 = vpow.pop %v1588
      %v1590 = vmul.f32 %v1583, 1.442695
      %v1591 = vpow.pop %v1590
      %v1592 = vsel %vm780, %v1585, 0.0
      %1593 = vadd.xlane.f32.xlu0 %v1592
      %v1594 = vpop.xlane.xlu0 %1593
      %v1595 = vsel %vm780, %v1587, 0.0
      %1596 = vadd.xlane.f32.xlu0 %v1595
      %v1597 = vpop.xlane.xlu0 %1596
      %v1598 = vsel %vm780, %v1589, 0.0
      %1599 = vadd.xlane.f32.xlu0 %v1598
      %v1600 = vpop.xlane.xlu0 %1599
      %v1601 = vsel %vm780, %v1591, 0.0
      %1602 = vadd.xlane.f32.xlu0 %v1601
      %v1603 = vpop.xlane.xlu0 %1602
      %v1604 = vrcp.pop %v1594
      %v1605 = vrcp.pop %v1597
      %v1606 = vrcp.pop %v1600
      %v1607 = vrcp.pop %v1603
      %v1608 = vmul.f32 %v1585, %v1604
      %v1609 = vmul.f32 %v1587, %v1605
      %v1610 = vmul.f32 %v1589, %v1606
      %v1611 = vmul.f32 %v1591, %v1607
      %v1612 = vpack.c.bf16 %v1609, %v1608
      %v1613 = vpack.c.bf16 %v1611, %v1610
      %1614 = vrot.lane.b32.xlu0 %v938, 40
      %v1615 = vpop.permute.xlu0 %1614
      %1616 = vrot.lane.b32.xlu0 %v939, 40
      %v1617 = vpop.permute.xlu0 %1616
      %v1621 = vsel %vm780, %v1612, 0
      %v1624 = vsel %vm780, %v1613, 0
      %1626 = vmatprep.subr.bf16.mxu0 0
      %1627 = vmatpush1.bf16.msra.mxu0 %v1615
      %1628 = vmatprep.subr.bf16.mxu0 0
      %1629 = vmatpush1.bf16.msra.mxu0 %v1617
      %1630 = vmatprep.subr.bf16.mxu0 0
      %1631 = vmatpush1.bf16.msra.mxu0 0
      %1632 = vmatprep.subr.bf16.mxu0 0
      %1633 = vmatpush1.bf16.msra.mxu0 0
      %1634 = vmatprep.subr.bf16.mxu0 0
      %1635 = vmatpush1.bf16.msra.mxu0 0
      %1636 = vmatprep.subr.bf16.mxu0 0
      %1637 = vmatpush1.bf16.msra.mxu0 0
      %1638 = vmatprep.subr.bf16.mxu0 0
      %1639 = vmatpush1.bf16.msra.mxu0 0
      %1640 = vmatprep.subr.bf16.mxu0 0
      %1641 = vmatpush1.bf16.msra.mxu0 0
      %1642 = vmatprep.subr.bf16.mxu0 0
      %1643 = vmatpush1.bf16.msra.mxu0 0
      %1644 = vmatprep.subr.bf16.mxu0 0
      %1645 = vmatpush1.bf16.msra.mxu0 0
      %1646 = vmatprep.subr.bf16.mxu0 0
      %1647 = vmatpush1.bf16.msra.mxu0 0
      %1648 = vmatprep.subr.bf16.mxu0 0
      %1649 = vmatpush1.bf16.msra.mxu0 0
      %1650 = vmatprep.subr.bf16.mxu0 0
      %1651 = vmatpush1.bf16.msra.mxu0 0
      %1652 = vmatprep.subr.bf16.mxu0 0
      %1653 = vmatpush1.bf16.msra.mxu0 0
      %1654 = vmatprep.subr.bf16.mxu0 0
      %1655 = vmatpush1.bf16.msra.mxu0 0
      %1656 = vmatprep.subr.bf16.mxu0 0
      %1657 = vmatpush1.bf16.msra.mxu0 0
      %1658 = vmatprep.mubr.bf16.mxu0 0
      %1659 = vmatmul.mubr.bf16.gmra.mrb[0].mxu0 %v1621
      %v1660 = vpop.f32.mrb[0].mxu0
      %v1661 = vadd.f32 0.0, %v1660
      %v1662 = vpop.f32.mrb[0].mxu0
      %v1663 = vpop.f32.mrb[0].mxu0
      %v1664 = vadd.f32 0.0, %v1663
      %v1665 = vpop.f32.mrb[0].mxu0
      %1666 = vmatprep.mubr.bf16.mxu0 0
      %1667 = vmatmul.mubr.bf16.gmra.mrb[0].mxu0 %v1624
      %v1668 = vpop.f32.mrb[0].mxu0
      %v1669 = vadd.f32 0.0, %v1668
      %v1670 = vpop.f32.mrb[0].mxu0
      %v1671 = vpop.f32.mrb[0].mxu0
      %v1672 = vadd.f32 0.0, %v1671
      %v1673 = vpop.f32.mrb[0].mxu0
      %1674 = vdwg.mxu0
      %1679 = vrot.lane.b32.xlu0 %v1293, 8
      %v1680 = vpop.permute.xlu0 %1679
      %1681 = vrot.lane.b32.xlu0 %v1296, 8
      %v1682 = vpop.permute.xlu0 %1681
      %1683 = vrot.lane.b32.xlu0 %v1301, 8
      %v1684 = vpop.permute.xlu0 %1683
      %1685 = vrot.lane.b32.xlu0 %v1304, 8
      %v1686 = vpop.permute.xlu0 %1685
      %1695 = vrot.lane.b32.xlu0 %v1477, 16
      %v1696 = vpop.permute.xlu0 %1695
      %1697 = vrot.lane.b32.xlu0 %v1480, 16
      %v1698 = vpop.permute.xlu0 %1697
      %1699 = vrot.lane.b32.xlu0 %v1485, 16
      %v1700 = vpop.permute.xlu0 %1699
      %1701 = vrot.lane.b32.xlu0 %v1488, 16
      %v1702 = vpop.permute.xlu0 %1701
      %1711 = vrot.lane.b32.xlu0 %v1661, 24
      %v1712 = vpop.permute.xlu0 %1711
      %1713 = vrot.lane.b32.xlu0 %v1664, 24
      %v1714 = vpop.permute.xlu0 %1713
      %1715 = vrot.lane.b32.xlu0 %v1669, 24
      %v1716 = vpop.permute.xlu0 %1715
      %1717 = vrot.lane.b32.xlu0 %v1672, 24
      %v1718 = vpop.permute.xlu0 %1717
      %v1723 = vsel %vm946, %v1109, %v1680
      %v1724 = vsel %vm946, %v1112, %v1682
      %v1725 = vsel %vm946, %v1117, %v1684
      %v1726 = vsel %vm946, %v1120, %v1686
      %vm1727 = vcmask 130048
      %v1728 = vsel %vm1727, %v1723, %v1696
      %v1729 = vsel %vm1727, %v1724, %v1698
      %v1730 = vsel %vm1727, %v1725, %v1700
      %v1731 = vsel %vm1727, %v1726, %v1702
      %vm1732 = vcmask 195584
      %v1733 = vsel %vm1732, %v1728, %v1712
      %v1734 = vsel %vm1732, %v1729, %v1714
      %v1735 = vsel %vm1732, %v1730, %v1716
      %v1736 = vsel %vm1732, %v1731, %v1718
      %v1737 = vld [vmem:[%s734] sm:$0xf]
      %v1738 = vld [vmem:[%s734 + $0x4] sm:$0xf]
      %v1739 = vld [vmem:[%s734 + $0x8] sm:$0xf]
      %v1740 = vld [vmem:[%s734 + $0xc] sm:$0xf]
      %v1741 = vpack.c.bf16 %v1734, %v1733
      %v1742 = vpack.c.bf16 %v1736, %v1735
      %v1747 = vunpack.c.l.b16 %v1737
      %v1748 = vunpack.c.l.b16 %v1738
      %v1749 = vunpack.c.l.b16 %v1739
      %v1750 = vunpack.c.l.b16 %v1740
      %v1751 = vpack.c.b16 %v1748, %v1747
      %v1752 = vpack.c.b16 %v1750, %v1749
      %v1756 = vsel %vm780, %v1741, 0
      %v1759 = vsel %vm780, %v1742, 0
      %1761 = vmatprep.subr.bf16.mxu0 0
      %1762 = vmatpush1.bf16.msra.mxu0 %v1751
      %1763 = vmatprep.subr.bf16.mxu0 0
      %1764 = vmatpush1.bf16.msra.mxu0 %v1752
      %1765 = vmatprep.subr.bf16.mxu0 0
      %1766 = vmatpush1.bf16.msra.mxu0 0
      %1767 = vmatprep.subr.bf16.mxu0 0
      %1768 = vmatpush1.bf16.msra.mxu0 0
      %1769 = vmatprep.subr.bf16.mxu0 0
      %1770 = vmatpush1.bf16.msra.mxu0 0
      %1771 = vmatprep.subr.bf16.mxu0 0
      %1772 = vmatpush1.bf16.msra.mxu0 0
      %1773 = vmatprep.subr.bf16.mxu0 0
      %1774 = vmatpush1.bf16.msra.mxu0 0
      %1775 = vmatprep.subr.bf16.mxu0 0
      %1776 = vmatpush1.bf16.msra.mxu0 0
      %1777 = vmatprep.subr.bf16.mxu0 0
      %1778 = vmatpush1.bf16.msra.mxu0 0
      %1779 = vmatprep.subr.bf16.mxu0 0
      %1780 = vmatpush1.bf16.msra.mxu0 0
      %1781 = vmatprep.subr.bf16.mxu0 0
      %1782 = vmatpush1.bf16.msra.mxu0 0
      %1783 = vmatprep.subr.bf16.mxu0 0
      %1784 = vmatpush1.bf16.msra.mxu0 0
      %1785 = vmatprep.subr.bf16.mxu0 0
      %1786 = vmatpush1.bf16.msra.mxu0 0
      %1787 = vmatprep.subr.bf16.mxu0 0
      %1788 = vmatpush1.bf16.msra.mxu0 0
      %1789 = vmatprep.subr.bf16.mxu0 0
      %1790 = vmatpush1.bf16.msra.mxu0 0
      %1791 = vmatprep.subr.bf16.mxu0 0
      %1792 = vmatpush1.bf16.msra.mxu0 0
      %1793 = vmatprep.mubr.bf16.mxu0 0
      %1794 = vmatmul.mubr.bf16.gmra.mrb[0].mxu0 %v1756
      %v1795 = vpop.f32.mrb[0].mxu0
      %v1796 = vadd.f32 0.0, %v1795
      %v1797 = vpop.f32.mrb[0].mxu0
      %v1798 = vpop.f32.mrb[0].mxu0
      %v1799 = vadd.f32 0.0, %v1798
      %v1800 = vpop.f32.mrb[0].mxu0
      %1801 = vmatprep.mubr.bf16.mxu0 0
      %1802 = vmatmul.mubr.bf16.gmra.mrb[0].mxu0 %v1759
      %v1803 = vpop.f32.mrb[0].mxu0
      %v1804 = vadd.f32 0.0, %v1803
      %v1805 = vpop.f32.mrb[0].mxu0
      %v1806 = vpop.f32.mrb[0].mxu0
      %v1807 = vadd.f32 0.0, %v1806
      %v1808 = vpop.f32.mrb[0].mxu0
      %1809 = vdwg.mxu0
      %v1810 = vadd.f32 %v774, %v1796
      %v1811 = vadd.f32 %v775, %v1799
      %v1812 = vadd.f32 %v776, %v1804
      %v1813 = vadd.f32 %v777, %v1807
      %v1814 = vld [vmem:[%s737] sm:$0x1]
      %v1816 = vlaneseq
      %v1817 = vshrl.u32 %v1816, 7
      %v1818 = vsub.s32 0, %v1817
      %v1819 = vrot.slane %v1814, %v1818
      %v1821 = vadd.f32 %v1810, %v1819
      %v1822 = vadd.f32 %v1811, %v1819
      %v1823 = vadd.f32 %v1812, %v1819
      %v1824 = vadd.f32 %v1813, %v1819
      %v1825 = vld [vmem:[%s740] sm:$0x1]
      %v1826 = vld [vmem:[%s743] sm:$0x1]
      %v1827 = vsel %vm780, %v1821, 0.0
      %1828 = vadd.xlane.f32.xlu0 %v1827
      %v1829 = vpop.xlane.xlu0 %1828
      %v1830 = vsel %vm780, %v1822, 0.0
      %1831 = vadd.xlane.f32.xlu0 %v1830
      %v1832 = vpop.xlane.xlu0 %1831
      %v1833 = vsel %vm780, %v1823, 0.0
      %1834 = vadd.xlane.f32.xlu0 %v1833
      %v1835 = vpop.xlane.xlu0 %1834
      %v1836 = vsel %vm780, %v1824, 0.0
      %1837 = vadd.xlane.f32.xlu0 %v1836
      %v1838 = vpop.xlane.xlu0 %1837
      %v1839 = vmul.f32 %v1829, %v793
      %v1840 = vmul.f32 %v1832, %v793
      %v1841 = vmul.f32 %v1835, %v793
      %v1842 = vmul.f32 %v1838, %v793
      %v1843 = vsub.f32 %v1821, %v1839
      %v1844 = vsub.f32 %v1822, %v1840
      %v1845 = vsub.f32 %v1823, %v1841
      %v1846 = vsub.f32 %v1824, %v1842
      %v1847 = vmul.f32 %v1843, %v1843
      %v1848 = vmul.f32 %v1844, %v1844
      %v1849 = vmul.f32 %v1845, %v1845
      %v1850 = vmul.f32 %v1846, %v1846
      %v1851 = vsel %vm780, %v1847, 0.0
      %1852 = vadd.xlane.f32.xlu0 %v1851
      %v1853 = vpop.xlane.xlu0 %1852
      %v1854 = vsel %vm780, %v1848, 0.0
      %1855 = vadd.xlane.f32.xlu0 %v1854
      %v1856 = vpop.xlane.xlu0 %1855
      %v1857 = vsel %vm780, %v1849, 0.0
      %1858 = vadd.xlane.f32.xlu0 %v1857
      %v1859 = vpop.xlane.xlu0 %1858
      %v1860 = vsel %vm780, %v1850, 0.0
      %1861 = vadd.xlane.f32.xlu0 %v1860
      %v1862 = vpop.xlane.xlu0 %1861
      %v1863 = vmul.f32 %v1853, %v793
      %v1864 = vmul.f32 %v1856, %v793
      %v1865 = vmul.f32 %v1859, %v793
      %v1866 = vmul.f32 %v1862, %v793
      %v1867 = vadd.f32 %v1863, 1e-05
      %v1868 = vadd.f32 %v1864, 1e-05
      %v1869 = vadd.f32 %v1865, 1e-05
      %v1870 = vadd.f32 %v1866, 1e-05
      %v1871 = vrsqrt.pop %v1867
      %v1872 = vrsqrt.pop %v1868
      %v1873 = vrsqrt.pop %v1869
      %v1874 = vrsqrt.pop %v1870
      %v1875 = vmul.f32 %v1843, %v1871
      %v1876 = vmul.f32 %v1844, %v1872
      %v1877 = vmul.f32 %v1845, %v1873
      %v1878 = vmul.f32 %v1846, %v1874
      %v1880 = vlaneseq
      %v1881 = vshrl.u32 %v1880, 7
      %v1882 = vsub.s32 0, %v1881
      %v1883 = vrot.slane %v1825, %v1882
      %v1885 = vmul.f32 %v1875, %v1883
      %v1886 = vmul.f32 %v1876, %v1883
      %v1887 = vmul.f32 %v1877, %v1883
      %v1888 = vmul.f32 %v1878, %v1883
      %v1890 = vlaneseq
      %v1891 = vshrl.u32 %v1890, 7
      %v1892 = vsub.s32 0, %v1891
      %v1893 = vrot.slane %v1826, %v1892
      %v1895 = vadd.f32 %v1885, %v1893
      %v1896 = vadd.f32 %v1886, %v1893
      %v1897 = vadd.f32 %v1887, %v1893
      %v1898 = vadd.f32 %v1888, %v1893
      %v1899 = vld [vmem:[%s748] sm:$0xf]
      %v1900 = vld [vmem:[%s748 + $0x4] sm:$0xf]
      %v1901 = vld [vmem:[%s748 + $0x8] sm:$0xf]
      %v1902 = vld [vmem:[%s748 + $0xc] sm:$0xf]
      %v1903 = vpack.c.bf16 %v1896, %v1895
      %v1904 = vpack.c.bf16 %v1898, %v1897
      %v1905 = vld [vmem:[%s751] sm:$0x1]
      %v1907 = vlaneseq
      %v1908 = vshrl.u32 %v1907, 7
      %v1909 = vsub.s32 0, %v1908
      %v1910 = vrot.slane %v1905, %v1909
      %v1916 = vunpack.c.l.b16 %v1899
      %v1917 = vunpack.c.l.b16 %v1900
      %v1918 = vunpack.c.l.b16 %v1901
      %v1919 = vunpack.c.l.b16 %v1902
      %v1920 = vpack.c.b16 %v1917, %v1916
      %v1921 = vpack.c.b16 %v1919, %v1918
      %v1925 = vsel %vm780, %v1903, 0
      %v1928 = vsel %vm780, %v1904, 0
      %1930 = vmatprep.subr.bf16.mxu0 0
      %1931 = vmatpush1.bf16.msra.mxu0 %v1920
      %1932 = vmatprep.subr.bf16.mxu0 0
      %1933 = vmatpush1.bf16.msra.mxu0 %v1921
      %1934 = vmatprep.subr.bf16.mxu0 0
      %1935 = vmatpush1.bf16.msra.mxu0 0
      %1936 = vmatprep.subr.bf16.mxu0 0
      %1937 = vmatpush1.bf16.msra.mxu0 0
      %1938 = vmatprep.subr.bf16.mxu0 0
      %1939 = vmatpush1.bf16.msra.mxu0 0
      %1940 = vmatprep.subr.bf16.mxu0 0
      %1941 = vmatpush1.bf16.msra.mxu0 0
      %1942 = vmatprep.subr.bf16.mxu0 0
      %1943 = vmatpush1.bf16.msra.mxu0 0
      %1944 = vmatprep.subr.bf16.mxu0 0
      %1945 = vmatpush1.bf16.msra.mxu0 0
      %1946 = vmatprep.subr.bf16.mxu0 0
      %1947 = vmatpush1.bf16.msra.mxu0 0
      %1948 = vmatprep.subr.bf16.mxu0 0
      %1949 = vmatpush1.bf16.msra.mxu0 0
      %1950 = vmatprep.subr.bf16.mxu0 0
      %1951 = vmatpush1.bf16.msra.mxu0 0
      %1952 = vmatprep.subr.bf16.mxu0 0
      %1953 = vmatpush1.bf16.msra.mxu0 0
      %1954 = vmatprep.subr.bf16.mxu0 0
      %1955 = vmatpush1.bf16.msra.mxu0 0
      %1956 = vmatprep.subr.bf16.mxu0 0
      %1957 = vmatpush1.bf16.msra.mxu0 0
      %1958 = vmatprep.subr.bf16.mxu0 0
      %1959 = vmatpush1.bf16.msra.mxu0 0
      %1960 = vmatprep.subr.bf16.mxu0 0
      %1961 = vmatpush1.bf16.msra.mxu0 0
      %1962 = vmatprep.mubr.bf16.mxu0 0
      %1963 = vmatmul.mubr.bf16.gmra.mrb[0].mxu0 %v1925
      %v1964 = vpop.f32.mrb[0].mxu0
      %v1965 = vadd.f32 %v1910, %v1964
      %v1966 = vpop.f32.mrb[0].mxu0
      %v1967 = vpop.f32.mrb[0].mxu0
      %v1968 = vadd.f32 %v1910, %v1967
      %v1969 = vpop.f32.mrb[0].mxu0
      %1970 = vmatprep.mubr.bf16.mxu0 0
      %1971 = vmatmul.mubr.bf16.gmra.mrb[0].mxu0 %v1928
      %v1972 = vpop.f32.mrb[0].mxu0
      %v1973 = vadd.f32 %v1910, %v1972
      %v1974 = vpop.f32.mrb[0].mxu0
      %v1975 = vpop.f32.mrb[0].mxu0
      %v1976 = vadd.f32 %v1910, %v1975
      %v1977 = vpop.f32.mrb[0].mxu0
      %1978 = vdwg.mxu0
      %v1979 = vmul.f32 %v1965, %v1965
      %v1980 = vmul.f32 %v1968, %v1968
      %v1981 = vmul.f32 %v1973, %v1973
      %v1982 = vmul.f32 %v1976, %v1976
      %v1983 = vmul.f32 %v1965, %v1979
      %v1984 = vmul.f32 %v1968, %v1980
      %v1985 = vmul.f32 %v1973, %v1981
      %v1986 = vmul.f32 %v1976, %v1982
      %v1987 = vmul.f32 %v1983, 0.044715
      %v1988 = vmul.f32 %v1984, 0.044715
      %v1989 = vmul.f32 %v1985, 0.044715
      %v1990 = vmul.f32 %v1986, 0.044715
      %v1991 = vadd.f32 %v1965, %v1987
      %v1992 = vadd.f32 %v1968, %v1988
      %v1993 = vadd.f32 %v1973, %v1989
      %v1994 = vadd.f32 %v1976, %v1990
      %v1995 = vmul.f32 %v1991, 0.7978846
      %v1996 = vmul.f32 %v1992, 0.7978846
      %v1997 = vmul.f32 %v1993, 0.7978846
      %v1998 = vmul.f32 %v1994, 0.7978846
      %v1999 = vtanh.pop %v1995
      %v2000 = vtanh.pop %v1996
      %v2001 = vtanh.pop %v1997
      %v2002 = vtanh.pop %v1998
      %v2003 = vadd.f32 %v1999, 1.0
      %v2004 = vadd.f32 %v2000, 1.0
      %v2005 = vadd.f32 %v2001, 1.0
      %v2006 = vadd.f32 %v2002, 1.0
      %v2007 = vmul.f32 %v2003, 0.5
      %v2008 = vmul.f32 %v2004, 0.5
      %v2009 = vmul.f32 %v2005, 0.5
      %v2010 = vmul.f32 %v2006, 0.5
      %v2011 = vmul.f32 %v1965, %v2007
      %v2012 = vmul.f32 %v1968, %v2008
      %v2013 = vmul.f32 %v1973, %v2009
      %v2014 = vmul.f32 %v1976, %v2010
      %v2015 = vld [vmem:[%s756] sm:$0xf]
      %v2016 = vld [vmem:[%s756 + $0x4] sm:$0xf]
      %v2017 = vld [vmem:[%s756 + $0x8] sm:$0xf]
      %v2018 = vld [vmem:[%s756 + $0xc] sm:$0xf]
      %v2019 = vld [vmem:[%s756 + $0x10] sm:$0xf]
      %v2020 = vld [vmem:[%s756 + $0x14] sm:$0xf]
      %v2021 = vld [vmem:[%s756 + $0x18] sm:$0xf]
      %v2022 = vld [vmem:[%s756 + $0x1c] sm:$0xf]
      %v2023 = vld [vmem:[%s756 + $0x20] sm:$0xf]
      %v2024 = vld [vmem:[%s756 + $0x24] sm:$0xf]
      %v2025 = vld [vmem:[%s756 + $0x28] sm:$0xf]
      %v2026 = vld [vmem:[%s756 + $0x2c] sm:$0xf]
      %v2027 = vld [vmem:[%s756 + $0x30] sm:$0xf]
      %v2028 = vld [vmem:[%s756 + $0x34] sm:$0xf]
      %v2029 = vld [vmem:[%s756 + $0x38] sm:$0xf]
      %v2030 = vld [vmem:[%s756 + $0x3c] sm:$0xf]
      %v2031 = vpack.c.bf16 %v2012, %v2011
      %v2032 = vpack.c.bf16 %v2014, %v2013
      %v2049 = vunpack.c.l.b16 %v2015
      %v2050 = vunpack.c.l.b16 %v2016
      %v2051 = vunpack.c.l.b16 %v2017
      %v2052 = vunpack.c.l.b16 %v2018
      %v2053 = vunpack.c.l.b16 %v2019
      %v2054 = vunpack.c.l.b16 %v2020
      %v2055 = vunpack.c.l.b16 %v2021
      %v2056 = vunpack.c.l.b16 %v2022
      %v2057 = vunpack.c.l.b16 %v2023
      %v2058 = vunpack.c.l.b16 %v2024
      %v2059 = vunpack.c.l.b16 %v2025
      %v2060 = vunpack.c.l.b16 %v2026
      %v2061 = vunpack.c.l.b16 %v2027
      %v2062 = vunpack.c.l.b16 %v2028
      %v2063 = vunpack.c.l.b16 %v2029
      %v2064 = vunpack.c.l.b16 %v2030
      %v2065 = vpack.c.b16 %v2050, %v2049
      %v2066 = vpack.c.b16 %v2052, %v2051
      %v2067 = vpack.c.b16 %v2054, %v2053
      %v2068 = vpack.c.b16 %v2056, %v2055
      %v2069 = vpack.c.b16 %v2058, %v2057
      %v2070 = vpack.c.b16 %v2060, %v2059
      %v2071 = vpack.c.b16 %v2062, %v2061
      %v2072 = vpack.c.b16 %v2064, %v2063
      %2081 = vmatprep.subr.bf16.mxu0 0
      %2082 = vmatpush1.bf16.msra.mxu0 %v2065
      %2083 = vmatprep.subr.bf16.mxu0 0
      %2084 = vmatpush1.bf16.msra.mxu0 %v2066
      %2085 = vmatprep.subr.bf16.mxu0 0
      %2086 = vmatpush1.bf16.msra.mxu0 %v2067
      %2087 = vmatprep.subr.bf16.mxu0 0
      %2088 = vmatpush1.bf16.msra.mxu0 %v2068
      %2089 = vmatprep.subr.bf16.mxu0 0
      %2090 = vmatpush1.bf16.msra.mxu0 %v2069
      %2091 = vmatprep.subr.bf16.mxu0 0
      %2092 = vmatpush1.bf16.msra.mxu0 %v2070
      %2093 = vmatprep.subr.bf16.mxu0 0
      %2094 = vmatpush1.bf16.msra.mxu0 %v2071
      %2095 = vmatprep.subr.bf16.mxu0 0
      %2096 = vmatpush1.bf16.msra.mxu0 %v2072
      %2097 = vmatprep.subr.bf16.mxu0 0
      %2098 = vmatpush1.bf16.msra.mxu0 0
      %2099 = vmatprep.subr.bf16.mxu0 0
      %2100 = vmatpush1.bf16.msra.mxu0 0
      %2101 = vmatprep.subr.bf16.mxu0 0
      %2102 = vmatpush1.bf16.msra.mxu0 0
      %2103 = vmatprep.subr.bf16.mxu0 0
      %2104 = vmatpush1.bf16.msra.mxu0 0
      %2105 = vmatprep.subr.bf16.mxu0 0
      %2106 = vmatpush1.bf16.msra.mxu0 0
      %2107 = vmatprep.subr.bf16.mxu0 0
      %2108 = vmatpush1.bf16.msra.mxu0 0
      %2109 = vmatprep.subr.bf16.mxu0 0
      %2110 = vmatpush1.bf16.msra.mxu0 0
      %2111 = vmatprep.subr.bf16.mxu0 0
      %2112 = vmatpush1.bf16.msra.mxu0 0
      %2113 = vmatprep.mubr.bf16.mxu0 0
      %2114 = vmatmul.mubr.bf16.gmra.mrb[0].mxu0 %v2031
      %v2115 = vpop.f32.mrb[0].mxu0
      %v2116 = vadd.f32 0.0, %v2115
      %v2117 = vpop.f32.mrb[0].mxu0
      %v2118 = vpop.f32.mrb[0].mxu0
      %v2119 = vadd.f32 0.0, %v2118
      %v2120 = vpop.f32.mrb[0].mxu0
      %2121 = vmatprep.mubr.bf16.mxu0 0
      %2122 = vmatmul.mubr.bf16.gmra.mrb[0].mxu0 %v2032
      %v2123 = vpop.f32.mrb[0].mxu0
      %v2124 = vadd.f32 0.0, %v2123
      %v2125 = vpop.f32.mrb[0].mxu0
      %v2126 = vpop.f32.mrb[0].mxu0
      %v2127 = vadd.f32 0.0, %v2126
      %v2128 = vpop.f32.mrb[0].mxu0
      %2129 = vdwg.mxu0
      %v2130 = vadd.f32 %v1821, %v2116
      %v2131 = vadd.f32 %v1822, %v2119
      %v2132 = vadd.f32 %v1823, %v2124
      %v2133 = vadd.f32 %v1824, %v2127
      %v2134 = vld [vmem:[%s759] sm:$0x1]
      %v2136 = vlaneseq
      %v2137 = vshrl.u32 %v2136, 7
      %v2138 = vsub.s32 0, %v2137
      %v2139 = vrot.slane %v2134, %v2138
      %v2141 = vadd.f32 %v2130, %v2139
      %v2142 = vadd.f32 %v2131, %v2139
      %v2143 = vadd.f32 %v2132, %v2139
      %v2144 = vadd.f32 %v2133, %v2139
      %2145 = vst.msk [vmem:[#allocation2] sm:$0xff] %vm780, %v2141
      %2146 = vst.msk [vmem:[#allocation2 + $0x8] sm:$0xff] %vm780, %v2142
      %2147 = vst.msk [vmem:[#allocation2 + $0x10] sm:$0xff] %vm780, %v2143
      %2148 = vst.msk [vmem:[#allocation2 + $0x18] sm:$0xff] %vm780, %v2144
      %p2149 = scmp.eq.s32.totalorder %s30, 2
      // Predicated region
      $region101: #{heatformer_passive_forward.11} parent=95 // pred_check
        %p2150 = pneg %p2149
      $region102: #{heatformer_passive_forward.11} parent=95 // pred_check_branch
        %2152 = sbr.rel (%p2150) target = $region104
      $region103: #{heatformer_passive_forward.11} parent=95 // pred_region
        %v2153 = vld [vmem:[%s15] sm:$0x1]
        %v2154 = vld [vmem:[%s16] sm:$0x1]
        %v2155 = vsel %vm780, %v2141, 0.0
        %2156 = vadd.xlane.f32.xlu0 %v2155
        %v2157 = vpop.xlane.xlu0 %2156
        %v2158 = vsel %vm780, %v2142, 0.0
        %2159 = vadd.xlane.f32.xlu0 %v2158
        %v2160 = vpop.xlane.xlu0 %2159
        %v2161 = vsel %vm780, %v2143, 0.0
        %2162 = vadd.xlane.f32.xlu0 %v2161
        %v2163 = vpop.xlane.xlu0 %2162
        %v2164 = vsel %vm780, %v2144, 0.0
        %2165 = vadd.xlane.f32.xlu0 %v2164
        %v2166 = vpop.xlane.xlu0 %2165
        %v2167 = vmul.f32 %v2157, %v793
        %v2168 = vmul.f32 %v2160, %v793
        %v2169 = vmul.f32 %v2163, %v793
        %v2170 = vmul.f32 %v2166, %v793
        %v2171 = vsub.f32 %v2141, %v2167
        %v2172 = vsub.f32 %v2142, %v2168
        %v2173 = vsub.f32 %v2143, %v2169
        %v2174 = vsub.f32 %v2144, %v2170
        %v2175 = vmul.f32 %v2171, %v2171
        %v2176 = vmul.f32 %v2172, %v2172
        %v2177 = vmul.f32 %v2173, %v2173
        %v2178 = vmul.f32 %v2174, %v2174
        %v2179 = vsel %vm780, %v2175, 0.0
        %2180 = vadd.xlane.f32.xlu0 %v2179
        %v2181 = vpop.xlane.xlu0 %2180
        %v2182 = vsel %vm780, %v2176, 0.0
        %2183 = vadd.xlane.f32.xlu0 %v2182
        %v2184 = vpop.xlane.xlu0 %2183
        %v2185 = vsel %vm780, %v2177, 0.0
        %2186 = vadd.xlane.f32.xlu0 %v2185
        %v2187 = vpop.xlane.xlu0 %2186
        %v2188 = vsel %vm780, %v2178, 0.0
        %2189 = vadd.xlane.f32.xlu0 %v2188
        %v2190 = vpop.xlane.xlu0 %2189
        %v2191 = vmul.f32 %v2181, %v793
        %v2192 = vmul.f32 %v2184, %v793
        %v2193 = vmul.f32 %v2187, %v793
        %v2194 = vmul.f32 %v2190, %v793
        %v2195 = vadd.f32 %v2191, 1e-05
        %v2196 = vadd.f32 %v2192, 1e-05
        %v2197 = vadd.f32 %v2193, 1e-05
        %v2198 = vadd.f32 %v2194, 1e-05
        %v2199 = vrsqrt.pop %v2195
        %v2200 = vrsqrt.pop %v2196
        %v2201 = vrsqrt.pop %v2197
        %v2202 = vrsqrt.pop %v2198
        %v2203 = vmul.f32 %v2171, %v2199
        %v2204 = vmul.f32 %v2172, %v2200
        %v2205 = vmul.f32 %v2173, %v2201
        %v2206 = vmul.f32 %v2174, %v2202
        %v2208 = vlaneseq
        %v2209 = vshrl.u32 %v2208, 7
        %v2210 = vsub.s32 0, %v2209
        %v2211 = vrot.slane %v2153, %v2210
        %v2213 = vmul.f32 %v2203, %v2211
        %v2214 = vmul.f32 %v2204, %v2211
        %v2215 = vmul.f32 %v2205, %v2211
        %v2216 = vmul.f32 %v2206, %v2211
        %v2218 = vlaneseq
        %v2219 = vshrl.u32 %v2218, 7
        %v2220 = vsub.s32 0, %v2219
        %v2221 = vrot.slane %v2154, %v2220
        %v2223 = vadd.f32 %v2213, %v2221
        %v2224 = vadd.f32 %v2214, %v2221
        %v2225 = vadd.f32 %v2215, %v2221
        %v2226 = vadd.f32 %v2216, %v2221
        %v2227 = vld [vmem:[%s17] sm:$0xf]
        %v2228 = vld [vmem:[%s17 + $0x4] sm:$0xf]
        %v2229 = vld [vmem:[%s17 + $0x8] sm:$0xf]
        %v2230 = vld [vmem:[%s17 + $0xc] sm:$0xf]
        %v2231 = vpack.c.bf16 %v2224, %v2223
        %v2232 = vpack.c.bf16 %v2226, %v2225
        %v2233 = vld [vmem:[%s18] sm:$0x1]
        %v2235 = vlaneseq
        %v2236 = vshrl.u32 %v2235, 7
        %v2237 = vsub.s32 0, %v2236
        %v2238 = vrot.slane %v2233, %v2237
        %v2244 = vunpack.c.l.b16 %v2227
        %v2245 = vunpack.c.l.b16 %v2228
        %v2246 = vunpack.c.l.b16 %v2229
        %v2247 = vunpack.c.l.b16 %v2230
        %v2248 = vpack.c.b16 %v2245, %v2244
        %v2249 = vpack.c.b16 %v2247, %v2246
        %v2253 = vsel %vm780, %v2231, 0
        %v2256 = vsel %vm780, %v2232, 0
        %2258 = vmatprep.subr.bf16.mxu0 0
        %2259 = vmatpush1.bf16.msra.mxu0 %v2248
        %2260 = vmatprep.subr.bf16.mxu0 0
        %2261 = vmatpush1.bf16.msra.mxu0 %v2249
        %2262 = vmatprep.subr.bf16.mxu0 0
        %2263 = vmatpush1.bf16.msra.mxu0 0
        %2264 = vmatprep.subr.bf16.mxu0 0
        %2265 = vmatpush1.bf16.msra.mxu0 0
        %2266 = vmatprep.subr.bf16.mxu0 0
        %2267 = vmatpush1.bf16.msra.mxu0 0
        %2268 = vmatprep.subr.bf16.mxu0 0
        %2269 = vmatpush1.bf16.msra.mxu0 0
        %2270 = vmatprep.subr.bf16.mxu0 0
        %2271 = vmatpush1.bf16.msra.mxu0 0
        %2272 = vmatprep.subr.bf16.mxu0 0
        %2273 = vmatpush1.bf16.msra.mxu0 0
        %2274 = vmatprep.subr.bf16.mxu0 0
        %2275 = vmatpush1.bf16.msra.mxu0 0
        %2276 = vmatprep.subr.bf16.mxu0 0
        %2277 = vmatpush1.bf16.msra.mxu0 0
        %2278 = vmatprep.subr.bf16.mxu0 0
        %2279 = vmatpush1.bf16.msra.mxu0 0
        %2280 = vmatprep.subr.bf16.mxu0 0
        %2281 = vmatpush1.bf16.msra.mxu0 0
        %2282 = vmatprep.subr.bf16.mxu0 0
        %2283 = vmatpush1.bf16.msra.mxu0 0
        %2284 = vmatprep.subr.bf16.mxu0 0
        %2285 = vmatpush1.bf16.msra.mxu0 0
        %2286 = vmatprep.subr.bf16.mxu0 0
        %2287 = vmatpush1.bf16.msra.mxu0 0
        %2288 = vmatprep.subr.bf16.mxu0 0
        %2289 = vmatpush1.bf16.msra.mxu0 0
        %2290 = vmatprep.mubr.bf16.mxu0 0
        %2291 = vmatmul.mubr.bf16.gmra.mrb[0].mxu0 %v2253
        %v2292 = vpop.f32.mrb[0].mxu0
        %v2293 = vadd.f32 %v2238, %v2292
        %v2294 = vpop.f32.mrb[0].mxu0
        %v2295 = vpop.f32.mrb[0].mxu0
        %v2296 = vadd.f32 %v2238, %v2295
        %v2297 = vpop.f32.mrb[0].mxu0
        %2298 = vmatprep.mubr.bf16.mxu0 0
        %2299 = vmatmul.mubr.bf16.gmra.mrb[0].mxu0 %v2256
        %v2300 = vpop.f32.mrb[0].mxu0
        %v2301 = vadd.f32 %v2238, %v2300
        %v2302 = vpop.f32.mrb[0].mxu0
        %v2303 = vpop.f32.mrb[0].mxu0
        %v2304 = vadd.f32 %v2238, %v2303
        %v2305 = vpop.f32.mrb[0].mxu0
        %2306 = vdwg.mxu0
        %v2307 = vld [vmem:[%s1] sm:$0xff]
        %v2308 = vld [vmem:[%s1 + $0x8] sm:$0xff]
        %v2309 = vld [vmem:[%s1 + $0x10] sm:$0xff]
        %v2310 = vld [vmem:[%s1 + $0x18] sm:$0xff]
        %v2311 = vadd.f32 %v2293, %v2307
        %v2312 = vadd.f32 %v2296, %v2308
        %v2313 = vadd.f32 %v2301, %v2309
        %v2314 = vadd.f32 %v2304, %v2310
        %v2315 = vmul.f32 %v2311, 0.9995004
        %v2316 = vmul.f32 %v2312, 0.9995004
        %v2317 = vmul.f32 %v2313, 0.9995004
        %v2318 = vmul.f32 %v2314, 0.9995004
        %v2319 = vadd.f32 %v2315, 0.0
        %v2320 = vadd.f32 %v2316, 0.0
        %v2321 = vadd.f32 %v2317, 0.0
        %v2322 = vadd.f32 %v2318, 0.0
        %vm2323 = vcmp.gt.f32.partialorder %v2319, 0.0
        %vm2324 = vcmp.gt.f32.partialorder %v2320, 0.0
        %vm2325 = vcmp.gt.f32.partialorder %v2321, 0.0
        %vm2326 = vcmp.gt.f32.partialorder %v2322, 0.0
        %v2327 = vmin.f32 %v2319, 0.0
        %v2328 = vmin.f32 %v2320, 0.0
        %v2329 = vmin.f32 %v2321, 0.0
        %v2330 = vmin.f32 %v2322, 0.0
        %v2331 = vmul.f32 %v2327, 1.442695
        %v2332 = vpow.pop %v2331
        %v2333 = vmul.f32 %v2328, 1.442695
        %v2334 = vpow.pop %v2333
        %v2335 = vmul.f32 %v2329, 1.442695
        %v2336 = vpow.pop %v2335
        %v2337 = vmul.f32 %v2330, 1.442695
        %v2338 = vpow.pop %v2337
        %v2339 = vsub.f32 %v2332, 1.0
        %v2340 = vsub.f32 %v2334, 1.0
        %v2341 = vsub.f32 %v2336, 1.0
        %v2342 = vsub.f32 %v2338, 1.0
        %v2343 = vsel %vm2323, %v2319, %v2339
        %v2344 = vsel %vm2324, %v2320, %v2340
        %v2345 = vsel %vm2325, %v2321, %v2341
        %v2346 = vsel %vm2326, %v2322, %v2342
        %2347 = vst.msk [vmem:[%s19] sm:$0xff] %vm1727, %v2343
        %2348 = vst.msk [vmem:[%s19 + $0x8] sm:$0xff] %vm1727, %v2344
        %2349 = vst.msk [vmem:[%s19 + $0x10] sm:$0xff] %vm1727, %v2345
        %2350 = vst.msk [vmem:[%s19 + $0x18] sm:$0xff] %vm1727, %v2346
      $region104: #{heatformer_passive_forward.11} parent=95 // pred_fallthru
        _
      // Predicated region
      $region105: #{heatformer_passive_forward.11} parent=95 // pred_check
        %p2351 = pneg %p502
      $region106: #{heatformer_passive_forward.11} parent=95 // pred_check_branch
        %2353 = sbr.rel (%p2351) target = $region108
      $region107: #{heatformer_passive_forward.11} parent=95 // pred_region
        _
      $region108: #{heatformer_passive_forward.11} parent=95 // pred_fallthru
        _
      // Predicated region
      $region109: #{heatformer_passive_forward.11} parent=95 // pred_check
        %p2354 = pneg %p502
      $region110: #{heatformer_passive_forward.11} parent=95 // pred_check_branch
        %2356 = sbr.rel (%p2354) target = $region112
      $region111: #{heatformer_passive_forward.11} parent=95 // pred_region
        _
      $region112: #{heatformer_passive_forward.11} parent=95 // pred_fallthru
        _
    $region96: #{heatformer_passive_forward.11} parent=5 // pred_fallthru
      _
    %p2357 = scmp.le.s32.totalorder 2, %s25
    // Predicated region
    $region113: #{heatformer_passive_forward.11} parent=5 // pred_check
      %p2358 = pneg %p2357
    $region114: #{heatformer_passive_forward.11} parent=5 // pred_check_branch
      %2360 = sbr.rel (%p2358) target = $region116
    $region115: #{heatformer_passive_forward.11} parent=5 // pred_region
      %s2361 = ssub.s32 %s25, 2
    $region116: #{heatformer_passive_forward.11} parent=5 // pred_fallthru
      _
  $region6: #{heatformer_passive_forward.11} parent=0 // loop_footer
    %s29 = sadd.s32 1, %s25
  $region7: #{heatformer_passive_forward.11} parent=0 // loop_footer_branch
    %24 = sbr.rel target = $region3
  $region8: #{heatformer_passive_forward.11} parent=0 // loop_exit
    _

// kernel: heatformer_passive_forward.12
$region0: #{heatformer_passive_forward.12}
  #allocation0 [shape = 'u32[]', space=smem, size = 0x4, offset = 0x4, fixed_abs, tag = 'smem constant byte address 0x4 - core index']
  #allocation1 [shape = 'u32[144,128]{1,0:T(1,128)}', space=vmem, size = 0x12000, scoped, tag = 'internal scratch']
  %s0 = inlined_call_operand.vmem [shape: bf16[512,27], index: 0, kind: input, shape index: {}]
  %s1 = inlined_call_operand.vmem [shape: bf16[27,8], index: 1, kind: input, shape index: {}]
  %s2 = inlined_call_operand.vmem [shape: f32[1,8], index: 2, kind: input, shape index: {}]
  %s3 = inlined_call_operand.vmem [shape: f32[512,8], index: 3, kind: output, shape index: {}]
  %s4 = sld [smem:[#allocation0]]
  $region45: #{heatformer_passive_forward.12} parent=0
    _
  %s6 = ssub.s32 1, %s4
  %s7 = scalar_select 0, %s6, %s4
  loop: start=0, step=1, limit=4
  $region2: #{heatformer_passive_forward.12} parent=0 // loop_pre_header
    _
  $region3: #{heatformer_passive_forward.12} parent=0 // loop_header
    %s9 = sphi 0, %s13
    %p10 = scmp.ge.s32.totalorder %s9, 4
    %s19 = sphi 0, %s21
    %s22 = sphi 0, %s19
    %s23 = sphi 0, %s22
    %s39 = sphi 0, %s23
    %s43 = sphi 0, %s43
    %s45 = sphi 0, %s43
    %s46 = sphi 0, %s45
    %s60 = sphi 0, %s46
    %s64 = sphi 0, %s64
    %s66 = sphi 0, %s64
    %s67 = sphi 0, %s66
    %s81 = sphi 0, %s67
    %s87 = sphi 0, %s89
    %s90 = sphi 0, %s87
    %s91 = sphi 0, %s90
    %s107 = sphi 0, %s91
  $region4: #{heatformer_passive_forward.12} parent=0 // loop_header_branch
    %12 = sbr.rel (%p10) target = $region8
  $region5: #{heatformer_passive_forward.12} parent=0 // loop_body
    %s14 = ssub.s32 %s9, 1
    %s15 = ssub.s32 %s9, 2
    %s16 = sadd.s32 %s9, 1
    %s17 = ssub.s32 %s9, %s16
    %p18 = scmp.eq.s32.totalorder %s17, 0
    %s20 = sadd.s32 %s19, 1
    %s21 = scalar_select %p18, %s19, %s20
    %p24 = pneg %p18
    %p25 = scmp.eq.s32.totalorder %s9, 1
    %p26 = por %p24, %p25
    %p27 = scmp.ne.s32.totalorder %s19, %s22
    %p28 = scmp.eq.s32.totalorder %s9, 0
    %p29 = por %p27, %p28
    %p30 = scmp.ne.s32.totalorder %s19, %s22
    %p31 = scmp.eq.s32.totalorder %s14, 1
    %p32 = por %p30, %p31
    %p33 = scmp.ne.s32.totalorder %s22, %s23
    %p34 = scmp.eq.s32.totalorder %s14, 0
    %p35 = por %p33, %p34
    %p36 = scmp.ne.s32.totalorder %s22, %s23
    %p37 = scmp.eq.s32.totalorder %s15, 1
    %p38 = por %p36, %p37
    %p40 = scmp.ne.s32.totalorder %s23, %s39
    %p41 = scmp.eq.s32.totalorder %s15, 0
    %p42 = por %p40, %p41
    %s44 = sadd.s32 %s43, 1
    %p47 = scmp.eq.s32.totalorder %s9, 1
    %p48 = scmp.ne.s32.totalorder %s43, %s45
    %p49 = scmp.eq.s32.totalorder %s9, 0
    %p50 = por %p48, %p49
    %p51 = scmp.ne.s32.totalorder %s43, %s45
    %p52 = scmp.eq.s32.totalorder %s14, 1
    %p53 = por %p51, %p52
    %p54 = scmp.ne.s32.totalorder %s45, %s46
    %p55 = scmp.eq.s32.totalorder %s14, 0
    %p56 = por %p54, %p55
    %p57 = scmp.ne.s32.totalorder %s45, %s46
    %p58 = scmp.eq.s32.totalorder %s15, 1
    %p59 = por %p57, %p58
    %p61 = scmp.ne.s32.totalorder %s46, %s60
    %p62 = scmp.eq.s32.totalorder %s15, 0
    %p63 = por %p61, %p62
    %s65 = sadd.s32 %s64, 1
    %p68 = scmp.eq.s32.totalorder %s9, 1
    %p69 = scmp.ne.s32.totalorder %s64, %s66
    %p70 = scmp.eq.s32.totalorder %s9, 0
    %p71 = por %p69, %p70
    %p72 = scmp.ne.s32.totalorder %s64, %s66
    %p73 = scmp.eq.s32.totalorder %s14, 1
    %p74 = por %p72, %p73
    %p75 = scmp.ne.s32.totalorder %s66, %s67
    %p76 = scmp.eq.s32.totalorder %s14, 0
    %p77 = por %p75, %p76
    %p78 = scmp.ne.s32.totalorder %s66, %s67
    %p79 = scmp.eq.s32.totalorder %s15, 1
    %p80 = por %p78, %p79
    %p82 = scmp.ne.s32.totalorder %s67, %s81
    %p83 = scmp.eq.s32.totalorder %s15, 0
    %p84 = por %p82, %p83
    %s85 = ssub.s32 %s9, %s16
    %p86 = scmp.eq.s32.totalorder %s85, 0
    %s88 = sadd.s32 %s87, 1
    %s89 = scalar_select %p86, %s87, %s88
    %p92 = pneg %p86
    %p93 = scmp.eq.s32.totalorder %s9, 1
    %p94 = por %p92, %p93
    %p95 = scmp.ne.s32.totalorder %s87, %s90
    %p96 = scmp.eq.s32.totalorder %s9, 0
    %p97 = por %p95, %p96
    %p98 = scmp.ne.s32.totalorder %s87, %s90
    %p99 = scmp.eq.s32.totalorder %s14, 1
    %p100 = por %p98, %p99
    %p101 = scmp.ne.s32.totalorder %s90, %s91
    %p102 = scmp.eq.s32.totalorder %s14, 0
    %p103 = por %p101, %p102
    %p104 = scmp.ne.s32.totalorder %s90, %s91
    %p105 = scmp.eq.s32.totalorder %s15, 1
    %p106 = por %p104, %p105
    %p108 = scmp.ne.s32.totalorder %s91, %s107
    %p109 = scmp.eq.s32.totalorder %s15, 0
    %p110 = por %p108, %p109
    %p111 = scmp.le.s32.totalorder 1, %s9
    %p112 = scmp.lt.s32.totalorder %s9, 3
    %p113 = pnand %p111, %p112
    %p114 = pneg %p113
    // Predicated region
    $region9: #{heatformer_passive_forward.12} parent=5 // pred_check
      _
    $region10: #{heatformer_passive_forward.12} parent=5 // pred_check_branch
      %116 = sbr.rel (%p113) target = $region12
    $region11: #{heatformer_passive_forward.12} parent=5 // pred_region
      %s117 = ssub.s32 %s9, 1
      // Predicated region
      $region13: #{heatformer_passive_forward.12} parent=11 // pred_check
        %p118 = pneg %p56
      $region14: #{heatformer_passive_forward.12} parent=11 // pred_check_branch
        %120 = sbr.rel (%p118) target = $region16
      $region15: #{heatformer_passive_forward.12} parent=11 // pred_region
        _
      $region16: #{heatformer_passive_forward.12} parent=11 // pred_fallthru
        _
      // Predicated region
      $region17: #{heatformer_passive_forward.12} parent=11 // pred_check
        %p121 = pneg %p77
      $region18: #{heatformer_passive_forward.12} parent=11 // pred_check_branch
        %123 = sbr.rel (%p121) target = $region20
      $region19: #{heatformer_passive_forward.12} parent=11 // pred_region
        _
      $region20: #{heatformer_passive_forward.12} parent=11 // pred_fallthru
        _
    $region12: #{heatformer_passive_forward.12} parent=5 // pred_fallthru
      _
    %p124 = scmp.lt.s32.totalorder %s9, 2
    // Predicated region
    $region21: #{heatformer_passive_forward.12} parent=5 // pred_check
      %p125 = pneg %p124
    $region22: #{heatformer_passive_forward.12} parent=5 // pred_check_branch
      %127 = sbr.rel (%p125) target = $region24
    $region23: #{heatformer_passive_forward.12} parent=5 // pred_region
      // Predicated region
      $region25: #{heatformer_passive_forward.12} parent=23 // pred_check
        %p128 = pneg %p29
      $region26: #{heatformer_passive_forward.12} parent=23 // pred_check_branch
        %130 = sbr.rel (%p128) target = $region28
      $region27: #{heatformer_passive_forward.12} parent=23 // pred_region
        %s131 = smul.u32 32, %s9
        %p132 = scmp.lt.s32.totalorder %s131, 63
        %s133 = scalar_select %p132, %s131, 63
        %s134 = smul.addr %s133, 4
        %s135 = scalar_lea.vmem %s0, %s134
        %s136 = smul.u32 32, %s9
      $region28: #{heatformer_passive_forward.12} parent=23 // pred_fallthru
        _
    $region24: #{heatformer_passive_forward.12} parent=5 // pred_fallthru
      _
    %p137 = scmp.le.s32.totalorder 1, %s9
    %p138 = scmp.lt.s32.totalorder %s9, 3
    %p139 = pnand %p137, %p138
    %p140 = pneg %p139
    // Predicated region
    $region29: #{heatformer_passive_forward.12} parent=5 // pred_check
      _
    $region30: #{heatformer_passive_forward.12} parent=5 // pred_check_branch
      %142 = sbr.rel (%p139) target = $region32
    $region31: #{heatformer_passive_forward.12} parent=5 // pred_region
      %s143 = ssub.s32 %s9, 1
      %s144 = smul.u32 32, %s14
      %p145 = scmp.lt.s32.totalorder %s144, 63
      %s146 = scalar_select %p145, %s144, 63
      %s147 = smul.addr %s146, 4
      %s148 = scalar_lea.vmem %s0, %s147
      %p149 = pneg %p35
      %p150 = pneg %p32
      %p151 = pneg %p56
      %p152 = pneg %p53
      %p153 = pneg %p77
      %p154 = pneg %p74
      %p155 = pneg %p103
      %p156 = pneg %p100
      %s157 = smul.u32 32, %s14
      %p158 = scmp.lt.s32.totalorder %s157, 63
      %s159 = scalar_select %p158, %s157, 63
      %s160 = smul.addr %s159, 8
      %s161 = scalar_lea.vmem %s3, %s160
      %s162 = smul.u32 32, %s14
      %p163 = scmp.lt.s32.totalorder %s162, 63
      %s164 = scalar_select %p163, %s162, 63
      %s165 = smul.addr %s164, 4
      %s166 = scalar_lea.vmem %s0, %s165
      %s167 = smul.u32 32, %s14
      %s168 = smul.u32 32, %s14
      %p169 = scmp.lt.s32.totalorder %s168, 63
      %s170 = scalar_select %p169, %s168, 63
      %s171 = smul.addr %s170, 8
      %s172 = scalar_lea.vmem %s3, %s171
      %s173 = smul.u32 32, %s14
      %v175 = vld [vmem:[%s166] sm:$0xf]
      %v176 = vld [vmem:[%s166 + $0x4] sm:$0xf]
      %v177 = vld [vmem:[%s166 + $0x8] sm:$0xf]
      %v178 = vld [vmem:[%s166 + $0xc] sm:$0xf]
      %v179 = vld [vmem:[%s166 + $0x10] sm:$0xf]
      %v180 = vld [vmem:[%s166 + $0x14] sm:$0xf]
      %v181 = vld [vmem:[%s166 + $0x18] sm:$0xf]
      %v182 = vld [vmem:[%s166 + $0x1c] sm:$0xf]
      %v183 = vld [vmem:[%s166 + $0x20] sm:$0xf]
      %v184 = vld [vmem:[%s166 + $0x24] sm:$0xf]
      %v185 = vld [vmem:[%s166 + $0x28] sm:$0xf]
      %v186 = vld [vmem:[%s166 + $0x2c] sm:$0xf]
      %v187 = vld [vmem:[%s166 + $0x30] sm:$0xf]
      %v188 = vld [vmem:[%s166 + $0x34] sm:$0xf]
      %v189 = vld [vmem:[%s166 + $0x38] sm:$0xf]
      %v190 = vld [vmem:[%s166 + $0x3c] sm:$0xf]
      %v191 = vld [vmem:[%s166 + $0x40] sm:$0xf]
      %v192 = vld [vmem:[%s166 + $0x44] sm:$0xf]
      %v193 = vld [vmem:[%s166 + $0x48] sm:$0xf]
      %v194 = vld [vmem:[%s166 + $0x4c] sm:$0xf]
      %v195 = vld [vmem:[%s166 + $0x50] sm:$0xf]
      %v196 = vld [vmem:[%s166 + $0x54] sm:$0xf]
      %v197 = vld [vmem:[%s166 + $0x58] sm:$0xf]
      %v198 = vld [vmem:[%s166 + $0x5c] sm:$0xf]
      %v199 = vld [vmem:[%s166 + $0x60] sm:$0xf]
      %v200 = vld [vmem:[%s166 + $0x64] sm:$0xf]
      %v201 = vld [vmem:[%s166 + $0x68] sm:$0xf]
      %v202 = vld [vmem:[%s166 + $0x6c] sm:$0xf]
      %v203 = vld [vmem:[%s166 + $0x70] sm:$0xf]
      %v204 = vld [vmem:[%s166 + $0x74] sm:$0xf]
      %v205 = vld [vmem:[%s166 + $0x78] sm:$0xf]
      %v206 = vld [vmem:[%s166 + $0x7c] sm:$0xf]
      %v207 = vld [vmem:[%s1] sm:$0xf]
      %v208 = vld [vmem:[%s1 + $0x4] sm:$0xf]
      %v209 = vld [vmem:[%s1 + $0x8] sm:$0xf]
      %v210 = vld [vmem:[%s1 + $0xc] sm:$0x3]
      %v211 = vld [vmem:[%s2] sm:$0x1]
      %v213 = vlaneseq
      %v214 = vshrl.u32 %v213, 7
      %v215 = vsub.s32 0, %v214
      %v216 = vrot.slane %v211, %v215
      %v250 = vunpack.c.l.b16 %v175
      %v251 = vunpack.c.l.b16 %v176
      %v252 = vunpack.c.l.b16 %v177
      %v253 = vunpack.c.l.b16 %v178
      %v254 = vunpack.c.l.b16 %v179
      %v255 = vunpack.c.l.b16 %v180
      %v256 = vunpack.c.l.b16 %v181
      %v257 = vunpack.c.l.b16 %v182
      %v258 = vunpack.c.l.b16 %v183
      %v259 = vunpack.c.l.b16 %v184
      %v260 = vunpack.c.l.b16 %v185
      %v261 = vunpack.c.l.b16 %v186
      %v262 = vunpack.c.l.b16 %v187
      %v263 = vunpack.c.l.b16 %v188
      %v264 = vunpack.c.l.b16 %v189
      %v265 = vunpack.c.l.b16 %v190
      %v266 = vunpack.c.l.b16 %v191
      %v267 = vunpack.c.l.b16 %v192
      %v268 = vunpack.c.l.b16 %v193
      %v269 = vunpack.c.l.b16 %v194
      %v270 = vunpack.c.l.b16 %v195
      %v271 = vunpack.c.l.b16 %v196
      %v272 = vunpack.c.l.b16 %v197
      %v273 = vunpack.c.l.b16 %v198
      %v274 = vunpack.c.l.b16 %v199
      %v275 = vunpack.c.l.b16 %v200
      %v276 = vunpack.c.l.b16 %v201
      %v277 = vunpack.c.l.b16 %v202
      %v278 = vunpack.c.l.b16 %v203
      %v279 = vunpack.c.l.b16 %v204
      %v280 = vunpack.c.l.b16 %v205
      %v281 = vunpack.c.l.b16 %v206
      %v282 = vpack.c.b16 %v251, %v250
      %v283 = vpack.c.b16 %v253, %v252
      %v284 = vpack.c.b16 %v255, %v254
      %v285 = vpack.c.b16 %v257, %v256
      %v286 = vpack.c.b16 %v259, %v258
      %v287 = vpack.c.b16 %v261, %v260
      %v288 = vpack.c.b16 %v263, %v262
      %v289 = vpack.c.b16 %v265, %v264
      %v290 = vpack.c.b16 %v267, %v266
      %v291 = vpack.c.b16 %v269, %v268
      %v292 = vpack.c.b16 %v271, %v270
      %v293 = vpack.c.b16 %v273, %v272
      %v294 = vpack.c.b16 %v275, %v274
      %v295 = vpack.c.b16 %v277, %v276
      %v296 = vpack.c.b16 %v279, %v278
      %v297 = vpack.c.b16 %v281, %v280
      %v302 = vunpack.c.l.b16 %v207
      %v303 = vunpack.c.l.b16 %v208
      %v304 = vunpack.c.l.b16 %v209
      %v305 = vunpack.c.l.b16 %v210
      %v306 = vpack.c.b16 %v303, %v302
      %v307 = vpack.c.b16 %v305, %v304
      %vm309 = vcmask 220160
      %v311 = vsel %vm309, %v282, 0
      %v314 = vsel %vm309, %v283, 0
      %v317 = vsel %vm309, %v284, 0
      %v320 = vsel %vm309, %v285, 0
      %v323 = vsel %vm309, %v286, 0
      %v326 = vsel %vm309, %v287, 0
      %v329 = vsel %vm309, %v288, 0
      %v332 = vsel %vm309, %v289, 0
      %v335 = vsel %vm309, %v290, 0
      %v338 = vsel %vm309, %v291, 0
      %v341 = vsel %vm309, %v292, 0
      %v344 = vsel %vm309, %v293, 0
      %v347 = vsel %vm309, %v294, 0
      %v350 = vsel %vm309, %v295, 0
      %v353 = vsel %vm309, %v296, 0
      %v356 = vsel %vm309, %v297, 0
      %vm358 = vcmask 1044480
      %vm359 = vcmask 1045504
      %v360 = vsel %vm358, 4294967295, 65535
      %v361 = vsel %vm359, %v360, 0
      %v363 = vand.u32 %v307, %v361
      %365 = vmatprep.subr.bf16.mxu0 0
      %366 = vmatpush1.bf16.msra.mxu0 %v306
      %367 = vmatprep.subr.bf16.mxu0 0
      %368 = vmatpush1.bf16.msra.mxu0 %v363
      %369 = vmatprep.subr.bf16.mxu0 0
      %370 = vmatpush1.bf16.msra.mxu0 0
      %371 = vmatprep.subr.bf16.mxu0 0
      %372 = vmatpush1.bf16.msra.mxu0 0
      %373 = vmatprep.subr.bf16.mxu0 0
      %374 = vmatpush1.bf16.msra.mxu0 0
      %375 = vmatprep.subr.bf16.mxu0 0
      %376 = vmatpush1.bf16.msra.mxu0 0
      %377 = vmatprep.subr.bf16.mxu0 0
      %378 = vmatpush1.bf16.msra.mxu0 0
      %379 = vmatprep.subr.bf16.mxu0 0
      %380 = vmatpush1.bf16.msra.mxu0 0
      %381 = vmatprep.subr.bf16.mxu0 0
      %382 = vmatpush1.bf16.msra.mxu0 0
      %383 = vmatprep.subr.bf16.mxu0 0
      %384 = vmatpush1.bf16.msra.mxu0 0
      %385 = vmatprep.subr.bf16.mxu0 0
      %386 = vmatpush1.bf16.msra.mxu0 0
      %387 = vmatprep.subr.bf16.mxu0 0
      %388 = vmatpush1.bf16.msra.mxu0 0
      %389 = vmatprep.subr.bf16.mxu0 0
      %390 = vmatpush1.bf16.msra.mxu0 0
      %391 = vmatprep.subr.bf16.mxu0 0
      %392 = vmatpush1.bf16.msra.mxu0 0
      %393 = vmatprep.subr.bf16.mxu0 0
      %394 = vmatpush1.bf16.msra.mxu0 0
      %395 = vmatprep.subr.bf16.mxu0 0
      %396 = vmatpush1.bf16.msra.mxu0 0
      %397 = vmatprep.mubr.bf16.mxu0 0
      %398 = vmatmul.mubr.bf16.gmra.mrb[0].mxu0 %v311
      %v399 = vpop.f32.mrb[0].mxu0
      %v400 = vadd.f32 %v216, %v399
      %v401 = vpop.f32.mrb[0].mxu0
      %v402 = vpop.f32.mrb[0].mxu0
      %v403 = vadd.f32 %v216, %v402
      %v404 = vpop.f32.mrb[0].mxu0
      %405 = vmatprep.mubr.bf16.mxu0 0
      %406 = vmatmul.mubr.bf16.gmra.mrb[0].mxu0 %v314
      %v407 = vpop.f32.mrb[0].mxu0
      %v408 = vadd.f32 %v216, %v407
      %v409 = vpop.f32.mrb[0].mxu0
      %v410 = vpop.f32.mrb[0].mxu0
      %v411 = vadd.f32 %v216, %v410
      %v412 = vpop.f32.mrb[0].mxu0
      %413 = vmatprep.mubr.bf16.mxu0 0
      %414 = vmatmul.mubr.bf16.gmra.mrb[0].mxu0 %v317
      %v415 = vpop.f32.mrb[0].mxu0
      %v416 = vadd.f32 %v216, %v415
      %v417 = vpop.f32.mrb[0].mxu0
      %v418 = vpop.f32.mrb[0].mxu0
      %v419 = vadd.f32 %v216, %v418
      %v420 = vpop.f32.mrb[0].mxu0
      %421 = vmatprep.mubr.bf16.mxu0 0
      %422 = vmatmul.mubr.bf16.gmra.mrb[0].mxu0 %v320
      %v423 = vpop.f32.mrb[0].mxu0
      %v424 = vadd.f32 %v216, %v423
      %v425 = vpop.f32.mrb[0].mxu0
      %v426 = vpop.f32.mrb[0].mxu0
      %v427 = vadd.f32 %v216, %v426
      %v428 = vpop.f32.mrb[0].mxu0
      %429 = vmatprep.mubr.bf16.mxu0 0
      %430 = vmatmul.mubr.bf16.gmra.mrb[0].mxu0 %v323
      %v431 = vpop.f32.mrb[0].mxu0
      %v432 = vadd.f32 %v216, %v431
      %v433 = vpop.f32.mrb[0].mxu0
      %v434 = vpop.f32.mrb[0].mxu0
      %v435 = vadd.f32 %v216, %v434
      %v436 = vpop.f32.mrb[0].mxu0
      %437 = vmatprep.mubr.bf16.mxu0 0
      %438 = vmatmul.mubr.bf16.gmra.mrb[0].mxu0 %v326
      %v439 = vpop.f32.mrb[0].mxu0
      %v440 = vadd.f32 %v216, %v439
      %v441 = vpop.f32.mrb[0].mxu0
      %v442 = vpop.f32.mrb[0].mxu0
      %v443 = vadd.f32 %v216, %v442
      %v444 = vpop.f32.mrb[0].mxu0
      %445 = vmatprep.mubr.bf16.mxu0 0
      %446 = vmatmul.mubr.bf16.gmra.mrb[0].mxu0 %v329
      %v447 = vpop.f32.mrb[0].mxu0
      %v448 = vadd.f32 %v216, %v447
      %v449 = vpop.f32.mrb[0].mxu0
      %v450 = vpop.f32.mrb[0].mxu0
      %v451 = vadd.f32 %v216, %v450
      %v452 = vpop.f32.mrb[0].mxu0
      %453 = vmatprep.mubr.bf16.mxu0 0
      %454 = vmatmul.mubr.bf16.gmra.mrb[0].mxu0 %v332
      %v455 = vpop.f32.mrb[0].mxu0
      %v456 = vadd.f32 %v216, %v455
      %v457 = vpop.f32.mrb[0].mxu0
      %v458 = vpop.f32.mrb[0].mxu0
      %v459 = vadd.f32 %v216, %v458
      %v460 = vpop.f32.mrb[0].mxu0
      %461 = vmatprep.mubr.bf16.mxu0 0
      %462 = vmatmul.mubr.bf16.gmra.mrb[0].mxu0 %v335
      %v463 = vpop.f32.mrb[0].mxu0
      %v464 = vadd.f32 %v216, %v463
      %v465 = vpop.f32.mrb[0].mxu0
      %v466 = vpop.f32.mrb[0].mxu0
      %v467 = vadd.f32 %v216, %v466
      %v468 = vpop.f32.mrb[0].mxu0
      %469 = vmatprep.mubr.bf16.mxu0 0
      %470 = vmatmul.mubr.bf16.gmra.mrb[0].mxu0 %v338
      %v471 = vpop.f32.mrb[0].mxu0
      %v472 = vadd.f32 %v216, %v471
      %v473 = vpop.f32.mrb[0].mxu0
      %v474 = vpop.f32.mrb[0].mxu0
      %v475 = vadd.f32 %v216, %v474
      %v476 = vpop.f32.mrb[0].mxu0
      %477 = vmatprep.mubr.bf16.mxu0 0
      %478 = vmatmul.mubr.bf16.gmra.mrb[0].mxu0 %v341
      %v479 = vpop.f32.mrb[0].mxu0
      %v480 = vadd.f32 %v216, %v479
      %v481 = vpop.f32.mrb[0].mxu0
      %v482 = vpop.f32.mrb[0].mxu0
      %v483 = vadd.f32 %v216, %v482
      %v484 = vpop.f32.mrb[0].mxu0
      %485 = vmatprep.mubr.bf16.mxu0 0
      %486 = vmatmul.mubr.bf16.gmra.mrb[0].mxu0 %v344
      %v487 = vpop.f32.mrb[0].mxu0
      %v488 = vadd.f32 %v216, %v487
      %v489 = vpop.f32.mrb[0].mxu0
      %v490 = vpop.f32.mrb[0].mxu0
      %v491 = vadd.f32 %v216, %v490
      %v492 = vpop.f32.mrb[0].mxu0
      %493 = vmatprep.mubr.bf16.mxu0 0
      %494 = vmatmul.mubr.bf16.gmra.mrb[0].mxu0 %v347
      %v495 = vpop.f32.mrb[0].mxu0
      %v496 = vadd.f32 %v216, %v495
      %v497 = vpop.f32.mrb[0].mxu0
      %v498 = vpop.f32.mrb[0].mxu0
      %v499 = vadd.f32 %v216, %v498
      %v500 = vpop.f32.mrb[0].mxu0
      %501 = vmatprep.mubr.bf16.mxu0 0
      %502 = vmatmul.mubr.bf16.gmra.mrb[0].mxu0 %v350
      %v503 = vpop.f32.mrb[0].mxu0
      %v504 = vadd.f32 %v216, %v503
      %v505 = vpop.f32.mrb[0].mxu0
      %v506 = vpop.f32.mrb[0].mxu0
      %v507 = vadd.f32 %v216, %v506
      %v508 = vpop.f32.mrb[0].mxu0
      %509 = vmatprep.mubr.bf16.mxu0 0
      %510 = vmatmul.mubr.bf16.gmra.mrb[0].mxu0 %v353
      %v511 = vpop.f32.mrb[0].mxu0
      %v512 = vadd.f32 %v216, %v511
      %v513 = vpop.f32.mrb[0].mxu0
      %v514 = vpop.f32.mrb[0].mxu0
      %v515 = vadd.f32 %v216, %v514
      %v516 = vpop.f32.mrb[0].mxu0
      %517 = vmatprep.mubr.bf16.mxu0 0
      %518 = vmatmul.mubr.bf16.gmra.mrb[0].mxu0 %v356
      %v519 = vpop.f32.mrb[0].mxu0
      %v520 = vadd.f32 %v216, %v519
      %v521 = vpop.f32.mrb[0].mxu0
      %v522 = vpop.f32.mrb[0].mxu0
      %v523 = vadd.f32 %v216, %v522
      %v524 = vpop.f32.mrb[0].mxu0
      %525 = vdwg.mxu0
      %vm526 = vcmp.gt.f32.partialorder %v400, 0.0
      %vm527 = vcmp.gt.f32.partialorder %v403, 0.0
      %vm528 = vcmp.gt.f32.partialorder %v408, 0.0
      %vm529 = vcmp.gt.f32.partialorder %v411, 0.0
      %vm530 = vcmp.gt.f32.partialorder %v416, 0.0
      %vm531 = vcmp.gt.f32.partialorder %v419, 0.0
      %vm532 = vcmp.gt.f32.partialorder %v424, 0.0
      %vm533 = vcmp.gt.f32.partialorder %v427, 0.0
      %vm534 = vcmp.gt.f32.partialorder %v432, 0.0
      %vm535 = vcmp.gt.f32.partialorder %v435, 0.0
      %vm536 = vcmp.gt.f32.partialorder %v440, 0.0
      %vm537 = vcmp.gt.f32.partialorder %v443, 0.0
      %vm538 = vcmp.gt.f32.partialorder %v448, 0.0
      %vm539 = vcmp.gt.f32.partialorder %v451, 0.0
      %vm540 = vcmp.gt.f32.partialorder %v456, 0.0
      %vm541 = vcmp.gt.f32.partialorder %v459, 0.0
      %vm542 = vcmp.gt.f32.partialorder %v464, 0.0
      %vm543 = vcmp.gt.f32.partialorder %v467, 0.0
      %vm544 = vcmp.gt.f32.partialorder %v472, 0.0
      %vm545 = vcmp.gt.f32.partialorder %v475, 0.0
      %vm546 = vcmp.gt.f32.partialorder %v480, 0.0
      %vm547 = vcmp.gt.f32.partialorder %v483, 0.0
      %vm548 = vcmp.gt.f32.partialorder %v488, 0.0
      %vm549 = vcmp.gt.f32.partialorder %v491, 0.0
      %vm550 = vcmp.gt.f32.partialorder %v496, 0.0
      %vm551 = vcmp.gt.f32.partialorder %v499, 0.0
      %vm552 = vcmp.gt.f32.partialorder %v504, 0.0
      %vm553 = vcmp.gt.f32.partialorder %v507, 0.0
      %vm554 = vcmp.gt.f32.partialorder %v512, 0.0
      %vm555 = vcmp.gt.f32.partialorder %v515, 0.0
      %vm556 = vcmp.gt.f32.partialorder %v520, 0.0
      %vm557 = vcmp.gt.f32.partialorder %v523, 0.0
      %v558 = vmin.f32 %v400, 0.0
      %v559 = vmin.f32 %v403, 0.0
      %v560 = vmin.f32 %v408, 0.0
      %v561 = vmin.f32 %v411, 0.0
      %v562 = vmin.f32 %v416, 0.0
      %v563 = vmin.f32 %v419, 0.0
      %v564 = vmin.f32 %v424, 0.0
      %v565 = vmin.f32 %v427, 0.0
      %v566 = vmin.f32 %v432, 0.0
      %v567 = vmin.f32 %v435, 0.0
      %v568 = vmin.f32 %v440, 0.0
      %v569 = vmin.f32 %v443, 0.0
      %v570 = vmin.f32 %v448, 0.0
      %v571 = vmin.f32 %v451, 0.0
      %v572 = vmin.f32 %v456, 0.0
      %v573 = vmin.f32 %v459, 0.0
      %v574 = vmin.f32 %v464, 0.0
      %v575 = vmin.f32 %v467, 0.0
      %v576 = vmin.f32 %v472, 0.0
      %v577 = vmin.f32 %v475, 0.0
      %v578 = vmin.f32 %v480, 0.0
      %v579 = vmin.f32 %v483, 0.0
      %v580 = vmin.f32 %v488, 0.0
      %v581 = vmin.f32 %v491, 0.0
      %v582 = vmin.f32 %v496, 0.0
      %v583 = vmin.f32 %v499, 0.0
      %v584 = vmin.f32 %v504, 0.0
      %v585 = vmin.f32 %v507, 0.0
      %v586 = vmin.f32 %v512, 0.0
      %v587 = vmin.f32 %v515, 0.0
      %v588 = vmin.f32 %v520, 0.0
      %v589 = vmin.f32 %v523, 0.0
      %v590 = vmul.f32 %v558, 1.442695
      %v591 = vpow.pop %v590
      %v592 = vmul.f32 %v559, 1.442695
      %v593 = vpow.pop %v592
      %v594 = vmul.f32 %v560, 1.442695
      %v595 = vpow.pop %v594
      %v596 = vmul.f32 %v561, 1.442695
      %v597 = vpow.pop %v596
      %v598 = vmul.f32 %v562, 1.442695
      %v599 = vpow.pop %v598
      %v600 = vmul.f32 %v563, 1.442695
      %v601 = vpow.pop %v600
      %v602 = vmul.f32 %v564, 1.442695
      %v603 = vpow.pop %v602
      %v604 = vmul.f32 %v565, 1.442695
      %v605 = vpow.pop %v604
      %v606 = vmul.f32 %v566, 1.442695
      %v607 = vpow.pop %v606
      %v608 = vmul.f32 %v567, 1.442695
      %v609 = vpow.pop %v608
      %v610 = vmul.f32 %v568, 1.442695
      %v611 = vpow.pop %v610
      %v612 = vmul.f32 %v569, 1.442695
      %v613 = vpow.pop %v612
      %v614 = vmul.f32 %v570, 1.442695
      %v615 = vpow.pop %v614
      %v616 = vmul.f32 %v571, 1.442695
      %v617 = vpow.pop %v616
      %v618 = vmul.f32 %v572, 1.442695
      %v619 = vpow.pop %v618
      %v620 = vmul.f32 %v573, 1.442695
      %v621 = vpow.pop %v620
      %v622 = vmul.f32 %v574, 1.442695
      %v623 = vpow.pop %v622
      %v624 = vmul.f32 %v575, 1.442695
      %v625 = vpow.pop %v624
      %v626 = vmul.f32 %v576, 1.442695
      %v627 = vpow.pop %v626
      %v628 = vmul.f32 %v577, 1.442695
      %v629 = vpow.pop %v628
      %v630 = vmul.f32 %v578, 1.442695
      %v631 = vpow.pop %v630
      %v632 = vmul.f32 %v579, 1.442695
      %v633 = vpow.pop %v632
      %v634 = vmul.f32 %v580, 1.442695
      %v635 = vpow.pop %v634
      %v636 = vmul.f32 %v581, 1.442695
      %v637 = vpow.pop %v636
      %v638 = vmul.f32 %v582, 1.442695
      %v639 = vpow.pop %v638
      %v640 = vmul.f32 %v583, 1.442695
      %v641 = vpow.pop %v640
      %v642 = vmul.f32 %v584, 1.442695
      %v643 = vpow.pop %v642
      %v644 = vmul.f32 %v585, 1.442695
      %v645 = vpow.pop %v644
      %v646 = vmul.f32 %v586, 1.442695
      %v647 = vpow.pop %v646
      %v648 = vmul.f32 %v587, 1.442695
      %v649 = vpow.pop %v648
      %v650 = vmul.f32 %v588, 1.442695
      %v651 = vpow.pop %v650
      %v652 = vmul.f32 %v589, 1.442695
      %v653 = vpow.pop %v652
      %v654 = vsub.f32 %v591, 1.0
      %v655 = vsub.f32 %v593, 1.0
      %v656 = vsub.f32 %v595, 1.0
      %v657 = vsub.f32 %v597, 1.0
      %v658 = vsub.f32 %v599, 1.0
      %v659 = vsub.f32 %v601, 1.0
      %v660 = vsub.f32 %v603, 1.0
      %v661 = vsub.f32 %v605, 1.0
      %v662 = vsub.f32 %v607, 1.0
      %v663 = vsub.f32 %v609, 1.0
      %v664 = vsub.f32 %v611, 1.0
      %v665 = vsub.f32 %v613, 1.0
      %v666 = vsub.f32 %v615, 1.0
      %v667 = vsub.f32 %v617, 1.0
      %v668 = vsub.f32 %v619, 1.0
      %v669 = vsub.f32 %v621, 1.0
      %v670 = vsub.f32 %v623, 1.0
      %v671 = vsub.f32 %v625, 1.0
      %v672 = vsub.f32 %v627, 1.0
      %v673 = vsub.f32 %v629, 1.0
      %v674 = vsub.f32 %v631, 1.0
      %v675 = vsub.f32 %v633, 1.0
      %v676 = vsub.f32 %v635, 1.0
      %v677 = vsub.f32 %v637, 1.0
      %v678 = vsub.f32 %v639, 1.0
      %v679 = vsub.f32 %v641, 1.0
      %v680 = vsub.f32 %v643, 1.0
      %v681 = vsub.f32 %v645, 1.0
      %v682 = vsub.f32 %v647, 1.0
      %v683 = vsub.f32 %v649, 1.0
      %v684 = vsub.f32 %v651, 1.0
      %v685 = vsub.f32 %v653, 1.0
      %v686 = vsel %vm526, %v400, %v654
      %v687 = vsel %vm527, %v403, %v655
      %v688 = vsel %vm528, %v408, %v656
      %v689 = vsel %vm529, %v411, %v657
      %v690 = vsel %vm530, %v416, %v658
      %v691 = vsel %vm531, %v419, %v659
      %v692 = vsel %vm532, %v424, %v660
      %v693 = vsel %vm533, %v427, %v661
      %v694 = vsel %vm534, %v432, %v662
      %v695 = vsel %vm535, %v435, %v663
      %v696 = vsel %vm536, %v440, %v664
      %v697 = vsel %vm537, %v443, %v665
      %v698 = vsel %vm538, %v448, %v666
      %v699 = vsel %vm539, %v451, %v667
      %v700 = vsel %vm540, %v456, %v668
      %v701 = vsel %vm541, %v459, %v669
      %v702 = vsel %vm542, %v464, %v670
      %v703 = vsel %vm543, %v467, %v671
      %v704 = vsel %vm544, %v472, %v672
      %v705 = vsel %vm545, %v475, %v673
      %v706 = vsel %vm546, %v480, %v674
      %v707 = vsel %vm547, %v483, %v675
      %v708 = vsel %vm548, %v488, %v676
      %v709 = vsel %vm549, %v491, %v677
      %v710 = vsel %vm550, %v496, %v678
      %v711 = vsel %vm551, %v499, %v679
      %v712 = vsel %vm552, %v504, %v680
      %v713 = vsel %vm553, %v507, %v681
      %v714 = vsel %vm554, %v512, %v682
      %v715 = vsel %vm555, %v515, %v683
      %v716 = vsel %vm556, %v520, %v684
      %v717 = vsel %vm557, %v523, %v685
      %vm718 = vcmask 64512
      %719 = vst.msk [vmem:[%s172] sm:$0xff] %vm718, %v686
      %720 = vst.msk [vmem:[%s172 + $0x8] sm:$0xff] %vm718, %v687
      %721 = vst.msk [vmem:[%s172 + $0x10] sm:$0xff] %vm718, %v688
      %722 = vst.msk [vmem:[%s172 + $0x18] sm:$0xff] %vm718, %v689
      %723 = vst.msk [vmem:[%s172 + $0x20] sm:$0xff] %vm718, %v690
      %724 = vst.msk [vmem:[%s172 + $0x28] sm:$0xff] %vm718, %v691
      %725 = vst.msk [vmem:[%s172 + $0x30] sm:$0xff] %vm718, %v692
      %726 = vst.msk [vmem:[%s172 + $0x38] sm:$0xff] %vm718, %v693
      %727 = vst.msk [vmem:[%s172 + $0x40] sm:$0xff] %vm718, %v694
      %728 = vst.msk [vmem:[%s172 + $0x48] sm:$0xff] %vm718, %v695
      %729 = vst.msk [vmem:[%s172 + $0x50] sm:$0xff] %vm718, %v696
      %730 = vst.msk [vmem:[%s172 + $0x58] sm:$0xff] %vm718, %v697
      %731 = vst.msk [vmem:[%s172 + $0x60] sm:$0xff] %vm718, %v698
      %732 = vst.msk [vmem:[%s172 + $0x68] sm:$0xff] %vm718, %v699
      %733 = vst.msk [vmem:[%s172 + $0x70] sm:$0xff] %vm718, %v700
      %734 = vst.msk [vmem:[%s172 + $0x78] sm:$0xff] %vm718, %v701
      %735 = vst.msk [vmem:[%s172 + $0x80] sm:$0xff] %vm718, %v702
      %736 = vst.msk [vmem:[%s172 + $0x88] sm:$0xff] %vm718, %v703
      %737 = vst.msk [vmem:[%s172 + $0x90] sm:$0xff] %vm718, %v704
      %738 = vst.msk [vmem:[%s172 + $0x98] sm:$0xff] %vm718, %v705
      %739 = vst.msk [vmem:[%s172 + $0xa0] sm:$0xff] %vm718, %v706
      %740 = vst.msk [vmem:[%s172 + $0xa8] sm:$0xff] %vm718, %v707
      %741 = vst.msk [vmem:[%s172 + $0xb0] sm:$0xff] %vm718, %v708
      %742 = vst.msk [vmem:[%s172 + $0xb8] sm:$0xff] %vm718, %v709
      %743 = vst.msk [vmem:[%s172 + $0xc0] sm:$0xff] %vm718, %v710
      %744 = vst.msk [vmem:[%s172 + $0xc8] sm:$0xff] %vm718, %v711
      %745 = vst.msk [vmem:[%s172 + $0xd0] sm:$0xff] %vm718, %v712
      %746 = vst.msk [vmem:[%s172 + $0xd8] sm:$0xff] %vm718, %v713
      %747 = vst.msk [vmem:[%s172 + $0xe0] sm:$0xff] %vm718, %v714
      %748 = vst.msk [vmem:[%s172 + $0xe8] sm:$0xff] %vm718, %v715
      %749 = vst.msk [vmem:[%s172 + $0xf0] sm:$0xff] %vm718, %v716
      %750 = vst.msk [vmem:[%s172 + $0xf8] sm:$0xff] %vm718, %v717
      %s751 = smul.u32 32, %s14
      %p752 = scmp.lt.s32.totalorder %s751, 63
      %s753 = scalar_select %p752, %s751, 63
      %s754 = smul.addr %s753, 8
      %s755 = scalar_lea.vmem %s3, %s754
      // Predicated region
      $region33: #{heatformer_passive_forward.12} parent=31 // pred_check
        %p756 = pneg %p100
      $region34: #{heatformer_passive_forward.12} parent=31 // pred_check_branch
        %758 = sbr.rel (%p756) target = $region36
      $region35: #{heatformer_passive_forward.12} parent=31 // pred_region
        %s759 = smul.u32 32, %s14
      $region36: #{heatformer_passive_forward.12} parent=31 // pred_fallthru
        _
    $region32: #{heatformer_passive_forward.12} parent=5 // pred_fallthru
      _
    %p760 = scmp.le.s32.totalorder 2, %s9
    // Predicated region
    $region37: #{heatformer_passive_forward.12} parent=5 // pred_check
      %p761 = pneg %p760
    $region38: #{heatformer_passive_forward.12} parent=5 // pred_check_branch
      %763 = sbr.rel (%p761) target = $region40
    $region39: #{heatformer_passive_forward.12} parent=5 // pred_region
      %s764 = ssub.s32 %s9, 2
      // Predicated region
      $region41: #{heatformer_passive_forward.12} parent=39 // pred_check
        %p765 = pneg %p106
      $region42: #{heatformer_passive_forward.12} parent=39 // pred_check_branch
        %767 = sbr.rel (%p765) target = $region44
      $region43: #{heatformer_passive_forward.12} parent=39 // pred_region
        %s768 = smul.u32 32, %s15
        %p769 = scmp.lt.s32.totalorder %s768, 63
        %s770 = scalar_select %p769, %s768, 63
        %s771 = smul.addr %s770, 8
        %s772 = scalar_lea.vmem %s3, %s771
      $region44: #{heatformer_passive_forward.12} parent=39 // pred_fallthru
        _
    $region40: #{heatformer_passive_forward.12} parent=5 // pred_fallthru
      _
  $region6: #{heatformer_passive_forward.12} parent=0 // loop_footer
    %s13 = sadd.s32 1, %s9
  $region7: #{heatformer_passive_forward.12} parent=0 // loop_footer_branch
    %8 = sbr.rel target = $region3
  $region8: #{heatformer_passive_forward.12} parent=0 // loop_exit
    _

// kernel: mul.10
$region0: #{mul.10}
  #allocation0 [shape = 's32[1]{0}', space=sflag, size = 0x4, scoped, tag = 'scoped memory for mul.10']
  %s0 = inlined_call_operand.vmem [shape: f32[2,8], index: 0, kind: input, shape index: {}]
  %s1 = inlined_call_operand.vmem [shape: f32[2,16,16,8], index: 1, kind: output, shape index: {}]
  // Predicated region
  $region2: #{mul.10} parent=0 // pred_check
    _
  $region3: #{mul.10} parent=0 // pred_check_branch
    %3 = sbr.rel (0) target = $region5
  $region4: #{mul.10} parent=0 // pred_region
    _
  $region5: #{mul.10} parent=0 // pred_fallthru
    _
  %v4 = vld [vmem:[%s0] ss:$0 sm:$0xff]
  %5 = vst [vmem:[%s1] sm:$0xff] %v4
  %s6 = scalar_lea.vmem %s0, 1
  %v7 = vld [vmem:[%s6] ss:$0 sm:$0xff]
  %s8 = scalar_lea.vmem %s1, 256
  %9 = vst [vmem:[%s8] sm:$0xff] %v7
  %s10 = scalar_lea.vmem %s1, 16
  %11 = vst [vmem:[%s10] sm:$0xff] %v4
  %s12 = scalar_lea.vmem %s1, 272
  %13 = vst [vmem:[%s12] sm:$0xff] %v7
  %s14 = scalar_lea.vmem %s1, 32
  %15 = vst [vmem:[%s14] sm:$0xff] %v4
  %s16 = scalar_lea.vmem %s1, 288
  %17 = vst [vmem:[%s16] sm:$0xff] %v7
  %s18 = scalar_lea.vmem %s1, 48
  %19 = vst [vmem:[%s18] sm:$0xff] %v4
  %s20 = scalar_lea.vmem %s1, 304
  %21 = vst [vmem:[%s20] sm:$0xff] %v7
  %s22 = scalar_lea.vmem %s1, 64
  %23 = vst [vmem:[%s22] sm:$0xff] %v4
  %s24 = scalar_lea.vmem %s1, 320
  %25 = vst [vmem:[%s24] sm:$0xff] %v7
  %s26 = scalar_lea.vmem %s1, 80
  %27 = vst [vmem:[%s26] sm:$0xff] %v4
  %s28 = scalar_lea.vmem %s1, 336
  %29 = vst [vmem:[%s28] sm:$0xff] %v7
  %s30 = scalar_lea.vmem %s1, 96
  %31 = vst [vmem:[%s30] sm:$0xff] %v4
  %s32 = scalar_lea.vmem %s1, 352
  %33 = vst [vmem:[%s32] sm:$0xff] %v7
  %s34 = scalar_lea.vmem %s1, 112
  %35 = vst [vmem:[%s34] sm:$0xff] %v4
  %s36 = scalar_lea.vmem %s1, 368
  %37 = vst [vmem:[%s36] sm:$0xff] %v7
  %s38 = scalar_lea.vmem %s1, 128
  %39 = vst [vmem:[%s38] sm:$0xff] %v4
  %s40 = scalar_lea.vmem %s1, 384
  %41 = vst [vmem:[%s40] sm:$0xff] %v7
  %s42 = scalar_lea.vmem %s1, 144
  %43 = vst [vmem:[%s42] sm:$0xff] %v4
  %s44 = scalar_lea.vmem %s1, 400
  %45 = vst [vmem:[%s44] sm:$0xff] %v7
  %s46 = scalar_lea.vmem %s1, 160
  %47 = vst [vmem:[%s46] sm:$0xff] %v4
  %s48 = scalar_lea.vmem %s1, 416
  %49 = vst [vmem:[%s48] sm:$0xff] %v7
  %s50 = scalar_lea.vmem %s1, 176
  %51 = vst [vmem:[%s50] sm:$0xff] %v4
  %s52 = scalar_lea.vmem %s1, 432
  %53 = vst [vmem:[%s52] sm:$0xff] %v7
  %s54 = scalar_lea.vmem %s1, 192
  %55 = vst [vmem:[%s54] sm:$0xff] %v4
  %s56 = scalar_lea.vmem %s1, 448
  %57 = vst [vmem:[%s56] sm:$0xff] %v7
  %s58 = scalar_lea.vmem %s1, 208
  %59 = vst [vmem:[%s58] sm:$0xff] %v4
  %s60 = scalar_lea.vmem %s1, 464
  %61 = vst [vmem:[%s60] sm:$0xff] %v7
  %s62 = scalar_lea.vmem %s1, 224
  %63 = vst [vmem:[%s62] sm:$0xff] %v4
  %s64 = scalar_lea.vmem %s1, 480
  %65 = vst [vmem:[%s64] sm:$0xff] %v7
  %s66 = scalar_lea.vmem %s1, 240
  %67 = vst [vmem:[%s66] sm:$0xff] %v4
  %s68 = scalar_lea.vmem %s1, 496
  %69 = vst [vmem:[%s68] sm:$0xff] %v7
  %s70 = scalar_lea.vmem %s1, 8
  %71 = vst [vmem:[%s70] sm:$0xff] %v4
  %s72 = scalar_lea.vmem %s1, 264
  %73 = vst [vmem:[%s72] sm:$0xff] %v7
  %s74 = scalar_lea.vmem %s1, 24
  %75 = vst [vmem:[%s74] sm:$0xff] %v4
  %s76 = scalar_lea.vmem %s1, 280
  %77 = vst [vmem:[%s76] sm:$0xff] %v7
  %s78 = scalar_lea.vmem %s1, 40
  %79 = vst [vmem:[%s78] sm:$0xff] %v4
  %s80 = scalar_lea.vmem %s1, 296
  %81 = vst [vmem:[%s80] sm:$0xff] %v7
  %s82 = scalar_lea.vmem %s1, 56
  %83 = vst [vmem:[%s82] sm:$0xff] %v4
  %s84 = scalar_lea.vmem %s1, 312
  %85 = vst [vmem:[%s84] sm:$0xff] %v7
  %s86 = scalar_lea.vmem %s1, 72
  %87 = vst [vmem:[%s86] sm:$0xff] %v4
  %s88 = scalar_lea.vmem %s1, 328
  %89 = vst [vmem:[%s88] sm:$0xff] %v7
  %s90 = scalar_lea.vmem %s1, 88
  %91 = vst [vmem:[%s90] sm:$0xff] %v4
  %s92 = scalar_lea.vmem %s1, 344
  %93 = vst [vmem:[%s92] sm:$0xff] %v7
  %s94 = scalar_lea.vmem %s1, 104
  %95 = vst [vmem:[%s94] sm:$0xff] %v4
  %s96 = scalar_lea.vmem %s1, 360
  %97 = vst [vmem:[%s96] sm:$0xff] %v7
  %s98 = scalar_lea.vmem %s1, 120
  %99 = vst [vmem:[%s98] sm:$0xff] %v4
  %s100 = scalar_lea.vmem %s1, 376
  %101 = vst [vmem:[%s100] sm:$0xff] %v7
  %s102 = scalar_lea.vmem %s1, 136
  %103 = vst [vmem:[%s102] sm:$0xff] %v4
  %s104 = scalar_lea.vmem %s1, 392
  %105 = vst [vmem:[%s104] sm:$0xff] %v7
  %s106 = scalar_lea.vmem %s1, 152
  %107 = vst [vmem:[%s106] sm:$0xff] %v4
  %s108 = scalar_lea.vmem %s1, 408
  %109 = vst [vmem:[%s108] sm:$0xff] %v7
  %s110 = scalar_lea.vmem %s1, 168
  %111 = vst [vmem:[%s110] sm:$0xff] %v4
  %s112 = scalar_lea.vmem %s1, 424
  %113 = vst [vmem:[%s112] sm:$0xff] %v7
  %s114 = scalar_lea.vmem %s1, 184
  %115 = vst [vmem:[%s114] sm:$0xff] %v4
  %s116 = scalar_lea.vmem %s1, 440
  %117 = vst [vmem:[%s116] sm:$0xff] %v7
  %s118 = scalar_lea.vmem %s1, 200
  %119 = vst [vmem:[%s118] sm:$0xff] %v4
  %s120 = scalar_lea.vmem %s1, 456
  %121 = vst [vmem:[%s120] sm:$0xff] %v7
  %s122 = scalar_lea.vmem %s1, 216
  %123 = vst [vmem:[%s122] sm:$0xff] %v4
  %s124 = scalar_lea.vmem %s1, 472
  %125 = vst [vmem:[%s124] sm:$0xff] %v7
  %s126 = scalar_lea.vmem %s1, 232
  %127 = vst [vmem:[%s126] sm:$0xff] %v4
  %s128 = scalar_lea.vmem %s1, 488
  %129 = vst [vmem:[%s128] sm:$0xff] %v7
  %s130 = scalar_lea.vmem %s1, 248
  %131 = vst [vmem:[%s130] sm:$0xff] %v4
  %s132 = scalar_lea.vmem %s1, 504
  %133 = vst [vmem:[%s132] sm:$0xff] %v7

// kernel: mul.13
$region0: #{mul.13}
  %s0 = inlined_call_operand.vmem [shape: f32[512], index: 0, kind: input, shape index: {}]
  %s1 = inlined_call_operand.vmem [shape: f32[2,16,16], index: 1, kind: output, shape index: {}]
  $region1: #{mul.13} parent=0
    #allocation0 [shape = 'u8[4096]{0}', space=vmem, size = 0x1000, scoped, tag = 'scoped mem for input reshape']
    %s3 = sshllo.u32 0, 4
    %v4 = vld [vmem:[%s0] sm:%s3]
    %5 = vst [vmem:[#allocation0] sm:%s3] %v4
    %v6 = vld [vmem:[#allocation0] sm:$0xf]
    %vm7 = vcmask 130048
    %8 = vst.msk [vmem:[%s1] ss:$8 sm:$0xf] %vm7, %v6
    %v9 = vld [vmem:[#allocation0] sm:$0xf]
    %10 = vrot.lane.b32.xlu0 %v9, 112
    %v11 = vpop.permute.xlu0 %10
    %vm12 = vcmask 130048
    %s13 = scalar_lea.vmem %s1, 1
    %14 = vst.msk [vmem:[%s13] ss:$8 sm:$0xf] %vm12, %v11
    %v15 = vld [vmem:[#allocation0] sm:$0xf]
    %16 = vrot.lane.b32.xlu0 %v15, 96
    %v17 = vpop.permute.xlu0 %16
    %vm18 = vcmask 130048
    %s19 = scalar_lea.vmem %s1, 2
    %20 = vst.msk [vmem:[%s19] ss:$8 sm:$0xf] %vm18, %v17
    %v21 = vld [vmem:[#allocation0] sm:$0xf]
    %22 = vrot.lane.b32.xlu0 %v21, 80
    %v23 = vpop.permute.xlu0 %22
    %vm24 = vcmask 130048
    %s25 = scalar_lea.vmem %s1, 3
    %26 = vst.msk [vmem:[%s25] ss:$8 sm:$0xf] %vm24, %v23
    %v27 = vld [vmem:[#allocation0] sm:$0xf]
    %28 = vrot.lane.b32.xlu0 %v27, 64
    %v29 = vpop.permute.xlu0 %28
    %vm30 = vcmask 130048
    %s31 = scalar_lea.vmem %s1, 4
    %32 = vst.msk [vmem:[%s31] ss:$8 sm:$0xf] %vm30, %v29
    %v33 = vld [vmem:[#allocation0] sm:$0xf]
    %34 = vrot.lane.b32.xlu0 %v33, 48
    %v35 = vpop.permute.xlu0 %34
    %vm36 = vcmask 130048
    %s37 = scalar_lea.vmem %s1, 5
    %38 = vst.msk [vmem:[%s37] ss:$8 sm:$0xf] %vm36, %v35
    %v39 = vld [vmem:[#allocation0] sm:$0xf]
    %40 = vrot.lane.b32.xlu0 %v39, 32
    %v41 = vpop.permute.xlu0 %40
    %vm42 = vcmask 130048
    %s43 = scalar_lea.vmem %s1, 6
    %44 = vst.msk [vmem:[%s43] ss:$8 sm:$0xf] %vm42, %v41
    %v45 = vld [vmem:[#allocation0] sm:$0xf]
    %46 = vrot.lane.b32.xlu0 %v45, 16
    %v47 = vpop.permute.xlu0 %46
    %vm48 = vcmask 130048
    %s49 = scalar_lea.vmem %s1, 7
    %50 = vst.msk [vmem:[%s49] ss:$8 sm:$0xf] %vm48, %v47

// kernel: heatformer_passive_forward.13
$region0: #{heatformer_passive_forward.13}
  #allocation0 [shape = 'u32[]', space=smem, size = 0x4, offset = 0x4, fixed_abs, tag = 'smem constant byte address 0x4 - core index']
  #allocation1 [shape = 'u32[144,128]{1,0:T(1,128)}', space=vmem, size = 0x12000, scoped, tag = 'internal scratch']
  #allocation2 [shape = 'f32[1,1]{1,0:T(1,128)S(1)}', space=vmem, size = 0x200, scoped, tag = 'scoped memory for heatformer_passive_forward.13']
  %s0 = inlined_call_operand.vmem [shape: bf16[512,98], index: 0, kind: input, shape index: {}]
  %s1 = inlined_call_operand.vmem [shape: bf16[98,1], index: 1, kind: input, shape index: {}]
  %s2 = inlined_call_operand.<no memory space> [shape: f32[1,1], index: 2, kind: input, shape index: {}]
  %s3 = inlined_call_operand.vmem [shape: f32[512,1], index: 3, kind: output, shape index: {}]
  %s4 = sld [smem:[#allocation0]]
  $region45: #{heatformer_passive_forward.13} parent=0
    _
  %s6 = ssub.s32 1, %s4
  %s7 = scalar_select 0, %s6, %s4
  %v8 = vstv %s2
  %9 = vst [vmem:[#allocation2] sm:$0x1] %v8
  loop: start=0, step=1, limit=4
  $region2: #{heatformer_passive_forward.13} parent=0 // loop_pre_header
    _
  $region3: #{heatformer_passive_forward.13} parent=0 // loop_header
    %s11 = sphi 0, %s15
    %p12 = scmp.ge.s32.totalorder %s11, 4
    %s21 = sphi 0, %s23
    %s24 = sphi 0, %s21
    %s25 = sphi 0, %s24
    %s41 = sphi 0, %s25
    %s45 = sphi 0, %s45
    %s47 = sphi 0, %s45
    %s48 = sphi 0, %s47
    %s62 = sphi 0, %s48
    %s66 = sphi 0, %s66
    %s68 = sphi 0, %s66
    %s69 = sphi 0, %s68
    %s83 = sphi 0, %s69
    %s89 = sphi 0, %s91
    %s92 = sphi 0, %s89
    %s93 = sphi 0, %s92
    %s109 = sphi 0, %s93
  $region4: #{heatformer_passive_forward.13} parent=0 // loop_header_branch
    %14 = sbr.rel (%p12) target = $region8
  $region5: #{heatformer_passive_forward.13} parent=0 // loop_body
    %s16 = ssub.s32 %s11, 1
    %s17 = ssub.s32 %s11, 2
    %s18 = sadd.s32 %s11, 1
    %s19 = ssub.s32 %s11, %s18
    %p20 = scmp.eq.s32.totalorder %s19, 0
    %s22 = sadd.s32 %s21, 1
    %s23 = scalar_select %p20, %s21, %s22
    %p26 = pneg %p20
    %p27 = scmp.eq.s32.totalorder %s11, 1
    %p28 = por %p26, %p27
    %p29 = scmp.ne.s32.totalorder %s21, %s24
    %p30 = scmp.eq.s32.totalorder %s11, 0
    %p31 = por %p29, %p30
    %p32 = scmp.ne.s32.totalorder %s21, %s24
    %p33 = scmp.eq.s32.totalorder %s16, 1
    %p34 = por %p32, %p33
    %p35 = scmp.ne.s32.totalorder %s24, %s25
    %p36 = scmp.eq.s32.totalorder %s16, 0
    %p37 = por %p35, %p36
    %p38 = scmp.ne.s32.totalorder %s24, %s25
    %p39 = scmp.eq.s32.totalorder %s17, 1
    %p40 = por %p38, %p39
    %p42 = scmp.ne.s32.totalorder %s25, %s41
    %p43 = scmp.eq.s32.totalorder %s17, 0
    %p44 = por %p42, %p43
    %s46 = sadd.s32 %s45, 1
    %p49 = scmp.eq.s32.totalorder %s11, 1
    %p50 = scmp.ne.s32.totalorder %s45, %s47
    %p51 = scmp.eq.s32.totalorder %s11, 0
    %p52 = por %p50, %p51
    %p53 = scmp.ne.s32.totalorder %s45, %s47
    %p54 = scmp.eq.s32.totalorder %s16, 1
    %p55 = por %p53, %p54
    %p56 = scmp.ne.s32.totalorder %s47, %s48
    %p57 = scmp.eq.s32.totalorder %s16, 0
    %p58 = por %p56, %p57
    %p59 = scmp.ne.s32.totalorder %s47, %s48
    %p60 = scmp.eq.s32.totalorder %s17, 1
    %p61 = por %p59, %p60
    %p63 = scmp.ne.s32.totalorder %s48, %s62
    %p64 = scmp.eq.s32.totalorder %s17, 0
    %p65 = por %p63, %p64
    %s67 = sadd.s32 %s66, 1
    %p70 = scmp.eq.s32.totalorder %s11, 1
    %p71 = scmp.ne.s32.totalorder %s66, %s68
    %p72 = scmp.eq.s32.totalorder %s11, 0
    %p73 = por %p71, %p72
    %p74 = scmp.ne.s32.totalorder %s66, %s68
    %p75 = scmp.eq.s32.totalorder %s16, 1
    %p76 = por %p74, %p75
    %p77 = scmp.ne.s32.totalorder %s68, %s69
    %p78 = scmp.eq.s32.totalorder %s16, 0
    %p79 = por %p77, %p78
    %p80 = scmp.ne.s32.totalorder %s68, %s69
    %p81 = scmp.eq.s32.totalorder %s17, 1
    %p82 = por %p80, %p81
    %p84 = scmp.ne.s32.totalorder %s69, %s83
    %p85 = scmp.eq.s32.totalorder %s17, 0
    %p86 = por %p84, %p85
    %s87 = ssub.s32 %s11, %s18
    %p88 = scmp.eq.s32.totalorder %s87, 0
    %s90 = sadd.s32 %s89, 1
    %s91 = scalar_select %p88, %s89, %s90
    %p94 = pneg %p88
    %p95 = scmp.eq.s32.totalorder %s11, 1
    %p96 = por %p94, %p95
    %p97 = scmp.ne.s32.totalorder %s89, %s92
    %p98 = scmp.eq.s32.totalorder %s11, 0
    %p99 = por %p97, %p98
    %p100 = scmp.ne.s32.totalorder %s89, %s92
    %p101 = scmp.eq.s32.totalorder %s16, 1
    %p102 = por %p100, %p101
    %p103 = scmp.ne.s32.totalorder %s92, %s93
    %p104 = scmp.eq.s32.totalorder %s16, 0
    %p105 = por %p103, %p104
    %p106 = scmp.ne.s32.totalorder %s92, %s93
    %p107 = scmp.eq.s32.totalorder %s17, 1
    %p108 = por %p106, %p107
    %p110 = scmp.ne.s32.totalorder %s93, %s109
    %p111 = scmp.eq.s32.totalorder %s17, 0
    %p112 = por %p110, %p111
    %p113 = scmp.le.s32.totalorder 1, %s11
    %p114 = scmp.lt.s32.totalorder %s11, 3
    %p115 = pnand %p113, %p114
    %p116 = pneg %p115
    // Predicated region
    $region9: #{heatformer_passive_forward.13} parent=5 // pred_check
      _
    $region10: #{heatformer_passive_forward.13} parent=5 // pred_check_branch
      %118 = sbr.rel (%p115) target = $region12
    $region11: #{heatformer_passive_forward.13} parent=5 // pred_region
      %s119 = ssub.s32 %s11, 1
      // Predicated region
      $region13: #{heatformer_passive_forward.13} parent=11 // pred_check
        %p120 = pneg %p58
      $region14: #{heatformer_passive_forward.13} parent=11 // pred_check_branch
        %122 = sbr.rel (%p120) target = $region16
      $region15: #{heatformer_passive_forward.13} parent=11 // pred_region
        _
      $region16: #{heatformer_passive_forward.13} parent=11 // pred_fallthru
        _
      // Predicated region
      $region17: #{heatformer_passive_forward.13} parent=11 // pred_check
        %p123 = pneg %p79
      $region18: #{heatformer_passive_forward.13} parent=11 // pred_check_branch
        %125 = sbr.rel (%p123) target = $region20
      $region19: #{heatformer_passive_forward.13} parent=11 // pred_region
        _
      $region20: #{heatformer_passive_forward.13} parent=11 // pred_fallthru
        _
    $region12: #{heatformer_passive_forward.13} parent=5 // pred_fallthru
      _
    %p126 = scmp.lt.s32.totalorder %s11, 2
    // Predicated region
    $region21: #{heatformer_passive_forward.13} parent=5 // pred_check
      %p127 = pneg %p126
    $region22: #{heatformer_passive_forward.13} parent=5 // pred_check_branch
      %129 = sbr.rel (%p127) target = $region24
    $region23: #{heatformer_passive_forward.13} parent=5 // pred_region
      // Predicated region
      $region25: #{heatformer_passive_forward.13} parent=23 // pred_check
        %p130 = pneg %p31
      $region26: #{heatformer_passive_forward.13} parent=23 // pred_check_branch
        %132 = sbr.rel (%p130) target = $region28
      $region27: #{heatformer_passive_forward.13} parent=23 // pred_region
        %s133 = smul.u32 32, %s11
        %p134 = scmp.lt.s32.totalorder %s133, 63
        %s135 = scalar_select %p134, %s133, 63
        %s136 = smul.addr %s135, 4
        %s137 = scalar_lea.vmem %s0, %s136
        %s138 = smul.u32 32, %s11
      $region28: #{heatformer_passive_forward.13} parent=23 // pred_fallthru
        _
    $region24: #{heatformer_passive_forward.13} parent=5 // pred_fallthru
      _
    %p139 = scmp.le.s32.totalorder 1, %s11
    %p140 = scmp.lt.s32.totalorder %s11, 3
    %p141 = pnand %p139, %p140
    %p142 = pneg %p141
    // Predicated region
    $region29: #{heatformer_passive_forward.13} parent=5 // pred_check
      _
    $region30: #{heatformer_passive_forward.13} parent=5 // pred_check_branch
      %144 = sbr.rel (%p141) target = $region32
    $region31: #{heatformer_passive_forward.13} parent=5 // pred_region
      %s145 = ssub.s32 %s11, 1
      %s146 = smul.u32 32, %s16
      %p147 = scmp.lt.s32.totalorder %s146, 63
      %s148 = scalar_select %p147, %s146, 63
      %s149 = smul.addr %s148, 4
      %s150 = scalar_lea.vmem %s0, %s149
      %p151 = pneg %p37
      %p152 = pneg %p34
      %p153 = pneg %p58
      %p154 = pneg %p55
      %p155 = pneg %p79
      %p156 = pneg %p76
      %p157 = pneg %p105
      %p158 = pneg %p102
      %s159 = smul.u32 32, %s16
      %p160 = scmp.lt.s32.totalorder %s159, 63
      %s161 = scalar_select %p160, %s159, 63
      %s162 = smul.addr %s161, 8
      %s163 = scalar_lea.vmem %s3, %s162
      %s164 = smul.u32 32, %s16
      %p165 = scmp.lt.s32.totalorder %s164, 63
      %s166 = scalar_select %p165, %s164, 63
      %s167 = smul.addr %s166, 4
      %s168 = scalar_lea.vmem %s0, %s167
      %s169 = smul.u32 32, %s16
      %s170 = smul.u32 32, %s16
      %p171 = scmp.lt.s32.totalorder %s170, 63
      %s172 = scalar_select %p171, %s170, 63
      %s173 = smul.addr %s172, 8
      %s174 = scalar_lea.vmem %s3, %s173
      %s175 = smul.u32 32, %s16
      %v177 = vld [vmem:[%s168] sm:$0xf]
      %v178 = vld [vmem:[%s168 + $0x4] sm:$0xf]
      %v179 = vld [vmem:[%s168 + $0x8] sm:$0xf]
      %v180 = vld [vmem:[%s168 + $0xc] sm:$0xf]
      %v181 = vld [vmem:[%s168 + $0x10] sm:$0xf]
      %v182 = vld [vmem:[%s168 + $0x14] sm:$0xf]
      %v183 = vld [vmem:[%s168 + $0x18] sm:$0xf]
      %v184 = vld [vmem:[%s168 + $0x1c] sm:$0xf]
      %v185 = vld [vmem:[%s168 + $0x20] sm:$0xf]
      %v186 = vld [vmem:[%s168 + $0x24] sm:$0xf]
      %v187 = vld [vmem:[%s168 + $0x28] sm:$0xf]
      %v188 = vld [vmem:[%s168 + $0x2c] sm:$0xf]
      %v189 = vld [vmem:[%s168 + $0x30] sm:$0xf]
      %v190 = vld [vmem:[%s168 + $0x34] sm:$0xf]
      %v191 = vld [vmem:[%s168 + $0x38] sm:$0xf]
      %v192 = vld [vmem:[%s168 + $0x3c] sm:$0xf]
      %v193 = vld [vmem:[%s168 + $0x40] sm:$0xf]
      %v194 = vld [vmem:[%s168 + $0x44] sm:$0xf]
      %v195 = vld [vmem:[%s168 + $0x48] sm:$0xf]
      %v196 = vld [vmem:[%s168 + $0x4c] sm:$0xf]
      %v197 = vld [vmem:[%s168 + $0x50] sm:$0xf]
      %v198 = vld [vmem:[%s168 + $0x54] sm:$0xf]
      %v199 = vld [vmem:[%s168 + $0x58] sm:$0xf]
      %v200 = vld [vmem:[%s168 + $0x5c] sm:$0xf]
      %v201 = vld [vmem:[%s168 + $0x60] sm:$0xf]
      %v202 = vld [vmem:[%s168 + $0x64] sm:$0xf]
      %v203 = vld [vmem:[%s168 + $0x68] sm:$0xf]
      %v204 = vld [vmem:[%s168 + $0x6c] sm:$0xf]
      %v205 = vld [vmem:[%s168 + $0x70] sm:$0xf]
      %v206 = vld [vmem:[%s168 + $0x74] sm:$0xf]
      %v207 = vld [vmem:[%s168 + $0x78] sm:$0xf]
      %v208 = vld [vmem:[%s168 + $0x7c] sm:$0xf]
      %v209 = vld [vmem:[%s1] sm:$0xf]
      %v210 = vld [vmem:[%s1 + $0x4] sm:$0xf]
      %v211 = vld [vmem:[%s1 + $0x8] sm:$0xf]
      %v212 = vld [vmem:[%s1 + $0xc] sm:$0xf]
      %v213 = vld [vmem:[%s1 + $0x10] sm:$0xf]
      %v214 = vld [vmem:[%s1 + $0x14] sm:$0xf]
      %v215 = vld [vmem:[%s1 + $0x18] sm:$0xf]
      %v216 = vld [vmem:[%s1 + $0x1c] sm:$0xf]
      %v217 = vld [vmem:[%s1 + $0x20] sm:$0xf]
      %v218 = vld [vmem:[%s1 + $0x24] sm:$0xf]
      %v219 = vld [vmem:[%s1 + $0x28] sm:$0xf]
      %v220 = vld [vmem:[%s1 + $0x2c] sm:$0xf]
      %v221 = vld [vmem:[%s1 + $0x30] sm:$0x1]
      %v222 = vld [vmem:[#allocation2] sm:$0x1]
      %v224 = vlaneseq
      %v225 = vshrl.u32 %v224, 7
      %v226 = vsub.s32 0, %v225
      %v227 = vrot.slane %v222, %v226
      %v261 = vunpack.c.l.b16 %v177
      %v262 = vunpack.c.l.b16 %v178
      %v263 = vunpack.c.l.b16 %v179
      %v264 = vunpack.c.l.b16 %v180
      %v265 = vunpack.c.l.b16 %v181
      %v266 = vunpack.c.l.b16 %v182
      %v267 = vunpack.c.l.b16 %v183
      %v268 = vunpack.c.l.b16 %v184
      %v269 = vunpack.c.l.b16 %v185
      %v270 = vunpack.c.l.b16 %v186
      %v271 = vunpack.c.l.b16 %v187
      %v272 = vunpack.c.l.b16 %v188
      %v273 = vunpack.c.l.b16 %v189
      %v274 = vunpack.c.l.b16 %v190
      %v275 = vunpack.c.l.b16 %v191
      %v276 = vunpack.c.l.b16 %v192
      %v277 = vunpack.c.l.b16 %v193
      %v278 = vunpack.c.l.b16 %v194
      %v279 = vunpack.c.l.b16 %v195
      %v280 = vunpack.c.l.b16 %v196
      %v281 = vunpack.c.l.b16 %v197
      %v282 = vunpack.c.l.b16 %v198
      %v283 = vunpack.c.l.b16 %v199
      %v284 = vunpack.c.l.b16 %v200
      %v285 = vunpack.c.l.b16 %v201
      %v286 = vunpack.c.l.b16 %v202
      %v287 = vunpack.c.l.b16 %v203
      %v288 = vunpack.c.l.b16 %v204
      %v289 = vunpack.c.l.b16 %v205
      %v290 = vunpack.c.l.b16 %v206
      %v291 = vunpack.c.l.b16 %v207
      %v292 = vunpack.c.l.b16 %v208
      %v293 = vpack.c.b16 %v262, %v261
      %v294 = vpack.c.b16 %v264, %v263
      %v295 = vpack.c.b16 %v266, %v265
      %v296 = vpack.c.b16 %v268, %v267
      %v297 = vpack.c.b16 %v270, %v269
      %v298 = vpack.c.b16 %v272, %v271
      %v299 = vpack.c.b16 %v274, %v273
      %v300 = vpack.c.b16 %v276, %v275
      %v301 = vpack.c.b16 %v278, %v277
      %v302 = vpack.c.b16 %v280, %v279
      %v303 = vpack.c.b16 %v282, %v281
      %v304 = vpack.c.b16 %v284, %v283
      %v305 = vpack.c.b16 %v286, %v285
      %v306 = vpack.c.b16 %v288, %v287
      %v307 = vpack.c.b16 %v290, %v289
      %v308 = vpack.c.b16 %v292, %v291
      %v322 = vunpack.c.l.b16 %v209
      %v323 = vunpack.c.l.b16 %v210
      %v324 = vunpack.c.l.b16 %v211
      %v325 = vunpack.c.l.b16 %v212
      %v326 = vunpack.c.l.b16 %v213
      %v327 = vunpack.c.l.b16 %v214
      %v328 = vunpack.c.l.b16 %v215
      %v329 = vunpack.c.l.b16 %v216
      %v330 = vunpack.c.l.b16 %v217
      %v331 = vunpack.c.l.b16 %v218
      %v332 = vunpack.c.l.b16 %v219
      %v333 = vunpack.c.l.b16 %v220
      %v334 = vunpack.c.l.b16 %v221
      %v335 = vpack.c.b16 %v323, %v322
      %v336 = vpack.c.b16 %v325, %v324
      %v337 = vpack.c.b16 %v327, %v326
      %v338 = vpack.c.b16 %v329, %v328
      %v339 = vpack.c.b16 %v331, %v330
      %v340 = vpack.c.b16 %v333, %v332
      %v341 = vpack.c.b16 %v334, %v334
      %vm348 = vcmask 801792
      %v350 = vsel %vm348, %v293, 0
      %v353 = vsel %vm348, %v294, 0
      %v356 = vsel %vm348, %v295, 0
      %v359 = vsel %vm348, %v296, 0
      %v362 = vsel %vm348, %v297, 0
      %v365 = vsel %vm348, %v298, 0
      %v368 = vsel %vm348, %v299, 0
      %v371 = vsel %vm348, %v300, 0
      %v374 = vsel %vm348, %v301, 0
      %v377 = vsel %vm348, %v302, 0
      %v380 = vsel %vm348, %v303, 0
      %v383 = vsel %vm348, %v304, 0
      %v386 = vsel %vm348, %v305, 0
      %v389 = vsel %vm348, %v306, 0
      %v392 = vsel %vm348, %v307, 0
      %v395 = vsel %vm348, %v308, 0
      %vm397 = vcmask 1040384
      %v399 = vsel %vm397, %v341, 0
      %401 = vmatprep.subr.bf16.mxu0 0
      %402 = vmatpush1.bf16.msra.mxu0 %v335
      %403 = vmatprep.subr.bf16.mxu0 0
      %404 = vmatpush1.bf16.msra.mxu0 %v336
      %405 = vmatprep.subr.bf16.mxu0 0
      %406 = vmatpush1.bf16.msra.mxu0 %v337
      %407 = vmatprep.subr.bf16.mxu0 0
      %408 = vmatpush1.bf16.msra.mxu0 %v338
      %409 = vmatprep.subr.bf16.mxu0 0
      %410 = vmatpush1.bf16.msra.mxu0 %v339
      %411 = vmatprep.subr.bf16.mxu0 0
      %412 = vmatpush1.bf16.msra.mxu0 %v340
      %413 = vmatprep.subr.bf16.mxu0 0
      %414 = vmatpush1.bf16.msra.mxu0 %v399
      %415 = vmatprep.subr.bf16.mxu0 0
      %416 = vmatpush1.bf16.msra.mxu0 0
      %417 = vmatprep.subr.bf16.mxu0 0
      %418 = vmatpush1.bf16.msra.mxu0 0
      %419 = vmatprep.subr.bf16.mxu0 0
      %420 = vmatpush1.bf16.msra.mxu0 0
      %421 = vmatprep.subr.bf16.mxu0 0
      %422 = vmatpush1.bf16.msra.mxu0 0
      %423 = vmatprep.subr.bf16.mxu0 0
      %424 = vmatpush1.bf16.msra.mxu0 0
      %425 = vmatprep.subr.bf16.mxu0 0
      %426 = vmatpush1.bf16.msra.mxu0 0
      %427 = vmatprep.subr.bf16.mxu0 0
      %428 = vmatpush1.bf16.msra.mxu0 0
      %429 = vmatprep.subr.bf16.mxu0 0
      %430 = vmatpush1.bf16.msra.mxu0 0
      %431 = vmatprep.subr.bf16.mxu0 0
      %432 = vmatpush1.bf16.msra.mxu0 0
      %433 = vmatprep.mubr.bf16.mxu0 0
      %434 = vmatmul.mubr.bf16.gmra.mrb[0].mxu0 %v350
      %v435 = vpop.f32.mrb[0].mxu0
      %v436 = vadd.f32 %v227, %v435
      %v437 = vpop.f32.mrb[0].mxu0
      %v438 = vpop.f32.mrb[0].mxu0
      %v439 = vadd.f32 %v227, %v438
      %v440 = vpop.f32.mrb[0].mxu0
      %441 = vmatprep.mubr.bf16.mxu0 0
      %442 = vmatmul.mubr.bf16.gmra.mrb[0].mxu0 %v353
      %v443 = vpop.f32.mrb[0].mxu0
      %v444 = vadd.f32 %v227, %v443
      %v445 = vpop.f32.mrb[0].mxu0
      %v446 = vpop.f32.mrb[0].mxu0
      %v447 = vadd.f32 %v227, %v446
      %v448 = vpop.f32.mrb[0].mxu0
      %449 = vmatprep.mubr.bf16.mxu0 0
      %450 = vmatmul.mubr.bf16.gmra.mrb[0].mxu0 %v356
      %v451 = vpop.f32.mrb[0].mxu0
      %v452 = vadd.f32 %v227, %v451
      %v453 = vpop.f32.mrb[0].mxu0
      %v454 = vpop.f32.mrb[0].mxu0
      %v455 = vadd.f32 %v227, %v454
      %v456 = vpop.f32.mrb[0].mxu0
      %457 = vmatprep.mubr.bf16.mxu0 0
      %458 = vmatmul.mubr.bf16.gmra.mrb[0].mxu0 %v359
      %v459 = vpop.f32.mrb[0].mxu0
      %v460 = vadd.f32 %v227, %v459
      %v461 = vpop.f32.mrb[0].mxu0
      %v462 = vpop.f32.mrb[0].mxu0
      %v463 = vadd.f32 %v227, %v462
      %v464 = vpop.f32.mrb[0].mxu0
      %465 = vmatprep.mubr.bf16.mxu0 0
      %466 = vmatmul.mubr.bf16.gmra.mrb[0].mxu0 %v362
      %v467 = vpop.f32.mrb[0].mxu0
      %v468 = vadd.f32 %v227, %v467
      %v469 = vpop.f32.mrb[0].mxu0
      %v470 = vpop.f32.mrb[0].mxu0
      %v471 = vadd.f32 %v227, %v470
      %v472 = vpop.f32.mrb[0].mxu0
      %473 = vmatprep.mubr.bf16.mxu0 0
      %474 = vmatmul.mubr.bf16.gmra.mrb[0].mxu0 %v365
      %v475 = vpop.f32.mrb[0].mxu0
      %v476 = vadd.f32 %v227, %v475
      %v477 = vpop.f32.mrb[0].mxu0
      %v478 = vpop.f32.mrb[0].mxu0
      %v479 = vadd.f32 %v227, %v478
      %v480 = vpop.f32.mrb[0].mxu0
      %481 = vmatprep.mubr.bf16.mxu0 0
      %482 = vmatmul.mubr.bf16.gmra.mrb[0].mxu0 %v368
      %v483 = vpop.f32.mrb[0].mxu0
      %v484 = vadd.f32 %v227, %v483
      %v485 = vpop.f32.mrb[0].mxu0
      %v486 = vpop.f32.mrb[0].mxu0
      %v487 = vadd.f32 %v227, %v486
      %v488 = vpop.f32.mrb[0].mxu0
      %489 = vmatprep.mubr.bf16.mxu0 0
      %490 = vmatmul.mubr.bf16.gmra.mrb[0].mxu0 %v371
      %v491 = vpop.f32.mrb[0].mxu0
      %v492 = vadd.f32 %v227, %v491
      %v493 = vpop.f32.mrb[0].mxu0
      %v494 = vpop.f32.mrb[0].mxu0
      %v495 = vadd.f32 %v227, %v494
      %v496 = vpop.f32.mrb[0].mxu0
      %497 = vmatprep.mubr.bf16.mxu0 0
      %498 = vmatmul.mubr.bf16.gmra.mrb[0].mxu0 %v374
      %v499 = vpop.f32.mrb[0].mxu0
      %v500 = vadd.f32 %v227, %v499
      %v501 = vpop.f32.mrb[0].mxu0
      %v502 = vpop.f32.mrb[0].mxu0
      %v503 = vadd.f32 %v227, %v502
      %v504 = vpop.f32.mrb[0].mxu0
      %505 = vmatprep.mubr.bf16.mxu0 0
      %506 = vmatmul.mubr.bf16.gmra.mrb[0].mxu0 %v377
      %v507 = vpop.f32.mrb[0].mxu0
      %v508 = vadd.f32 %v227, %v507
      %v509 = vpop.f32.mrb[0].mxu0
      %v510 = vpop.f32.mrb[0].mxu0
      %v511 = vadd.f32 %v227, %v510
      %v512 = vpop.f32.mrb[0].mxu0
      %513 = vmatprep.mubr.bf16.mxu0 0
      %514 = vmatmul.mubr.bf16.gmra.mrb[0].mxu0 %v380
      %v515 = vpop.f32.mrb[0].mxu0
      %v516 = vadd.f32 %v227, %v515
      %v517 = vpop.f32.mrb[0].mxu0
      %v518 = vpop.f32.mrb[0].mxu0
      %v519 = vadd.f32 %v227, %v518
      %v520 = vpop.f32.mrb[0].mxu0
      %521 = vmatprep.mubr.bf16.mxu0 0
      %522 = vmatmul.mubr.bf16.gmra.mrb[0].mxu0 %v383
      %v523 = vpop.f32.mrb[0].mxu0
      %v524 = vadd.f32 %v227, %v523
      %v525 = vpop.f32.mrb[0].mxu0
      %v526 = vpop.f32.mrb[0].mxu0
      %v527 = vadd.f32 %v227, %v526
      %v528 = vpop.f32.mrb[0].mxu0
      %529 = vmatprep.mubr.bf16.mxu0 0
      %530 = vmatmul.mubr.bf16.gmra.mrb[0].mxu0 %v386
      %v531 = vpop.f32.mrb[0].mxu0
      %v532 = vadd.f32 %v227, %v531
      %v533 = vpop.f32.mrb[0].mxu0
      %v534 = vpop.f32.mrb[0].mxu0
      %v535 = vadd.f32 %v227, %v534
      %v536 = vpop.f32.mrb[0].mxu0
      %537 = vmatprep.mubr.bf16.mxu0 0
      %538 = vmatmul.mubr.bf16.gmra.mrb[0].mxu0 %v389
      %v539 = vpop.f32.mrb[0].mxu0
      %v540 = vadd.f32 %v227, %v539
      %v541 = vpop.f32.mrb[0].mxu0
      %v542 = vpop.f32.mrb[0].mxu0
      %v543 = vadd.f32 %v227, %v542
      %v544 = vpop.f32.mrb[0].mxu0
      %545 = vmatprep.mubr.bf16.mxu0 0
      %546 = vmatmul.mubr.bf16.gmra.mrb[0].mxu0 %v392
      %v547 = vpop.f32.mrb[0].mxu0
      %v548 = vadd.f32 %v227, %v547
      %v549 = vpop.f32.mrb[0].mxu0
      %v550 = vpop.f32.mrb[0].mxu0
      %v551 = vadd.f32 %v227, %v550
      %v552 = vpop.f32.mrb[0].mxu0
      %553 = vmatprep.mubr.bf16.mxu0 0
      %554 = vmatmul.mubr.bf16.gmra.mrb[0].mxu0 %v395
      %v555 = vpop.f32.mrb[0].mxu0
      %v556 = vadd.f32 %v227, %v555
      %v557 = vpop.f32.mrb[0].mxu0
      %v558 = vpop.f32.mrb[0].mxu0
      %v559 = vadd.f32 %v227, %v558
      %v560 = vpop.f32.mrb[0].mxu0
      %561 = vdwg.mxu0
      %v562 = vxor.u32 %v436, 2147483648
      %v563 = vxor.u32 %v439, 2147483648
      %v564 = vxor.u32 %v444, 2147483648
      %v565 = vxor.u32 %v447, 2147483648
      %v566 = vxor.u32 %v452, 2147483648
      %v567 = vxor.u32 %v455, 2147483648
      %v568 = vxor.u32 %v460, 2147483648
      %v569 = vxor.u32 %v463, 2147483648
      %v570 = vxor.u32 %v468, 2147483648
      %v571 = vxor.u32 %v471, 2147483648
      %v572 = vxor.u32 %v476, 2147483648
      %v573 = vxor.u32 %v479, 2147483648
      %v574 = vxor.u32 %v484, 2147483648
      %v575 = vxor.u32 %v487, 2147483648
      %v576 = vxor.u32 %v492, 2147483648
      %v577 = vxor.u32 %v495, 2147483648
      %v578 = vxor.u32 %v500, 2147483648
      %v579 = vxor.u32 %v503, 2147483648
      %v580 = vxor.u32 %v508, 2147483648
      %v581 = vxor.u32 %v511, 2147483648
      %v582 = vxor.u32 %v516, 2147483648
      %v583 = vxor.u32 %v519, 2147483648
      %v584 = vxor.u32 %v524, 2147483648
      %v585 = vxor.u32 %v527, 2147483648
      %v586 = vxor.u32 %v532, 2147483648
      %v587 = vxor.u32 %v535, 2147483648
      %v588 = vxor.u32 %v540, 2147483648
      %v589 = vxor.u32 %v543, 2147483648
      %v590 = vxor.u32 %v548, 2147483648
      %v591 = vxor.u32 %v551, 2147483648
      %v592 = vxor.u32 %v556, 2147483648
      %v593 = vxor.u32 %v559, 2147483648
      %v594 = vmul.f32 %v562, 1.442695
      %v595 = vpow.pop %v594
      %v596 = vmul.f32 %v563, 1.442695
      %v597 = vpow.pop %v596
      %v598 = vmul.f32 %v564, 1.442695
      %v599 = vpow.pop %v598
      %v600 = vmul.f32 %v565, 1.442695
      %v601 = vpow.pop %v600
      %v602 = vmul.f32 %v566, 1.442695
      %v603 = vpow.pop %v602
      %v604 = vmul.f32 %v567, 1.442695
      %v605 = vpow.pop %v604
      %v606 = vmul.f32 %v568, 1.442695
      %v607 = vpow.pop %v606
      %v608 = vmul.f32 %v569, 1.442695
      %v609 = vpow.pop %v608
      %v610 = vmul.f32 %v570, 1.442695
      %v611 = vpow.pop %v610
      %v612 = vmul.f32 %v571, 1.442695
      %v613 = vpow.pop %v612
      %v614 = vmul.f32 %v572, 1.442695
      %v615 = vpow.pop %v614
      %v616 = vmul.f32 %v573, 1.442695
      %v617 = vpow.pop %v616
      %v618 = vmul.f32 %v574, 1.442695
      %v619 = vpow.pop %v618
      %v620 = vmul.f32 %v575, 1.442695
      %v621 = vpow.pop %v620
      %v622 = vmul.f32 %v576, 1.442695
      %v623 = vpow.pop %v622
      %v624 = vmul.f32 %v577, 1.442695
      %v625 = vpow.pop %v624
      %v626 = vmul.f32 %v578, 1.442695
      %v627 = vpow.pop %v626
      %v628 = vmul.f32 %v579, 1.442695
      %v629 = vpow.pop %v628
      %v630 = vmul.f32 %v580, 1.442695
      %v631 = vpow.pop %v630
      %v632 = vmul.f32 %v581, 1.442695
      %v633 = vpow.pop %v632
      %v634 = vmul.f32 %v582, 1.442695
      %v635 = vpow.pop %v634
      %v636 = vmul.f32 %v583, 1.442695
      %v637 = vpow.pop %v636
      %v638 = vmul.f32 %v584, 1.442695
      %v639 = vpow.pop %v638
      %v640 = vmul.f32 %v585, 1.442695
      %v641 = vpow.pop %v640
      %v642 = vmul.f32 %v586, 1.442695
      %v643 = vpow.pop %v642
      %v644 = vmul.f32 %v587, 1.442695
      %v645 = vpow.pop %v644
      %v646 = vmul.f32 %v588, 1.442695
      %v647 = vpow.pop %v646
      %v648 = vmul.f32 %v589, 1.442695
      %v649 = vpow.pop %v648
      %v650 = vmul.f32 %v590, 1.442695
      %v651 = vpow.pop %v650
      %v652 = vmul.f32 %v591, 1.442695
      %v653 = vpow.pop %v652
      %v654 = vmul.f32 %v592, 1.442695
      %v655 = vpow.pop %v654
      %v656 = vmul.f32 %v593, 1.442695
      %v657 = vpow.pop %v656
      %v658 = vadd.f32 %v595, 1.0
      %v659 = vadd.f32 %v597, 1.0
      %v660 = vadd.f32 %v599, 1.0
      %v661 = vadd.f32 %v601, 1.0
      %v662 = vadd.f32 %v603, 1.0
      %v663 = vadd.f32 %v605, 1.0
      %v664 = vadd.f32 %v607, 1.0
      %v665 = vadd.f32 %v609, 1.0
      %v666 = vadd.f32 %v611, 1.0
      %v667 = vadd.f32 %v613, 1.0
      %v668 = vadd.f32 %v615, 1.0
      %v669 = vadd.f32 %v617, 1.0
      %v670 = vadd.f32 %v619, 1.0
      %v671 = vadd.f32 %v621, 1.0
      %v672 = vadd.f32 %v623, 1.0
      %v673 = vadd.f32 %v625, 1.0
      %v674 = vadd.f32 %v627, 1.0
      %v675 = vadd.f32 %v629, 1.0
      %v676 = vadd.f32 %v631, 1.0
      %v677 = vadd.f32 %v633, 1.0
      %v678 = vadd.f32 %v635, 1.0
      %v679 = vadd.f32 %v637, 1.0
      %v680 = vadd.f32 %v639, 1.0
      %v681 = vadd.f32 %v641, 1.0
      %v682 = vadd.f32 %v643, 1.0
      %v683 = vadd.f32 %v645, 1.0
      %v684 = vadd.f32 %v647, 1.0
      %v685 = vadd.f32 %v649, 1.0
      %v686 = vadd.f32 %v651, 1.0
      %v687 = vadd.f32 %v653, 1.0
      %v688 = vadd.f32 %v655, 1.0
      %v689 = vadd.f32 %v657, 1.0
      %v690 = vrcp.pop %v658
      %v691 = vmul.f32 1.0, %v690
      %v692 = vrcp.pop %v659
      %v693 = vmul.f32 1.0, %v692
      %v694 = vrcp.pop %v660
      %v695 = vmul.f32 1.0, %v694
      %v696 = vrcp.pop %v661
      %v697 = vmul.f32 1.0, %v696
      %v698 = vrcp.pop %v662
      %v699 = vmul.f32 1.0, %v698
      %v700 = vrcp.pop %v663
      %v701 = vmul.f32 1.0, %v700
      %v702 = vrcp.pop %v664
      %v703 = vmul.f32 1.0, %v702
      %v704 = vrcp.pop %v665
      %v705 = vmul.f32 1.0, %v704
      %v706 = vrcp.pop %v666
      %v707 = vmul.f32 1.0, %v706
      %v708 = vrcp.pop %v667
      %v709 = vmul.f32 1.0, %v708
      %v710 = vrcp.pop %v668
      %v711 = vmul.f32 1.0, %v710
      %v712 = vrcp.pop %v669
      %v713 = vmul.f32 1.0, %v712
      %v714 = vrcp.pop %v670
      %v715 = vmul.f32 1.0, %v714
      %v716 = vrcp.pop %v671
      %v717 = vmul.f32 1.0, %v716
      %v718 = vrcp.pop %v672
      %v719 = vmul.f32 1.0, %v718
      %v720 = vrcp.pop %v673
      %v721 = vmul.f32 1.0, %v720
      %v722 = vrcp.pop %v674
      %v723 = vmul.f32 1.0, %v722
      %v724 = vrcp.pop %v675
      %v725 = vmul.f32 1.0, %v724
      %v726 = vrcp.pop %v676
      %v727 = vmul.f32 1.0, %v726
      %v728 = vrcp.pop %v677
      %v729 = vmul.f32 1.0, %v728
      %v730 = vrcp.pop %v678
      %v731 = vmul.f32 1.0, %v730
      %v732 = vrcp.pop %v679
      %v733 = vmul.f32 1.0, %v732
      %v734 = vrcp.pop %v680
      %v735 = vmul.f32 1.0, %v734
      %v736 = vrcp.pop %v681
      %v737 = vmul.f32 1.0, %v736
      %v738 = vrcp.pop %v682
      %v739 = vmul.f32 1.0, %v738
      %v740 = vrcp.pop %v683
      %v741 = vmul.f32 1.0, %v740
      %v742 = vrcp.pop %v684
      %v743 = vmul.f32 1.0, %v742
      %v744 = vrcp.pop %v685
      %v745 = vmul.f32 1.0, %v744
      %v746 = vrcp.pop %v686
      %v747 = vmul.f32 1.0, %v746
      %v748 = vrcp.pop %v687
      %v749 = vmul.f32 1.0, %v748
      %v750 = vrcp.pop %v688
      %v751 = vmul.f32 1.0, %v750
      %v752 = vrcp.pop %v689
      %v753 = vmul.f32 1.0, %v752
      %vm754 = vcmask 7168
      %755 = vst.msk [vmem:[%s174] sm:$0xff] %vm754, %v691
      %756 = vst.msk [vmem:[%s174 + $0x8] sm:$0xff] %vm754, %v693
      %757 = vst.msk [vmem:[%s174 + $0x10] sm:$0xff] %vm754, %v695
      %758 = vst.msk [vmem:[%s174 + $0x18] sm:$0xff] %vm754, %v697
      %759 = vst.msk [vmem:[%s174 + $0x20] sm:$0xff] %vm754, %v699
      %760 = vst.msk [vmem:[%s174 + $0x28] sm:$0xff] %vm754, %v701
      %761 = vst.msk [vmem:[%s174 + $0x30] sm:$0xff] %vm754, %v703
      %762 = vst.msk [vmem:[%s174 + $0x38] sm:$0xff] %vm754, %v705
      %763 = vst.msk [vmem:[%s174 + $0x40] sm:$0xff] %vm754, %v707
      %764 = vst.msk [vmem:[%s174 + $0x48] sm:$0xff] %vm754, %v709
      %765 = vst.msk [vmem:[%s174 + $0x50] sm:$0xff] %vm754, %v711
      %766 = vst.msk [vmem:[%s174 + $0x58] sm:$0xff] %vm754, %v713
      %767 = vst.msk [vmem:[%s174 + $0x60] sm:$0xff] %vm754, %v715
      %768 = vst.msk [vmem:[%s174 + $0x68] sm:$0xff] %vm754, %v717
      %769 = vst.msk [vmem:[%s174 + $0x70] sm:$0xff] %vm754, %v719
      %770 = vst.msk [vmem:[%s174 + $0x78] sm:$0xff] %vm754, %v721
      %771 = vst.msk [vmem:[%s174 + $0x80] sm:$0xff] %vm754, %v723
      %772 = vst.msk [vmem:[%s174 + $0x88] sm:$0xff] %vm754, %v725
      %773 = vst.msk [vmem:[%s174 + $0x90] sm:$0xff] %vm754, %v727
      %774 = vst.msk [vmem:[%s174 + $0x98] sm:$0xff] %vm754, %v729
      %775 = vst.msk [vmem:[%s174 + $0xa0] sm:$0xff] %vm754, %v731
      %776 = vst.msk [vmem:[%s174 + $0xa8] sm:$0xff] %vm754, %v733
      %777 = vst.msk [vmem:[%s174 + $0xb0] sm:$0xff] %vm754, %v735
      %778 = vst.msk [vmem:[%s174 + $0xb8] sm:$0xff] %vm754, %v737
      %779 = vst.msk [vmem:[%s174 + $0xc0] sm:$0xff] %vm754, %v739
      %780 = vst.msk [vmem:[%s174 + $0xc8] sm:$0xff] %vm754, %v741
      %781 = vst.msk [vmem:[%s174 + $0xd0] sm:$0xff] %vm754, %v743
      %782 = vst.msk [vmem:[%s174 + $0xd8] sm:$0xff] %vm754, %v745
      %783 = vst.msk [vmem:[%s174 + $0xe0] sm:$0xff] %vm754, %v747
      %784 = vst.msk [vmem:[%s174 + $0xe8] sm:$0xff] %vm754, %v749
      %785 = vst.msk [vmem:[%s174 + $0xf0] sm:$0xff] %vm754, %v751
      %786 = vst.msk [vmem:[%s174 + $0xf8] sm:$0xff] %vm754, %v753
      %s787 = smul.u32 32, %s16
      %p788 = scmp.lt.s32.totalorder %s787, 63
      %s789 = scalar_select %p788, %s787, 63
      %s790 = smul.addr %s789, 8
      %s791 = scalar_lea.vmem %s3, %s790
      // Predicated region
      $region33: #{heatformer_passive_forward.13} parent=31 // pred_check
        %p792 = pneg %p102
      $region34: #{heatformer_passive_forward.13} parent=31 // pred_check_branch
        %794 = sbr.rel (%p792) target = $region36
      $region35: #{heatformer_passive_forward.13} parent=31 // pred_region
        %s795 = smul.u32 32, %s16
      $region36: #{heatformer_passive_forward.13} parent=31 // pred_fallthru
        _
    $region32: #{heatformer_passive_forward.13} parent=5 // pred_fallthru
      _
    %p796 = scmp.le.s32.totalorder 2, %s11
    // Predicated region
    $region37: #{heatformer_passive_forward.13} parent=5 // pred_check
      %p797 = pneg %p796
    $region38: #{heatformer_passive_forward.13} parent=5 // pred_check_branch
      %799 = sbr.rel (%p797) target = $region40
    $region39: #{heatformer_passive_forward.13} parent=5 // pred_region
      %s800 = ssub.s32 %s11, 2
      // Predicated region
      $region41: #{heatformer_passive_forward.13} parent=39 // pred_check
        %p801 = pneg %p108
      $region42: #{heatformer_passive_forward.13} parent=39 // pred_check_branch
        %803 = sbr.rel (%p801) target = $region44
      $region43: #{heatformer_passive_forward.13} parent=39 // pred_region
        %s804 = smul.u32 32, %s17
        %p805 = scmp.lt.s32.totalorder %s804, 63
        %s806 = scalar_select %p805, %s804, 63
        %s807 = smul.addr %s806, 8
        %s808 = scalar_lea.vmem %s3, %s807
      $region44: #{heatformer_passive_forward.13} parent=39 // pred_fallthru
        _
    $region40: #{heatformer_passive_forward.13} parent=5 // pred_fallthru
      _
  $region6: #{heatformer_passive_forward.13} parent=0 // loop_footer
    %s15 = sadd.s32 1, %s11
  $region7: #{heatformer_passive_forward.13} parent=0 // loop_footer_branch
    %10 = sbr.rel target = $region3
  $region8: #{heatformer_passive_forward.13} parent=0 // loop_exit
    _

// kernel: heatformer_passive_forward.14
$region0: #{heatformer_passive_forward.14}
  #allocation0 [shape = 'u32[]', space=smem, size = 0x4, offset = 0x4, fixed_abs, tag = 'smem constant byte address 0x4 - core index']
  #allocation1 [shape = 'u32[144,128]{1,0:T(1,128)}', space=vmem, size = 0x12000, scoped, tag = 'internal scratch']
  %s0 = inlined_call_operand.vmem [shape: bf16[512,72], index: 0, kind: input, shape index: {}]
  %s1 = inlined_call_operand.vmem [shape: bf16[72,3], index: 1, kind: input, shape index: {}]
  %s2 = inlined_call_operand.vmem [shape: f32[1,3], index: 2, kind: input, shape index: {}]
  %s3 = inlined_call_operand.vmem [shape: f32[512,3], index: 3, kind: output, shape index: {}]
  %s4 = sld [smem:[#allocation0]]
  $region45: #{heatformer_passive_forward.14} parent=0
    _
  %s6 = ssub.s32 1, %s4
  %s7 = scalar_select 0, %s6, %s4
  loop: start=0, step=1, limit=4
  $region2: #{heatformer_passive_forward.14} parent=0 // loop_pre_header
    _
  $region3: #{heatformer_passive_forward.14} parent=0 // loop_header
    %s9 = sphi 0, %s13
    %p10 = scmp.ge.s32.totalorder %s9, 4
    %s19 = sphi 0, %s21
    %s22 = sphi 0, %s19
    %s23 = sphi 0, %s22
    %s39 = sphi 0, %s23
    %s43 = sphi 0, %s43
    %s45 = sphi 0, %s43
    %s46 = sphi 0, %s45
    %s60 = sphi 0, %s46
    %s64 = sphi 0, %s64
    %s66 = sphi 0, %s64
    %s67 = sphi 0, %s66
    %s81 = sphi 0, %s67
    %s87 = sphi 0, %s89
    %s90 = sphi 0, %s87
    %s91 = sphi 0, %s90
    %s107 = sphi 0, %s91
  $region4: #{heatformer_passive_forward.14} parent=0 // loop_header_branch
    %12 = sbr.rel (%p10) target = $region8
  $region5: #{heatformer_passive_forward.14} parent=0 // loop_body
    %s14 = ssub.s32 %s9, 1
    %s15 = ssub.s32 %s9, 2
    %s16 = sadd.s32 %s9, 1
    %s17 = ssub.s32 %s9, %s16
    %p18 = scmp.eq.s32.totalorder %s17, 0
    %s20 = sadd.s32 %s19, 1
    %s21 = scalar_select %p18, %s19, %s20
    %p24 = pneg %p18
    %p25 = scmp.eq.s32.totalorder %s9, 1
    %p26 = por %p24, %p25
    %p27 = scmp.ne.s32.totalorder %s19, %s22
    %p28 = scmp.eq.s32.totalorder %s9, 0
    %p29 = por %p27, %p28
    %p30 = scmp.ne.s32.totalorder %s19, %s22
    %p31 = scmp.eq.s32.totalorder %s14, 1
    %p32 = por %p30, %p31
    %p33 = scmp.ne.s32.totalorder %s22, %s23
    %p34 = scmp.eq.s32.totalorder %s14, 0
    %p35 = por %p33, %p34
    %p36 = scmp.ne.s32.totalorder %s22, %s23
    %p37 = scmp.eq.s32.totalorder %s15, 1
    %p38 = por %p36, %p37
    %p40 = scmp.ne.s32.totalorder %s23, %s39
    %p41 = scmp.eq.s32.totalorder %s15, 0
    %p42 = por %p40, %p41
    %s44 = sadd.s32 %s43, 1
    %p47 = scmp.eq.s32.totalorder %s9, 1
    %p48 = scmp.ne.s32.totalorder %s43, %s45
    %p49 = scmp.eq.s32.totalorder %s9, 0
    %p50 = por %p48, %p49
    %p51 = scmp.ne.s32.totalorder %s43, %s45
    %p52 = scmp.eq.s32.totalorder %s14, 1
    %p53 = por %p51, %p52
    %p54 = scmp.ne.s32.totalorder %s45, %s46
    %p55 = scmp.eq.s32.totalorder %s14, 0
    %p56 = por %p54, %p55
    %p57 = scmp.ne.s32.totalorder %s45, %s46
    %p58 = scmp.eq.s32.totalorder %s15, 1
    %p59 = por %p57, %p58
    %p61 = scmp.ne.s32.totalorder %s46, %s60
    %p62 = scmp.eq.s32.totalorder %s15, 0
    %p63 = por %p61, %p62
    %s65 = sadd.s32 %s64, 1
    %p68 = scmp.eq.s32.totalorder %s9, 1
    %p69 = scmp.ne.s32.totalorder %s64, %s66
    %p70 = scmp.eq.s32.totalorder %s9, 0
    %p71 = por %p69, %p70
    %p72 = scmp.ne.s32.totalorder %s64, %s66
    %p73 = scmp.eq.s32.totalorder %s14, 1
    %p74 = por %p72, %p73
    %p75 = scmp.ne.s32.totalorder %s66, %s67
    %p76 = scmp.eq.s32.totalorder %s14, 0
    %p77 = por %p75, %p76
    %p78 = scmp.ne.s32.totalorder %s66, %s67
    %p79 = scmp.eq.s32.totalorder %s15, 1
    %p80 = por %p78, %p79
    %p82 = scmp.ne.s32.totalorder %s67, %s81
    %p83 = scmp.eq.s32.totalorder %s15, 0
    %p84 = por %p82, %p83
    %s85 = ssub.s32 %s9, %s16
    %p86 = scmp.eq.s32.totalorder %s85, 0
    %s88 = sadd.s32 %s87, 1
    %s89 = scalar_select %p86, %s87, %s88
    %p92 = pneg %p86
    %p93 = scmp.eq.s32.totalorder %s9, 1
    %p94 = por %p92, %p93
    %p95 = scmp.ne.s32.totalorder %s87, %s90
    %p96 = scmp.eq.s32.totalorder %s9, 0
    %p97 = por %p95, %p96
    %p98 = scmp.ne.s32.totalorder %s87, %s90
    %p99 = scmp.eq.s32.totalorder %s14, 1
    %p100 = por %p98, %p99
    %p101 = scmp.ne.s32.totalorder %s90, %s91
    %p102 = scmp.eq.s32.totalorder %s14, 0
    %p103 = por %p101, %p102
    %p104 = scmp.ne.s32.totalorder %s90, %s91
    %p105 = scmp.eq.s32.totalorder %s15, 1
    %p106 = por %p104, %p105
    %p108 = scmp.ne.s32.totalorder %s91, %s107
    %p109 = scmp.eq.s32.totalorder %s15, 0
    %p110 = por %p108, %p109
    %p111 = scmp.le.s32.totalorder 1, %s9
    %p112 = scmp.lt.s32.totalorder %s9, 3
    %p113 = pnand %p111, %p112
    %p114 = pneg %p113
    // Predicated region
    $region9: #{heatformer_passive_forward.14} parent=5 // pred_check
      _
    $region10: #{heatformer_passive_forward.14} parent=5 // pred_check_branch
      %116 = sbr.rel (%p113) target = $region12
    $region11: #{heatformer_passive_forward.14} parent=5 // pred_region
      %s117 = ssub.s32 %s9, 1
      // Predicated region
      $region13: #{heatformer_passive_forward.14} parent=11 // pred_check
        %p118 = pneg %p56
      $region14: #{heatformer_passive_forward.14} parent=11 // pred_check_branch
        %120 = sbr.rel (%p118) target = $region16
      $region15: #{heatformer_passive_forward.14} parent=11 // pred_region
        _
      $region16: #{heatformer_passive_forward.14} parent=11 // pred_fallthru
        _
      // Predicated region
      $region17: #{heatformer_passive_forward.14} parent=11 // pred_check
        %p121 = pneg %p77
      $region18: #{heatformer_passive_forward.14} parent=11 // pred_check_branch
        %123 = sbr.rel (%p121) target = $region20
      $region19: #{heatformer_passive_forward.14} parent=11 // pred_region
        _
      $region20: #{heatformer_passive_forward.14} parent=11 // pred_fallthru
        _
    $region12: #{heatformer_passive_forward.14} parent=5 // pred_fallthru
      _
    %p124 = scmp.lt.s32.totalorder %s9, 2
    // Predicated region
    $region21: #{heatformer_passive_forward.14} parent=5 // pred_check
      %p125 = pneg %p124
    $region22: #{heatformer_passive_forward.14} parent=5 // pred_check_branch
      %127 = sbr.rel (%p125) target = $region24
    $region23: #{heatformer_passive_forward.14} parent=5 // pred_region
      // Predicated region
      $region25: #{heatformer_passive_forward.14} parent=23 // pred_check
        %p128 = pneg %p29
      $region26: #{heatformer_passive_forward.14} parent=23 // pred_check_branch
        %130 = sbr.rel (%p128) target = $region28
      $region27: #{heatformer_passive_forward.14} parent=23 // pred_region
        %s131 = smul.u32 32, %s9
        %p132 = scmp.lt.s32.totalorder %s131, 63
        %s133 = scalar_select %p132, %s131, 63
        %s134 = smul.addr %s133, 4
        %s135 = scalar_lea.vmem %s0, %s134
        %s136 = smul.u32 32, %s9
      $region28: #{heatformer_passive_forward.14} parent=23 // pred_fallthru
        _
    $region24: #{heatformer_passive_forward.14} parent=5 // pred_fallthru
      _
    %p137 = scmp.le.s32.totalorder 1, %s9
    %p138 = scmp.lt.s32.totalorder %s9, 3
    %p139 = pnand %p137, %p138
    %p140 = pneg %p139
    // Predicated region
    $region29: #{heatformer_passive_forward.14} parent=5 // pred_check
      _
    $region30: #{heatformer_passive_forward.14} parent=5 // pred_check_branch
      %142 = sbr.rel (%p139) target = $region32
    $region31: #{heatformer_passive_forward.14} parent=5 // pred_region
      %s143 = ssub.s32 %s9, 1
      %s144 = smul.u32 32, %s14
      %p145 = scmp.lt.s32.totalorder %s144, 63
      %s146 = scalar_select %p145, %s144, 63
      %s147 = smul.addr %s146, 4
      %s148 = scalar_lea.vmem %s0, %s147
      %p149 = pneg %p35
      %p150 = pneg %p32
      %p151 = pneg %p56
      %p152 = pneg %p53
      %p153 = pneg %p77
      %p154 = pneg %p74
      %p155 = pneg %p103
      %p156 = pneg %p100
      %s157 = smul.u32 32, %s14
      %p158 = scmp.lt.s32.totalorder %s157, 63
      %s159 = scalar_select %p158, %s157, 63
      %s160 = smul.addr %s159, 8
      %s161 = scalar_lea.vmem %s3, %s160
      %s162 = smul.u32 32, %s14
      %p163 = scmp.lt.s32.totalorder %s162, 63
      %s164 = scalar_select %p163, %s162, 63
      %s165 = smul.addr %s164, 4
      %s166 = scalar_lea.vmem %s0, %s165
      %s167 = smul.u32 32, %s14
      %s168 = smul.u32 32, %s14
      %p169 = scmp.lt.s32.totalorder %s168, 63
      %s170 = scalar_select %p169, %s168, 63
      %s171 = smul.addr %s170, 8
      %s172 = scalar_lea.vmem %s3, %s171
      %s173 = smul.u32 32, %s14
      %v175 = vld [vmem:[%s166] sm:$0xf]
      %v176 = vld [vmem:[%s166 + $0x4] sm:$0xf]
      %v177 = vld [vmem:[%s166 + $0x8] sm:$0xf]
      %v178 = vld [vmem:[%s166 + $0xc] sm:$0xf]
      %v179 = vld [vmem:[%s166 + $0x10] sm:$0xf]
      %v180 = vld [vmem:[%s166 + $0x14] sm:$0xf]
      %v181 = vld [vmem:[%s166 + $0x18] sm:$0xf]
      %v182 = vld [vmem:[%s166 + $0x1c] sm:$0xf]
      %v183 = vld [vmem:[%s166 + $0x20] sm:$0xf]
      %v184 = vld [vmem:[%s166 + $0x24] sm:$0xf]
      %v185 = vld [vmem:[%s166 + $0x28] sm:$0xf]
      %v186 = vld [vmem:[%s166 + $0x2c] sm:$0xf]
      %v187 = vld [vmem:[%s166 + $0x30] sm:$0xf]
      %v188 = vld [vmem:[%s166 + $0x34] sm:$0xf]
      %v189 = vld [vmem:[%s166 + $0x38] sm:$0xf]
      %v190 = vld [vmem:[%s166 + $0x3c] sm:$0xf]
      %v191 = vld [vmem:[%s166 + $0x40] sm:$0xf]
      %v192 = vld [vmem:[%s166 + $0x44] sm:$0xf]
      %v193 = vld [vmem:[%s166 + $0x48] sm:$0xf]
      %v194 = vld [vmem:[%s166 + $0x4c] sm:$0xf]
      %v195 = vld [vmem:[%s166 + $0x50] sm:$0xf]
      %v196 = vld [vmem:[%s166 + $0x54] sm:$0xf]
      %v197 = vld [vmem:[%s166 + $0x58] sm:$0xf]
      %v198 = vld [vmem:[%s166 + $0x5c] sm:$0xf]
      %v199 = vld [vmem:[%s166 + $0x60] sm:$0xf]
      %v200 = vld [vmem:[%s166 + $0x64] sm:$0xf]
      %v201 = vld [vmem:[%s166 + $0x68] sm:$0xf]
      %v202 = vld [vmem:[%s166 + $0x6c] sm:$0xf]
      %v203 = vld [vmem:[%s166 + $0x70] sm:$0xf]
      %v204 = vld [vmem:[%s166 + $0x74] sm:$0xf]
      %v205 = vld [vmem:[%s166 + $0x78] sm:$0xf]
      %v206 = vld [vmem:[%s166 + $0x7c] sm:$0xf]
      %v207 = vld [vmem:[%s1] sm:$0xf]
      %v208 = vld [vmem:[%s1 + $0x4] sm:$0xf]
      %v209 = vld [vmem:[%s1 + $0x8] sm:$0xf]
      %v210 = vld [vmem:[%s1 + $0xc] sm:$0xf]
      %v211 = vld [vmem:[%s1 + $0x10] sm:$0xf]
      %v212 = vld [vmem:[%s1 + $0x14] sm:$0xf]
      %v213 = vld [vmem:[%s1 + $0x18] sm:$0xf]
      %v214 = vld [vmem:[%s1 + $0x1c] sm:$0xf]
      %v215 = vld [vmem:[%s1 + $0x20] sm:$0xf]
      %v216 = vld [vmem:[%s2] sm:$0x1]
      %v218 = vlaneseq
      %v219 = vshrl.u32 %v218, 7
      %v220 = vsub.s32 0, %v219
      %v221 = vrot.slane %v216, %v220
      %v255 = vunpack.c.l.b16 %v175
      %v256 = vunpack.c.l.b16 %v176
      %v257 = vunpack.c.l.b16 %v177
      %v258 = vunpack.c.l.b16 %v178
      %v259 = vunpack.c.l.b16 %v179
      %v260 = vunpack.c.l.b16 %v180
      %v261 = vunpack.c.l.b16 %v181
      %v262 = vunpack.c.l.b16 %v182
      %v263 = vunpack.c.l.b16 %v183
      %v264 = vunpack.c.l.b16 %v184
      %v265 = vunpack.c.l.b16 %v185
      %v266 = vunpack.c.l.b16 %v186
      %v267 = vunpack.c.l.b16 %v187
      %v268 = vunpack.c.l.b16 %v188
      %v269 = vunpack.c.l.b16 %v189
      %v270 = vunpack.c.l.b16 %v190
      %v271 = vunpack.c.l.b16 %v191
      %v272 = vunpack.c.l.b16 %v192
      %v273 = vunpack.c.l.b16 %v193
      %v274 = vunpack.c.l.b16 %v194
      %v275 = vunpack.c.l.b16 %v195
      %v276 = vunpack.c.l.b16 %v196
      %v277 = vunpack.c.l.b16 %v197
      %v278 = vunpack.c.l.b16 %v198
      %v279 = vunpack.c.l.b16 %v199
      %v280 = vunpack.c.l.b16 %v200
      %v281 = vunpack.c.l.b16 %v201
      %v282 = vunpack.c.l.b16 %v202
      %v283 = vunpack.c.l.b16 %v203
      %v284 = vunpack.c.l.b16 %v204
      %v285 = vunpack.c.l.b16 %v205
      %v286 = vunpack.c.l.b16 %v206
      %v287 = vpack.c.b16 %v256, %v255
      %v288 = vpack.c.b16 %v258, %v257
      %v289 = vpack.c.b16 %v260, %v259
      %v290 = vpack.c.b16 %v262, %v261
      %v291 = vpack.c.b16 %v264, %v263
      %v292 = vpack.c.b16 %v266, %v265
      %v293 = vpack.c.b16 %v268, %v267
      %v294 = vpack.c.b16 %v270, %v269
      %v295 = vpack.c.b16 %v272, %v271
      %v296 = vpack.c.b16 %v274, %v273
      %v297 = vpack.c.b16 %v276, %v275
      %v298 = vpack.c.b16 %v278, %v277
      %v299 = vpack.c.b16 %v280, %v279
      %v300 = vpack.c.b16 %v282, %v281
      %v301 = vpack.c.b16 %v284, %v283
      %v302 = vpack.c.b16 %v286, %v285
      %v312 = vunpack.c.l.b16 %v207
      %v313 = vunpack.c.l.b16 %v208
      %v314 = vunpack.c.l.b16 %v209
      %v315 = vunpack.c.l.b16 %v210
      %v316 = vunpack.c.l.b16 %v211
      %v317 = vunpack.c.l.b16 %v212
      %v318 = vunpack.c.l.b16 %v213
      %v319 = vunpack.c.l.b16 %v214
      %v320 = vunpack.c.l.b16 %v215
      %v321 = vpack.c.b16 %v313, %v312
      %v322 = vpack.c.b16 %v315, %v314
      %v323 = vpack.c.b16 %v317, %v316
      %v324 = vpack.c.b16 %v319, %v318
      %v325 = vpack.c.b16 %v320, %v320
      %vm330 = vcmask 588800
      %v332 = vsel %vm330, %v287, 0
      %v335 = vsel %vm330, %v288, 0
      %v338 = vsel %vm330, %v289, 0
      %v341 = vsel %vm330, %v290, 0
      %v344 = vsel %vm330, %v291, 0
      %v347 = vsel %vm330, %v292, 0
      %v350 = vsel %vm330, %v293, 0
      %v353 = vsel %vm330, %v294, 0
      %v356 = vsel %vm330, %v295, 0
      %v359 = vsel %vm330, %v296, 0
      %v362 = vsel %vm330, %v297, 0
      %v365 = vsel %vm330, %v298, 0
      %v368 = vsel %vm330, %v299, 0
      %v371 = vsel %vm330, %v300, 0
      %v374 = vsel %vm330, %v301, 0
      %v377 = vsel %vm330, %v302, 0
      %vm379 = vcmask 1043456
      %v381 = vsel %vm379, %v325, 0
      %383 = vmatprep.subr.bf16.mxu0 0
      %384 = vmatpush1.bf16.msra.mxu0 %v321
      %385 = vmatprep.subr.bf16.mxu0 0
      %386 = vmatpush1.bf16.msra.mxu0 %v322
      %387 = vmatprep.subr.bf16.mxu0 0
      %388 = vmatpush1.bf16.msra.mxu0 %v323
      %389 = vmatprep.subr.bf16.mxu0 0
      %390 = vmatpush1.bf16.msra.mxu0 %v324
      %391 = vmatprep.subr.bf16.mxu0 0
      %392 = vmatpush1.bf16.msra.mxu0 %v381
      %393 = vmatprep.subr.bf16.mxu0 0
      %394 = vmatpush1.bf16.msra.mxu0 0
      %395 = vmatprep.subr.bf16.mxu0 0
      %396 = vmatpush1.bf16.msra.mxu0 0
      %397 = vmatprep.subr.bf16.mxu0 0
      %398 = vmatpush1.bf16.msra.mxu0 0
      %399 = vmatprep.subr.bf16.mxu0 0
      %400 = vmatpush1.bf16.msra.mxu0 0
      %401 = vmatprep.subr.bf16.mxu0 0
      %402 = vmatpush1.bf16.msra.mxu0 0
      %403 = vmatprep.subr.bf16.mxu0 0
      %404 = vmatpush1.bf16.msra.mxu0 0
      %405 = vmatprep.subr.bf16.mxu0 0
      %406 = vmatpush1.bf16.msra.mxu0 0
      %407 = vmatprep.subr.bf16.mxu0 0
      %408 = vmatpush1.bf16.msra.mxu0 0
      %409 = vmatprep.subr.bf16.mxu0 0
      %410 = vmatpush1.bf16.msra.mxu0 0
      %411 = vmatprep.subr.bf16.mxu0 0
      %412 = vmatpush1.bf16.msra.mxu0 0
      %413 = vmatprep.subr.bf16.mxu0 0
      %414 = vmatpush1.bf16.msra.mxu0 0
      %415 = vmatprep.mubr.bf16.mxu0 0
      %416 = vmatmul.mubr.bf16.gmra.mrb[0].mxu0 %v332
      %v417 = vpop.f32.mrb[0].mxu0
      %v418 = vadd.f32 %v221, %v417
      %v419 = vpop.f32.mrb[0].mxu0
      %v420 = vpop.f32.mrb[0].mxu0
      %v421 = vadd.f32 %v221, %v420
      %v422 = vpop.f32.mrb[0].mxu0
      %423 = vmatprep.mubr.bf16.mxu0 0
      %424 = vmatmul.mubr.bf16.gmra.mrb[0].mxu0 %v335
      %v425 = vpop.f32.mrb[0].mxu0
      %v426 = vadd.f32 %v221, %v425
      %v427 = vpop.f32.mrb[0].mxu0
      %v428 = vpop.f32.mrb[0].mxu0
      %v429 = vadd.f32 %v221, %v428
      %v430 = vpop.f32.mrb[0].mxu0
      %431 = vmatprep.mubr.bf16.mxu0 0
      %432 = vmatmul.mubr.bf16.gmra.mrb[0].mxu0 %v338
      %v433 = vpop.f32.mrb[0].mxu0
      %v434 = vadd.f32 %v221, %v433
      %v435 = vpop.f32.mrb[0].mxu0
      %v436 = vpop.f32.mrb[0].mxu0
      %v437 = vadd.f32 %v221, %v436
      %v438 = vpop.f32.mrb[0].mxu0
      %439 = vmatprep.mubr.bf16.mxu0 0
      %440 = vmatmul.mubr.bf16.gmra.mrb[0].mxu0 %v341
      %v441 = vpop.f32.mrb[0].mxu0
      %v442 = vadd.f32 %v221, %v441
      %v443 = vpop.f32.mrb[0].mxu0
      %v444 = vpop.f32.mrb[0].mxu0
      %v445 = vadd.f32 %v221, %v444
      %v446 = vpop.f32.mrb[0].mxu0
      %447 = vmatprep.mubr.bf16.mxu0 0
      %448 = vmatmul.mubr.bf16.gmra.mrb[0].mxu0 %v344
      %v449 = vpop.f32.mrb[0].mxu0
      %v450 = vadd.f32 %v221, %v449
      %v451 = vpop.f32.mrb[0].mxu0
      %v452 = vpop.f32.mrb[0].mxu0
      %v453 = vadd.f32 %v221, %v452
      %v454 = vpop.f32.mrb[0].mxu0
      %455 = vmatprep.mubr.bf16.mxu0 0
      %456 = vmatmul.mubr.bf16.gmra.mrb[0].mxu0 %v347
      %v457 = vpop.f32.mrb[0].mxu0
      %v458 = vadd.f32 %v221, %v457
      %v459 = vpop.f32.mrb[0].mxu0
      %v460 = vpop.f32.mrb[0].mxu0
      %v461 = vadd.f32 %v221, %v460
      %v462 = vpop.f32.mrb[0].mxu0
      %463 = vmatprep.mubr.bf16.mxu0 0
      %464 = vmatmul.mubr.bf16.gmra.mrb[0].mxu0 %v350
      %v465 = vpop.f32.mrb[0].mxu0
      %v466 = vadd.f32 %v221, %v465
      %v467 = vpop.f32.mrb[0].mxu0
      %v468 = vpop.f32.mrb[0].mxu0
      %v469 = vadd.f32 %v221, %v468
      %v470 = vpop.f32.mrb[0].mxu0
      %471 = vmatprep.mubr.bf16.mxu0 0
      %472 = vmatmul.mubr.bf16.gmra.mrb[0].mxu0 %v353
      %v473 = vpop.f32.mrb[0].mxu0
      %v474 = vadd.f32 %v221, %v473
      %v475 = vpop.f32.mrb[0].mxu0
      %v476 = vpop.f32.mrb[0].mxu0
      %v477 = vadd.f32 %v221, %v476
      %v478 = vpop.f32.mrb[0].mxu0
      %479 = vmatprep.mubr.bf16.mxu0 0
      %480 = vmatmul.mubr.bf16.gmra.mrb[0].mxu0 %v356
      %v481 = vpop.f32.mrb[0].mxu0
      %v482 = vadd.f32 %v221, %v481
      %v483 = vpop.f32.mrb[0].mxu0
      %v484 = vpop.f32.mrb[0].mxu0
      %v485 = vadd.f32 %v221, %v484
      %v486 = vpop.f32.mrb[0].mxu0
      %487 = vmatprep.mubr.bf16.mxu0 0
      %488 = vmatmul.mubr.bf16.gmra.mrb[0].mxu0 %v359
      %v489 = vpop.f32.mrb[0].mxu0
      %v490 = vadd.f32 %v221, %v489
      %v491 = vpop.f32.mrb[0].mxu0
      %v492 = vpop.f32.mrb[0].mxu0
      %v493 = vadd.f32 %v221, %v492
      %v494 = vpop.f32.mrb[0].mxu0
      %495 = vmatprep.mubr.bf16.mxu0 0
      %496 = vmatmul.mubr.bf16.gmra.mrb[0].mxu0 %v362
      %v497 = vpop.f32.mrb[0].mxu0
      %v498 = vadd.f32 %v221, %v497
      %v499 = vpop.f32.mrb[0].mxu0
      %v500 = vpop.f32.mrb[0].mxu0
      %v501 = vadd.f32 %v221, %v500
      %v502 = vpop.f32.mrb[0].mxu0
      %503 = vmatprep.mubr.bf16.mxu0 0
      %504 = vmatmul.mubr.bf16.gmra.mrb[0].mxu0 %v365
      %v505 = vpop.f32.mrb[0].mxu0
      %v506 = vadd.f32 %v221, %v505
      %v507 = vpop.f32.mrb[0].mxu0
      %v508 = vpop.f32.mrb[0].mxu0
      %v509 = vadd.f32 %v221, %v508
      %v510 = vpop.f32.mrb[0].mxu0
      %511 = vmatprep.mubr.bf16.mxu0 0
      %512 = vmatmul.mubr.bf16.gmra.mrb[0].mxu0 %v368
      %v513 = vpop.f32.mrb[0].mxu0
      %v514 = vadd.f32 %v221, %v513
      %v515 = vpop.f32.mrb[0].mxu0
      %v516 = vpop.f32.mrb[0].mxu0
      %v517 = vadd.f32 %v221, %v516
      %v518 = vpop.f32.mrb[0].mxu0
      %519 = vmatprep.mubr.bf16.mxu0 0
      %520 = vmatmul.mubr.bf16.gmra.mrb[0].mxu0 %v371
      %v521 = vpop.f32.mrb[0].mxu0
      %v522 = vadd.f32 %v221, %v521
      %v523 = vpop.f32.mrb[0].mxu0
      %v524 = vpop.f32.mrb[0].mxu0
      %v525 = vadd.f32 %v221, %v524
      %v526 = vpop.f32.mrb[0].mxu0
      %527 = vmatprep.mubr.bf16.mxu0 0
      %528 = vmatmul.mubr.bf16.gmra.mrb[0].mxu0 %v374
      %v529 = vpop.f32.mrb[0].mxu0
      %v530 = vadd.f32 %v221, %v529
      %v531 = vpop.f32.mrb[0].mxu0
      %v532 = vpop.f32.mrb[0].mxu0
      %v533 = vadd.f32 %v221, %v532
      %v534 = vpop.f32.mrb[0].mxu0
      %535 = vmatprep.mubr.bf16.mxu0 0
      %536 = vmatmul.mubr.bf16.gmra.mrb[0].mxu0 %v377
      %v537 = vpop.f32.mrb[0].mxu0
      %v538 = vadd.f32 %v221, %v537
      %v539 = vpop.f32.mrb[0].mxu0
      %v540 = vpop.f32.mrb[0].mxu0
      %v541 = vadd.f32 %v221, %v540
      %v542 = vpop.f32.mrb[0].mxu0
      %543 = vdwg.mxu0
      %vm544 = vcmask 23552
      %545 = vst.msk [vmem:[%s172] sm:$0xff] %vm544, %v418
      %546 = vst.msk [vmem:[%s172 + $0x8] sm:$0xff] %vm544, %v421
      %547 = vst.msk [vmem:[%s172 + $0x10] sm:$0xff] %vm544, %v426
      %548 = vst.msk [vmem:[%s172 + $0x18] sm:$0xff] %vm544, %v429
      %549 = vst.msk [vmem:[%s172 + $0x20] sm:$0xff] %vm544, %v434
      %550 = vst.msk [vmem:[%s172 + $0x28] sm:$0xff] %vm544, %v437
      %551 = vst.msk [vmem:[%s172 + $0x30] sm:$0xff] %vm544, %v442
      %552 = vst.msk [vmem:[%s172 + $0x38] sm:$0xff] %vm544, %v445
      %553 = vst.msk [vmem:[%s172 + $0x40] sm:$0xff] %vm544, %v450
      %554 = vst.msk [vmem:[%s172 + $0x48] sm:$0xff] %vm544, %v453
      %555 = vst.msk [vmem:[%s172 + $0x50] sm:$0xff] %vm544, %v458
      %556 = vst.msk [vmem:[%s172 + $0x58] sm:$0xff] %vm544, %v461
      %557 = vst.msk [vmem:[%s172 + $0x60] sm:$0xff] %vm544, %v466
      %558 = vst.msk [vmem:[%s172 + $0x68] sm:$0xff] %vm544, %v469
      %559 = vst.msk [vmem:[%s172 + $0x70] sm:$0xff] %vm544, %v474
      %560 = vst.msk [vmem:[%s172 + $0x78] sm:$0xff] %vm544, %v477
      %561 = vst.msk [vmem:[%s172 + $0x80] sm:$0xff] %vm544, %v482
      %562 = vst.msk [vmem:[%s172 + $0x88] sm:$0xff] %vm544, %v485
      %563 = vst.msk [vmem:[%s172 + $0x90] sm:$0xff] %vm544, %v490
      %564 = vst.msk [vmem:[%s172 + $0x98] sm:$0xff] %vm544, %v493
      %565 = vst.msk [vmem:[%s172 + $0xa0] sm:$0xff] %vm544, %v498
      %566 = vst.msk [vmem:[%s172 + $0xa8] sm:$0xff] %vm544, %v501
      %567 = vst.msk [vmem:[%s172 + $0xb0] sm:$0xff] %vm544, %v506
      %568 = vst.msk [vmem:[%s172 + $0xb8] sm:$0xff] %vm544, %v509
      %569 = vst.msk [vmem:[%s172 + $0xc0] sm:$0xff] %vm544, %v514
      %570 = vst.msk [vmem:[%s172 + $0xc8] sm:$0xff] %vm544, %v517
      %571 = vst.msk [vmem:[%s172 + $0xd0] sm:$0xff] %vm544, %v522
      %572 = vst.msk [vmem:[%s172 + $0xd8] sm:$0xff] %vm544, %v525
      %573 = vst.msk [vmem:[%s172 + $0xe0] sm:$0xff] %vm544, %v530
      %574 = vst.msk [vmem:[%s172 + $0xe8] sm:$0xff] %vm544, %v533
      %575 = vst.msk [vmem:[%s172 + $0xf0] sm:$0xff] %vm544, %v538
      %576 = vst.msk [vmem:[%s172 + $0xf8] sm:$0xff] %vm544, %v541
      %s577 = smul.u32 32, %s14
      %p578 = scmp.lt.s32.totalorder %s577, 63
      %s579 = scalar_select %p578, %s577, 63
      %s580 = smul.addr %s579, 8
      %s581 = scalar_lea.vmem %s3, %s580
      // Predicated region
      $region33: #{heatformer_passive_forward.14} parent=31 // pred_check
        %p582 = pneg %p100
      $region34: #{heatformer_passive_forward.14} parent=31 // pred_check_branch
        %584 = sbr.rel (%p582) target = $region36
      $region35: #{heatformer_passive_forward.14} parent=31 // pred_region
        %s585 = smul.u32 32, %s14
      $region36: #{heatformer_passive_forward.14} parent=31 // pred_fallthru
        _
    $region32: #{heatformer_passive_forward.14} parent=5 // pred_fallthru
      _
    %p586 = scmp.le.s32.totalorder 2, %s9
    // Predicated region
    $region37: #{heatformer_passive_forward.14} parent=5 // pred_check
      %p587 = pneg %p586
    $region38: #{heatformer_passive_forward.14} parent=5 // pred_check_branch
      %589 = sbr.rel (%p587) target = $region40
    $region39: #{heatformer_passive_forward.14} parent=5 // pred_region
      %s590 = ssub.s32 %s9, 2
      // Predicated region
      $region41: #{heatformer_passive_forward.14} parent=39 // pred_check
        %p591 = pneg %p106
      $region42: #{heatformer_passive_forward.14} parent=39 // pred_check_branch
        %593 = sbr.rel (%p591) target = $region44
      $region43: #{heatformer_passive_forward.14} parent=39 // pred_region
        %s594 = smul.u32 32, %s15
        %p595 = scmp.lt.s32.totalorder %s594, 63
        %s596 = scalar_select %p595, %s594, 63
        %s597 = smul.addr %s596, 8
        %s598 = scalar_lea.vmem %s3, %s597
      $region44: #{heatformer_passive_forward.14} parent=39 // pred_fallthru
        _
    $region40: #{heatformer_passive_forward.14} parent=5 // pred_fallthru
      _
  $region6: #{heatformer_passive_forward.14} parent=0 // loop_footer
    %s13 = sadd.s32 1, %s9
  $region7: #{heatformer_passive_forward.14} parent=0 // loop_footer_branch
    %8 = sbr.rel target = $region3
  $region8: #{heatformer_passive_forward.14} parent=0 // loop_exit
    _

// kernel: heatformer_passive_forward.15
$region0: #{heatformer_passive_forward.15}
  #allocation0 [shape = 'u32[]', space=smem, size = 0x4, offset = 0x4, fixed_abs, tag = 'smem constant byte address 0x4 - core index']
  #allocation1 [shape = 'u32[144,128]{1,0:T(1,128)}', space=vmem, size = 0x12000, scoped, tag = 'internal scratch']
  %s0 = inlined_call_operand.vmem [shape: bf16[512,36], index: 0, kind: input, shape index: {}]
  %s1 = inlined_call_operand.vmem [shape: bf16[36,8], index: 1, kind: input, shape index: {}]
  %s2 = inlined_call_operand.vmem [shape: f32[1,8], index: 2, kind: input, shape index: {}]
  %s3 = inlined_call_operand.vmem [shape: f32[512,8], index: 3, kind: output, shape index: {}]
  %s4 = sld [smem:[#allocation0]]
  $region45: #{heatformer_passive_forward.15} parent=0
    _
  %s6 = ssub.s32 1, %s4
  %s7 = scalar_select 0, %s6, %s4
  loop: start=0, step=1, limit=4
  $region2: #{heatformer_passive_forward.15} parent=0 // loop_pre_header
    _
  $region3: #{heatformer_passive_forward.15} parent=0 // loop_header
    %s9 = sphi 0, %s13
    %p10 = scmp.ge.s32.totalorder %s9, 4
    %s19 = sphi 0, %s21
    %s22 = sphi 0, %s19
    %s23 = sphi 0, %s22
    %s39 = sphi 0, %s23
    %s43 = sphi 0, %s43
    %s45 = sphi 0, %s43
    %s46 = sphi 0, %s45
    %s60 = sphi 0, %s46
    %s64 = sphi 0, %s64
    %s66 = sphi 0, %s64
    %s67 = sphi 0, %s66
    %s81 = sphi 0, %s67
    %s87 = sphi 0, %s89
    %s90 = sphi 0, %s87
    %s91 = sphi 0, %s90
    %s107 = sphi 0, %s91
  $region4: #{heatformer_passive_forward.15} parent=0 // loop_header_branch
    %12 = sbr.rel (%p10) target = $region8
  $region5: #{heatformer_passive_forward.15} parent=0 // loop_body
    %s14 = ssub.s32 %s9, 1
    %s15 = ssub.s32 %s9, 2
    %s16 = sadd.s32 %s9, 1
    %s17 = ssub.s32 %s9, %s16
    %p18 = scmp.eq.s32.totalorder %s17, 0
    %s20 = sadd.s32 %s19, 1
    %s21 = scalar_select %p18, %s19, %s20
    %p24 = pneg %p18
    %p25 = scmp.eq.s32.totalorder %s9, 1
    %p26 = por %p24, %p25
    %p27 = scmp.ne.s32.totalorder %s19, %s22
    %p28 = scmp.eq.s32.totalorder %s9, 0
    %p29 = por %p27, %p28
    %p30 = scmp.ne.s32.totalorder %s19, %s22
    %p31 = scmp.eq.s32.totalorder %s14, 1
    %p32 = por %p30, %p31
    %p33 = scmp.ne.s32.totalorder %s22, %s23
    %p34 = scmp.eq.s32.totalorder %s14, 0
    %p35 = por %p33, %p34
    %p36 = scmp.ne.s32.totalorder %s22, %s23
    %p37 = scmp.eq.s32.totalorder %s15, 1
    %p38 = por %p36, %p37
    %p40 = scmp.ne.s32.totalorder %s23, %s39
    %p41 = scmp.eq.s32.totalorder %s15, 0
    %p42 = por %p40, %p41
    %s44 = sadd.s32 %s43, 1
    %p47 = scmp.eq.s32.totalorder %s9, 1
    %p48 = scmp.ne.s32.totalorder %s43, %s45
    %p49 = scmp.eq.s32.totalorder %s9, 0
    %p50 = por %p48, %p49
    %p51 = scmp.ne.s32.totalorder %s43, %s45
    %p52 = scmp.eq.s32.totalorder %s14, 1
    %p53 = por %p51, %p52
    %p54 = scmp.ne.s32.totalorder %s45, %s46
    %p55 = scmp.eq.s32.totalorder %s14, 0
    %p56 = por %p54, %p55
    %p57 = scmp.ne.s32.totalorder %s45, %s46
    %p58 = scmp.eq.s32.totalorder %s15, 1
    %p59 = por %p57, %p58
    %p61 = scmp.ne.s32.totalorder %s46, %s60
    %p62 = scmp.eq.s32.totalorder %s15, 0
    %p63 = por %p61, %p62
    %s65 = sadd.s32 %s64, 1
    %p68 = scmp.eq.s32.totalorder %s9, 1
    %p69 = scmp.ne.s32.totalorder %s64, %s66
    %p70 = scmp.eq.s32.totalorder %s9, 0
    %p71 = por %p69, %p70
    %p72 = scmp.ne.s32.totalorder %s64, %s66
    %p73 = scmp.eq.s32.totalorder %s14, 1
    %p74 = por %p72, %p73
    %p75 = scmp.ne.s32.totalorder %s66, %s67
    %p76 = scmp.eq.s32.totalorder %s14, 0
    %p77 = por %p75, %p76
    %p78 = scmp.ne.s32.totalorder %s66, %s67
    %p79 = scmp.eq.s32.totalorder %s15, 1
    %p80 = por %p78, %p79
    %p82 = scmp.ne.s32.totalorder %s67, %s81
    %p83 = scmp.eq.s32.totalorder %s15, 0
    %p84 = por %p82, %p83
    %s85 = ssub.s32 %s9, %s16
    %p86 = scmp.eq.s32.totalorder %s85, 0
    %s88 = sadd.s32 %s87, 1
    %s89 = scalar_select %p86, %s87, %s88
    %p92 = pneg %p86
    %p93 = scmp.eq.s32.totalorder %s9, 1
    %p94 = por %p92, %p93
    %p95 = scmp.ne.s32.totalorder %s87, %s90
    %p96 = scmp.eq.s32.totalorder %s9, 0
    %p97 = por %p95, %p96
    %p98 = scmp.ne.s32.totalorder %s87, %s90
    %p99 = scmp.eq.s32.totalorder %s14, 1
    %p100 = por %p98, %p99
    %p101 = scmp.ne.s32.totalorder %s90, %s91
    %p102 = scmp.eq.s32.totalorder %s14, 0
    %p103 = por %p101, %p102
    %p104 = scmp.ne.s32.totalorder %s90, %s91
    %p105 = scmp.eq.s32.totalorder %s15, 1
    %p106 = por %p104, %p105
    %p108 = scmp.ne.s32.totalorder %s91, %s107
    %p109 = scmp.eq.s32.totalorder %s15, 0
    %p110 = por %p108, %p109
    %p111 = scmp.le.s32.totalorder 1, %s9
    %p112 = scmp.lt.s32.totalorder %s9, 3
    %p113 = pnand %p111, %p112
    %p114 = pneg %p113
    // Predicated region
    $region9: #{heatformer_passive_forward.15} parent=5 // pred_check
      _
    $region10: #{heatformer_passive_forward.15} parent=5 // pred_check_branch
      %116 = sbr.rel (%p113) target = $region12
    $region11: #{heatformer_passive_forward.15} parent=5 // pred_region
      %s117 = ssub.s32 %s9, 1
      // Predicated region
      $region13: #{heatformer_passive_forward.15} parent=11 // pred_check
        %p118 = pneg %p56
      $region14: #{heatformer_passive_forward.15} parent=11 // pred_check_branch
        %120 = sbr.rel (%p118) target = $region16
      $region15: #{heatformer_passive_forward.15} parent=11 // pred_region
        _
      $region16: #{heatformer_passive_forward.15} parent=11 // pred_fallthru
        _
      // Predicated region
      $region17: #{heatformer_passive_forward.15} parent=11 // pred_check
        %p121 = pneg %p77
      $region18: #{heatformer_passive_forward.15} parent=11 // pred_check_branch
        %123 = sbr.rel (%p121) target = $region20
      $region19: #{heatformer_passive_forward.15} parent=11 // pred_region
        _
      $region20: #{heatformer_passive_forward.15} parent=11 // pred_fallthru
        _
    $region12: #{heatformer_passive_forward.15} parent=5 // pred_fallthru
      _
    %p124 = scmp.lt.s32.totalorder %s9, 2
    // Predicated region
    $region21: #{heatformer_passive_forward.15} parent=5 // pred_check
      %p125 = pneg %p124
    $region22: #{heatformer_passive_forward.15} parent=5 // pred_check_branch
      %127 = sbr.rel (%p125) target = $region24
    $region23: #{heatformer_passive_forward.15} parent=5 // pred_region
      // Predicated region
      $region25: #{heatformer_passive_forward.15} parent=23 // pred_check
        %p128 = pneg %p29
      $region26: #{heatformer_passive_forward.15} parent=23 // pred_check_branch
        %130 = sbr.rel (%p128) target = $region28
      $region27: #{heatformer_passive_forward.15} parent=23 // pred_region
        %s131 = smul.u32 32, %s9
        %p132 = scmp.lt.s32.totalorder %s131, 63
        %s133 = scalar_select %p132, %s131, 63
        %s134 = smul.addr %s133, 4
        %s135 = scalar_lea.vmem %s0, %s134
        %s136 = smul.u32 32, %s9
      $region28: #{heatformer_passive_forward.15} parent=23 // pred_fallthru
        _
    $region24: #{heatformer_passive_forward.15} parent=5 // pred_fallthru
      _
    %p137 = scmp.le.s32.totalorder 1, %s9
    %p138 = scmp.lt.s32.totalorder %s9, 3
    %p139 = pnand %p137, %p138
    %p140 = pneg %p139
    // Predicated region
    $region29: #{heatformer_passive_forward.15} parent=5 // pred_check
      _
    $region30: #{heatformer_passive_forward.15} parent=5 // pred_check_branch
      %142 = sbr.rel (%p139) target = $region32
    $region31: #{heatformer_passive_forward.15} parent=5 // pred_region
      %s143 = ssub.s32 %s9, 1
      %s144 = smul.u32 32, %s14
      %p145 = scmp.lt.s32.totalorder %s144, 63
      %s146 = scalar_select %p145, %s144, 63
      %s147 = smul.addr %s146, 4
      %s148 = scalar_lea.vmem %s0, %s147
      %p149 = pneg %p35
      %p150 = pneg %p32
      %p151 = pneg %p56
      %p152 = pneg %p53
      %p153 = pneg %p77
      %p154 = pneg %p74
      %p155 = pneg %p103
      %p156 = pneg %p100
      %s157 = smul.u32 32, %s14
      %p158 = scmp.lt.s32.totalorder %s157, 63
      %s159 = scalar_select %p158, %s157, 63
      %s160 = smul.addr %s159, 8
      %s161 = scalar_lea.vmem %s3, %s160
      %s162 = smul.u32 32, %s14
      %p163 = scmp.lt.s32.totalorder %s162, 63
      %s164 = scalar_select %p163, %s162, 63
      %s165 = smul.addr %s164, 4
      %s166 = scalar_lea.vmem %s0, %s165
      %s167 = smul.u32 32, %s14
      %s168 = smul.u32 32, %s14
      %p169 = scmp.lt.s32.totalorder %s168, 63
      %s170 = scalar_select %p169, %s168, 63
      %s171 = smul.addr %s170, 8
      %s172 = scalar_lea.vmem %s3, %s171
      %s173 = smul.u32 32, %s14
      %v175 = vld [vmem:[%s166] sm:$0xf]
      %v176 = vld [vmem:[%s166 + $0x4] sm:$0xf]
      %v177 = vld [vmem:[%s166 + $0x8] sm:$0xf]
      %v178 = vld [vmem:[%s166 + $0xc] sm:$0xf]
      %v179 = vld [vmem:[%s166 + $0x10] sm:$0xf]
      %v180 = vld [vmem:[%s166 + $0x14] sm:$0xf]
      %v181 = vld [vmem:[%s166 + $0x18] sm:$0xf]
      %v182 = vld [vmem:[%s166 + $0x1c] sm:$0xf]
      %v183 = vld [vmem:[%s166 + $0x20] sm:$0xf]
      %v184 = vld [vmem:[%s166 + $0x24] sm:$0xf]
      %v185 = vld [vmem:[%s166 + $0x28] sm:$0xf]
      %v186 = vld [vmem:[%s166 + $0x2c] sm:$0xf]
      %v187 = vld [vmem:[%s166 + $0x30] sm:$0xf]
      %v188 = vld [vmem:[%s166 + $0x34] sm:$0xf]
      %v189 = vld [vmem:[%s166 + $0x38] sm:$0xf]
      %v190 = vld [vmem:[%s166 + $0x3c] sm:$0xf]
      %v191 = vld [vmem:[%s166 + $0x40] sm:$0xf]
      %v192 = vld [vmem:[%s166 + $0x44] sm:$0xf]
      %v193 = vld [vmem:[%s166 + $0x48] sm:$0xf]
      %v194 = vld [vmem:[%s166 + $0x4c] sm:$0xf]
      %v195 = vld [vmem:[%s166 + $0x50] sm:$0xf]
      %v196 = vld [vmem:[%s166 + $0x54] sm:$0xf]
      %v197 = vld [vmem:[%s166 + $0x58] sm:$0xf]
      %v198 = vld [vmem:[%s166 + $0x5c] sm:$0xf]
      %v199 = vld [vmem:[%s166 + $0x60] sm:$0xf]
      %v200 = vld [vmem:[%s166 + $0x64] sm:$0xf]
      %v201 = vld [vmem:[%s166 + $0x68] sm:$0xf]
      %v202 = vld [vmem:[%s166 + $0x6c] sm:$0xf]
      %v203 = vld [vmem:[%s166 + $0x70] sm:$0xf]
      %v204 = vld [vmem:[%s166 + $0x74] sm:$0xf]
      %v205 = vld [vmem:[%s166 + $0x78] sm:$0xf]
      %v206 = vld [vmem:[%s166 + $0x7c] sm:$0xf]
      %v207 = vld [vmem:[%s1] sm:$0xf]
      %v208 = vld [vmem:[%s1 + $0x4] sm:$0xf]
      %v209 = vld [vmem:[%s1 + $0x8] sm:$0xf]
      %v210 = vld [vmem:[%s1 + $0xc] sm:$0xf]
      %v211 = vld [vmem:[%s1 + $0x10] sm:$0x3]
      %v212 = vld [vmem:[%s2] sm:$0x1]
      %v214 = vlaneseq
      %v215 = vshrl.u32 %v214, 7
      %v216 = vsub.s32 0, %v215
      %v217 = vrot.slane %v212, %v216
      %v251 = vunpack.c.l.b16 %v175
      %v252 = vunpack.c.l.b16 %v176
      %v253 = vunpack.c.l.b16 %v177
      %v254 = vunpack.c.l.b16 %v178
      %v255 = vunpack.c.l.b16 %v179
      %v256 = vunpack.c.l.b16 %v180
      %v257 = vunpack.c.l.b16 %v181
      %v258 = vunpack.c.l.b16 %v182
      %v259 = vunpack.c.l.b16 %v183
      %v260 = vunpack.c.l.b16 %v184
      %v261 = vunpack.c.l.b16 %v185
      %v262 = vunpack.c.l.b16 %v186
      %v263 = vunpack.c.l.b16 %v187
      %v264 = vunpack.c.l.b16 %v188
      %v265 = vunpack.c.l.b16 %v189
      %v266 = vunpack.c.l.b16 %v190
      %v267 = vunpack.c.l.b16 %v191
      %v268 = vunpack.c.l.b16 %v192
      %v269 = vunpack.c.l.b16 %v193
      %v270 = vunpack.c.l.b16 %v194
      %v271 = vunpack.c.l.b16 %v195
      %v272 = vunpack.c.l.b16 %v196
      %v273 = vunpack.c.l.b16 %v197
      %v274 = vunpack.c.l.b16 %v198
      %v275 = vunpack.c.l.b16 %v199
      %v276 = vunpack.c.l.b16 %v200
      %v277 = vunpack.c.l.b16 %v201
      %v278 = vunpack.c.l.b16 %v202
      %v279 = vunpack.c.l.b16 %v203
      %v280 = vunpack.c.l.b16 %v204
      %v281 = vunpack.c.l.b16 %v205
      %v282 = vunpack.c.l.b16 %v206
      %v283 = vpack.c.b16 %v252, %v251
      %v284 = vpack.c.b16 %v254, %v253
      %v285 = vpack.c.b16 %v256, %v255
      %v286 = vpack.c.b16 %v258, %v257
      %v287 = vpack.c.b16 %v260, %v259
      %v288 = vpack.c.b16 %v262, %v261
      %v289 = vpack.c.b16 %v264, %v263
      %v290 = vpack.c.b16 %v266, %v265
      %v291 = vpack.c.b16 %v268, %v267
      %v292 = vpack.c.b16 %v270, %v269
      %v293 = vpack.c.b16 %v272, %v271
      %v294 = vpack.c.b16 %v274, %v273
      %v295 = vpack.c.b16 %v276, %v275
      %v296 = vpack.c.b16 %v278, %v277
      %v297 = vpack.c.b16 %v280, %v279
      %v298 = vpack.c.b16 %v282, %v281
      %v304 = vunpack.c.l.b16 %v207
      %v305 = vunpack.c.l.b16 %v208
      %v306 = vunpack.c.l.b16 %v209
      %v307 = vunpack.c.l.b16 %v210
      %v308 = vunpack.c.l.b16 %v211
      %v309 = vpack.c.b16 %v305, %v304
      %v310 = vpack.c.b16 %v307, %v306
      %v311 = vpack.c.b16 %v308, %v308
      %vm314 = vcmask 293888
      %v316 = vsel %vm314, %v283, 0
      %v319 = vsel %vm314, %v284, 0
      %v322 = vsel %vm314, %v285, 0
      %v325 = vsel %vm314, %v286, 0
      %v328 = vsel %vm314, %v287, 0
      %v331 = vsel %vm314, %v288, 0
      %v334 = vsel %vm314, %v289, 0
      %v337 = vsel %vm314, %v290, 0
      %v340 = vsel %vm314, %v291, 0
      %v343 = vsel %vm314, %v292, 0
      %v346 = vsel %vm314, %v293, 0
      %v349 = vsel %vm314, %v294, 0
      %v352 = vsel %vm314, %v295, 0
      %v355 = vsel %vm314, %v296, 0
      %v358 = vsel %vm314, %v297, 0
      %v361 = vsel %vm314, %v298, 0
      %vm363 = vcmask 1041408
      %v365 = vsel %vm363, %v311, 0
      %367 = vmatprep.subr.bf16.mxu0 0
      %368 = vmatpush1.bf16.msra.mxu0 %v309
      %369 = vmatprep.subr.bf16.mxu0 0
      %370 = vmatpush1.bf16.msra.mxu0 %v310
      %371 = vmatprep.subr.bf16.mxu0 0
      %372 = vmatpush1.bf16.msra.mxu0 %v365
      %373 = vmatprep.subr.bf16.mxu0 0
      %374 = vmatpush1.bf16.msra.mxu0 0
      %375 = vmatprep.subr.bf16.mxu0 0
      %376 = vmatpush1.bf16.msra.mxu0 0
      %377 = vmatprep.subr.bf16.mxu0 0
      %378 = vmatpush1.bf16.msra.mxu0 0
      %379 = vmatprep.subr.bf16.mxu0 0
      %380 = vmatpush1.bf16.msra.mxu0 0
      %381 = vmatprep.subr.bf16.mxu0 0
      %382 = vmatpush1.bf16.msra.mxu0 0
      %383 = vmatprep.subr.bf16.mxu0 0
      %384 = vmatpush1.bf16.msra.mxu0 0
      %385 = vmatprep.subr.bf16.mxu0 0
      %386 = vmatpush1.bf16.msra.mxu0 0
      %387 = vmatprep.subr.bf16.mxu0 0
      %388 = vmatpush1.bf16.msra.mxu0 0
      %389 = vmatprep.subr.bf16.mxu0 0
      %390 = vmatpush1.bf16.msra.mxu0 0
      %391 = vmatprep.subr.bf16.mxu0 0
      %392 = vmatpush1.bf16.msra.mxu0 0
      %393 = vmatprep.subr.bf16.mxu0 0
      %394 = vmatpush1.bf16.msra.mxu0 0
      %395 = vmatprep.subr.bf16.mxu0 0
      %396 = vmatpush1.bf16.msra.mxu0 0
      %397 = vmatprep.subr.bf16.mxu0 0
      %398 = vmatpush1.bf16.msra.mxu0 0
      %399 = vmatprep.mubr.bf16.mxu0 0
      %400 = vmatmul.mubr.bf16.gmra.mrb[0].mxu0 %v316
      %v401 = vpop.f32.mrb[0].mxu0
      %v402 = vadd.f32 %v217, %v401
      %v403 = vpop.f32.mrb[0].mxu0
      %v404 = vpop.f32.mrb[0].mxu0
      %v405 = vadd.f32 %v217, %v404
      %v406 = vpop.f32.mrb[0].mxu0
      %407 = vmatprep.mubr.bf16.mxu0 0
      %408 = vmatmul.mubr.bf16.gmra.mrb[0].mxu0 %v319
      %v409 = vpop.f32.mrb[0].mxu0
      %v410 = vadd.f32 %v217, %v409
      %v411 = vpop.f32.mrb[0].mxu0
      %v412 = vpop.f32.mrb[0].mxu0
      %v413 = vadd.f32 %v217, %v412
      %v414 = vpop.f32.mrb[0].mxu0
      %415 = vmatprep.mubr.bf16.mxu0 0
      %416 = vmatmul.mubr.bf16.gmra.mrb[0].mxu0 %v322
      %v417 = vpop.f32.mrb[0].mxu0
      %v418 = vadd.f32 %v217, %v417
      %v419 = vpop.f32.mrb[0].mxu0
      %v420 = vpop.f32.mrb[0].mxu0
      %v421 = vadd.f32 %v217, %v420
      %v422 = vpop.f32.mrb[0].mxu0
      %423 = vmatprep.mubr.bf16.mxu0 0
      %424 = vmatmul.mubr.bf16.gmra.mrb[0].mxu0 %v325
      %v425 = vpop.f32.mrb[0].mxu0
      %v426 = vadd.f32 %v217, %v425
      %v427 = vpop.f32.mrb[0].mxu0
      %v428 = vpop.f32.mrb[0].mxu0
      %v429 = vadd.f32 %v217, %v428
      %v430 = vpop.f32.mrb[0].mxu0
      %431 = vmatprep.mubr.bf16.mxu0 0
      %432 = vmatmul.mubr.bf16.gmra.mrb[0].mxu0 %v328
      %v433 = vpop.f32.mrb[0].mxu0
      %v434 = vadd.f32 %v217, %v433
      %v435 = vpop.f32.mrb[0].mxu0
      %v436 = vpop.f32.mrb[0].mxu0
      %v437 = vadd.f32 %v217, %v436
      %v438 = vpop.f32.mrb[0].mxu0
      %439 = vmatprep.mubr.bf16.mxu0 0
      %440 = vmatmul.mubr.bf16.gmra.mrb[0].mxu0 %v331
      %v441 = vpop.f32.mrb[0].mxu0
      %v442 = vadd.f32 %v217, %v441
      %v443 = vpop.f32.mrb[0].mxu0
      %v444 = vpop.f32.mrb[0].mxu0
      %v445 = vadd.f32 %v217, %v444
      %v446 = vpop.f32.mrb[0].mxu0
      %447 = vmatprep.mubr.bf16.mxu0 0
      %448 = vmatmul.mubr.bf16.gmra.mrb[0].mxu0 %v334
      %v449 = vpop.f32.mrb[0].mxu0
      %v450 = vadd.f32 %v217, %v449
      %v451 = vpop.f32.mrb[0].mxu0
      %v452 = vpop.f32.mrb[0].mxu0
      %v453 = vadd.f32 %v217, %v452
      %v454 = vpop.f32.mrb[0].mxu0
      %455 = vmatprep.mubr.bf16.mxu0 0
      %456 = vmatmul.mubr.bf16.gmra.mrb[0].mxu0 %v337
      %v457 = vpop.f32.mrb[0].mxu0
      %v458 = vadd.f32 %v217, %v457
      %v459 = vpop.f32.mrb[0].mxu0
      %v460 = vpop.f32.mrb[0].mxu0
      %v461 = vadd.f32 %v217, %v460
      %v462 = vpop.f32.mrb[0].mxu0
      %463 = vmatprep.mubr.bf16.mxu0 0
      %464 = vmatmul.mubr.bf16.gmra.mrb[0].mxu0 %v340
      %v465 = vpop.f32.mrb[0].mxu0
      %v466 = vadd.f32 %v217, %v465
      %v467 = vpop.f32.mrb[0].mxu0
      %v468 = vpop.f32.mrb[0].mxu0
      %v469 = vadd.f32 %v217, %v468
      %v470 = vpop.f32.mrb[0].mxu0
      %471 = vmatprep.mubr.bf16.mxu0 0
      %472 = vmatmul.mubr.bf16.gmra.mrb[0].mxu0 %v343
      %v473 = vpop.f32.mrb[0].mxu0
      %v474 = vadd.f32 %v217, %v473
      %v475 = vpop.f32.mrb[0].mxu0
      %v476 = vpop.f32.mrb[0].mxu0
      %v477 = vadd.f32 %v217, %v476
      %v478 = vpop.f32.mrb[0].mxu0
      %479 = vmatprep.mubr.bf16.mxu0 0
      %480 = vmatmul.mubr.bf16.gmra.mrb[0].mxu0 %v346
      %v481 = vpop.f32.mrb[0].mxu0
      %v482 = vadd.f32 %v217, %v481
      %v483 = vpop.f32.mrb[0].mxu0
      %v484 = vpop.f32.mrb[0].mxu0
      %v485 = vadd.f32 %v217, %v484
      %v486 = vpop.f32.mrb[0].mxu0
      %487 = vmatprep.mubr.bf16.mxu0 0
      %488 = vmatmul.mubr.bf16.gmra.mrb[0].mxu0 %v349
      %v489 = vpop.f32.mrb[0].mxu0
      %v490 = vadd.f32 %v217, %v489
      %v491 = vpop.f32.mrb[0].mxu0
      %v492 = vpop.f32.mrb[0].mxu0
      %v493 = vadd.f32 %v217, %v492
      %v494 = vpop.f32.mrb[0].mxu0
      %495 = vmatprep.mubr.bf16.mxu0 0
      %496 = vmatmul.mubr.bf16.gmra.mrb[0].mxu0 %v352
      %v497 = vpop.f32.mrb[0].mxu0
      %v498 = vadd.f32 %v217, %v497
      %v499 = vpop.f32.mrb[0].mxu0
      %v500 = vpop.f32.mrb[0].mxu0
      %v501 = vadd.f32 %v217, %v500
      %v502 = vpop.f32.mrb[0].mxu0
      %503 = vmatprep.mubr.bf16.mxu0 0
      %504 = vmatmul.mubr.bf16.gmra.mrb[0].mxu0 %v355
      %v505 = vpop.f32.mrb[0].mxu0
      %v506 = vadd.f32 %v217, %v505
      %v507 = vpop.f32.mrb[0].mxu0
      %v508 = vpop.f32.mrb[0].mxu0
      %v509 = vadd.f32 %v217, %v508
      %v510 = vpop.f32.mrb[0].mxu0
      %511 = vmatprep.mubr.bf16.mxu0 0
      %512 = vmatmul.mubr.bf16.gmra.mrb[0].mxu0 %v358
      %v513 = vpop.f32.mrb[0].mxu0
      %v514 = vadd.f32 %v217, %v513
      %v515 = vpop.f32.mrb[0].mxu0
      %v516 = vpop.f32.mrb[0].mxu0
      %v517 = vadd.f32 %v217, %v516
      %v518 = vpop.f32.mrb[0].mxu0
      %519 = vmatprep.mubr.bf16.mxu0 0
      %520 = vmatmul.mubr.bf16.gmra.mrb[0].mxu0 %v361
      %v521 = vpop.f32.mrb[0].mxu0
      %v522 = vadd.f32 %v217, %v521
      %v523 = vpop.f32.mrb[0].mxu0
      %v524 = vpop.f32.mrb[0].mxu0
      %v525 = vadd.f32 %v217, %v524
      %v526 = vpop.f32.mrb[0].mxu0
      %527 = vdwg.mxu0
      %vm528 = vcmp.gt.f32.partialorder %v402, 0.0
      %vm529 = vcmp.gt.f32.partialorder %v405, 0.0
      %vm530 = vcmp.gt.f32.partialorder %v410, 0.0
      %vm531 = vcmp.gt.f32.partialorder %v413, 0.0
      %vm532 = vcmp.gt.f32.partialorder %v418, 0.0
      %vm533 = vcmp.gt.f32.partialorder %v421, 0.0
      %vm534 = vcmp.gt.f32.partialorder %v426, 0.0
      %vm535 = vcmp.gt.f32.partialorder %v429, 0.0
      %vm536 = vcmp.gt.f32.partialorder %v434, 0.0
      %vm537 = vcmp.gt.f32.partialorder %v437, 0.0
      %vm538 = vcmp.gt.f32.partialorder %v442, 0.0
      %vm539 = vcmp.gt.f32.partialorder %v445, 0.0
      %vm540 = vcmp.gt.f32.partialorder %v450, 0.0
      %vm541 = vcmp.gt.f32.partialorder %v453, 0.0
      %vm542 = vcmp.gt.f32.partialorder %v458, 0.0
      %vm543 = vcmp.gt.f32.partialorder %v461, 0.0
      %vm544 = vcmp.gt.f32.partialorder %v466, 0.0
      %vm545 = vcmp.gt.f32.partialorder %v469, 0.0
      %vm546 = vcmp.gt.f32.partialorder %v474, 0.0
      %vm547 = vcmp.gt.f32.partialorder %v477, 0.0
      %vm548 = vcmp.gt.f32.partialorder %v482, 0.0
      %vm549 = vcmp.gt.f32.partialorder %v485, 0.0
      %vm550 = vcmp.gt.f32.partialorder %v490, 0.0
      %vm551 = vcmp.gt.f32.partialorder %v493, 0.0
      %vm552 = vcmp.gt.f32.partialorder %v498, 0.0
      %vm553 = vcmp.gt.f32.partialorder %v501, 0.0
      %vm554 = vcmp.gt.f32.partialorder %v506, 0.0
      %vm555 = vcmp.gt.f32.partialorder %v509, 0.0
      %vm556 = vcmp.gt.f32.partialorder %v514, 0.0
      %vm557 = vcmp.gt.f32.partialorder %v517, 0.0
      %vm558 = vcmp.gt.f32.partialorder %v522, 0.0
      %vm559 = vcmp.gt.f32.partialorder %v525, 0.0
      %v560 = vmin.f32 %v402, 0.0
      %v561 = vmin.f32 %v405, 0.0
      %v562 = vmin.f32 %v410, 0.0
      %v563 = vmin.f32 %v413, 0.0
      %v564 = vmin.f32 %v418, 0.0
      %v565 = vmin.f32 %v421, 0.0
      %v566 = vmin.f32 %v426, 0.0
      %v567 = vmin.f32 %v429, 0.0
      %v568 = vmin.f32 %v434, 0.0
      %v569 = vmin.f32 %v437, 0.0
      %v570 = vmin.f32 %v442, 0.0
      %v571 = vmin.f32 %v445, 0.0
      %v572 = vmin.f32 %v450, 0.0
      %v573 = vmin.f32 %v453, 0.0
      %v574 = vmin.f32 %v458, 0.0
      %v575 = vmin.f32 %v461, 0.0
      %v576 = vmin.f32 %v466, 0.0
      %v577 = vmin.f32 %v469, 0.0
      %v578 = vmin.f32 %v474, 0.0
      %v579 = vmin.f32 %v477, 0.0
      %v580 = vmin.f32 %v482, 0.0
      %v581 = vmin.f32 %v485, 0.0
      %v582 = vmin.f32 %v490, 0.0
      %v583 = vmin.f32 %v493, 0.0
      %v584 = vmin.f32 %v498, 0.0
      %v585 = vmin.f32 %v501, 0.0
      %v586 = vmin.f32 %v506, 0.0
      %v587 = vmin.f32 %v509, 0.0
      %v588 = vmin.f32 %v514, 0.0
      %v589 = vmin.f32 %v517, 0.0
      %v590 = vmin.f32 %v522, 0.0
      %v591 = vmin.f32 %v525, 0.0
      %v592 = vmul.f32 %v560, 1.442695
      %v593 = vpow.pop %v592
      %v594 = vmul.f32 %v561, 1.442695
      %v595 = vpow.pop %v594
      %v596 = vmul.f32 %v562, 1.442695
      %v597 = vpow.pop %v596
      %v598 = vmul.f32 %v563, 1.442695
      %v599 = vpow.pop %v598
      %v600 = vmul.f32 %v564, 1.442695
      %v601 = vpow.pop %v600
      %v602 = vmul.f32 %v565, 1.442695
      %v603 = vpow.pop %v602
      %v604 = vmul.f32 %v566, 1.442695
      %v605 = vpow.pop %v604
      %v606 = vmul.f32 %v567, 1.442695
      %v607 = vpow.pop %v606
      %v608 = vmul.f32 %v568, 1.442695
      %v609 = vpow.pop %v608
      %v610 = vmul.f32 %v569, 1.442695
      %v611 = vpow.pop %v610
      %v612 = vmul.f32 %v570, 1.442695
      %v613 = vpow.pop %v612
      %v614 = vmul.f32 %v571, 1.442695
      %v615 = vpow.pop %v614
      %v616 = vmul.f32 %v572, 1.442695
      %v617 = vpow.pop %v616
      %v618 = vmul.f32 %v573, 1.442695
      %v619 = vpow.pop %v618
      %v620 = vmul.f32 %v574, 1.442695
      %v621 = vpow.pop %v620
      %v622 = vmul.f32 %v575, 1.442695
      %v623 = vpow.pop %v622
      %v624 = vmul.f32 %v576, 1.442695
      %v625 = vpow.pop %v624
      %v626 = vmul.f32 %v577, 1.442695
      %v627 = vpow.pop %v626
      %v628 = vmul.f32 %v578, 1.442695
      %v629 = vpow.pop %v628
      %v630 = vmul.f32 %v579, 1.442695
      %v631 = vpow.pop %v630
      %v632 = vmul.f32 %v580, 1.442695
      %v633 = vpow.pop %v632
      %v634 = vmul.f32 %v581, 1.442695
      %v635 = vpow.pop %v634
      %v636 = vmul.f32 %v582, 1.442695
      %v637 = vpow.pop %v636
      %v638 = vmul.f32 %v583, 1.442695
      %v639 = vpow.pop %v638
      %v640 = vmul.f32 %v584, 1.442695
      %v641 = vpow.pop %v640
      %v642 = vmul.f32 %v585, 1.442695
      %v643 = vpow.pop %v642
      %v644 = vmul.f32 %v586, 1.442695
      %v645 = vpow.pop %v644
      %v646 = vmul.f32 %v587, 1.442695
      %v647 = vpow.pop %v646
      %v648 = vmul.f32 %v588, 1.442695
      %v649 = vpow.pop %v648
      %v650 = vmul.f32 %v589, 1.442695
      %v651 = vpow.pop %v650
      %v652 = vmul.f32 %v590, 1.442695
      %v653 = vpow.pop %v652
      %v654 = vmul.f32 %v591, 1.442695
      %v655 = vpow.pop %v654
      %v656 = vsub.f32 %v593, 1.0
      %v657 = vsub.f32 %v595, 1.0
      %v658 = vsub.f32 %v597, 1.0
      %v659 = vsub.f32 %v599, 1.0
      %v660 = vsub.f32 %v601, 1.0
      %v661 = vsub.f32 %v603, 1.0
      %v662 = vsub.f32 %v605, 1.0
      %v663 = vsub.f32 %v607, 1.0
      %v664 = vsub.f32 %v609, 1.0
      %v665 = vsub.f32 %v611, 1.0
      %v666 = vsub.f32 %v613, 1.0
      %v667 = vsub.f32 %v615, 1.0
      %v668 = vsub.f32 %v617, 1.0
      %v669 = vsub.f32 %v619, 1.0
      %v670 = vsub.f32 %v621, 1.0
      %v671 = vsub.f32 %v623, 1.0
      %v672 = vsub.f32 %v625, 1.0
      %v673 = vsub.f32 %v627, 1.0
      %v674 = vsub.f32 %v629, 1.0
      %v675 = vsub.f32 %v631, 1.0
      %v676 = vsub.f32 %v633, 1.0
      %v677 = vsub.f32 %v635, 1.0
      %v678 = vsub.f32 %v637, 1.0
      %v679 = vsub.f32 %v639, 1.0
      %v680 = vsub.f32 %v641, 1.0
      %v681 = vsub.f32 %v643, 1.0
      %v682 = vsub.f32 %v645, 1.0
      %v683 = vsub.f32 %v647, 1.0
      %v684 = vsub.f32 %v649, 1.0
      %v685 = vsub.f32 %v651, 1.0
      %v686 = vsub.f32 %v653, 1.0
      %v687 = vsub.f32 %v655, 1.0
      %v688 = vsel %vm528, %v402, %v656
      %v689 = vsel %vm529, %v405, %v657
      %v690 = vsel %vm530, %v410, %v658
      %v691 = vsel %vm531, %v413, %v659
      %v692 = vsel %vm532, %v418, %v660
      %v693 = vsel %vm533, %v421, %v661
      %v694 = vsel %vm534, %v426, %v662
      %v695 = vsel %vm535, %v429, %v663
      %v696 = vsel %vm536, %v434, %v664
      %v697 = vsel %vm537, %v437, %v665
      %v698 = vsel %vm538, %v442, %v666
      %v699 = vsel %vm539, %v445, %v667
      %v700 = vsel %vm540, %v450, %v668
      %v701 = vsel %vm541, %v453, %v669
      %v702 = vsel %vm542, %v458, %v670
      %v703 = vsel %vm543, %v461, %v671
      %v704 = vsel %vm544, %v466, %v672
      %v705 = vsel %vm545, %v469, %v673
      %v706 = vsel %vm546, %v474, %v674
      %v707 = vsel %vm547, %v477, %v675
      %v708 = vsel %vm548, %v482, %v676
      %v709 = vsel %vm549, %v485, %v677
      %v710 = vsel %vm550, %v490, %v678
      %v711 = vsel %vm551, %v493, %v679
      %v712 = vsel %vm552, %v498, %v680
      %v713 = vsel %vm553, %v501, %v681
      %v714 = vsel %vm554, %v506, %v682
      %v715 = vsel %vm555, %v509, %v683
      %v716 = vsel %vm556, %v514, %v684
      %v717 = vsel %vm557, %v517, %v685
      %v718 = vsel %vm558, %v522, %v686
      %v719 = vsel %vm559, %v525, %v687
      %vm720 = vcmask 64512
      %721 = vst.msk [vmem:[%s172] sm:$0xff] %vm720, %v688
      %722 = vst.msk [vmem:[%s172 + $0x8] sm:$0xff] %vm720, %v689
      %723 = vst.msk [vmem:[%s172 + $0x10] sm:$0xff] %vm720, %v690
      %724 = vst.msk [vmem:[%s172 + $0x18] sm:$0xff] %vm720, %v691
      %725 = vst.msk [vmem:[%s172 + $0x20] sm:$0xff] %vm720, %v692
      %726 = vst.msk [vmem:[%s172 + $0x28] sm:$0xff] %vm720, %v693
      %727 = vst.msk [vmem:[%s172 + $0x30] sm:$0xff] %vm720, %v694
      %728 = vst.msk [vmem:[%s172 + $0x38] sm:$0xff] %vm720, %v695
      %729 = vst.msk [vmem:[%s172 + $0x40] sm:$0xff] %vm720, %v696
      %730 = vst.msk [vmem:[%s172 + $0x48] sm:$0xff] %vm720, %v697
      %731 = vst.msk [vmem:[%s172 + $0x50] sm:$0xff] %vm720, %v698
      %732 = vst.msk [vmem:[%s172 + $0x58] sm:$0xff] %vm720, %v699
      %733 = vst.msk [vmem:[%s172 + $0x60] sm:$0xff] %vm720, %v700
      %734 = vst.msk [vmem:[%s172 + $0x68] sm:$0xff] %vm720, %v701
      %735 = vst.msk [vmem:[%s172 + $0x70] sm:$0xff] %vm720, %v702
      %736 = vst.msk [vmem:[%s172 + $0x78] sm:$0xff] %vm720, %v703
      %737 = vst.msk [vmem:[%s172 + $0x80] sm:$0xff] %vm720, %v704
      %738 = vst.msk [vmem:[%s172 + $0x88] sm:$0xff] %vm720, %v705
      %739 = vst.msk [vmem:[%s172 + $0x90] sm:$0xff] %vm720, %v706
      %740 = vst.msk [vmem:[%s172 + $0x98] sm:$0xff] %vm720, %v707
      %741 = vst.msk [vmem:[%s172 + $0xa0] sm:$0xff] %vm720, %v708
      %742 = vst.msk [vmem:[%s172 + $0xa8] sm:$0xff] %vm720, %v709
      %743 = vst.msk [vmem:[%s172 + $0xb0] sm:$0xff] %vm720, %v710
      %744 = vst.msk [vmem:[%s172 + $0xb8] sm:$0xff] %vm720, %v711
      %745 = vst.msk [vmem:[%s172 + $0xc0] sm:$0xff] %vm720, %v712
      %746 = vst.msk [vmem:[%s172 + $0xc8] sm:$0xff] %vm720, %v713
      %747 = vst.msk [vmem:[%s172 + $0xd0] sm:$0xff] %vm720, %v714
      %748 = vst.msk [vmem:[%s172 + $0xd8] sm:$0xff] %vm720, %v715
      %749 = vst.msk [vmem:[%s172 + $0xe0] sm:$0xff] %vm720, %v716
      %750 = vst.msk [vmem:[%s172 + $0xe8] sm:$0xff] %vm720, %v717
      %751 = vst.msk [vmem:[%s172 + $0xf0] sm:$0xff] %vm720, %v718
      %752 = vst.msk [vmem:[%s172 + $0xf8] sm:$0xff] %vm720, %v719
      %s753 = smul.u32 32, %s14
      %p754 = scmp.lt.s32.totalorder %s753, 63
      %s755 = scalar_select %p754, %s753, 63
      %s756 = smul.addr %s755, 8
      %s757 = scalar_lea.vmem %s3, %s756
      // Predicated region
      $region33: #{heatformer_passive_forward.15} parent=31 // pred_check
        %p758 = pneg %p100
      $region34: #{heatformer_passive_forward.15} parent=31 // pred_check_branch
        %760 = sbr.rel (%p758) target = $region36
      $region35: #{heatformer_passive_forward.15} parent=31 // pred_region
        %s761 = smul.u32 32, %s14
      $region36: #{heatformer_passive_forward.15} parent=31 // pred_fallthru
        _
    $region32: #{heatformer_passive_forward.15} parent=5 // pred_fallthru
      _
    %p762 = scmp.le.s32.totalorder 2, %s9
    // Predicated region
    $region37: #{heatformer_passive_forward.15} parent=5 // pred_check
      %p763 = pneg %p762
    $region38: #{heatformer_passive_forward.15} parent=5 // pred_check_branch
      %765 = sbr.rel (%p763) target = $region40
    $region39: #{heatformer_passive_forward.15} parent=5 // pred_region
      %s766 = ssub.s32 %s9, 2
      // Predicated region
      $region41: #{heatformer_passive_forward.15} parent=39 // pred_check
        %p767 = pneg %p106
      $region42: #{heatformer_passive_forward.15} parent=39 // pred_check_branch
        %769 = sbr.rel (%p767) target = $region44
      $region43: #{heatformer_passive_forward.15} parent=39 // pred_region
        %s770 = smul.u32 32, %s15
        %p771 = scmp.lt.s32.totalorder %s770, 63
        %s772 = scalar_select %p771, %s770, 63
        %s773 = smul.addr %s772, 8
        %s774 = scalar_lea.vmem %s3, %s773
      $region44: #{heatformer_passive_forward.15} parent=39 // pred_fallthru
        _
    $region40: #{heatformer_passive_forward.15} parent=5 // pred_fallthru
      _
  $region6: #{heatformer_passive_forward.15} parent=0 // loop_footer
    %s13 = sadd.s32 1, %s9
  $region7: #{heatformer_passive_forward.15} parent=0 // loop_footer_branch
    %8 = sbr.rel target = $region3
  $region8: #{heatformer_passive_forward.15} parent=0 // loop_exit
    _

// kernel: heatformer_passive_forward.16
$region0: #{heatformer_passive_forward.16}
  #allocation0 [shape = 'u32[]', space=smem, size = 0x4, offset = 0x4, fixed_abs, tag = 'smem constant byte address 0x4 - core index']
  #allocation1 [shape = 'u32[144,128]{1,0:T(1,128)}', space=vmem, size = 0x12000, scoped, tag = 'internal scratch']
  %s0 = inlined_call_operand.vmem [shape: bf16[512,72], index: 0, kind: input, shape index: {}]
  %s1 = inlined_call_operand.vmem [shape: bf16[72,8], index: 1, kind: input, shape index: {}]
  %s2 = inlined_call_operand.vmem [shape: f32[1,8], index: 2, kind: input, shape index: {}]
  %s3 = inlined_call_operand.vmem [shape: f32[512,8], index: 3, kind: output, shape index: {}]
  %s4 = sld [smem:[#allocation0]]
  $region45: #{heatformer_passive_forward.16} parent=0
    _
  %s6 = ssub.s32 1, %s4
  %s7 = scalar_select 0, %s6, %s4
  loop: start=0, step=1, limit=4
  $region2: #{heatformer_passive_forward.16} parent=0 // loop_pre_header
    _
  $region3: #{heatformer_passive_forward.16} parent=0 // loop_header
    %s9 = sphi 0, %s13
    %p10 = scmp.ge.s32.totalorder %s9, 4
    %s19 = sphi 0, %s21
    %s22 = sphi 0, %s19
    %s23 = sphi 0, %s22
    %s39 = sphi 0, %s23
    %s43 = sphi 0, %s43
    %s45 = sphi 0, %s43
    %s46 = sphi 0, %s45
    %s60 = sphi 0, %s46
    %s64 = sphi 0, %s64
    %s66 = sphi 0, %s64
    %s67 = sphi 0, %s66
    %s81 = sphi 0, %s67
    %s87 = sphi 0, %s89
    %s90 = sphi 0, %s87
    %s91 = sphi 0, %s90
    %s107 = sphi 0, %s91
  $region4: #{heatformer_passive_forward.16} parent=0 // loop_header_branch
    %12 = sbr.rel (%p10) target = $region8
  $region5: #{heatformer_passive_forward.16} parent=0 // loop_body
    %s14 = ssub.s32 %s9, 1
    %s15 = ssub.s32 %s9, 2
    %s16 = sadd.s32 %s9, 1
    %s17 = ssub.s32 %s9, %s16
    %p18 = scmp.eq.s32.totalorder %s17, 0
    %s20 = sadd.s32 %s19, 1
    %s21 = scalar_select %p18, %s19, %s20
    %p24 = pneg %p18
    %p25 = scmp.eq.s32.totalorder %s9, 1
    %p26 = por %p24, %p25
    %p27 = scmp.ne.s32.totalorder %s19, %s22
    %p28 = scmp.eq.s32.totalorder %s9, 0
    %p29 = por %p27, %p28
    %p30 = scmp.ne.s32.totalorder %s19, %s22
    %p31 = scmp.eq.s32.totalorder %s14, 1
    %p32 = por %p30, %p31
    %p33 = scmp.ne.s32.totalorder %s22, %s23
    %p34 = scmp.eq.s32.totalorder %s14, 0
    %p35 = por %p33, %p34
    %p36 = scmp.ne.s32.totalorder %s22, %s23
    %p37 = scmp.eq.s32.totalorder %s15, 1
    %p38 = por %p36, %p37
    %p40 = scmp.ne.s32.totalorder %s23, %s39
    %p41 = scmp.eq.s32.totalorder %s15, 0
    %p42 = por %p40, %p41
    %s44 = sadd.s32 %s43, 1
    %p47 = scmp.eq.s32.totalorder %s9, 1
    %p48 = scmp.ne.s32.totalorder %s43, %s45
    %p49 = scmp.eq.s32.totalorder %s9, 0
    %p50 = por %p48, %p49
    %p51 = scmp.ne.s32.totalorder %s43, %s45
    %p52 = scmp.eq.s32.totalorder %s14, 1
    %p53 = por %p51, %p52
    %p54 = scmp.ne.s32.totalorder %s45, %s46
    %p55 = scmp.eq.s32.totalorder %s14, 0
    %p56 = por %p54, %p55
    %p57 = scmp.ne.s32.totalorder %s45, %s46
    %p58 = scmp.eq.s32.totalorder %s15, 1
    %p59 = por %p57, %p58
    %p61 = scmp.ne.s32.totalorder %s46, %s60
    %p62 = scmp.eq.s32.totalorder %s15, 0
    %p63 = por %p61, %p62
    %s65 = sadd.s32 %s64, 1
    %p68 = scmp.eq.s32.totalorder %s9, 1
    %p69 = scmp.ne.s32.totalorder %s64, %s66
    %p70 = scmp.eq.s32.totalorder %s9, 0
    %p71 = por %p69, %p70
    %p72 = scmp.ne.s32.totalorder %s64, %s66
    %p73 = scmp.eq.s32.totalorder %s14, 1
    %p74 = por %p72, %p73
    %p75 = scmp.ne.s32.totalorder %s66, %s67
    %p76 = scmp.eq.s32.totalorder %s14, 0
    %p77 = por %p75, %p76
    %p78 = scmp.ne.s32.totalorder %s66, %s67
    %p79 = scmp.eq.s32.totalorder %s15, 1
    %p80 = por %p78, %p79
    %p82 = scmp.ne.s32.totalorder %s67, %s81
    %p83 = scmp.eq.s32.totalorder %s15, 0
    %p84 = por %p82, %p83
    %s85 = ssub.s32 %s9, %s16
    %p86 = scmp.eq.s32.totalorder %s85, 0
    %s88 = sadd.s32 %s87, 1
    %s89 = scalar_select %p86, %s87, %s88
    %p92 = pneg %p86
    %p93 = scmp.eq.s32.totalorder %s9, 1
    %p94 = por %p92, %p93
    %p95 = scmp.ne.s32.totalorder %s87, %s90
    %p96 = scmp.eq.s32.totalorder %s9, 0
    %p97 = por %p95, %p96
    %p98 = scmp.ne.s32.totalorder %s87, %s90
    %p99 = scmp.eq.s32.totalorder %s14, 1
    %p100 = por %p98, %p99
    %p101 = scmp.ne.s32.totalorder %s90, %s91
    %p102 = scmp.eq.s32.totalorder %s14, 0
    %p103 = por %p101, %p102
    %p104 = scmp.ne.s32.totalorder %s90, %s91
    %p105 = scmp.eq.s32.totalorder %s15, 1
    %p106 = por %p104, %p105
    %p108 = scmp.ne.s32.totalorder %s91, %s107
    %p109 = scmp.eq.s32.totalorder %s15, 0
    %p110 = por %p108, %p109
    %p111 = scmp.le.s32.totalorder 1, %s9
    %p112 = scmp.lt.s32.totalorder %s9, 3
    %p113 = pnand %p111, %p112
    %p114 = pneg %p113
    // Predicated region
    $region9: #{heatformer_passive_forward.16} parent=5 // pred_check
      _
    $region10: #{heatformer_passive_forward.16} parent=5 // pred_check_branch
      %116 = sbr.rel (%p113) target = $region12
    $region11: #{heatformer_passive_forward.16} parent=5 // pred_region
      %s117 = ssub.s32 %s9, 1
      // Predicated region
      $region13: #{heatformer_passive_forward.16} parent=11 // pred_check
        %p118 = pneg %p56
      $region14: #{heatformer_passive_forward.16} parent=11 // pred_check_branch
        %120 = sbr.rel (%p118) target = $region16
      $region15: #{heatformer_passive_forward.16} parent=11 // pred_region
        _
      $region16: #{heatformer_passive_forward.16} parent=11 // pred_fallthru
        _
      // Predicated region
      $region17: #{heatformer_passive_forward.16} parent=11 // pred_check
        %p121 = pneg %p77
      $region18: #{heatformer_passive_forward.16} parent=11 // pred_check_branch
        %123 = sbr.rel (%p121) target = $region20
      $region19: #{heatformer_passive_forward.16} parent=11 // pred_region
        _
      $region20: #{heatformer_passive_forward.16} parent=11 // pred_fallthru
        _
    $region12: #{heatformer_passive_forward.16} parent=5 // pred_fallthru
      _
    %p124 = scmp.lt.s32.totalorder %s9, 2
    // Predicated region
    $region21: #{heatformer_passive_forward.16} parent=5 // pred_check
      %p125 = pneg %p124
    $region22: #{heatformer_passive_forward.16} parent=5 // pred_check_branch
      %127 = sbr.rel (%p125) target = $region24
    $region23: #{heatformer_passive_forward.16} parent=5 // pred_region
      // Predicated region
      $region25: #{heatformer_passive_forward.16} parent=23 // pred_check
        %p128 = pneg %p29
      $region26: #{heatformer_passive_forward.16} parent=23 // pred_check_branch
        %130 = sbr.rel (%p128) target = $region28
      $region27: #{heatformer_passive_forward.16} parent=23 // pred_region
        %s131 = smul.u32 32, %s9
        %p132 = scmp.lt.s32.totalorder %s131, 63
        %s133 = scalar_select %p132, %s131, 63
        %s134 = smul.addr %s133, 4
        %s135 = scalar_lea.vmem %s0, %s134
        %s136 = smul.u32 32, %s9
      $region28: #{heatformer_passive_forward.16} parent=23 // pred_fallthru
        _
    $region24: #{heatformer_passive_forward.16} parent=5 // pred_fallthru
      _
    %p137 = scmp.le.s32.totalorder 1, %s9
    %p138 = scmp.lt.s32.totalorder %s9, 3
    %p139 = pnand %p137, %p138
    %p140 = pneg %p139
    // Predicated region
    $region29: #{heatformer_passive_forward.16} parent=5 // pred_check
      _
    $region30: #{heatformer_passive_forward.16} parent=5 // pred_check_branch
      %142 = sbr.rel (%p139) target = $region32
    $region31: #{heatformer_passive_forward.16} parent=5 // pred_region
      %s143 = ssub.s32 %s9, 1
      %s144 = smul.u32 32, %s14
      %p145 = scmp.lt.s32.totalorder %s144, 63
      %s146 = scalar_select %p145, %s144, 63
      %s147 = smul.addr %s146, 4
      %s148 = scalar_lea.vmem %s0, %s147
      %p149 = pneg %p35
      %p150 = pneg %p32
      %p151 = pneg %p56
      %p152 = pneg %p53
      %p153 = pneg %p77
      %p154 = pneg %p74
      %p155 = pneg %p103
      %p156 = pneg %p100
      %s157 = smul.u32 32, %s14
      %p158 = scmp.lt.s32.totalorder %s157, 63
      %s159 = scalar_select %p158, %s157, 63
      %s160 = smul.addr %s159, 8
      %s161 = scalar_lea.vmem %s3, %s160
      %s162 = smul.u32 32, %s14
      %p163 = scmp.lt.s32.totalorder %s162, 63
      %s164 = scalar_select %p163, %s162, 63
      %s165 = smul.addr %s164, 4
      %s166 = scalar_lea.vmem %s0, %s165
      %s167 = smul.u32 32, %s14
      %s168 = smul.u32 32, %s14
      %p169 = scmp.lt.s32.totalorder %s168, 63
      %s170 = scalar_select %p169, %s168, 63
      %s171 = smul.addr %s170, 8
      %s172 = scalar_lea.vmem %s3, %s171
      %s173 = smul.u32 32, %s14
      %v175 = vld [vmem:[%s166] sm:$0xf]
      %v176 = vld [vmem:[%s166 + $0x4] sm:$0xf]
      %v177 = vld [vmem:[%s166 + $0x8] sm:$0xf]
      %v178 = vld [vmem:[%s166 + $0xc] sm:$0xf]
      %v179 = vld [vmem:[%s166 + $0x10] sm:$0xf]
      %v180 = vld [vmem:[%s166 + $0x14] sm:$0xf]
      %v181 = vld [vmem:[%s166 + $0x18] sm:$0xf]
      %v182 = vld [vmem:[%s166 + $0x1c] sm:$0xf]
      %v183 = vld [vmem:[%s166 + $0x20] sm:$0xf]
      %v184 = vld [vmem:[%s166 + $0x24] sm:$0xf]
      %v185 = vld [vmem:[%s166 + $0x28] sm:$0xf]
      %v186 = vld [vmem:[%s166 + $0x2c] sm:$0xf]
      %v187 = vld [vmem:[%s166 + $0x30] sm:$0xf]
      %v188 = vld [vmem:[%s166 + $0x34] sm:$0xf]
      %v189 = vld [vmem:[%s166 + $0x38] sm:$0xf]
      %v190 = vld [vmem:[%s166 + $0x3c] sm:$0xf]
      %v191 = vld [vmem:[%s166 + $0x40] sm:$0xf]
      %v192 = vld [vmem:[%s166 + $0x44] sm:$0xf]
      %v193 = vld [vmem:[%s166 + $0x48] sm:$0xf]
      %v194 = vld [vmem:[%s166 + $0x4c] sm:$0xf]
      %v195 = vld [vmem:[%s166 + $0x50] sm:$0xf]
      %v196 = vld [vmem:[%s166 + $0x54] sm:$0xf]
      %v197 = vld [vmem:[%s166 + $0x58] sm:$0xf]
      %v198 = vld [vmem:[%s166 + $0x5c] sm:$0xf]
      %v199 = vld [vmem:[%s166 + $0x60] sm:$0xf]
      %v200 = vld [vmem:[%s166 + $0x64] sm:$0xf]
      %v201 = vld [vmem:[%s166 + $0x68] sm:$0xf]
      %v202 = vld [vmem:[%s166 + $0x6c] sm:$0xf]
      %v203 = vld [vmem:[%s166 + $0x70] sm:$0xf]
      %v204 = vld [vmem:[%s166 + $0x74] sm:$0xf]
      %v205 = vld [vmem:[%s166 + $0x78] sm:$0xf]
      %v206 = vld [vmem:[%s166 + $0x7c] sm:$0xf]
      %v207 = vld [vmem:[%s1] sm:$0xf]
      %v208 = vld [vmem:[%s1 + $0x4] sm:$0xf]
      %v209 = vld [vmem:[%s1 + $0x8] sm:$0xf]
      %v210 = vld [vmem:[%s1 + $0xc] sm:$0xf]
      %v211 = vld [vmem:[%s1 + $0x10] sm:$0xf]
      %v212 = vld [vmem:[%s1 + $0x14] sm:$0xf]
      %v213 = vld [vmem:[%s1 + $0x18] sm:$0xf]
      %v214 = vld [vmem:[%s1 + $0x1c] sm:$0xf]
      %v215 = vld [vmem:[%s1 + $0x20] sm:$0xf]
      %v216 = vld [vmem:[%s2] sm:$0x1]
      %v218 = vlaneseq
      %v219 = vshrl.u32 %v218, 7
      %v220 = vsub.s32 0, %v219
      %v221 = vrot.slane %v216, %v220
      %v255 = vunpack.c.l.b16 %v175
      %v256 = vunpack.c.l.b16 %v176
      %v257 = vunpack.c.l.b16 %v177
      %v258 = vunpack.c.l.b16 %v178
      %v259 = vunpack.c.l.b16 %v179
      %v260 = vunpack.c.l.b16 %v180
      %v261 = vunpack.c.l.b16 %v181
      %v262 = vunpack.c.l.b16 %v182
      %v263 = vunpack.c.l.b16 %v183
      %v264 = vunpack.c.l.b16 %v184
      %v265 = vunpack.c.l.b16 %v185
      %v266 = vunpack.c.l.b16 %v186
      %v267 = vunpack.c.l.b16 %v187
      %v268 = vunpack.c.l.b16 %v188
      %v269 = vunpack.c.l.b16 %v189
      %v270 = vunpack.c.l.b16 %v190
      %v271 = vunpack.c.l.b16 %v191
      %v272 = vunpack.c.l.b16 %v192
      %v273 = vunpack.c.l.b16 %v193
      %v274 = vunpack.c.l.b16 %v194
      %v275 = vunpack.c.l.b16 %v195
      %v276 = vunpack.c.l.b16 %v196
      %v277 = vunpack.c.l.b16 %v197
      %v278 = vunpack.c.l.b16 %v198
      %v279 = vunpack.c.l.b16 %v199
      %v280 = vunpack.c.l.b16 %v200
      %v281 = vunpack.c.l.b16 %v201
      %v282 = vunpack.c.l.b16 %v202
      %v283 = vunpack.c.l.b16 %v203
      %v284 = vunpack.c.l.b16 %v204
      %v285 = vunpack.c.l.b16 %v205
      %v286 = vunpack.c.l.b16 %v206
      %v287 = vpack.c.b16 %v256, %v255
      %v288 = vpack.c.b16 %v258, %v257
      %v289 = vpack.c.b16 %v260, %v259
      %v290 = vpack.c.b16 %v262, %v261
      %v291 = vpack.c.b16 %v264, %v263
      %v292 = vpack.c.b16 %v266, %v265
      %v293 = vpack.c.b16 %v268, %v267
      %v294 = vpack.c.b16 %v270, %v269
      %v295 = vpack.c.b16 %v272, %v271
      %v296 = vpack.c.b16 %v274, %v273
      %v297 = vpack.c.b16 %v276, %v275
      %v298 = vpack.c.b16 %v278, %v277
      %v299 = vpack.c.b16 %v280, %v279
      %v300 = vpack.c.b16 %v282, %v281
      %v301 = vpack.c.b16 %v284, %v283
      %v302 = vpack.c.b16 %v286, %v285
      %v312 = vunpack.c.l.b16 %v207
      %v313 = vunpack.c.l.b16 %v208
      %v314 = vunpack.c.l.b16 %v209
      %v315 = vunpack.c.l.b16 %v210
      %v316 = vunpack.c.l.b16 %v211
      %v317 = vunpack.c.l.b16 %v212
      %v318 = vunpack.c.l.b16 %v213
      %v319 = vunpack.c.l.b16 %v214
      %v320 = vunpack.c.l.b16 %v215
      %v321 = vpack.c.b16 %v313, %v312
      %v322 = vpack.c.b16 %v315, %v314
      %v323 = vpack.c.b16 %v317, %v316
      %v324 = vpack.c.b16 %v319, %v318
      %v325 = vpack.c.b16 %v320, %v320
      %vm330 = vcmask 588800
      %v332 = vsel %vm330, %v287, 0
      %v335 = vsel %vm330, %v288, 0
      %v338 = vsel %vm330, %v289, 0
      %v341 = vsel %vm330, %v290, 0
      %v344 = vsel %vm330, %v291, 0
      %v347 = vsel %vm330, %v292, 0
      %v350 = vsel %vm330, %v293, 0
      %v353 = vsel %vm330, %v294, 0
      %v356 = vsel %vm330, %v295, 0
      %v359 = vsel %vm330, %v296, 0
      %v362 = vsel %vm330, %v297, 0
      %v365 = vsel %vm330, %v298, 0
      %v368 = vsel %vm330, %v299, 0
      %v371 = vsel %vm330, %v300, 0
      %v374 = vsel %vm330, %v301, 0
      %v377 = vsel %vm330, %v302, 0
      %vm379 = vcmask 1043456
      %v381 = vsel %vm379, %v325, 0
      %383 = vmatprep.subr.bf16.mxu0 0
      %384 = vmatpush1.bf16.msra.mxu0 %v321
      %385 = vmatprep.subr.bf16.mxu0 0
      %386 = vmatpush1.bf16.msra.mxu0 %v322
      %387 = vmatprep.subr.bf16.mxu0 0
      %388 = vmatpush1.bf16.msra.mxu0 %v323
      %389 = vmatprep.subr.bf16.mxu0 0
      %390 = vmatpush1.bf16.msra.mxu0 %v324
      %391 = vmatprep.subr.bf16.mxu0 0
      %392 = vmatpush1.bf16.msra.mxu0 %v381
      %393 = vmatprep.subr.bf16.mxu0 0
      %394 = vmatpush1.bf16.msra.mxu0 0
      %395 = vmatprep.subr.bf16.mxu0 0
      %396 = vmatpush1.bf16.msra.mxu0 0
      %397 = vmatprep.subr.bf16.mxu0 0
      %398 = vmatpush1.bf16.msra.mxu0 0
      %399 = vmatprep.subr.bf16.mxu0 0
      %400 = vmatpush1.bf16.msra.mxu0 0
      %401 = vmatprep.subr.bf16.mxu0 0
      %402 = vmatpush1.bf16.msra.mxu0 0
      %403 = vmatprep.subr.bf16.mxu0 0
      %404 = vmatpush1.bf16.msra.mxu0 0
      %405 = vmatprep.subr.bf16.mxu0 0
      %406 = vmatpush1.bf16.msra.mxu0 0
      %407 = vmatprep.subr.bf16.mxu0 0
      %408 = vmatpush1.bf16.msra.mxu0 0
      %409 = vmatprep.subr.bf16.mxu0 0
      %410 = vmatpush1.bf16.msra.mxu0 0
      %411 = vmatprep.subr.bf16.mxu0 0
      %412 = vmatpush1.bf16.msra.mxu0 0
      %413 = vmatprep.subr.bf16.mxu0 0
      %414 = vmatpush1.bf16.msra.mxu0 0
      %415 = vmatprep.mubr.bf16.mxu0 0
      %416 = vmatmul.mubr.bf16.gmra.mrb[0].mxu0 %v332
      %v417 = vpop.f32.mrb[0].mxu0
      %v418 = vadd.f32 %v221, %v417
      %v419 = vpop.f32.mrb[0].mxu0
      %v420 = vpop.f32.mrb[0].mxu0
      %v421 = vadd.f32 %v221, %v420
      %v422 = vpop.f32.mrb[0].mxu0
      %423 = vmatprep.mubr.bf16.mxu0 0
      %424 = vmatmul.mubr.bf16.gmra.mrb[0].mxu0 %v335
      %v425 = vpop.f32.mrb[0].mxu0
      %v426 = vadd.f32 %v221, %v425
      %v427 = vpop.f32.mrb[0].mxu0
      %v428 = vpop.f32.mrb[0].mxu0
      %v429 = vadd.f32 %v221, %v428
      %v430 = vpop.f32.mrb[0].mxu0
      %431 = vmatprep.mubr.bf16.mxu0 0
      %432 = vmatmul.mubr.bf16.gmra.mrb[0].mxu0 %v338
      %v433 = vpop.f32.mrb[0].mxu0
      %v434 = vadd.f32 %v221, %v433
      %v435 = vpop.f32.mrb[0].mxu0
      %v436 = vpop.f32.mrb[0].mxu0
      %v437 = vadd.f32 %v221, %v436
      %v438 = vpop.f32.mrb[0].mxu0
      %439 = vmatprep.mubr.bf16.mxu0 0
      %440 = vmatmul.mubr.bf16.gmra.mrb[0].mxu0 %v341
      %v441 = vpop.f32.mrb[0].mxu0
      %v442 = vadd.f32 %v221, %v441
      %v443 = vpop.f32.mrb[0].mxu0
      %v444 = vpop.f32.mrb[0].mxu0
      %v445 = vadd.f32 %v221, %v444
      %v446 = vpop.f32.mrb[0].mxu0
      %447 = vmatprep.mubr.bf16.mxu0 0
      %448 = vmatmul.mubr.bf16.gmra.mrb[0].mxu0 %v344
      %v449 = vpop.f32.mrb[0].mxu0
      %v450 = vadd.f32 %v221, %v449
      %v451 = vpop.f32.mrb[0].mxu0
      %v452 = vpop.f32.mrb[0].mxu0
      %v453 = vadd.f32 %v221, %v452
      %v454 = vpop.f32.mrb[0].mxu0
      %455 = vmatprep.mubr.bf16.mxu0 0
      %456 = vmatmul.mubr.bf16.gmra.mrb[0].mxu0 %v347
      %v457 = vpop.f32.mrb[0].mxu0
      %v458 = vadd.f32 %v221, %v457
      %v459 = vpop.f32.mrb[0].mxu0
      %v460 = vpop.f32.mrb[0].mxu0
      %v461 = vadd.f32 %v221, %v460
      %v462 = vpop.f32.mrb[0].mxu0
      %463 = vmatprep.mubr.bf16.mxu0 0
      %464 = vmatmul.mubr.bf16.gmra.mrb[0].mxu0 %v350
      %v465 = vpop.f32.mrb[0].mxu0
      %v466 = vadd.f32 %v221, %v465
      %v467 = vpop.f32.mrb[0].mxu0
      %v468 = vpop.f32.mrb[0].mxu0
      %v469 = vadd.f32 %v221, %v468
      %v470 = vpop.f32.mrb[0].mxu0
      %471 = vmatprep.mubr.bf16.mxu0 0
      %472 = vmatmul.mubr.bf16.gmra.mrb[0].mxu0 %v353
      %v473 = vpop.f32.mrb[0].mxu0
      %v474 = vadd.f32 %v221, %v473
      %v475 = vpop.f32.mrb[0].mxu0
      %v476 = vpop.f32.mrb[0].mxu0
      %v477 = vadd.f32 %v221, %v476
      %v478 = vpop.f32.mrb[0].mxu0
      %479 = vmatprep.mubr.bf16.mxu0 0
      %480 = vmatmul.mubr.bf16.gmra.mrb[0].mxu0 %v356
      %v481 = vpop.f32.mrb[0].mxu0
      %v482 = vadd.f32 %v221, %v481
      %v483 = vpop.f32.mrb[0].mxu0
      %v484 = vpop.f32.mrb[0].mxu0
      %v485 = vadd.f32 %v221, %v484
      %v486 = vpop.f32.mrb[0].mxu0
      %487 = vmatprep.mubr.bf16.mxu0 0
      %488 = vmatmul.mubr.bf16.gmra.mrb[0].mxu0 %v359
      %v489 = vpop.f32.mrb[0].mxu0
      %v490 = vadd.f32 %v221, %v489
      %v491 = vpop.f32.mrb[0].mxu0
      %v492 = vpop.f32.mrb[0].mxu0
      %v493 = vadd.f32 %v221, %v492
      %v494 = vpop.f32.mrb[0].mxu0
      %495 = vmatprep.mubr.bf16.mxu0 0
      %496 = vmatmul.mubr.bf16.gmra.mrb[0].mxu0 %v362
      %v497 = vpop.f32.mrb[0].mxu0
      %v498 = vadd.f32 %v221, %v497
      %v499 = vpop.f32.mrb[0].mxu0
      %v500 = vpop.f32.mrb[0].mxu0
      %v501 = vadd.f32 %v221, %v500
      %v502 = vpop.f32.mrb[0].mxu0
      %503 = vmatprep.mubr.bf16.mxu0 0
      %504 = vmatmul.mubr.bf16.gmra.mrb[0].mxu0 %v365
      %v505 = vpop.f32.mrb[0].mxu0
      %v506 = vadd.f32 %v221, %v505
      %v507 = vpop.f32.mrb[0].mxu0
      %v508 = vpop.f32.mrb[0].mxu0
      %v509 = vadd.f32 %v221, %v508
      %v510 = vpop.f32.mrb[0].mxu0
      %511 = vmatprep.mubr.bf16.mxu0 0
      %512 = vmatmul.mubr.bf16.gmra.mrb[0].mxu0 %v368
      %v513 = vpop.f32.mrb[0].mxu0
      %v514 = vadd.f32 %v221, %v513
      %v515 = vpop.f32.mrb[0].mxu0
      %v516 = vpop.f32.mrb[0].mxu0
      %v517 = vadd.f32 %v221, %v516
      %v518 = vpop.f32.mrb[0].mxu0
      %519 = vmatprep.mubr.bf16.mxu0 0
      %520 = vmatmul.mubr.bf16.gmra.mrb[0].mxu0 %v371
      %v521 = vpop.f32.mrb[0].mxu0
      %v522 = vadd.f32 %v221, %v521
      %v523 = vpop.f32.mrb[0].mxu0
      %v524 = vpop.f32.mrb[0].mxu0
      %v525 = vadd.f32 %v221, %v524
      %v526 = vpop.f32.mrb[0].mxu0
      %527 = vmatprep.mubr.bf16.mxu0 0
      %528 = vmatmul.mubr.bf16.gmra.mrb[0].mxu0 %v374
      %v529 = vpop.f32.mrb[0].mxu0
      %v530 = vadd.f32 %v221, %v529
      %v531 = vpop.f32.mrb[0].mxu0
      %v532 = vpop.f32.mrb[0].mxu0
      %v533 = vadd.f32 %v221, %v532
      %v534 = vpop.f32.mrb[0].mxu0
      %535 = vmatprep.mubr.bf16.mxu0 0
      %536 = vmatmul.mubr.bf16.gmra.mrb[0].mxu0 %v377
      %v537 = vpop.f32.mrb[0].mxu0
      %v538 = vadd.f32 %v221, %v537
      %v539 = vpop.f32.mrb[0].mxu0
      %v540 = vpop.f32.mrb[0].mxu0
      %v541 = vadd.f32 %v221, %v540
      %v542 = vpop.f32.mrb[0].mxu0
      %543 = vdwg.mxu0
      %vm544 = vcmp.gt.f32.partialorder %v418, 0.0
      %vm545 = vcmp.gt.f32.partialorder %v421, 0.0
      %vm546 = vcmp.gt.f32.partialorder %v426, 0.0
      %vm547 = vcmp.gt.f32.partialorder %v429, 0.0
      %vm548 = vcmp.gt.f32.partialorder %v434, 0.0
      %vm549 = vcmp.gt.f32.partialorder %v437, 0.0
      %vm550 = vcmp.gt.f32.partialorder %v442, 0.0
      %vm551 = vcmp.gt.f32.partialorder %v445, 0.0
      %vm552 = vcmp.gt.f32.partialorder %v450, 0.0
      %vm553 = vcmp.gt.f32.partialorder %v453, 0.0
      %vm554 = vcmp.gt.f32.partialorder %v458, 0.0
      %vm555 = vcmp.gt.f32.partialorder %v461, 0.0
      %vm556 = vcmp.gt.f32.partialorder %v466, 0.0
      %vm557 = vcmp.gt.f32.partialorder %v469, 0.0
      %vm558 = vcmp.gt.f32.partialorder %v474, 0.0
      %vm559 = vcmp.gt.f32.partialorder %v477, 0.0
      %vm560 = vcmp.gt.f32.partialorder %v482, 0.0
      %vm561 = vcmp.gt.f32.partialorder %v485, 0.0
      %vm562 = vcmp.gt.f32.partialorder %v490, 0.0
      %vm563 = vcmp.gt.f32.partialorder %v493, 0.0
      %vm564 = vcmp.gt.f32.partialorder %v498, 0.0
      %vm565 = vcmp.gt.f32.partialorder %v501, 0.0
      %vm566 = vcmp.gt.f32.partialorder %v506, 0.0
      %vm567 = vcmp.gt.f32.partialorder %v509, 0.0
      %vm568 = vcmp.gt.f32.partialorder %v514, 0.0
      %vm569 = vcmp.gt.f32.partialorder %v517, 0.0
      %vm570 = vcmp.gt.f32.partialorder %v522, 0.0
      %vm571 = vcmp.gt.f32.partialorder %v525, 0.0
      %vm572 = vcmp.gt.f32.partialorder %v530, 0.0
      %vm573 = vcmp.gt.f32.partialorder %v533, 0.0
      %vm574 = vcmp.gt.f32.partialorder %v538, 0.0
      %vm575 = vcmp.gt.f32.partialorder %v541, 0.0
      %v576 = vmin.f32 %v418, 0.0
      %v577 = vmin.f32 %v421, 0.0
      %v578 = vmin.f32 %v426, 0.0
      %v579 = vmin.f32 %v429, 0.0
      %v580 = vmin.f32 %v434, 0.0
      %v581 = vmin.f32 %v437, 0.0
      %v582 = vmin.f32 %v442, 0.0
      %v583 = vmin.f32 %v445, 0.0
      %v584 = vmin.f32 %v450, 0.0
      %v585 = vmin.f32 %v453, 0.0
      %v586 = vmin.f32 %v458, 0.0
      %v587 = vmin.f32 %v461, 0.0
      %v588 = vmin.f32 %v466, 0.0
      %v589 = vmin.f32 %v469, 0.0
      %v590 = vmin.f32 %v474, 0.0
      %v591 = vmin.f32 %v477, 0.0
      %v592 = vmin.f32 %v482, 0.0
      %v593 = vmin.f32 %v485, 0.0
      %v594 = vmin.f32 %v490, 0.0
      %v595 = vmin.f32 %v493, 0.0
      %v596 = vmin.f32 %v498, 0.0
      %v597 = vmin.f32 %v501, 0.0
      %v598 = vmin.f32 %v506, 0.0
      %v599 = vmin.f32 %v509, 0.0
      %v600 = vmin.f32 %v514, 0.0
      %v601 = vmin.f32 %v517, 0.0
      %v602 = vmin.f32 %v522, 0.0
      %v603 = vmin.f32 %v525, 0.0
      %v604 = vmin.f32 %v530, 0.0
      %v605 = vmin.f32 %v533, 0.0
      %v606 = vmin.f32 %v538, 0.0
      %v607 = vmin.f32 %v541, 0.0
      %v608 = vmul.f32 %v576, 1.442695
      %v609 = vpow.pop %v608
      %v610 = vmul.f32 %v577, 1.442695
      %v611 = vpow.pop %v610
      %v612 = vmul.f32 %v578, 1.442695
      %v613 = vpow.pop %v612
      %v614 = vmul.f32 %v579, 1.442695
      %v615 = vpow.pop %v614
      %v616 = vmul.f32 %v580, 1.442695
      %v617 = vpow.pop %v616
      %v618 = vmul.f32 %v581, 1.442695
      %v619 = vpow.pop %v618
      %v620 = vmul.f32 %v582, 1.442695
      %v621 = vpow.pop %v620
      %v622 = vmul.f32 %v583, 1.442695
      %v623 = vpow.pop %v622
      %v624 = vmul.f32 %v584, 1.442695
      %v625 = vpow.pop %v624
      %v626 = vmul.f32 %v585, 1.442695
      %v627 = vpow.pop %v626
      %v628 = vmul.f32 %v586, 1.442695
      %v629 = vpow.pop %v628
      %v630 = vmul.f32 %v587, 1.442695
      %v631 = vpow.pop %v630
      %v632 = vmul.f32 %v588, 1.442695
      %v633 = vpow.pop %v632
      %v634 = vmul.f32 %v589, 1.442695
      %v635 = vpow.pop %v634
      %v636 = vmul.f32 %v590, 1.442695
      %v637 = vpow.pop %v636
      %v638 = vmul.f32 %v591, 1.442695
      %v639 = vpow.pop %v638
      %v640 = vmul.f32 %v592, 1.442695
      %v641 = vpow.pop %v640
      %v642 = vmul.f32 %v593, 1.442695
      %v643 = vpow.pop %v642
      %v644 = vmul.f32 %v594, 1.442695
      %v645 = vpow.pop %v644
      %v646 = vmul.f32 %v595, 1.442695
      %v647 = vpow.pop %v646
      %v648 = vmul.f32 %v596, 1.442695
      %v649 = vpow.pop %v648
      %v650 = vmul.f32 %v597, 1.442695
      %v651 = vpow.pop %v650
      %v652 = vmul.f32 %v598, 1.442695
      %v653 = vpow.pop %v652
      %v654 = vmul.f32 %v599, 1.442695
      %v655 = vpow.pop %v654
      %v656 = vmul.f32 %v600, 1.442695
      %v657 = vpow.pop %v656
      %v658 = vmul.f32 %v601, 1.442695
      %v659 = vpow.pop %v658
      %v660 = vmul.f32 %v602, 1.442695
      %v661 = vpow.pop %v660
      %v662 = vmul.f32 %v603, 1.442695
      %v663 = vpow.pop %v662
      %v664 = vmul.f32 %v604, 1.442695
      %v665 = vpow.pop %v664
      %v666 = vmul.f32 %v605, 1.442695
      %v667 = vpow.pop %v666
      %v668 = vmul.f32 %v606, 1.442695
      %v669 = vpow.pop %v668
      %v670 = vmul.f32 %v607, 1.442695
      %v671 = vpow.pop %v670
      %v672 = vsub.f32 %v609, 1.0
      %v673 = vsub.f32 %v611, 1.0
      %v674 = vsub.f32 %v613, 1.0
      %v675 = vsub.f32 %v615, 1.0
      %v676 = vsub.f32 %v617, 1.0
      %v677 = vsub.f32 %v619, 1.0
      %v678 = vsub.f32 %v621, 1.0
      %v679 = vsub.f32 %v623, 1.0
      %v680 = vsub.f32 %v625, 1.0
      %v681 = vsub.f32 %v627, 1.0
      %v682 = vsub.f32 %v629, 1.0
      %v683 = vsub.f32 %v631, 1.0
      %v684 = vsub.f32 %v633, 1.0
      %v685 = vsub.f32 %v635, 1.0
      %v686 = vsub.f32 %v637, 1.0
      %v687 = vsub.f32 %v639, 1.0
      %v688 = vsub.f32 %v641, 1.0
      %v689 = vsub.f32 %v643, 1.0
      %v690 = vsub.f32 %v645, 1.0
      %v691 = vsub.f32 %v647, 1.0
      %v692 = vsub.f32 %v649, 1.0
      %v693 = vsub.f32 %v651, 1.0
      %v694 = vsub.f32 %v653, 1.0
      %v695 = vsub.f32 %v655, 1.0
      %v696 = vsub.f32 %v657, 1.0
      %v697 = vsub.f32 %v659, 1.0
      %v698 = vsub.f32 %v661, 1.0
      %v699 = vsub.f32 %v663, 1.0
      %v700 = vsub.f32 %v665, 1.0
      %v701 = vsub.f32 %v667, 1.0
      %v702 = vsub.f32 %v669, 1.0
      %v703 = vsub.f32 %v671, 1.0
      %v704 = vsel %vm544, %v418, %v672
      %v705 = vsel %vm545, %v421, %v673
      %v706 = vsel %vm546, %v426, %v674
      %v707 = vsel %vm547, %v429, %v675
      %v708 = vsel %vm548, %v434, %v676
      %v709 = vsel %vm549, %v437, %v677
      %v710 = vsel %vm550, %v442, %v678
      %v711 = vsel %vm551, %v445, %v679
      %v712 = vsel %vm552, %v450, %v680
      %v713 = vsel %vm553, %v453, %v681
      %v714 = vsel %vm554, %v458, %v682
      %v715 = vsel %vm555, %v461, %v683
      %v716 = vsel %vm556, %v466, %v684
      %v717 = vsel %vm557, %v469, %v685
      %v718 = vsel %vm558, %v474, %v686
      %v719 = vsel %vm559, %v477, %v687
      %v720 = vsel %vm560, %v482, %v688
      %v721 = vsel %vm561, %v485, %v689
      %v722 = vsel %vm562, %v490, %v690
      %v723 = vsel %vm563, %v493, %v691
      %v724 = vsel %vm564, %v498, %v692
      %v725 = vsel %vm565, %v501, %v693
      %v726 = vsel %vm566, %v506, %v694
      %v727 = vsel %vm567, %v509, %v695
      %v728 = vsel %vm568, %v514, %v696
      %v729 = vsel %vm569, %v517, %v697
      %v730 = vsel %vm570, %v522, %v698
      %v731 = vsel %vm571, %v525, %v699
      %v732 = vsel %vm572, %v530, %v700
      %v733 = vsel %vm573, %v533, %v701
      %v734 = vsel %vm574, %v538, %v702
      %v735 = vsel %vm575, %v541, %v703
      %vm736 = vcmask 64512
      %737 = vst.msk [vmem:[%s172] sm:$0xff] %vm736, %v704
      %738 = vst.msk [vmem:[%s172 + $0x8] sm:$0xff] %vm736, %v705
      %739 = vst.msk [vmem:[%s172 + $0x10] sm:$0xff] %vm736, %v706
      %740 = vst.msk [vmem:[%s172 + $0x18] sm:$0xff] %vm736, %v707
      %741 = vst.msk [vmem:[%s172 + $0x20] sm:$0xff] %vm736, %v708
      %742 = vst.msk [vmem:[%s172 + $0x28] sm:$0xff] %vm736, %v709
      %743 = vst.msk [vmem:[%s172 + $0x30] sm:$0xff] %vm736, %v710
      %744 = vst.msk [vmem:[%s172 + $0x38] sm:$0xff] %vm736, %v711
      %745 = vst.msk [vmem:[%s172 + $0x40] sm:$0xff] %vm736, %v712
      %746 = vst.msk [vmem:[%s172 + $0x48] sm:$0xff] %vm736, %v713
      %747 = vst.msk [vmem:[%s172 + $0x50] sm:$0xff] %vm736, %v714
      %748 = vst.msk [vmem:[%s172 + $0x58] sm:$0xff] %vm736, %v715
      %749 = vst.msk [vmem:[%s172 + $0x60] sm:$0xff] %vm736, %v716
      %750 = vst.msk [vmem:[%s172 + $0x68] sm:$0xff] %vm736, %v717
      %751 = vst.msk [vmem:[%s172 + $0x70] sm:$0xff] %vm736, %v718
      %752 = vst.msk [vmem:[%s172 + $0x78] sm:$0xff] %vm736, %v719
      %753 = vst.msk [vmem:[%s172 + $0x80] sm:$0xff] %vm736, %v720
      %754 = vst.msk [vmem:[%s172 + $0x88] sm:$0xff] %vm736, %v721
      %755 = vst.msk [vmem:[%s172 + $0x90] sm:$0xff] %vm736, %v722
      %756 = vst.msk [vmem:[%s172 + $0x98] sm:$0xff] %vm736, %v723
      %757 = vst.msk [vmem:[%s172 + $0xa0] sm:$0xff] %vm736, %v724
      %758 = vst.msk [vmem:[%s172 + $0xa8] sm:$0xff] %vm736, %v725
      %759 = vst.msk [vmem:[%s172 + $0xb0] sm:$0xff] %vm736, %v726
      %760 = vst.msk [vmem:[%s172 + $0xb8] sm:$0xff] %vm736, %v727
      %761 = vst.msk [vmem:[%s172 + $0xc0] sm:$0xff] %vm736, %v728
      %762 = vst.msk [vmem:[%s172 + $0xc8] sm:$0xff] %vm736, %v729
      %763 = vst.msk [vmem:[%s172 + $0xd0] sm:$0xff] %vm736, %v730
      %764 = vst.msk [vmem:[%s172 + $0xd8] sm:$0xff] %vm736, %v731
      %765 = vst.msk [vmem:[%s172 + $0xe0] sm:$0xff] %vm736, %v732
      %766 = vst.msk [vmem:[%s172 + $0xe8] sm:$0xff] %vm736, %v733
      %767 = vst.msk [vmem:[%s172 + $0xf0] sm:$0xff] %vm736, %v734
      %768 = vst.msk [vmem:[%s172 + $0xf8] sm:$0xff] %vm736, %v735
      %s769 = smul.u32 32, %s14
      %p770 = scmp.lt.s32.totalorder %s769, 63
      %s771 = scalar_select %p770, %s769, 63
      %s772 = smul.addr %s771, 8
      %s773 = scalar_lea.vmem %s3, %s772
      // Predicated region
      $region33: #{heatformer_passive_forward.16} parent=31 // pred_check
        %p774 = pneg %p100
      $region34: #{heatformer_passive_forward.16} parent=31 // pred_check_branch
        %776 = sbr.rel (%p774) target = $region36
      $region35: #{heatformer_passive_forward.16} parent=31 // pred_region
        %s777 = smul.u32 32, %s14
      $region36: #{heatformer_passive_forward.16} parent=31 // pred_fallthru
        _
    $region32: #{heatformer_passive_forward.16} parent=5 // pred_fallthru
      _
    %p778 = scmp.le.s32.totalorder 2, %s9
    // Predicated region
    $region37: #{heatformer_passive_forward.16} parent=5 // pred_check
      %p779 = pneg %p778
    $region38: #{heatformer_passive_forward.16} parent=5 // pred_check_branch
      %781 = sbr.rel (%p779) target = $region40
    $region39: #{heatformer_passive_forward.16} parent=5 // pred_region
      %s782 = ssub.s32 %s9, 2
      // Predicated region
      $region41: #{heatformer_passive_forward.16} parent=39 // pred_check
        %p783 = pneg %p106
      $region42: #{heatformer_passive_forward.16} parent=39 // pred_check_branch
        %785 = sbr.rel (%p783) target = $region44
      $region43: #{heatformer_passive_forward.16} parent=39 // pred_region
        %s786 = smul.u32 32, %s15
        %p787 = scmp.lt.s32.totalorder %s786, 63
        %s788 = scalar_select %p787, %s786, 63
        %s789 = smul.addr %s788, 8
        %s790 = scalar_lea.vmem %s3, %s789
      $region44: #{heatformer_passive_forward.16} parent=39 // pred_fallthru
        _
    $region40: #{heatformer_passive_forward.16} parent=5 // pred_fallthru
      _
  $region6: #{heatformer_passive_forward.16} parent=0 // loop_footer
    %s13 = sadd.s32 1, %s9
  $region7: #{heatformer_passive_forward.16} parent=0 // loop_footer_branch
    %8 = sbr.rel target = $region3
  $region8: #{heatformer_passive_forward.16} parent=0 // loop_exit
    _

// kernel: heatformer_passive_forward.17
$region0: #{heatformer_passive_forward.17}
  #allocation0 [shape = 'u32[]', space=smem, size = 0x4, offset = 0x4, fixed_abs, tag = 'smem constant byte address 0x4 - core index']
  #allocation1 [shape = 'u32[144,128]{1,0:T(1,128)}', space=vmem, size = 0x12000, scoped, tag = 'internal scratch']
  %s0 = inlined_call_operand.vmem [shape: bf16[512,72], index: 0, kind: input, shape index: {}]
  %s1 = inlined_call_operand.vmem [shape: bf16[72,2], index: 1, kind: input, shape index: {}]
  %s2 = inlined_call_operand.vmem [shape: f32[1,2], index: 2, kind: input, shape index: {}]
  %s3 = inlined_call_operand.vmem [shape: f32[512,2], index: 3, kind: output, shape index: {}]
  %s4 = sld [smem:[#allocation0]]
  $region45: #{heatformer_passive_forward.17} parent=0
    _
  %s6 = ssub.s32 1, %s4
  %s7 = scalar_select 0, %s6, %s4
  loop: start=0, step=1, limit=4
  $region2: #{heatformer_passive_forward.17} parent=0 // loop_pre_header
    _
  $region3: #{heatformer_passive_forward.17} parent=0 // loop_header
    %s9 = sphi 0, %s13
    %p10 = scmp.ge.s32.totalorder %s9, 4
    %s19 = sphi 0, %s21
    %s22 = sphi 0, %s19
    %s23 = sphi 0, %s22
    %s39 = sphi 0, %s23
    %s43 = sphi 0, %s43
    %s45 = sphi 0, %s43
    %s46 = sphi 0, %s45
    %s60 = sphi 0, %s46
    %s64 = sphi 0, %s64
    %s66 = sphi 0, %s64
    %s67 = sphi 0, %s66
    %s81 = sphi 0, %s67
    %s87 = sphi 0, %s89
    %s90 = sphi 0, %s87
    %s91 = sphi 0, %s90
    %s107 = sphi 0, %s91
  $region4: #{heatformer_passive_forward.17} parent=0 // loop_header_branch
    %12 = sbr.rel (%p10) target = $region8
  $region5: #{heatformer_passive_forward.17} parent=0 // loop_body
    %s14 = ssub.s32 %s9, 1
    %s15 = ssub.s32 %s9, 2
    %s16 = sadd.s32 %s9, 1
    %s17 = ssub.s32 %s9, %s16
    %p18 = scmp.eq.s32.totalorder %s17, 0
    %s20 = sadd.s32 %s19, 1
    %s21 = scalar_select %p18, %s19, %s20
    %p24 = pneg %p18
    %p25 = scmp.eq.s32.totalorder %s9, 1
    %p26 = por %p24, %p25
    %p27 = scmp.ne.s32.totalorder %s19, %s22
    %p28 = scmp.eq.s32.totalorder %s9, 0
    %p29 = por %p27, %p28
    %p30 = scmp.ne.s32.totalorder %s19, %s22
    %p31 = scmp.eq.s32.totalorder %s14, 1
    %p32 = por %p30, %p31
    %p33 = scmp.ne.s32.totalorder %s22, %s23
    %p34 = scmp.eq.s32.totalorder %s14, 0
    %p35 = por %p33, %p34
    %p36 = scmp.ne.s32.totalorder %s22, %s23
    %p37 = scmp.eq.s32.totalorder %s15, 1
    %p38 = por %p36, %p37
    %p40 = scmp.ne.s32.totalorder %s23, %s39
    %p41 = scmp.eq.s32.totalorder %s15, 0
    %p42 = por %p40, %p41
    %s44 = sadd.s32 %s43, 1
    %p47 = scmp.eq.s32.totalorder %s9, 1
    %p48 = scmp.ne.s32.totalorder %s43, %s45
    %p49 = scmp.eq.s32.totalorder %s9, 0
    %p50 = por %p48, %p49
    %p51 = scmp.ne.s32.totalorder %s43, %s45
    %p52 = scmp.eq.s32.totalorder %s14, 1
    %p53 = por %p51, %p52
    %p54 = scmp.ne.s32.totalorder %s45, %s46
    %p55 = scmp.eq.s32.totalorder %s14, 0
    %p56 = por %p54, %p55
    %p57 = scmp.ne.s32.totalorder %s45, %s46
    %p58 = scmp.eq.s32.totalorder %s15, 1
    %p59 = por %p57, %p58
    %p61 = scmp.ne.s32.totalorder %s46, %s60
    %p62 = scmp.eq.s32.totalorder %s15, 0
    %p63 = por %p61, %p62
    %s65 = sadd.s32 %s64, 1
    %p68 = scmp.eq.s32.totalorder %s9, 1
    %p69 = scmp.ne.s32.totalorder %s64, %s66
    %p70 = scmp.eq.s32.totalorder %s9, 0
    %p71 = por %p69, %p70
    %p72 = scmp.ne.s32.totalorder %s64, %s66
    %p73 = scmp.eq.s32.totalorder %s14, 1
    %p74 = por %p72, %p73
    %p75 = scmp.ne.s32.totalorder %s66, %s67
    %p76 = scmp.eq.s32.totalorder %s14, 0
    %p77 = por %p75, %p76
    %p78 = scmp.ne.s32.totalorder %s66, %s67
    %p79 = scmp.eq.s32.totalorder %s15, 1
    %p80 = por %p78, %p79
    %p82 = scmp.ne.s32.totalorder %s67, %s81
    %p83 = scmp.eq.s32.totalorder %s15, 0
    %p84 = por %p82, %p83
    %s85 = ssub.s32 %s9, %s16
    %p86 = scmp.eq.s32.totalorder %s85, 0
    %s88 = sadd.s32 %s87, 1
    %s89 = scalar_select %p86, %s87, %s88
    %p92 = pneg %p86
    %p93 = scmp.eq.s32.totalorder %s9, 1
    %p94 = por %p92, %p93
    %p95 = scmp.ne.s32.totalorder %s87, %s90
    %p96 = scmp.eq.s32.totalorder %s9, 0
    %p97 = por %p95, %p96
    %p98 = scmp.ne.s32.totalorder %s87, %s90
    %p99 = scmp.eq.s32.totalorder %s14, 1
    %p100 = por %p98, %p99
    %p101 = scmp.ne.s32.totalorder %s90, %s91
    %p102 = scmp.eq.s32.totalorder %s14, 0
    %p103 = por %p101, %p102
    %p104 = scmp.ne.s32.totalorder %s90, %s91
    %p105 = scmp.eq.s32.totalorder %s15, 1
    %p106 = por %p104, %p105
    %p108 = scmp.ne.s32.totalorder %s91, %s107
    %p109 = scmp.eq.s32.totalorder %s15, 0
    %p110 = por %p108, %p109
    %p111 = scmp.le.s32.totalorder 1, %s9
    %p112 = scmp.lt.s32.totalorder %s9, 3
    %p113 = pnand %p111, %p112
    %p114 = pneg %p113
    // Predicated region
    $region9: #{heatformer_passive_forward.17} parent=5 // pred_check
      _
    $region10: #{heatformer_passive_forward.17} parent=5 // pred_check_branch
      %116 = sbr.rel (%p113) target = $region12
    $region11: #{heatformer_passive_forward.17} parent=5 // pred_region
      %s117 = ssub.s32 %s9, 1
      // Predicated region
      $region13: #{heatformer_passive_forward.17} parent=11 // pred_check
        %p118 = pneg %p56
      $region14: #{heatformer_passive_forward.17} parent=11 // pred_check_branch
        %120 = sbr.rel (%p118) target = $region16
      $region15: #{heatformer_passive_forward.17} parent=11 // pred_region
        _
      $region16: #{heatformer_passive_forward.17} parent=11 // pred_fallthru
        _
      // Predicated region
      $region17: #{heatformer_passive_forward.17} parent=11 // pred_check
        %p121 = pneg %p77
      $region18: #{heatformer_passive_forward.17} parent=11 // pred_check_branch
        %123 = sbr.rel (%p121) target = $region20
      $region19: #{heatformer_passive_forward.17} parent=11 // pred_region
        _
      $region20: #{heatformer_passive_forward.17} parent=11 // pred_fallthru
        _
    $region12: #{heatformer_passive_forward.17} parent=5 // pred_fallthru
      _
    %p124 = scmp.lt.s32.totalorder %s9, 2
    // Predicated region
    $region21: #{heatformer_passive_forward.17} parent=5 // pred_check
      %p125 = pneg %p124
    $region22: #{heatformer_passive_forward.17} parent=5 // pred_check_branch
      %127 = sbr.rel (%p125) target = $region24
    $region23: #{heatformer_passive_forward.17} parent=5 // pred_region
      // Predicated region
      $region25: #{heatformer_passive_forward.17} parent=23 // pred_check
        %p128 = pneg %p29
      $region26: #{heatformer_passive_forward.17} parent=23 // pred_check_branch
        %130 = sbr.rel (%p128) target = $region28
      $region27: #{heatformer_passive_forward.17} parent=23 // pred_region
        %s131 = smul.u32 32, %s9
        %p132 = scmp.lt.s32.totalorder %s131, 63
        %s133 = scalar_select %p132, %s131, 63
        %s134 = smul.addr %s133, 4
        %s135 = scalar_lea.vmem %s0, %s134
        %s136 = smul.u32 32, %s9
      $region28: #{heatformer_passive_forward.17} parent=23 // pred_fallthru
        _
    $region24: #{heatformer_passive_forward.17} parent=5 // pred_fallthru
      _
    %p137 = scmp.le.s32.totalorder 1, %s9
    %p138 = scmp.lt.s32.totalorder %s9, 3
    %p139 = pnand %p137, %p138
    %p140 = pneg %p139
    // Predicated region
    $region29: #{heatformer_passive_forward.17} parent=5 // pred_check
      _
    $region30: #{heatformer_passive_forward.17} parent=5 // pred_check_branch
      %142 = sbr.rel (%p139) target = $region32
    $region31: #{heatformer_passive_forward.17} parent=5 // pred_region
      %s143 = ssub.s32 %s9, 1
      %s144 = smul.u32 32, %s14
      %p145 = scmp.lt.s32.totalorder %s144, 63
      %s146 = scalar_select %p145, %s144, 63
      %s147 = smul.addr %s146, 4
      %s148 = scalar_lea.vmem %s0, %s147
      %p149 = pneg %p35
      %p150 = pneg %p32
      %p151 = pneg %p56
      %p152 = pneg %p53
      %p153 = pneg %p77
      %p154 = pneg %p74
      %p155 = pneg %p103
      %p156 = pneg %p100
      %s157 = smul.u32 32, %s14
      %p158 = scmp.lt.s32.totalorder %s157, 63
      %s159 = scalar_select %p158, %s157, 63
      %s160 = smul.addr %s159, 8
      %s161 = scalar_lea.vmem %s3, %s160
      %s162 = smul.u32 32, %s14
      %p163 = scmp.lt.s32.totalorder %s162, 63
      %s164 = scalar_select %p163, %s162, 63
      %s165 = smul.addr %s164, 4
      %s166 = scalar_lea.vmem %s0, %s165
      %s167 = smul.u32 32, %s14
      %s168 = smul.u32 32, %s14
      %p169 = scmp.lt.s32.totalorder %s168, 63
      %s170 = scalar_select %p169, %s168, 63
      %s171 = smul.addr %s170, 8
      %s172 = scalar_lea.vmem %s3, %s171
      %s173 = smul.u32 32, %s14
      %v175 = vld [vmem:[%s166] sm:$0xf]
      %v176 = vld [vmem:[%s166 + $0x4] sm:$0xf]
      %v177 = vld [vmem:[%s166 + $0x8] sm:$0xf]
      %v178 = vld [vmem:[%s166 + $0xc] sm:$0xf]
      %v179 = vld [vmem:[%s166 + $0x10] sm:$0xf]
      %v180 = vld [vmem:[%s166 + $0x14] sm:$0xf]
      %v181 = vld [vmem:[%s166 + $0x18] sm:$0xf]
      %v182 = vld [vmem:[%s166 + $0x1c] sm:$0xf]
      %v183 = vld [vmem:[%s166 + $0x20] sm:$0xf]
      %v184 = vld [vmem:[%s166 + $0x24] sm:$0xf]
      %v185 = vld [vmem:[%s166 + $0x28] sm:$0xf]
      %v186 = vld [vmem:[%s166 + $0x2c] sm:$0xf]
      %v187 = vld [vmem:[%s166 + $0x30] sm:$0xf]
      %v188 = vld [vmem:[%s166 + $0x34] sm:$0xf]
      %v189 = vld [vmem:[%s166 + $0x38] sm:$0xf]
      %v190 = vld [vmem:[%s166 + $0x3c] sm:$0xf]
      %v191 = vld [vmem:[%s166 + $0x40] sm:$0xf]
      %v192 = vld [vmem:[%s166 + $0x44] sm:$0xf]
      %v193 = vld [vmem:[%s166 + $0x48] sm:$0xf]
      %v194 = vld [vmem:[%s166 + $0x4c] sm:$0xf]
      %v195 = vld [vmem:[%s166 + $0x50] sm:$0xf]
      %v196 = vld [vmem:[%s166 + $0x54] sm:$0xf]
      %v197 = vld [vmem:[%s166 + $0x58] sm:$0xf]
      %v198 = vld [vmem:[%s166 + $0x5c] sm:$0xf]
      %v199 = vld [vmem:[%s166 + $0x60] sm:$0xf]
      %v200 = vld [vmem:[%s166 + $0x64] sm:$0xf]
      %v201 = vld [vmem:[%s166 + $0x68] sm:$0xf]
      %v202 = vld [vmem:[%s166 + $0x6c] sm:$0xf]
      %v203 = vld [vmem:[%s166 + $0x70] sm:$0xf]
      %v204 = vld [vmem:[%s166 + $0x74] sm:$0xf]
      %v205 = vld [vmem:[%s166 + $0x78] sm:$0xf]
      %v206 = vld [vmem:[%s166 + $0x7c] sm:$0xf]
      %v207 = vld [vmem:[%s1] sm:$0xf]
      %v208 = vld [vmem:[%s1 + $0x4] sm:$0xf]
      %v209 = vld [vmem:[%s1 + $0x8] sm:$0xf]
      %v210 = vld [vmem:[%s1 + $0xc] sm:$0xf]
      %v211 = vld [vmem:[%s1 + $0x10] sm:$0xf]
      %v212 = vld [vmem:[%s1 + $0x14] sm:$0xf]
      %v213 = vld [vmem:[%s1 + $0x18] sm:$0xf]
      %v214 = vld [vmem:[%s1 + $0x1c] sm:$0xf]
      %v215 = vld [vmem:[%s1 + $0x20] sm:$0xf]
      %v216 = vld [vmem:[%s2] sm:$0x1]
      %v218 = vlaneseq
      %v219 = vshrl.u32 %v218, 7
      %v220 = vsub.s32 0, %v219
      %v221 = vrot.slane %v216, %v220
      %v255 = vunpack.c.l.b16 %v175
      %v256 = vunpack.c.l.b16 %v176
      %v257 = vunpack.c.l.b16 %v177
      %v258 = vunpack.c.l.b16 %v178
      %v259 = vunpack.c.l.b16 %v179
      %v260 = vunpack.c.l.b16 %v180
      %v261 = vunpack.c.l.b16 %v181
      %v262 = vunpack.c.l.b16 %v182
      %v263 = vunpack.c.l.b16 %v183
      %v264 = vunpack.c.l.b16 %v184
      %v265 = vunpack.c.l.b16 %v185
      %v266 = vunpack.c.l.b16 %v186
      %v267 = vunpack.c.l.b16 %v187
      %v268 = vunpack.c.l.b16 %v188
      %v269 = vunpack.c.l.b16 %v189
      %v270 = vunpack.c.l.b16 %v190
      %v271 = vunpack.c.l.b16 %v191
      %v272 = vunpack.c.l.b16 %v192
      %v273 = vunpack.c.l.b16 %v193
      %v274 = vunpack.c.l.b16 %v194
      %v275 = vunpack.c.l.b16 %v195
      %v276 = vunpack.c.l.b16 %v196
      %v277 = vunpack.c.l.b16 %v197
      %v278 = vunpack.c.l.b16 %v198
      %v279 = vunpack.c.l.b16 %v199
      %v280 = vunpack.c.l.b16 %v200
      %v281 = vunpack.c.l.b16 %v201
      %v282 = vunpack.c.l.b16 %v202
      %v283 = vunpack.c.l.b16 %v203
      %v284 = vunpack.c.l.b16 %v204
      %v285 = vunpack.c.l.b16 %v205
      %v286 = vunpack.c.l.b16 %v206
      %v287 = vpack.c.b16 %v256, %v255
      %v288 = vpack.c.b16 %v258, %v257
      %v289 = vpack.c.b16 %v260, %v259
      %v290 = vpack.c.b16 %v262, %v261
      %v291 = vpack.c.b16 %v264, %v263
      %v292 = vpack.c.b16 %v266, %v265
      %v293 = vpack.c.b16 %v268, %v267
      %v294 = vpack.c.b16 %v270, %v269
      %v295 = vpack.c.b16 %v272, %v271
      %v296 = vpack.c.b16 %v274, %v273
      %v297 = vpack.c.b16 %v276, %v275
      %v298 = vpack.c.b16 %v278, %v277
      %v299 = vpack.c.b16 %v280, %v279
      %v300 = vpack.c.b16 %v282, %v281
      %v301 = vpack.c.b16 %v284, %v283
      %v302 = vpack.c.b16 %v286, %v285
      %v312 = vunpack.c.l.b16 %v207
      %v313 = vunpack.c.l.b16 %v208
      %v314 = vunpack.c.l.b16 %v209
      %v315 = vunpack.c.l.b16 %v210
      %v316 = vunpack.c.l.b16 %v211
      %v317 = vunpack.c.l.b16 %v212
      %v318 = vunpack.c.l.b16 %v213
      %v319 = vunpack.c.l.b16 %v214
      %v320 = vunpack.c.l.b16 %v215
      %v321 = vpack.c.b16 %v313, %v312
      %v322 = vpack.c.b16 %v315, %v314
      %v323 = vpack.c.b16 %v317, %v316
      %v324 = vpack.c.b16 %v319, %v318
      %v325 = vpack.c.b16 %v320, %v320
      %vm330 = vcmask 588800
      %v332 = vsel %vm330, %v287, 0
      %v335 = vsel %vm330, %v288, 0
      %v338 = vsel %vm330, %v289, 0
      %v341 = vsel %vm330, %v290, 0
      %v344 = vsel %vm330, %v291, 0
      %v347 = vsel %vm330, %v292, 0
      %v350 = vsel %vm330, %v293, 0
      %v353 = vsel %vm330, %v294, 0
      %v356 = vsel %vm330, %v295, 0
      %v359 = vsel %vm330, %v296, 0
      %v362 = vsel %vm330, %v297, 0
      %v365 = vsel %vm330, %v298, 0
      %v368 = vsel %vm330, %v299, 0
      %v371 = vsel %vm330, %v300, 0
      %v374 = vsel %vm330, %v301, 0
      %v377 = vsel %vm330, %v302, 0
      %vm379 = vcmask 1043456
      %v381 = vsel %vm379, %v325, 0
      %383 = vmatprep.subr.bf16.mxu0 0
      %384 = vmatpush1.bf16.msra.mxu0 %v321
      %385 = vmatprep.subr.bf16.mxu0 0
      %386 = vmatpush1.bf16.msra.mxu0 %v322
      %387 = vmatprep.subr.bf16.mxu0 0
      %388 = vmatpush1.bf16.msra.mxu0 %v323
      %389 = vmatprep.subr.bf16.mxu0 0
      %390 = vmatpush1.bf16.msra.mxu0 %v324
      %391 = vmatprep.subr.bf16.mxu0 0
      %392 = vmatpush1.bf16.msra.mxu0 %v381
      %393 = vmatprep.subr.bf16.mxu0 0
      %394 = vmatpush1.bf16.msra.mxu0 0
      %395 = vmatprep.subr.bf16.mxu0 0
      %396 = vmatpush1.bf16.msra.mxu0 0
      %397 = vmatprep.subr.bf16.mxu0 0
      %398 = vmatpush1.bf16.msra.mxu0 0
      %399 = vmatprep.subr.bf16.mxu0 0
      %400 = vmatpush1.bf16.msra.mxu0 0
      %401 = vmatprep.subr.bf16.mxu0 0
      %402 = vmatpush1.bf16.msra.mxu0 0
      %403 = vmatprep.subr.bf16.mxu0 0
      %404 = vmatpush1.bf16.msra.mxu0 0
      %405 = vmatprep.subr.bf16.mxu0 0
      %406 = vmatpush1.bf16.msra.mxu0 0
      %407 = vmatprep.subr.bf16.mxu0 0
      %408 = vmatpush1.bf16.msra.mxu0 0
      %409 = vmatprep.subr.bf16.mxu0 0
      %410 = vmatpush1.bf16.msra.mxu0 0
      %411 = vmatprep.subr.bf16.mxu0 0
      %412 = vmatpush1.bf16.msra.mxu0 0
      %413 = vmatprep.subr.bf16.mxu0 0
      %414 = vmatpush1.bf16.msra.mxu0 0
      %415 = vmatprep.mubr.bf16.mxu0 0
      %416 = vmatmul.mubr.bf16.gmra.mrb[0].mxu0 %v332
      %v417 = vpop.f32.mrb[0].mxu0
      %v418 = vadd.f32 %v221, %v417
      %v419 = vpop.f32.mrb[0].mxu0
      %v420 = vpop.f32.mrb[0].mxu0
      %v421 = vadd.f32 %v221, %v420
      %v422 = vpop.f32.mrb[0].mxu0
      %423 = vmatprep.mubr.bf16.mxu0 0
      %424 = vmatmul.mubr.bf16.gmra.mrb[0].mxu0 %v335
      %v425 = vpop.f32.mrb[0].mxu0
      %v426 = vadd.f32 %v221, %v425
      %v427 = vpop.f32.mrb[0].mxu0
      %v428 = vpop.f32.mrb[0].mxu0
      %v429 = vadd.f32 %v221, %v428
      %v430 = vpop.f32.mrb[0].mxu0
      %431 = vmatprep.mubr.bf16.mxu0 0
      %432 = vmatmul.mubr.bf16.gmra.mrb[0].mxu0 %v338
      %v433 = vpop.f32.mrb[0].mxu0
      %v434 = vadd.f32 %v221, %v433
      %v435 = vpop.f32.mrb[0].mxu0
      %v436 = vpop.f32.mrb[0].mxu0
      %v437 = vadd.f32 %v221, %v436
      %v438 = vpop.f32.mrb[0].mxu0
      %439 = vmatprep.mubr.bf16.mxu0 0
      %440 = vmatmul.mubr.bf16.gmra.mrb[0].mxu0 %v341
      %v441 = vpop.f32.mrb[0].mxu0
      %v442 = vadd.f32 %v221, %v441
      %v443 = vpop.f32.mrb[0].mxu0
      %v444 = vpop.f32.mrb[0].mxu0
      %v445 = vadd.f32 %v221, %v444
      %v446 = vpop.f32.mrb[0].mxu0
      %447 = vmatprep.mubr.bf16.mxu0 0
      %448 = vmatmul.mubr.bf16.gmra.mrb[0].mxu0 %v344
      %v449 = vpop.f32.mrb[0].mxu0
      %v450 = vadd.f32 %v221, %v449
      %v451 = vpop.f32.mrb[0].mxu0
      %v452 = vpop.f32.mrb[0].mxu0
      %v453 = vadd.f32 %v221, %v452
      %v454 = vpop.f32.mrb[0].mxu0
      %455 = vmatprep.mubr.bf16.mxu0 0
      %456 = vmatmul.mubr.bf16.gmra.mrb[0].mxu0 %v347
      %v457 = vpop.f32.mrb[0].mxu0
      %v458 = vadd.f32 %v221, %v457
      %v459 = vpop.f32.mrb[0].mxu0
      %v460 = vpop.f32.mrb[0].mxu0
      %v461 = vadd.f32 %v221, %v460
      %v462 = vpop.f32.mrb[0].mxu0
      %463 = vmatprep.mubr.bf16.mxu0 0
      %464 = vmatmul.mubr.bf16.gmra.mrb[0].mxu0 %v350
      %v465 = vpop.f32.mrb[0].mxu0
      %v466 = vadd.f32 %v221, %v465
      %v467 = vpop.f32.mrb[0].mxu0
      %v468 = vpop.f32.mrb[0].mxu0
      %v469 = vadd.f32 %v221, %v468
      %v470 = vpop.f32.mrb[0].mxu0
      %471 = vmatprep.mubr.bf16.mxu0 0
      %472 = vmatmul.mubr.bf16.gmra.mrb[0].mxu0 %v353
      %v473 = vpop.f32.mrb[0].mxu0
      %v474 = vadd.f32 %v221, %v473
      %v475 = vpop.f32.mrb[0].mxu0
      %v476 = vpop.f32.mrb[0].mxu0
      %v477 = vadd.f32 %v221, %v476
      %v478 = vpop.f32.mrb[0].mxu0
      %479 = vmatprep.mubr.bf16.mxu0 0
      %480 = vmatmul.mubr.bf16.gmra.mrb[0].mxu0 %v356
      %v481 = vpop.f32.mrb[0].mxu0
      %v482 = vadd.f32 %v221, %v481
      %v483 = vpop.f32.mrb[0].mxu0
      %v484 = vpop.f32.mrb[0].mxu0
      %v485 = vadd.f32 %v221, %v484
      %v486 = vpop.f32.mrb[0].mxu0
      %487 = vmatprep.mubr.bf16.mxu0 0
      %488 = vmatmul.mubr.bf16.gmra.mrb[0].mxu0 %v359
      %v489 = vpop.f32.mrb[0].mxu0
      %v490 = vadd.f32 %v221, %v489
      %v491 = vpop.f32.mrb[0].mxu0
      %v492 = vpop.f32.mrb[0].mxu0
      %v493 = vadd.f32 %v221, %v492
      %v494 = vpop.f32.mrb[0].mxu0
      %495 = vmatprep.mubr.bf16.mxu0 0
      %496 = vmatmul.mubr.bf16.gmra.mrb[0].mxu0 %v362
      %v497 = vpop.f32.mrb[0].mxu0
      %v498 = vadd.f32 %v221, %v497
      %v499 = vpop.f32.mrb[0].mxu0
      %v500 = vpop.f32.mrb[0].mxu0
      %v501 = vadd.f32 %v221, %v500
      %v502 = vpop.f32.mrb[0].mxu0
      %503 = vmatprep.mubr.bf16.mxu0 0
      %504 = vmatmul.mubr.bf16.gmra.mrb[0].mxu0 %v365
      %v505 = vpop.f32.mrb[0].mxu0
      %v506 = vadd.f32 %v221, %v505
      %v507 = vpop.f32.mrb[0].mxu0
      %v508 = vpop.f32.mrb[0].mxu0
      %v509 = vadd.f32 %v221, %v508
      %v510 = vpop.f32.mrb[0].mxu0
      %511 = vmatprep.mubr.bf16.mxu0 0
      %512 = vmatmul.mubr.bf16.gmra.mrb[0].mxu0 %v368
      %v513 = vpop.f32.mrb[0].mxu0
      %v514 = vadd.f32 %v221, %v513
      %v515 = vpop.f32.mrb[0].mxu0
      %v516 = vpop.f32.mrb[0].mxu0
      %v517 = vadd.f32 %v221, %v516
      %v518 = vpop.f32.mrb[0].mxu0
      %519 = vmatprep.mubr.bf16.mxu0 0
      %520 = vmatmul.mubr.bf16.gmra.mrb[0].mxu0 %v371
      %v521 = vpop.f32.mrb[0].mxu0
      %v522 = vadd.f32 %v221, %v521
      %v523 = vpop.f32.mrb[0].mxu0
      %v524 = vpop.f32.mrb[0].mxu0
      %v525 = vadd.f32 %v221, %v524
      %v526 = vpop.f32.mrb[0].mxu0
      %527 = vmatprep.mubr.bf16.mxu0 0
      %528 = vmatmul.mubr.bf16.gmra.mrb[0].mxu0 %v374
      %v529 = vpop.f32.mrb[0].mxu0
      %v530 = vadd.f32 %v221, %v529
      %v531 = vpop.f32.mrb[0].mxu0
      %v532 = vpop.f32.mrb[0].mxu0
      %v533 = vadd.f32 %v221, %v532
      %v534 = vpop.f32.mrb[0].mxu0
      %535 = vmatprep.mubr.bf16.mxu0 0
      %536 = vmatmul.mubr.bf16.gmra.mrb[0].mxu0 %v377
      %v537 = vpop.f32.mrb[0].mxu0
      %v538 = vadd.f32 %v221, %v537
      %v539 = vpop.f32.mrb[0].mxu0
      %v540 = vpop.f32.mrb[0].mxu0
      %v541 = vadd.f32 %v221, %v540
      %v542 = vpop.f32.mrb[0].mxu0
      %543 = vdwg.mxu0
      %vm544 = vcmask 15360
      %545 = vst.msk [vmem:[%s172] sm:$0xff] %vm544, %v418
      %546 = vst.msk [vmem:[%s172 + $0x8] sm:$0xff] %vm544, %v421
      %547 = vst.msk [vmem:[%s172 + $0x10] sm:$0xff] %vm544, %v426
      %548 = vst.msk [vmem:[%s172 + $0x18] sm:$0xff] %vm544, %v429
      %549 = vst.msk [vmem:[%s172 + $0x20] sm:$0xff] %vm544, %v434
      %550 = vst.msk [vmem:[%s172 + $0x28] sm:$0xff] %vm544, %v437
      %551 = vst.msk [vmem:[%s172 + $0x30] sm:$0xff] %vm544, %v442
      %552 = vst.msk [vmem:[%s172 + $0x38] sm:$0xff] %vm544, %v445
      %553 = vst.msk [vmem:[%s172 + $0x40] sm:$0xff] %vm544, %v450
      %554 = vst.msk [vmem:[%s172 + $0x48] sm:$0xff] %vm544, %v453
      %555 = vst.msk [vmem:[%s172 + $0x50] sm:$0xff] %vm544, %v458
      %556 = vst.msk [vmem:[%s172 + $0x58] sm:$0xff] %vm544, %v461
      %557 = vst.msk [vmem:[%s172 + $0x60] sm:$0xff] %vm544, %v466
      %558 = vst.msk [vmem:[%s172 + $0x68] sm:$0xff] %vm544, %v469
      %559 = vst.msk [vmem:[%s172 + $0x70] sm:$0xff] %vm544, %v474
      %560 = vst.msk [vmem:[%s172 + $0x78] sm:$0xff] %vm544, %v477
      %561 = vst.msk [vmem:[%s172 + $0x80] sm:$0xff] %vm544, %v482
      %562 = vst.msk [vmem:[%s172 + $0x88] sm:$0xff] %vm544, %v485
      %563 = vst.msk [vmem:[%s172 + $0x90] sm:$0xff] %vm544, %v490
      %564 = vst.msk [vmem:[%s172 + $0x98] sm:$0xff] %vm544, %v493
      %565 = vst.msk [vmem:[%s172 + $0xa0] sm:$0xff] %vm544, %v498
      %566 = vst.msk [vmem:[%s172 + $0xa8] sm:$0xff] %vm544, %v501
      %567 = vst.msk [vmem:[%s172 + $0xb0] sm:$0xff] %vm544, %v506
      %568 = vst.msk [vmem:[%s172 + $0xb8] sm:$0xff] %vm544, %v509
      %569 = vst.msk [vmem:[%s172 + $0xc0] sm:$0xff] %vm544, %v514
      %570 = vst.msk [vmem:[%s172 + $0xc8] sm:$0xff] %vm544, %v517
      %571 = vst.msk [vmem:[%s172 + $0xd0] sm:$0xff] %vm544, %v522
      %572 = vst.msk [vmem:[%s172 + $0xd8] sm:$0xff] %vm544, %v525
      %573 = vst.msk [vmem:[%s172 + $0xe0] sm:$0xff] %vm544, %v530
      %574 = vst.msk [vmem:[%s172 + $0xe8] sm:$0xff] %vm544, %v533
      %575 = vst.msk [vmem:[%s172 + $0xf0] sm:$0xff] %vm544, %v538
      %576 = vst.msk [vmem:[%s172 + $0xf8] sm:$0xff] %vm544, %v541
      %s577 = smul.u32 32, %s14
      %p578 = scmp.lt.s32.totalorder %s577, 63
      %s579 = scalar_select %p578, %s577, 63
      %s580 = smul.addr %s579, 8
      %s581 = scalar_lea.vmem %s3, %s580
      // Predicated region
      $region33: #{heatformer_passive_forward.17} parent=31 // pred_check
        %p582 = pneg %p100
      $region34: #{heatformer_passive_forward.17} parent=31 // pred_check_branch
        %584 = sbr.rel (%p582) target = $region36
      $region35: #{heatformer_passive_forward.17} parent=31 // pred_region
        %s585 = smul.u32 32, %s14
      $region36: #{heatformer_passive_forward.17} parent=31 // pred_fallthru
        _
    $region32: #{heatformer_passive_forward.17} parent=5 // pred_fallthru
      _
    %p586 = scmp.le.s32.totalorder 2, %s9
    // Predicated region
    $region37: #{heatformer_passive_forward.17} parent=5 // pred_check
      %p587 = pneg %p586
    $region38: #{heatformer_passive_forward.17} parent=5 // pred_check_branch
      %589 = sbr.rel (%p587) target = $region40
    $region39: #{heatformer_passive_forward.17} parent=5 // pred_region
      %s590 = ssub.s32 %s9, 2
      // Predicated region
      $region41: #{heatformer_passive_forward.17} parent=39 // pred_check
        %p591 = pneg %p106
      $region42: #{heatformer_passive_forward.17} parent=39 // pred_check_branch
        %593 = sbr.rel (%p591) target = $region44
      $region43: #{heatformer_passive_forward.17} parent=39 // pred_region
        %s594 = smul.u32 32, %s15
        %p595 = scmp.lt.s32.totalorder %s594, 63
        %s596 = scalar_select %p595, %s594, 63
        %s597 = smul.addr %s596, 8
        %s598 = scalar_lea.vmem %s3, %s597
      $region44: #{heatformer_passive_forward.17} parent=39 // pred_fallthru
        _
    $region40: #{heatformer_passive_forward.17} parent=5 // pred_fallthru
      _
  $region6: #{heatformer_passive_forward.17} parent=0 // loop_footer
    %s13 = sadd.s32 1, %s9
  $region7: #{heatformer_passive_forward.17} parent=0 // loop_footer_branch
    %8 = sbr.rel target = $region3
  $region8: #{heatformer_passive_forward.17} parent=0 // loop_exit
    _

</llo_original>
